<compile_context>
chip_gen: v7x
topology: tpu7x:2x2x1
jax: 0.10.0
libtpu: 0.0.40
codegen_flags: <defaults>
</compile_context>

<pallas_src>
import numpy as np

import jax
import jax.numpy as jnp
from jax.experimental import pallas as pl
from jax.experimental.pallas import tpu as pltpu  # noqa: F401  (TPU backend assumed)


_STEM_K = 32   # stem im2col K: 3*3*3 = 27, zero-padded to 32

# MobileNetV3-Small config (torchvision `_mobilenet_v3_conf`):
#   (cin, kernel, expanded, cout, use_se, activation, stride)
_CFG = [
    (16, 3, 16, 16, True, "relu", 2),
    (16, 3, 72, 24, False, "relu", 2),
    (24, 3, 88, 24, False, "relu", 1),
    (24, 5, 96, 40, True, "hardswish", 2),
    (40, 5, 240, 40, True, "hardswish", 1),
    (40, 5, 240, 40, True, "hardswish", 1),
    (40, 5, 120, 48, True, "hardswish", 1),
    (48, 5, 144, 48, True, "hardswish", 1),
    (48, 5, 288, 96, True, "hardswish", 2),
    (96, 5, 576, 96, True, "hardswish", 1),
    (96, 5, 576, 96, True, "hardswish", 1),
]

_C_FINAL = 576
_BIAS_W = max([_C_FINAL] + [c[2] for c in _CFG])   # widest bias vector (576)


def _make_divisible(v, divisor=8):
    new_v = max(divisor, int(v + divisor / 2) // divisor * divisor)
    if new_v < 0.9 * v:
        new_v += divisor
    return new_v


def _act(y, act):
    if act == "relu":
        return jnp.maximum(y, 0.0)
    if act == "hardswish":
        return y * (jnp.clip(y + 3.0, 0.0, 6.0) * (1.0 / 6.0))
    return y


def _full_spec(shape):
    # whole-array block (single grid point, everything resident in VMEM)
    return pl.BlockSpec(shape, lambda *_: (0,) * len(shape))


# ----------------------------------------------------------------------------
# trace-time constants (numpy; baked into the executable, tiny)
# ----------------------------------------------------------------------------
def _dw_gather_stacked(N, H, W, Ho, Wo, k, stride, pp):
    """Stacked 0/1 gather matrix + kept (non-all-zero) tap indices.

    S[t_pos*M_out:(t_pos+1)*M_out] @ x_flat == zero-padded, strided tap
    kept[t_pos] of x.  Rows ordered (n, ho, wo); cols ordered (n, h, w).
    """
    M_out, M_in = N * Ho * Wo, N * H * W
    mats, kept = [], []
    for i in range(k):
        for j in range(k):
            S = np.zeros((M_out, M_in), np.float32)
            for n in range(N):
                for ho in range(Ho):
                    hi = ho * stride + i - pp
                    if not (0 <= hi < H):
                        continue
                    for wo in range(Wo):
                        wi = wo * stride + j - pp
                        if 0 <= wi < W:
                            S[(n * Ho + ho) * Wo + wo, (n * H + hi) * W + wi] = 1.0
            if S.any():            # drop all-zero taps at trace time
                mats.append(S)
                kept.append(i * k + j)
    return np.concatenate(mats, axis=0), kept


def _se_pool_mat(N, Ho, Wo):
    """P: per-image average pool over the flat (n, ho, wo) rows."""
    hw = Ho * Wo
    P = np.zeros((N, N * hw), np.float32)
    for n in range(N):
        P[n, n * hw:(n + 1) * hw] = 1.0 / hw
    return P


def _bias_layout():
    """Row assignment of every bias vector inside the packed [rows, 576] array."""
    layout, r = [], 0

    def take():
        nonlocal r
        r += 1
        return r - 1

    for (_cin, _k, _exp, _cout, use_se, _act_, _stride) in _CFG:
        d = {"eb": take(), "db": take()}
        if use_se:
            d["b1"] = take()
            d["b2"] = take()
        d["pb"] = take()
        layout.append(d)
    last_row = take()
    return layout, last_row, r


# ----------------------------------------------------------------------------
# the single fused whole-backbone kernel
# ----------------------------------------------------------------------------
def _make_network_kernel(plan, n_in):
    bf16 = jnp.bfloat16

    def kernel(*refs):
        in_refs = refs[:n_in]
        o_final, o_s26, o_s52 = refs[n_in:]

        bias_ref = in_refs[plan["bias"]]

        def brow(row, c):                       # one packed f32 bias row -> [1, c]
            return bias_ref[row:row + 1, :c]

        h = in_refs[plan["x"]][...]             # [N*8*8, 32] stem im2col cols (f32)

        for bp in plan["blocks"]:
            inp = h

            # ---- expand 1x1 (or stem 3x3-as-matmul) + folded BN + act (MXU) ----
            h = jnp.dot(inp.astype(bf16), in_refs[bp["we"]][...],
                        preferred_element_type=jnp.float32)
            h = _act(h + brow(bp["eb"], bp["cexp"]), bp["act_e"])

            # ---- depthwise kxk + folded BN + act ----
            wd = in_refs[bp["wd"]][...]         # [k*k, cexp] f32 (BN-folded taps)
            if bp["spatial1"]:
                ct = bp["kept"][0]              # only the centre tap hits data
                d = h * wd[ct:ct + 1, :]
            else:
                # one stacked gather matmul, then weighted tap-sum on the VPU
                taps = jnp.dot(in_refs[bp["S"]][...], h.astype(bf16),
                               preferred_element_type=jnp.float32)
                mo = bp["m_out"]
                d = None
                for t, src in enumerate(bp["kept"]):
                    term = taps[t * mo:(t + 1) * mo, :] * wd[src:src + 1, :]
                    d = term if d is None else d + term
            d = _act(d + brow(bp["db"], bp["cexp"]), bp["act_d"])

            # ---- squeeze-excitation: pool -> FC -> relu -> FC -> hsig -> gate ----
            if bp["se"]:
                if bp["se_pool"]:
                    pooled = jnp.dot(in_refs[bp["P"]][...], d.astype(bf16),
                                     preferred_element_type=jnp.float32)   # [N, cexp]
                else:
                    pooled = d                   # 1x1 spatial: pool == identity
                z = jnp.dot(pooled.astype(bf16), in_refs[bp["w1"]][...],
                            preferred_element_type=jnp.float32)
                z = jnp.maximum(z + brow(bp["b1"], bp["cse"]), 0.0)
                g = jnp.dot(z.astype(bf16), in_refs[bp["w2"]][...],
                            preferred_element_type=jnp.float32)
                g = jnp.clip(g + brow(bp["b2"], bp["cexp"]) + 3.0, 0.0, 6.0) * (1.0 / 6.0)
                if bp["se_pool"]:
                    # VPU broadcast of the per-image gate over its spatial rows
                    d3 = d.reshape(bp["n"], bp["hw"], bp["cexp"])
                    d = (d3 * g[:, None, :]).reshape(bp["n"] * bp["hw"], bp["cexp"])
                else:
                    d = d * g

            # ---- project 1x1 + folded BN (linear) [+ residual] ----
            y = jnp.dot(d.astype(bf16), in_refs[bp["wp"]][...],
                        preferred_element_type=jnp.float32)
            y = y + brow(bp["pb"], bp["cout"])
            if bp["res"]:
                y = y + inp
            h = y

            if bp["tap"] == "s52":
                o_s52[...] = h                   # features[3] tap
            elif bp["tap"] == "s26":
                o_s26[...] = h                   # features[8] tap

        # ---- features[12]: 96 -> 576 1x1 conv + folded BN + hardswish ----
        y = jnp.dot(h.astype(bf16), in_refs[plan["wl"]][...],
                    preferred_element_type=jnp.float32)
        o_final[...] = _act(y + brow(plan["lb"], plan["c_final"]), "hardswish")

    return kernel


def _run_fused_backbone(params, x_cols, N, H, W):
    layout, lb_row, _ = _bias_layout()

    args = []

    def add(a):
        args.append(a)
        return len(args) - 1

    bias_idx = add(params["bias_pack"])
    x_idx = add(x_cols)

    plan_blocks = []
    s26_hw = s52_hw = None
    curH, curW = H, W
    for idx, (cin, k, exp, cout, use_se, act, stride) in enumerate(_CFG):
        blk = params["blocks"][idx]
        pp = (k - 1) // 2
        Ho = (curH + 2 * pp - k) // stride + 1
        Wo = (curW + 2 * pp - k) // stride + 1
        spatial1 = (curH == 1 and curW == 1)
        m_out = N * Ho * Wo

        bp = {
            "cexp": exp, "cout": cout, "n": N, "hw": Ho * Wo, "m_out": m_out,
            "act_e": "hardswish" if idx == 0 else act,   # stem activation
            "act_d": act,
            "spatial1": spatial1, "se": use_se,
            "res": (stride == 1 and cin == cout),
            "eb": layout[idx]["eb"], "db": layout[idx]["db"], "pb": layout[idx]["pb"],
        }
        bp["we"] = add(params["stem_w"] if idx == 0 else blk["expand_w"])
        bp["wd"] = add(blk["dw_w"])
        if spatial1:
            bp["kept"] = [pp * k + pp]
        else:
            S, kept = _dw_gather_stacked(N, curH, curW, Ho, Wo, k, stride, pp)
            bp["S"] = add(jnp.asarray(S, jnp.bfloat16))
            bp["kept"] = kept
        if use_se:
            bp["cse"] = _make_divisible(exp // 4, 8)
            bp["se_pool"] = not (Ho == 1 and Wo == 1)
            if bp["se_pool"]:
                bp["P"] = add(jnp.asarray(_se_pool_mat(N, Ho, Wo), jnp.bfloat16))
            bp["w1"] = add(blk["se_w1"])
            bp["w2"] = add(blk["se_w2"])
            bp["b1"] = layout[idx]["b1"]
            bp["b2"] = layout[idx]["b2"]
        bp["wp"] = add(blk["proj_w"])

        if idx == 2:                 # == features[3] output
            bp["tap"] = "s52"
            s52_shape, s52_hw = (m_out, cout), (Ho, Wo)
        elif idx == 7:               # == features[8] output
            bp["tap"] = "s26"
            s26_shape, s26_hw = (m_out, cout), (Ho, Wo)
        else:
            bp["tap"] = None

        plan_blocks.append(bp)
        curH, curW = Ho, Wo

    wl_idx = add(params["last_w"])
    plan = {"bias": bias_idx, "x": x_idx, "blocks": plan_blocks,
            "wl": wl_idx, "lb": lb_row, "c_final": params["last_w"].shape[1]}

    out_shapes = (
        jax.ShapeDtypeStruct((N * curH * curW, plan["c_final"]), jnp.float32),
        jax.ShapeDtypeStruct(s26_shape, jnp.float32),
        jax.ShapeDtypeStruct(s52_shape, jnp.float32),
    )

    kernel = _make_network_kernel(plan, len(args))
    outs = pl.pallas_call(
        kernel,
        out_shape=out_shapes,
        in_specs=[_full_spec(a.shape) for a in args],
        out_specs=tuple(_full_spec(s.shape) for s in out_shapes),
    )(*args)
    return outs, (curH, curW), s26_hw, s52_hw


# ----------------------------------------------------------------------------
# deterministic synthetic parameters (BN folded into bf16 weights; biases f32)
# ----------------------------------------------------------------------------
class _Keys:
    def __init__(self, seed):
        self._key = jax.random.PRNGKey(seed)

    def __call__(self):
        self._key, k = jax.random.split(self._key)
        return k


def _fold_bn(kg, c, eps=1e-3):
    gamma = jax.random.uniform(kg(), (c,), jnp.float32, 0.5, 1.5)
    beta = 0.1 * jax.random.normal(kg(), (c,), jnp.float32)
    mean = 0.1 * jax.random.normal(kg(), (c,), jnp.float32)
    var = jax.random.uniform(kg(), (c,), jnp.float32, 0.5, 1.5)
    scale = gamma / jnp.sqrt(var + eps)
    bias = beta - mean * scale
    return scale, bias


def init_params(seed=0):
    kg = _Keys(seed)
    layout, lb_row, n_rows = _bias_layout()
    rows = [None] * n_rows

    def put(row, vec):
        rows[row] = jnp.pad(vec, (0, _BIAS_W - vec.shape[0]))

    # stem 3x3/s2 conv (3 -> 16) as an im2col matmul; K padded 27 -> 32
    w = jax.random.normal(kg(), (27, 16), jnp.float32) / np.sqrt(27.0)
    w = jnp.pad(w, ((0, _STEM_K - 27), (0, 0)))
    sc, b = _fold_bn(kg, 16)
    stem_w = (w * sc[None, :]).astype(jnp.bfloat16)
    put(layout[0]["eb"], b)

    blocks = []
    for idx, (cin, k, exp, cout, use_se, act, stride) in enumerate(_CFG):
        blk = {}
        if idx > 0:
            w = jax.random.normal(kg(), (cin, exp), jnp.float32) / np.sqrt(float(cin))
            sc, b = _fold_bn(kg, exp)
            blk["expand_w"] = (w * sc[None, :]).astype(jnp.bfloat16)
            put(layout[idx]["eb"], b)
        # depthwise tap weights (applied on the VPU; kept f32, BN-folded)
        wdw = jax.random.normal(kg(), (k * k, exp), jnp.float32) / float(k)
        sc, b = _fold_bn(kg, exp)
        blk["dw_w"] = wdw * sc[None, :]
        put(layout[idx]["db"], b)
        if use_se:
            cse = _make_divisible(exp // 4, 8)
            blk["se_w1"] = (jax.random.normal(kg(), (exp, cse), jnp.float32)
                            / np.sqrt(float(exp))).astype(jnp.bfloat16)
            put(layout[idx]["b1"], 0.1 * jax.random.normal(kg(), (cse,), jnp.float32))
            blk["se_w2"] = (jax.random.normal(kg(), (cse, exp), jnp.float32)
                            / np.sqrt(float(cse))).astype(jnp.bfloat16)
            put(layout[idx]["b2"], 0.1 * jax.random.normal(kg(), (exp,), jnp.float32))
        w = jax.random.normal(kg(), (exp, cout), jnp.float32) / np.sqrt(float(exp))
        sc, b = _fold_bn(kg, cout)
        blk["proj_w"] = (w * sc[None, :]).astype(jnp.bfloat16)
        put(layout[idx]["pb"], b)
        blocks.append(blk)

    # features[12]: 96 -> 576
    w = jax.random.normal(kg(), (96, _C_FINAL), jnp.float32) / np.sqrt(96.0)
    sc, b = _fold_bn(kg, _C_FINAL)
    last_w = (w * sc[None, :]).astype(jnp.bfloat16)
    put(lb_row, b)

    return {"stem_w": stem_w, "blocks": blocks, "last_w": last_w,
            "bias_pack": jnp.stack(rows)}


# ----------------------------------------------------------------------------
# forward pass
# ----------------------------------------------------------------------------
def _extract_patches(x, k, stride, pad):
    """x:[N,H,W,C] -> ([k*k, N, Ho, Wo, C], Ho, Wo); stem-only plain-JAX glue."""
    N, H, W, C = x.shape
    xp = jnp.pad(x, ((0, 0), (pad, pad), (pad, pad), (0, 0)))
    Ho = (H + 2 * pad - k) // stride + 1
    Wo = (W + 2 * pad - k) // stride + 1
    taps = []
    for i in range(k):
        for j in range(k):
            taps.append(xp[:, i:i + (Ho - 1) * stride + 1:stride,
                           j:j + (Wo - 1) * stride + 1:stride, :])
    return jnp.stack(taps, axis=0), Ho, Wo


def mobilenet_small_forward(params, x_nchw):
    x = jnp.transpose(x_nchw, (0, 2, 3, 1)).astype(jnp.float32)   # NCHW -> NHWC
    N = x.shape[0]

    # stem im2col (3 input channels only -> tiny); K padded 27 -> 32.
    # TODO(synk): fold this im2col into the fused kernel to trim the last glue ops.
    patches, H, W = _extract_patches(x, 3, 2, 1)                  # [9, N, H, W, 3]
    cols = jnp.transpose(patches, (1, 2, 3, 0, 4)).reshape(N * H * W, 27)
    x_cols = jnp.pad(cols, ((0, 0), (0, _STEM_K - 27)))           # [N*H*W, 32]

    (final, s26, s52), fin_hw, s26_hw, s52_hw = _run_fused_backbone(
        params, x_cols, N, H, W)

    def to_nchw(flat, hw, c):
        h_, w_ = hw
        return jnp.transpose(flat.reshape(N, h_, w_, c), (0, 3, 1, 2))

    out = to_nchw(final, fin_hw, _C_FINAL)    # features[12] output
    s_26 = to_nchw(s26, s26_hw, _CFG[7][3])   # features[8] output
    s_52 = to_nchw(s52, s52_hw, _CFG[2][3])   # features[3] output
    return out, s_26, s_52


# ----------------------------------------------------------------------------
if __name__ == "__main__":
    params = init_params(seed=0)
    x = jax.random.normal(jax.random.PRNGKey(0), (2, 3, 16, 16), jnp.float32)

    fwd = jax.jit(mobilenet_small_forward)
    out, s_26, s_52 = fwd(params, x)
    jax.block_until_ready((out, s_26, s_52))

    # branch_channels = (576, 48, 24), NCHW outputs
    assert out.shape == (2, 576, 1, 1), out.shape
    assert s_26.shape == (2, 48, 1, 1), s_26.shape
    assert s_52.shape == (2, 24, 2, 2), s_52.shape
    assert all(bool(jnp.all(jnp.isfinite(a))) for a in (out, s_26, s_52))

    print("KERNEL_OK")
</pallas_src>

<mosaic_0001>
module attributes {stable_mosaic.version = 11 : i64} {
  func.func @kernel(%arg0: memref<52x576xf32, #tpu.memory_space<vmem>>, %arg1: memref<128x32xf32, #tpu.memory_space<vmem>>, %arg2: memref<32x16xbf16, #tpu.memory_space<vmem>>, %arg3: memref<9x16xf32, #tpu.memory_space<vmem>>, %arg4: memref<288x128xbf16, #tpu.memory_space<vmem>>, %arg5: memref<2x32xbf16, #tpu.memory_space<vmem>>, %arg6: memref<16x8xbf16, #tpu.memory_space<vmem>>, %arg7: memref<8x16xbf16, #tpu.memory_space<vmem>>, %arg8: memref<16x16xbf16, #tpu.memory_space<vmem>>, %arg9: memref<16x72xbf16, #tpu.memory_space<vmem>>, %arg10: memref<9x72xf32, #tpu.memory_space<vmem>>, %arg11: memref<72x32xbf16, #tpu.memory_space<vmem>>, %arg12: memref<72x24xbf16, #tpu.memory_space<vmem>>, %arg13: memref<24x88xbf16, #tpu.memory_space<vmem>>, %arg14: memref<9x88xf32, #tpu.memory_space<vmem>>, %arg15: memref<72x8xbf16, #tpu.memory_space<vmem>>, %arg16: memref<88x24xbf16, #tpu.memory_space<vmem>>, %arg17: memref<24x96xbf16, #tpu.memory_space<vmem>>, %arg18: memref<25x96xf32, #tpu.memory_space<vmem>>, %arg19: memref<8x8xbf16, #tpu.memory_space<vmem>>, %arg20: memref<96x24xbf16, #tpu.memory_space<vmem>>, %arg21: memref<24x96xbf16, #tpu.memory_space<vmem>>, %arg22: memref<96x40xbf16, #tpu.memory_space<vmem>>, %arg23: memref<40x240xbf16, #tpu.memory_space<vmem>>, %arg24: memref<25x240xf32, #tpu.memory_space<vmem>>, %arg25: memref<240x64xbf16, #tpu.memory_space<vmem>>, %arg26: memref<64x240xbf16, #tpu.memory_space<vmem>>, %arg27: memref<240x40xbf16, #tpu.memory_space<vmem>>, %arg28: memref<40x240xbf16, #tpu.memory_space<vmem>>, %arg29: memref<25x240xf32, #tpu.memory_space<vmem>>, %arg30: memref<240x64xbf16, #tpu.memory_space<vmem>>, %arg31: memref<64x240xbf16, #tpu.memory_space<vmem>>, %arg32: memref<240x40xbf16, #tpu.memory_space<vmem>>, %arg33: memref<40x120xbf16, #tpu.memory_space<vmem>>, %arg34: memref<25x120xf32, #tpu.memory_space<vmem>>, %arg35: memref<120x32xbf16, #tpu.memory_space<vmem>>, %arg36: memref<32x120xbf16, #tpu.memory_space<vmem>>, %arg37: memref<120x48xbf16, #tpu.memory_space<vmem>>, %arg38: memref<48x144xbf16, #tpu.memory_space<vmem>>, %arg39: memref<25x144xf32, #tpu.memory_space<vmem>>, %arg40: memref<144x40xbf16, #tpu.memory_space<vmem>>, %arg41: memref<40x144xbf16, #tpu.memory_space<vmem>>, %arg42: memref<144x48xbf16, #tpu.memory_space<vmem>>, %arg43: memref<48x288xbf16, #tpu.memory_space<vmem>>, %arg44: memref<25x288xf32, #tpu.memory_space<vmem>>, %arg45: memref<288x72xbf16, #tpu.memory_space<vmem>>, %arg46: memref<72x288xbf16, #tpu.memory_space<vmem>>, %arg47: memref<288x96xbf16, #tpu.memory_space<vmem>>, %arg48: memref<96x576xbf16, #tpu.memory_space<vmem>>, %arg49: memref<25x576xf32, #tpu.memory_space<vmem>>, %arg50: memref<576x144xbf16, #tpu.memory_space<vmem>>, %arg51: memref<144x576xbf16, #tpu.memory_space<vmem>>, %arg52: memref<576x96xbf16, #tpu.memory_space<vmem>>, %arg53: memref<96x576xbf16, #tpu.memory_space<vmem>>, %arg54: memref<25x576xf32, #tpu.memory_space<vmem>>, %arg55: memref<576x144xbf16, #tpu.memory_space<vmem>>, %arg56: memref<144x576xbf16, #tpu.memory_space<vmem>>, %arg57: memref<576x96xbf16, #tpu.memory_space<vmem>>, %arg58: memref<96x576xbf16, #tpu.memory_space<vmem>>, %arg59: memref<2x576xf32, #tpu.memory_space<vmem>>, %arg60: memref<2x48xf32, #tpu.memory_space<vmem>>, %arg61: memref<8x24xf32, #tpu.memory_space<vmem>>) attributes {dimension_semantics = [], scalar_prefetch = 0 : i64, scratch_operands = 0 : i64, tpu.core_type = #tpu.core_type<tc>} {
    %c0 = arith.constant 0 : index
    %c0_0 = arith.constant 0 : index
    %0 = vector.load %arg1[%c0, %c0_0] : memref<128x32xf32, #tpu.memory_space<vmem>>, vector<128x32xf32>
    %1 = arith.truncf %0 : vector<128x32xf32> to vector<128x32xbf16>
    %c0_1 = arith.constant 0 : index
    %c0_2 = arith.constant 0 : index
    %2 = vector.load %arg2[%c0_1, %c0_2] : memref<32x16xbf16, #tpu.memory_space<vmem>>, vector<32x16xbf16>
    %cst = arith.constant dense<0.000000e+00> : vector<128x16xf32>
    %3 = tpu.matmul %1, %2, %cst {dimension_numbers = #tpu.dot_dimension_numbers<[1], [0], [0], [1], [0, 0, 1, 1], [], []>} : vector<128x32xbf16>, vector<32x16xbf16>, vector<128x16xf32> -> vector<128x16xf32>
    %c0_3 = arith.constant 0 : index
    %c0_4 = arith.constant 0 : index
    %4 = vector.load %arg0[%c0_3, %c0_4] : memref<52x576xf32, #tpu.memory_space<vmem>>, vector<1x16xf32>
    %5 = vector.broadcast %4 : vector<1x16xf32> to vector<128x16xf32>
    %6 = arith.addf %3, %5 : vector<128x16xf32>
    %cst_5 = arith.constant 3.000000e+00 : f32
    %7 = vector.broadcast %cst_5 : f32 to vector<128x16xf32>
    %8 = arith.addf %6, %7 : vector<128x16xf32>
    %cst_6 = arith.constant 0.000000e+00 : f32
    %cst_7 = arith.constant 6.000000e+00 : f32
    %9 = vector.broadcast %cst_6 : f32 to vector<128x16xf32>
    %10 = arith.maximumf %9, %8 : vector<128x16xf32>
    %11 = vector.broadcast %cst_7 : f32 to vector<128x16xf32>
    %12 = arith.minimumf %11, %10 : vector<128x16xf32>
    %cst_8 = arith.constant 0.166666672 : f32
    %13 = vector.broadcast %cst_8 : f32 to vector<128x16xf32>
    %14 = arith.mulf %12, %13 : vector<128x16xf32>
    %15 = arith.mulf %6, %14 : vector<128x16xf32>
    %c0_9 = arith.constant 0 : index
    %c0_10 = arith.constant 0 : index
    %16 = vector.load %arg3[%c0_9, %c0_10] : memref<9x16xf32, #tpu.memory_space<vmem>>, vector<9x16xf32>
    %c0_11 = arith.constant 0 : index
    %c0_12 = arith.constant 0 : index
    %17 = vector.load %arg4[%c0_11, %c0_12] : memref<288x128xbf16, #tpu.memory_space<vmem>>, vector<288x128xbf16>
    %18 = arith.truncf %15 : vector<128x16xf32> to vector<128x16xbf16>
    %cst_13 = arith.constant dense<0.000000e+00> : vector<288x16xf32>
    %19 = tpu.matmul %17, %18, %cst_13 {dimension_numbers = #tpu.dot_dimension_numbers<[1], [0], [0], [1], [0, 0, 1, 1], [], []>} : vector<288x128xbf16>, vector<128x16xbf16>, vector<288x16xf32> -> vector<288x16xf32>
    %20 = vector.extract_strided_slice %19 {offsets = [0, 0], sizes = [32, 16], strides = [1, 1]} : vector<288x16xf32> to vector<32x16xf32>
    %21 = vector.extract_strided_slice %16 {offsets = [0, 0], sizes = [1, 16], strides = [1, 1]} : vector<9x16xf32> to vector<1x16xf32>
    %22 = vector.broadcast %21 : vector<1x16xf32> to vector<32x16xf32>
    %23 = arith.mulf %20, %22 : vector<32x16xf32>
    %24 = vector.extract_strided_slice %19 {offsets = [32, 0], sizes = [32, 16], strides = [1, 1]} : vector<288x16xf32> to vector<32x16xf32>
    %25 = vector.extract_strided_slice %16 {offsets = [1, 0], sizes = [1, 16], strides = [1, 1]} : vector<9x16xf32> to vector<1x16xf32>
    %26 = vector.broadcast %25 : vector<1x16xf32> to vector<32x16xf32>
    %27 = arith.mulf %24, %26 : vector<32x16xf32>
    %28 = arith.addf %23, %27 : vector<32x16xf32>
    %29 = vector.extract_strided_slice %19 {offsets = [64, 0], sizes = [32, 16], strides = [1, 1]} : vector<288x16xf32> to vector<32x16xf32>
    %30 = vector.extract_strided_slice %16 {offsets = [2, 0], sizes = [1, 16], strides = [1, 1]} : vector<9x16xf32> to vector<1x16xf32>
    %31 = vector.broadcast %30 : vector<1x16xf32> to vector<32x16xf32>
    %32 = arith.mulf %29, %31 : vector<32x16xf32>
    %33 = arith.addf %28, %32 : vector<32x16xf32>
    %34 = vector.extract_strided_slice %19 {offsets = [96, 0], sizes = [32, 16], strides = [1, 1]} : vector<288x16xf32> to vector<32x16xf32>
    %35 = vector.extract_strided_slice %16 {offsets = [3, 0], sizes = [1, 16], strides = [1, 1]} : vector<9x16xf32> to vector<1x16xf32>
    %36 = vector.broadcast %35 : vector<1x16xf32> to vector<32x16xf32>
    %37 = arith.mulf %34, %36 : vector<32x16xf32>
    %38 = arith.addf %33, %37 : vector<32x16xf32>
    %39 = vector.extract_strided_slice %19 {offsets = [128, 0], sizes = [32, 16], strides = [1, 1]} : vector<288x16xf32> to vector<32x16xf32>
    %40 = vector.extract_strided_slice %16 {offsets = [4, 0], sizes = [1, 16], strides = [1, 1]} : vector<9x16xf32> to vector<1x16xf32>
    %41 = vector.broadcast %40 : vector<1x16xf32> to vector<32x16xf32>
    %42 = arith.mulf %39, %41 : vector<32x16xf32>
    %43 = arith.addf %38, %42 : vector<32x16xf32>
    %44 = vector.extract_strided_slice %19 {offsets = [160, 0], sizes = [32, 16], strides = [1, 1]} : vector<288x16xf32> to vector<32x16xf32>
    %45 = vector.extract_strided_slice %16 {offsets = [5, 0], sizes = [1, 16], strides = [1, 1]} : vector<9x16xf32> to vector<1x16xf32>
    %46 = vector.broadcast %45 : vector<1x16xf32> to vector<32x16xf32>
    %47 = arith.mulf %44, %46 : vector<32x16xf32>
    %48 = arith.addf %43, %47 : vector<32x16xf32>
    %49 = vector.extract_strided_slice %19 {offsets = [192, 0], sizes = [32, 16], strides = [1, 1]} : vector<288x16xf32> to vector<32x16xf32>
    %50 = vector.extract_strided_slice %16 {offsets = [6, 0], sizes = [1, 16], strides = [1, 1]} : vector<9x16xf32> to vector<1x16xf32>
    %51 = vector.broadcast %50 : vector<1x16xf32> to vector<32x16xf32>
    %52 = arith.mulf %49, %51 : vector<32x16xf32>
    %53 = arith.addf %48, %52 : vector<32x16xf32>
    %54 = vector.extract_strided_slice %19 {offsets = [224, 0], sizes = [32, 16], strides = [1, 1]} : vector<288x16xf32> to vector<32x16xf32>
    %55 = vector.extract_strided_slice %16 {offsets = [7, 0], sizes = [1, 16], strides = [1, 1]} : vector<9x16xf32> to vector<1x16xf32>
    %56 = vector.broadcast %55 : vector<1x16xf32> to vector<32x16xf32>
    %57 = arith.mulf %54, %56 : vector<32x16xf32>
    %58 = arith.addf %53, %57 : vector<32x16xf32>
    %59 = vector.extract_strided_slice %19 {offsets = [256, 0], sizes = [32, 16], strides = [1, 1]} : vector<288x16xf32> to vector<32x16xf32>
    %60 = vector.extract_strided_slice %16 {offsets = [8, 0], sizes = [1, 16], strides = [1, 1]} : vector<9x16xf32> to vector<1x16xf32>
    %61 = vector.broadcast %60 : vector<1x16xf32> to vector<32x16xf32>
    %62 = arith.mulf %59, %61 : vector<32x16xf32>
    %63 = arith.addf %58, %62 : vector<32x16xf32>
    %c1 = arith.constant 1 : index
    %c0_14 = arith.constant 0 : index
    %64 = vector.load %arg0[%c1, %c0_14] : memref<52x576xf32, #tpu.memory_space<vmem>>, vector<1x16xf32>
    %65 = vector.broadcast %64 : vector<1x16xf32> to vector<32x16xf32>
    %66 = arith.addf %63, %65 : vector<32x16xf32>
    %cst_15 = arith.constant 0.000000e+00 : f32
    %67 = vector.broadcast %cst_15 : f32 to vector<32x16xf32>
    %68 = arith.maximumf %66, %67 : vector<32x16xf32>
    %c0_16 = arith.constant 0 : index
    %c0_17 = arith.constant 0 : index
    %69 = vector.load %arg5[%c0_16, %c0_17] : memref<2x32xbf16, #tpu.memory_space<vmem>>, vector<2x32xbf16>
    %70 = arith.truncf %68 : vector<32x16xf32> to vector<32x16xbf16>
    %cst_18 = arith.constant dense<0.000000e+00> : vector<2x16xf32>
    %71 = tpu.matmul %69, %70, %cst_18 {dimension_numbers = #tpu.dot_dimension_numbers<[1], [0], [0], [1], [0, 0, 1, 1], [], []>} : vector<2x32xbf16>, vector<32x16xbf16>, vector<2x16xf32> -> vector<2x16xf32>
    %72 = arith.truncf %71 : vector<2x16xf32> to vector<2x16xbf16>
    %c0_19 = arith.constant 0 : index
    %c0_20 = arith.constant 0 : index
    %73 = vector.load %arg6[%c0_19, %c0_20] : memref<16x8xbf16, #tpu.memory_space<vmem>>, vector<16x8xbf16>
    %cst_21 = arith.constant dense<0.000000e+00> : vector<2x8xf32>
    %74 = tpu.matmul %72, %73, %cst_21 {dimension_numbers = #tpu.dot_dimension_numbers<[1], [0], [0], [1], [0, 0, 1, 1], [], []>} : vector<2x16xbf16>, vector<16x8xbf16>, vector<2x8xf32> -> vector<2x8xf32>
    %c2 = arith.constant 2 : index
    %c0_22 = arith.constant 0 : index
    %75 = vector.load %arg0[%c2, %c0_22] : memref<52x576xf32, #tpu.memory_space<vmem>>, vector<1x8xf32>
    %76 = vector.broadcast %75 : vector<1x8xf32> to vector<2x8xf32>
    %77 = arith.addf %74, %76 : vector<2x8xf32>
    %cst_23 = arith.constant 0.000000e+00 : f32
    %78 = vector.broadcast %cst_23 : f32 to vector<2x8xf32>
    %79 = arith.maximumf %77, %78 : vector<2x8xf32>
    %80 = arith.truncf %79 : vector<2x8xf32> to vector<2x8xbf16>
    %c0_24 = arith.constant 0 : index
    %c0_25 = arith.constant 0 : index
    %81 = vector.load %arg7[%c0_24, %c0_25] : memref<8x16xbf16, #tpu.memory_space<vmem>>, vector<8x16xbf16>
    %cst_26 = arith.constant dense<0.000000e+00> : vector<2x16xf32>
    %82 = tpu.matmul %80, %81, %cst_26 {dimension_numbers = #tpu.dot_dimension_numbers<[1], [0], [0], [1], [0, 0, 1, 1], [], []>} : vector<2x8xbf16>, vector<8x16xbf16>, vector<2x16xf32> -> vector<2x16xf32>
    %c3 = arith.constant 3 : index
    %c0_27 = arith.constant 0 : index
    %83 = vector.load %arg0[%c3, %c0_27] : memref<52x576xf32, #tpu.memory_space<vmem>>, vector<1x16xf32>
    %84 = vector.broadcast %83 : vector<1x16xf32> to vector<2x16xf32>
    %85 = arith.addf %82, %84 : vector<2x16xf32>
    %cst_28 = arith.constant 3.000000e+00 : f32
    %86 = vector.broadcast %cst_28 : f32 to vector<2x16xf32>
    %87 = arith.addf %85, %86 : vector<2x16xf32>
    %cst_29 = arith.constant 0.000000e+00 : f32
    %cst_30 = arith.constant 6.000000e+00 : f32
    %88 = vector.broadcast %cst_29 : f32 to vector<2x16xf32>
    %89 = arith.maximumf %88, %87 : vector<2x16xf32>
    %90 = vector.broadcast %cst_30 : f32 to vector<2x16xf32>
    %91 = arith.minimumf %90, %89 : vector<2x16xf32>
    %cst_31 = arith.constant 0.166666672 : f32
    %92 = vector.broadcast %cst_31 : f32 to vector<2x16xf32>
    %93 = arith.mulf %91, %92 : vector<2x16xf32>
    %94 = vector.shape_cast %68 : vector<32x16xf32> to vector<2x16x16xf32>
    %95 = vector.shape_cast %93 : vector<2x16xf32> to vector<2x1x16xf32>
    %96 = vector.broadcast %95 : vector<2x1x16xf32> to vector<2x16x16xf32>
    %97 = arith.mulf %94, %96 : vector<2x16x16xf32>
    %98 = vector.shape_cast %97 : vector<2x16x16xf32> to vector<32x16xf32>
    %99 = arith.truncf %98 : vector<32x16xf32> to vector<32x16xbf16>
    %c0_32 = arith.constant 0 : index
    %c0_33 = arith.constant 0 : index
    %100 = vector.load %arg8[%c0_32, %c0_33] : memref<16x16xbf16, #tpu.memory_space<vmem>>, vector<16x16xbf16>
    %cst_34 = arith.constant dense<0.000000e+00> : vector<32x16xf32>
    %101 = tpu.matmul %99, %100, %cst_34 {dimension_numbers = #tpu.dot_dimension_numbers<[1], [0], [0], [1], [0, 0, 1, 1], [], []>} : vector<32x16xbf16>, vector<16x16xbf16>, vector<32x16xf32> -> vector<32x16xf32>
    %c4 = arith.constant 4 : index
    %c0_35 = arith.constant 0 : index
    %102 = vector.load %arg0[%c4, %c0_35] : memref<52x576xf32, #tpu.memory_space<vmem>>, vector<1x16xf32>
    %103 = vector.broadcast %102 : vector<1x16xf32> to vector<32x16xf32>
    %104 = arith.addf %101, %103 : vector<32x16xf32>
    %105 = arith.truncf %104 : vector<32x16xf32> to vector<32x16xbf16>
    %c0_36 = arith.constant 0 : index
    %c0_37 = arith.constant 0 : index
    %106 = vector.load %arg9[%c0_36, %c0_37] : memref<16x72xbf16, #tpu.memory_space<vmem>>, vector<16x72xbf16>
    %cst_38 = arith.constant dense<0.000000e+00> : vector<32x72xf32>
    %107 = tpu.matmul %105, %106, %cst_38 {dimension_numbers = #tpu.dot_dimension_numbers<[1], [0], [0], [1], [0, 0, 1, 1], [], []>} : vector<32x16xbf16>, vector<16x72xbf16>, vector<32x72xf32> -> vector<32x72xf32>
    %c5 = arith.constant 5 : index
    %c0_39 = arith.constant 0 : index
    %108 = vector.load %arg0[%c5, %c0_39] : memref<52x576xf32, #tpu.memory_space<vmem>>, vector<1x72xf32>
    %109 = vector.broadcast %108 : vector<1x72xf32> to vector<32x72xf32>
    %110 = arith.addf %107, %109 : vector<32x72xf32>
    %cst_40 = arith.constant 0.000000e+00 : f32
    %111 = vector.broadcast %cst_40 : f32 to vector<32x72xf32>
    %112 = arith.maximumf %110, %111 : vector<32x72xf32>
    %c0_41 = arith.constant 0 : index
    %c0_42 = arith.constant 0 : index
    %113 = vector.load %arg10[%c0_41, %c0_42] : memref<9x72xf32, #tpu.memory_space<vmem>>, vector<9x72xf32>
    %c0_43 = arith.constant 0 : index
    %c0_44 = arith.constant 0 : index
    %114 = vector.load %arg11[%c0_43, %c0_44] : memref<72x32xbf16, #tpu.memory_space<vmem>>, vector<72x32xbf16>
    %115 = arith.truncf %112 : vector<32x72xf32> to vector<32x72xbf16>
    %cst_45 = arith.constant dense<0.000000e+00> : vector<72x72xf32>
    %116 = tpu.matmul %114, %115, %cst_45 {dimension_numbers = #tpu.dot_dimension_numbers<[1], [0], [0], [1], [0, 0, 1, 1], [], []>} : vector<72x32xbf16>, vector<32x72xbf16>, vector<72x72xf32> -> vector<72x72xf32>
    %117 = vector.extract_strided_slice %116 {offsets = [0, 0], sizes = [8, 72], strides = [1, 1]} : vector<72x72xf32> to vector<8x72xf32>
    %118 = vector.extract_strided_slice %113 {offsets = [0, 0], sizes = [1, 72], strides = [1, 1]} : vector<9x72xf32> to vector<1x72xf32>
    %119 = vector.broadcast %118 : vector<1x72xf32> to vector<8x72xf32>
    %120 = arith.mulf %117, %119 : vector<8x72xf32>
    %121 = vector.extract_strided_slice %116 {offsets = [8, 0], sizes = [8, 72], strides = [1, 1]} : vector<72x72xf32> to vector<8x72xf32>
    %122 = vector.extract_strided_slice %113 {offsets = [1, 0], sizes = [1, 72], strides = [1, 1]} : vector<9x72xf32> to vector<1x72xf32>
    %123 = vector.broadcast %122 : vector<1x72xf32> to vector<8x72xf32>
    %124 = arith.mulf %121, %123 : vector<8x72xf32>
    %125 = arith.addf %120, %124 : vector<8x72xf32>
    %126 = vector.extract_strided_slice %116 {offsets = [16, 0], sizes = [8, 72], strides = [1, 1]} : vector<72x72xf32> to vector<8x72xf32>
    %127 = vector.extract_strided_slice %113 {offsets = [2, 0], sizes = [1, 72], strides = [1, 1]} : vector<9x72xf32> to vector<1x72xf32>
    %128 = vector.broadcast %127 : vector<1x72xf32> to vector<8x72xf32>
    %129 = arith.mulf %126, %128 : vector<8x72xf32>
    %130 = arith.addf %125, %129 : vector<8x72xf32>
    %131 = vector.extract_strided_slice %116 {offsets = [24, 0], sizes = [8, 72], strides = [1, 1]} : vector<72x72xf32> to vector<8x72xf32>
    %132 = vector.extract_strided_slice %113 {offsets = [3, 0], sizes = [1, 72], strides = [1, 1]} : vector<9x72xf32> to vector<1x72xf32>
    %133 = vector.broadcast %132 : vector<1x72xf32> to vector<8x72xf32>
    %134 = arith.mulf %131, %133 : vector<8x72xf32>
    %135 = arith.addf %130, %134 : vector<8x72xf32>
    %136 = vector.extract_strided_slice %116 {offsets = [32, 0], sizes = [8, 72], strides = [1, 1]} : vector<72x72xf32> to vector<8x72xf32>
    %137 = vector.extract_strided_slice %113 {offsets = [4, 0], sizes = [1, 72], strides = [1, 1]} : vector<9x72xf32> to vector<1x72xf32>
    %138 = vector.broadcast %137 : vector<1x72xf32> to vector<8x72xf32>
    %139 = arith.mulf %136, %138 : vector<8x72xf32>
    %140 = arith.addf %135, %139 : vector<8x72xf32>
    %141 = vector.extract_strided_slice %116 {offsets = [40, 0], sizes = [8, 72], strides = [1, 1]} : vector<72x72xf32> to vector<8x72xf32>
    %142 = vector.extract_strided_slice %113 {offsets = [5, 0], sizes = [1, 72], strides = [1, 1]} : vector<9x72xf32> to vector<1x72xf32>
    %143 = vector.broadcast %142 : vector<1x72xf32> to vector<8x72xf32>
    %144 = arith.mulf %141, %143 : vector<8x72xf32>
    %145 = arith.addf %140, %144 : vector<8x72xf32>
    %146 = vector.extract_strided_slice %116 {offsets = [48, 0], sizes = [8, 72], strides = [1, 1]} : vector<72x72xf32> to vector<8x72xf32>
    %147 = vector.extract_strided_slice %113 {offsets = [6, 0], sizes = [1, 72], strides = [1, 1]} : vector<9x72xf32> to vector<1x72xf32>
    %148 = vector.broadcast %147 : vector<1x72xf32> to vector<8x72xf32>
    %149 = arith.mulf %146, %148 : vector<8x72xf32>
    %150 = arith.addf %145, %149 : vector<8x72xf32>
    %151 = vector.extract_strided_slice %116 {offsets = [56, 0], sizes = [8, 72], strides = [1, 1]} : vector<72x72xf32> to vector<8x72xf32>
    %152 = vector.extract_strided_slice %113 {offsets = [7, 0], sizes = [1, 72], strides = [1, 1]} : vector<9x72xf32> to vector<1x72xf32>
    %153 = vector.broadcast %152 : vector<1x72xf32> to vector<8x72xf32>
    %154 = arith.mulf %151, %153 : vector<8x72xf32>
    %155 = arith.addf %150, %154 : vector<8x72xf32>
    %156 = vector.extract_strided_slice %116 {offsets = [64, 0], sizes = [8, 72], strides = [1, 1]} : vector<72x72xf32> to vector<8x72xf32>
    %157 = vector.extract_strided_slice %113 {offsets = [8, 0], sizes = [1, 72], strides = [1, 1]} : vector<9x72xf32> to vector<1x72xf32>
    %158 = vector.broadcast %157 : vector<1x72xf32> to vector<8x72xf32>
    %159 = arith.mulf %156, %158 : vector<8x72xf32>
    %160 = arith.addf %155, %159 : vector<8x72xf32>
    %c6 = arith.constant 6 : index
    %c0_46 = arith.constant 0 : index
    %161 = vector.load %arg0[%c6, %c0_46] : memref<52x576xf32, #tpu.memory_space<vmem>>, vector<1x72xf32>
    %162 = vector.broadcast %161 : vector<1x72xf32> to vector<8x72xf32>
    %163 = arith.addf %160, %162 : vector<8x72xf32>
    %cst_47 = arith.constant 0.000000e+00 : f32
    %164 = vector.broadcast %cst_47 : f32 to vector<8x72xf32>
    %165 = arith.maximumf %163, %164 : vector<8x72xf32>
    %166 = arith.truncf %165 : vector<8x72xf32> to vector<8x72xbf16>
    %c0_48 = arith.constant 0 : index
    %c0_49 = arith.constant 0 : index
    %167 = vector.load %arg12[%c0_48, %c0_49] : memref<72x24xbf16, #tpu.memory_space<vmem>>, vector<72x24xbf16>
    %cst_50 = arith.constant dense<0.000000e+00> : vector<8x24xf32>
    %168 = tpu.matmul %166, %167, %cst_50 {dimension_numbers = #tpu.dot_dimension_numbers<[1], [0], [0], [1], [0, 0, 1, 1], [], []>} : vector<8x72xbf16>, vector<72x24xbf16>, vector<8x24xf32> -> vector<8x24xf32>
    %c7 = arith.constant 7 : index
    %c0_51 = arith.constant 0 : index
    %169 = vector.load %arg0[%c7, %c0_51] : memref<52x576xf32, #tpu.memory_space<vmem>>, vector<1x24xf32>
    %170 = vector.broadcast %169 : vector<1x24xf32> to vector<8x24xf32>
    %171 = arith.addf %168, %170 : vector<8x24xf32>
    %172 = arith.truncf %171 : vector<8x24xf32> to vector<8x24xbf16>
    %c0_52 = arith.constant 0 : index
    %c0_53 = arith.constant 0 : index
    %173 = vector.load %arg13[%c0_52, %c0_53] : memref<24x88xbf16, #tpu.memory_space<vmem>>, vector<24x88xbf16>
    %cst_54 = arith.constant dense<0.000000e+00> : vector<8x88xf32>
    %174 = tpu.matmul %172, %173, %cst_54 {dimension_numbers = #tpu.dot_dimension_numbers<[1], [0], [0], [1], [0, 0, 1, 1], [], []>} : vector<8x24xbf16>, vector<24x88xbf16>, vector<8x88xf32> -> vector<8x88xf32>
    %c8 = arith.constant 8 : index
    %c0_55 = arith.constant 0 : index
    %175 = vector.load %arg0[%c8, %c0_55] : memref<52x576xf32, #tpu.memory_space<vmem>>, vector<1x88xf32>
    %176 = vector.broadcast %175 : vector<1x88xf32> to vector<8x88xf32>
    %177 = arith.addf %174, %176 : vector<8x88xf32>
    %cst_56 = arith.constant 0.000000e+00 : f32
    %178 = vector.broadcast %cst_56 : f32 to vector<8x88xf32>
    %179 = arith.maximumf %177, %178 : vector<8x88xf32>
    %c0_57 = arith.constant 0 : index
    %c0_58 = arith.constant 0 : index
    %180 = vector.load %arg14[%c0_57, %c0_58] : memref<9x88xf32, #tpu.memory_space<vmem>>, vector<9x88xf32>
    %c0_59 = arith.constant 0 : index
    %c0_60 = arith.constant 0 : index
    %181 = vector.load %arg15[%c0_59, %c0_60] : memref<72x8xbf16, #tpu.memory_space<vmem>>, vector<72x8xbf16>
    %182 = arith.truncf %179 : vector<8x88xf32> to vector<8x88xbf16>
    %cst_61 = arith.constant dense<0.000000e+00> : vector<72x88xf32>
    %183 = tpu.matmul %181, %182, %cst_61 {dimension_numbers = #tpu.dot_dimension_numbers<[1], [0], [0], [1], [0, 0, 1, 1], [], []>} : vector<72x8xbf16>, vector<8x88xbf16>, vector<72x88xf32> -> vector<72x88xf32>
    %184 = vector.extract_strided_slice %183 {offsets = [0, 0], sizes = [8, 88], strides = [1, 1]} : vector<72x88xf32> to vector<8x88xf32>
    %185 = vector.extract_strided_slice %180 {offsets = [0, 0], sizes = [1, 88], strides = [1, 1]} : vector<9x88xf32> to vector<1x88xf32>
    %186 = vector.broadcast %185 : vector<1x88xf32> to vector<8x88xf32>
    %187 = arith.mulf %184, %186 : vector<8x88xf32>
    %188 = vector.extract_strided_slice %183 {offsets = [8, 0], sizes = [8, 88], strides = [1, 1]} : vector<72x88xf32> to vector<8x88xf32>
    %189 = vector.extract_strided_slice %180 {offsets = [1, 0], sizes = [1, 88], strides = [1, 1]} : vector<9x88xf32> to vector<1x88xf32>
    %190 = vector.broadcast %189 : vector<1x88xf32> to vector<8x88xf32>
    %191 = arith.mulf %188, %190 : vector<8x88xf32>
    %192 = arith.addf %187, %191 : vector<8x88xf32>
    %193 = vector.extract_strided_slice %183 {offsets = [16, 0], sizes = [8, 88], strides = [1, 1]} : vector<72x88xf32> to vector<8x88xf32>
    %194 = vector.extract_strided_slice %180 {offsets = [2, 0], sizes = [1, 88], strides = [1, 1]} : vector<9x88xf32> to vector<1x88xf32>
    %195 = vector.broadcast %194 : vector<1x88xf32> to vector<8x88xf32>
    %196 = arith.mulf %193, %195 : vector<8x88xf32>
    %197 = arith.addf %192, %196 : vector<8x88xf32>
    %198 = vector.extract_strided_slice %183 {offsets = [24, 0], sizes = [8, 88], strides = [1, 1]} : vector<72x88xf32> to vector<8x88xf32>
    %199 = vector.extract_strided_slice %180 {offsets = [3, 0], sizes = [1, 88], strides = [1, 1]} : vector<9x88xf32> to vector<1x88xf32>
    %200 = vector.broadcast %199 : vector<1x88xf32> to vector<8x88xf32>
    %201 = arith.mulf %198, %200 : vector<8x88xf32>
    %202 = arith.addf %197, %201 : vector<8x88xf32>
    %203 = vector.extract_strided_slice %183 {offsets = [32, 0], sizes = [8, 88], strides = [1, 1]} : vector<72x88xf32> to vector<8x88xf32>
    %204 = vector.extract_strided_slice %180 {offsets = [4, 0], sizes = [1, 88], strides = [1, 1]} : vector<9x88xf32> to vector<1x88xf32>
    %205 = vector.broadcast %204 : vector<1x88xf32> to vector<8x88xf32>
    %206 = arith.mulf %203, %205 : vector<8x88xf32>
    %207 = arith.addf %202, %206 : vector<8x88xf32>
    %208 = vector.extract_strided_slice %183 {offsets = [40, 0], sizes = [8, 88], strides = [1, 1]} : vector<72x88xf32> to vector<8x88xf32>
    %209 = vector.extract_strided_slice %180 {offsets = [5, 0], sizes = [1, 88], strides = [1, 1]} : vector<9x88xf32> to vector<1x88xf32>
    %210 = vector.broadcast %209 : vector<1x88xf32> to vector<8x88xf32>
    %211 = arith.mulf %208, %210 : vector<8x88xf32>
    %212 = arith.addf %207, %211 : vector<8x88xf32>
    %213 = vector.extract_strided_slice %183 {offsets = [48, 0], sizes = [8, 88], strides = [1, 1]} : vector<72x88xf32> to vector<8x88xf32>
    %214 = vector.extract_strided_slice %180 {offsets = [6, 0], sizes = [1, 88], strides = [1, 1]} : vector<9x88xf32> to vector<1x88xf32>
    %215 = vector.broadcast %214 : vector<1x88xf32> to vector<8x88xf32>
    %216 = arith.mulf %213, %215 : vector<8x88xf32>
    %217 = arith.addf %212, %216 : vector<8x88xf32>
    %218 = vector.extract_strided_slice %183 {offsets = [56, 0], sizes = [8, 88], strides = [1, 1]} : vector<72x88xf32> to vector<8x88xf32>
    %219 = vector.extract_strided_slice %180 {offsets = [7, 0], sizes = [1, 88], strides = [1, 1]} : vector<9x88xf32> to vector<1x88xf32>
    %220 = vector.broadcast %219 : vector<1x88xf32> to vector<8x88xf32>
    %221 = arith.mulf %218, %220 : vector<8x88xf32>
    %222 = arith.addf %217, %221 : vector<8x88xf32>
    %223 = vector.extract_strided_slice %183 {offsets = [64, 0], sizes = [8, 88], strides = [1, 1]} : vector<72x88xf32> to vector<8x88xf32>
    %224 = vector.extract_strided_slice %180 {offsets = [8, 0], sizes = [1, 88], strides = [1, 1]} : vector<9x88xf32> to vector<1x88xf32>
    %225 = vector.broadcast %224 : vector<1x88xf32> to vector<8x88xf32>
    %226 = arith.mulf %223, %225 : vector<8x88xf32>
    %227 = arith.addf %222, %226 : vector<8x88xf32>
    %c9 = arith.constant 9 : index
    %c0_62 = arith.constant 0 : index
    %228 = vector.load %arg0[%c9, %c0_62] : memref<52x576xf32, #tpu.memory_space<vmem>>, vector<1x88xf32>
    %229 = vector.broadcast %228 : vector<1x88xf32> to vector<8x88xf32>
    %230 = arith.addf %227, %229 : vector<8x88xf32>
    %cst_63 = arith.constant 0.000000e+00 : f32
    %231 = vector.broadcast %cst_63 : f32 to vector<8x88xf32>
    %232 = arith.maximumf %230, %231 : vector<8x88xf32>
    %233 = arith.truncf %232 : vector<8x88xf32> to vector<8x88xbf16>
    %c0_64 = arith.constant 0 : index
    %c0_65 = arith.constant 0 : index
    %234 = vector.load %arg16[%c0_64, %c0_65] : memref<88x24xbf16, #tpu.memory_space<vmem>>, vector<88x24xbf16>
    %cst_66 = arith.constant dense<0.000000e+00> : vector<8x24xf32>
    %235 = tpu.matmul %233, %234, %cst_66 {dimension_numbers = #tpu.dot_dimension_numbers<[1], [0], [0], [1], [0, 0, 1, 1], [], []>} : vector<8x88xbf16>, vector<88x24xbf16>, vector<8x24xf32> -> vector<8x24xf32>
    %c10 = arith.constant 10 : index
    %c0_67 = arith.constant 0 : index
    %236 = vector.load %arg0[%c10, %c0_67] : memref<52x576xf32, #tpu.memory_space<vmem>>, vector<1x24xf32>
    %237 = vector.broadcast %236 : vector<1x24xf32> to vector<8x24xf32>
    %238 = arith.addf %235, %237 : vector<8x24xf32>
    %239 = arith.addf %238, %171 : vector<8x24xf32>
    %c0_68 = arith.constant 0 : index
    %c0_69 = arith.constant 0 : index
    %240 = vector.load %arg61[%c0_68, %c0_69] : memref<8x24xf32, #tpu.memory_space<vmem>>, vector<8x24xf32>
    tpu.vector_store %arg61[%c0_68, %c0_69], %239 {strides = array<i32>} : memref<8x24xf32, #tpu.memory_space<vmem>>, vector<8x24xf32>,
    %241 = arith.truncf %239 : vector<8x24xf32> to vector<8x24xbf16>
    %c0_70 = arith.constant 0 : index
    %c0_71 = arith.constant 0 : index
    %242 = vector.load %arg17[%c0_70, %c0_71] : memref<24x96xbf16, #tpu.memory_space<vmem>>, vector<24x96xbf16>
    %cst_72 = arith.constant dense<0.000000e+00> : vector<8x96xf32>
    %243 = tpu.matmul %241, %242, %cst_72 {dimension_numbers = #tpu.dot_dimension_numbers<[1], [0], [0], [1], [0, 0, 1, 1], [], []>} : vector<8x24xbf16>, vector<24x96xbf16>, vector<8x96xf32> -> vector<8x96xf32>
    %c11 = arith.constant 11 : index
    %c0_73 = arith.constant 0 : index
    %244 = vector.load %arg0[%c11, %c0_73] : memref<52x576xf32, #tpu.memory_space<vmem>>, vector<1x96xf32>
    %245 = vector.broadcast %244 : vector<1x96xf32> to vector<8x96xf32>
    %246 = arith.addf %243, %245 : vector<8x96xf32>
    %cst_74 = arith.constant 3.000000e+00 : f32
    %247 = vector.broadcast %cst_74 : f32 to vector<8x96xf32>
    %248 = arith.addf %246, %247 : vector<8x96xf32>
    %cst_75 = arith.constant 0.000000e+00 : f32
    %cst_76 = arith.constant 6.000000e+00 : f32
    %249 = vector.broadcast %cst_75 : f32 to vector<8x96xf32>
    %250 = arith.maximumf %249, %248 : vector<8x96xf32>
    %251 = vector.broadcast %cst_76 : f32 to vector<8x96xf32>
    %252 = arith.minimumf %251, %250 : vector<8x96xf32>
    %cst_77 = arith.constant 0.166666672 : f32
    %253 = vector.broadcast %cst_77 : f32 to vector<8x96xf32>
    %254 = arith.mulf %252, %253 : vector<8x96xf32>
    %255 = arith.mulf %246, %254 : vector<8x96xf32>
    %c0_78 = arith.constant 0 : index
    %c0_79 = arith.constant 0 : index
    %256 = vector.load %arg18[%c0_78, %c0_79] : memref<25x96xf32, #tpu.memory_space<vmem>>, vector<25x96xf32>
    %c0_80 = arith.constant 0 : index
    %c0_81 = arith.constant 0 : index
    %257 = vector.load %arg19[%c0_80, %c0_81] : memref<8x8xbf16, #tpu.memory_space<vmem>>, vector<8x8xbf16>
    %258 = arith.truncf %255 : vector<8x96xf32> to vector<8x96xbf16>
    %cst_82 = arith.constant dense<0.000000e+00> : vector<8x96xf32>
    %259 = tpu.matmul %257, %258, %cst_82 {dimension_numbers = #tpu.dot_dimension_numbers<[1], [0], [0], [1], [0, 0, 1, 1], [], []>} : vector<8x8xbf16>, vector<8x96xbf16>, vector<8x96xf32> -> vector<8x96xf32>
    %260 = vector.extract_strided_slice %259 {offsets = [0, 0], sizes = [2, 96], strides = [1, 1]} : vector<8x96xf32> to vector<2x96xf32>
    %261 = vector.extract_strided_slice %256 {offsets = [12, 0], sizes = [1, 96], strides = [1, 1]} : vector<25x96xf32> to vector<1x96xf32>
    %262 = vector.broadcast %261 : vector<1x96xf32> to vector<2x96xf32>
    %263 = arith.mulf %260, %262 : vector<2x96xf32>
    %264 = vector.extract_strided_slice %259 {offsets = [2, 0], sizes = [2, 96], strides = [1, 1]} : vector<8x96xf32> to vector<2x96xf32>
    %265 = vector.extract_strided_slice %256 {offsets = [13, 0], sizes = [1, 96], strides = [1, 1]} : vector<25x96xf32> to vector<1x96xf32>
    %266 = vector.broadcast %265 : vector<1x96xf32> to vector<2x96xf32>
    %267 = arith.mulf %264, %266 : vector<2x96xf32>
    %268 = arith.addf %263, %267 : vector<2x96xf32>
    %269 = vector.extract_strided_slice %259 {offsets = [4, 0], sizes = [2, 96], strides = [1, 1]} : vector<8x96xf32> to vector<2x96xf32>
    %270 = vector.extract_strided_slice %256 {offsets = [17, 0], sizes = [1, 96], strides = [1, 1]} : vector<25x96xf32> to vector<1x96xf32>
    %271 = vector.broadcast %270 : vector<1x96xf32> to vector<2x96xf32>
    %272 = arith.mulf %269, %271 : vector<2x96xf32>
    %273 = arith.addf %268, %272 : vector<2x96xf32>
    %274 = vector.extract_strided_slice %259 {offsets = [6, 0], sizes = [2, 96], strides = [1, 1]} : vector<8x96xf32> to vector<2x96xf32>
    %275 = vector.extract_strided_slice %256 {offsets = [18, 0], sizes = [1, 96], strides = [1, 1]} : vector<25x96xf32> to vector<1x96xf32>
    %276 = vector.broadcast %275 : vector<1x96xf32> to vector<2x96xf32>
    %277 = arith.mulf %274, %276 : vector<2x96xf32>
    %278 = arith.addf %273, %277 : vector<2x96xf32>
    %c12 = arith.constant 12 : index
    %c0_83 = arith.constant 0 : index
    %279 = vector.load %arg0[%c12, %c0_83] : memref<52x576xf32, #tpu.memory_space<vmem>>, vector<1x96xf32>
    %280 = vector.broadcast %279 : vector<1x96xf32> to vector<2x96xf32>
    %281 = arith.addf %278, %280 : vector<2x96xf32>
    %cst_84 = arith.constant 3.000000e+00 : f32
    %282 = vector.broadcast %cst_84 : f32 to vector<2x96xf32>
    %283 = arith.addf %281, %282 : vector<2x96xf32>
    %cst_85 = arith.constant 0.000000e+00 : f32
    %cst_86 = arith.constant 6.000000e+00 : f32
    %284 = vector.broadcast %cst_85 : f32 to vector<2x96xf32>
    %285 = arith.maximumf %284, %283 : vector<2x96xf32>
    %286 = vector.broadcast %cst_86 : f32 to vector<2x96xf32>
    %287 = arith.minimumf %286, %285 : vector<2x96xf32>
    %cst_87 = arith.constant 0.166666672 : f32
    %288 = vector.broadcast %cst_87 : f32 to vector<2x96xf32>
    %289 = arith.mulf %287, %288 : vector<2x96xf32>
    %290 = arith.mulf %281, %289 : vector<2x96xf32>
    %291 = arith.truncf %290 : vector<2x96xf32> to vector<2x96xbf16>
    %c0_88 = arith.constant 0 : index
    %c0_89 = arith.constant 0 : index
    %292 = vector.load %arg20[%c0_88, %c0_89] : memref<96x24xbf16, #tpu.memory_space<vmem>>, vector<96x24xbf16>
    %cst_90 = arith.constant dense<0.000000e+00> : vector<2x24xf32>
    %293 = tpu.matmul %291, %292, %cst_90 {dimension_numbers = #tpu.dot_dimension_numbers<[1], [0], [0], [1], [0, 0, 1, 1], [], []>} : vector<2x96xbf16>, vector<96x24xbf16>, vector<2x24xf32> -> vector<2x24xf32>
    %c13 = arith.constant 13 : index
    %c0_91 = arith.constant 0 : index
    %294 = vector.load %arg0[%c13, %c0_91] : memref<52x576xf32, #tpu.memory_space<vmem>>, vector<1x24xf32>
    %295 = vector.broadcast %294 : vector<1x24xf32> to vector<2x24xf32>
    %296 = arith.addf %293, %295 : vector<2x24xf32>
    %cst_92 = arith.constant 0.000000e+00 : f32
    %297 = vector.broadcast %cst_92 : f32 to vector<2x24xf32>
    %298 = arith.maximumf %296, %297 : vector<2x24xf32>
    %299 = arith.truncf %298 : vector<2x24xf32> to vector<2x24xbf16>
    %c0_93 = arith.constant 0 : index
    %c0_94 = arith.constant 0 : index
    %300 = vector.load %arg21[%c0_93, %c0_94] : memref<24x96xbf16, #tpu.memory_space<vmem>>, vector<24x96xbf16>
    %cst_95 = arith.constant dense<0.000000e+00> : vector<2x96xf32>
    %301 = tpu.matmul %299, %300, %cst_95 {dimension_numbers = #tpu.dot_dimension_numbers<[1], [0], [0], [1], [0, 0, 1, 1], [], []>} : vector<2x24xbf16>, vector<24x96xbf16>, vector<2x96xf32> -> vector<2x96xf32>
    %c14 = arith.constant 14 : index
    %c0_96 = arith.constant 0 : index
    %302 = vector.load %arg0[%c14, %c0_96] : memref<52x576xf32, #tpu.memory_space<vmem>>, vector<1x96xf32>
    %303 = vector.broadcast %302 : vector<1x96xf32> to vector<2x96xf32>
    %304 = arith.addf %301, %303 : vector<2x96xf32>
    %cst_97 = arith.constant 3.000000e+00 : f32
    %305 = vector.broadcast %cst_97 : f32 to vector<2x96xf32>
    %306 = arith.addf %304, %305 : vector<2x96xf32>
    %cst_98 = arith.constant 0.000000e+00 : f32
    %cst_99 = arith.constant 6.000000e+00 : f32
    %307 = vector.broadcast %cst_98 : f32 to vector<2x96xf32>
    %308 = arith.maximumf %307, %306 : vector<2x96xf32>
    %309 = vector.broadcast %cst_99 : f32 to vector<2x96xf32>
    %310 = arith.minimumf %309, %308 : vector<2x96xf32>
    %cst_100 = arith.constant 0.166666672 : f32
    %311 = vector.broadcast %cst_100 : f32 to vector<2x96xf32>
    %312 = arith.mulf %310, %311 : vector<2x96xf32>
    %313 = arith.mulf %290, %312 : vector<2x96xf32>
    %314 = arith.truncf %313 : vector<2x96xf32> to vector<2x96xbf16>
    %c0_101 = arith.constant 0 : index
    %c0_102 = arith.constant 0 : index
    %315 = vector.load %arg22[%c0_101, %c0_102] : memref<96x40xbf16, #tpu.memory_space<vmem>>, vector<96x40xbf16>
    %cst_103 = arith.constant dense<0.000000e+00> : vector<2x40xf32>
    %316 = tpu.matmul %314, %315, %cst_103 {dimension_numbers = #tpu.dot_dimension_numbers<[1], [0], [0], [1], [0, 0, 1, 1], [], []>} : vector<2x96xbf16>, vector<96x40xbf16>, vector<2x40xf32> -> vector<2x40xf32>
    %c15 = arith.constant 15 : index
    %c0_104 = arith.constant 0 : index
    %317 = vector.load %arg0[%c15, %c0_104] : memref<52x576xf32, #tpu.memory_space<vmem>>, vector<1x40xf32>
    %318 = vector.broadcast %317 : vector<1x40xf32> to vector<2x40xf32>
    %319 = arith.addf %316, %318 : vector<2x40xf32>
    %320 = arith.truncf %319 : vector<2x40xf32> to vector<2x40xbf16>
    %c0_105 = arith.constant 0 : index
    %c0_106 = arith.constant 0 : index
    %321 = vector.load %arg23[%c0_105, %c0_106] : memref<40x240xbf16, #tpu.memory_space<vmem>>, vector<40x240xbf16>
    %cst_107 = arith.constant dense<0.000000e+00> : vector<2x240xf32>
    %322 = tpu.matmul %320, %321, %cst_107 {dimension_numbers = #tpu.dot_dimension_numbers<[1], [0], [0], [1], [0, 0, 1, 1], [], []>} : vector<2x40xbf16>, vector<40x240xbf16>, vector<2x240xf32> -> vector<2x240xf32>
    %c16 = arith.constant 16 : index
    %c0_108 = arith.constant 0 : index
    %323 = vector.load %arg0[%c16, %c0_108] : memref<52x576xf32, #tpu.memory_space<vmem>>, vector<1x240xf32>
    %324 = vector.broadcast %323 : vector<1x240xf32> to vector<2x240xf32>
    %325 = arith.addf %322, %324 : vector<2x240xf32>
    %cst_109 = arith.constant 3.000000e+00 : f32
    %326 = vector.broadcast %cst_109 : f32 to vector<2x240xf32>
    %327 = arith.addf %325, %326 : vector<2x240xf32>
    %cst_110 = arith.constant 0.000000e+00 : f32
    %cst_111 = arith.constant 6.000000e+00 : f32
    %328 = vector.broadcast %cst_110 : f32 to vector<2x240xf32>
    %329 = arith.maximumf %328, %327 : vector<2x240xf32>
    %330 = vector.broadcast %cst_111 : f32 to vector<2x240xf32>
    %331 = arith.minimumf %330, %329 : vector<2x240xf32>
    %cst_112 = arith.constant 0.166666672 : f32
    %332 = vector.broadcast %cst_112 : f32 to vector<2x240xf32>
    %333 = arith.mulf %331, %332 : vector<2x240xf32>
    %334 = arith.mulf %325, %333 : vector<2x240xf32>
    %c0_113 = arith.constant 0 : index
    %c0_114 = arith.constant 0 : index
    %335 = vector.load %arg24[%c0_113, %c0_114] : memref<25x240xf32, #tpu.memory_space<vmem>>, vector<25x240xf32>
    %336 = vector.extract_strided_slice %335 {offsets = [12, 0], sizes = [1, 240], strides = [1, 1]} : vector<25x240xf32> to vector<1x240xf32>
    %337 = vector.broadcast %336 : vector<1x240xf32> to vector<2x240xf32>
    %338 = arith.mulf %334, %337 : vector<2x240xf32>
    %c17 = arith.constant 17 : index
    %c0_115 = arith.constant 0 : index
    %339 = vector.load %arg0[%c17, %c0_115] : memref<52x576xf32, #tpu.memory_space<vmem>>, vector<1x240xf32>
    %340 = vector.broadcast %339 : vector<1x240xf32> to vector<2x240xf32>
    %341 = arith.addf %338, %340 : vector<2x240xf32>
    %cst_116 = arith.constant 3.000000e+00 : f32
    %342 = vector.broadcast %cst_116 : f32 to vector<2x240xf32>
    %343 = arith.addf %341, %342 : vector<2x240xf32>
    %cst_117 = arith.constant 0.000000e+00 : f32
    %cst_118 = arith.constant 6.000000e+00 : f32
    %344 = vector.broadcast %cst_117 : f32 to vector<2x240xf32>
    %345 = arith.maximumf %344, %343 : vector<2x240xf32>
    %346 = vector.broadcast %cst_118 : f32 to vector<2x240xf32>
    %347 = arith.minimumf %346, %345 : vector<2x240xf32>
    %cst_119 = arith.constant 0.166666672 : f32
    %348 = vector.broadcast %cst_119 : f32 to vector<2x240xf32>
    %349 = arith.mulf %347, %348 : vector<2x240xf32>
    %350 = arith.mulf %341, %349 : vector<2x240xf32>
    %351 = arith.truncf %350 : vector<2x240xf32> to vector<2x240xbf16>
    %c0_120 = arith.constant 0 : index
    %c0_121 = arith.constant 0 : index
    %352 = vector.load %arg25[%c0_120, %c0_121] : memref<240x64xbf16, #tpu.memory_space<vmem>>, vector<240x64xbf16>
    %cst_122 = arith.constant dense<0.000000e+00> : vector<2x64xf32>
    %353 = tpu.matmul %351, %352, %cst_122 {dimension_numbers = #tpu.dot_dimension_numbers<[1], [0], [0], [1], [0, 0, 1, 1], [], []>} : vector<2x240xbf16>, vector<240x64xbf16>, vector<2x64xf32> -> vector<2x64xf32>
    %c18 = arith.constant 18 : index
    %c0_123 = arith.constant 0 : index
    %354 = vector.load %arg0[%c18, %c0_123] : memref<52x576xf32, #tpu.memory_space<vmem>>, vector<1x64xf32>
    %355 = vector.broadcast %354 : vector<1x64xf32> to vector<2x64xf32>
    %356 = arith.addf %353, %355 : vector<2x64xf32>
    %cst_124 = arith.constant 0.000000e+00 : f32
    %357 = vector.broadcast %cst_124 : f32 to vector<2x64xf32>
    %358 = arith.maximumf %356, %357 : vector<2x64xf32>
    %359 = arith.truncf %358 : vector<2x64xf32> to vector<2x64xbf16>
    %c0_125 = arith.constant 0 : index
    %c0_126 = arith.constant 0 : index
    %360 = vector.load %arg26[%c0_125, %c0_126] : memref<64x240xbf16, #tpu.memory_space<vmem>>, vector<64x240xbf16>
    %cst_127 = arith.constant dense<0.000000e+00> : vector<2x240xf32>
    %361 = tpu.matmul %359, %360, %cst_127 {dimension_numbers = #tpu.dot_dimension_numbers<[1], [0], [0], [1], [0, 0, 1, 1], [], []>} : vector<2x64xbf16>, vector<64x240xbf16>, vector<2x240xf32> -> vector<2x240xf32>
    %c19 = arith.constant 19 : index
    %c0_128 = arith.constant 0 : index
    %362 = vector.load %arg0[%c19, %c0_128] : memref<52x576xf32, #tpu.memory_space<vmem>>, vector<1x240xf32>
    %363 = vector.broadcast %362 : vector<1x240xf32> to vector<2x240xf32>
    %364 = arith.addf %361, %363 : vector<2x240xf32>
    %cst_129 = arith.constant 3.000000e+00 : f32
    %365 = vector.broadcast %cst_129 : f32 to vector<2x240xf32>
    %366 = arith.addf %364, %365 : vector<2x240xf32>
    %cst_130 = arith.constant 0.000000e+00 : f32
    %cst_131 = arith.constant 6.000000e+00 : f32
    %367 = vector.broadcast %cst_130 : f32 to vector<2x240xf32>
    %368 = arith.maximumf %367, %366 : vector<2x240xf32>
    %369 = vector.broadcast %cst_131 : f32 to vector<2x240xf32>
    %370 = arith.minimumf %369, %368 : vector<2x240xf32>
    %cst_132 = arith.constant 0.166666672 : f32
    %371 = vector.broadcast %cst_132 : f32 to vector<2x240xf32>
    %372 = arith.mulf %370, %371 : vector<2x240xf32>
    %373 = arith.mulf %350, %372 : vector<2x240xf32>
    %374 = arith.truncf %373 : vector<2x240xf32> to vector<2x240xbf16>
    %c0_133 = arith.constant 0 : index
    %c0_134 = arith.constant 0 : index
    %375 = vector.load %arg27[%c0_133, %c0_134] : memref<240x40xbf16, #tpu.memory_space<vmem>>, vector<240x40xbf16>
    %cst_135 = arith.constant dense<0.000000e+00> : vector<2x40xf32>
    %376 = tpu.matmul %374, %375, %cst_135 {dimension_numbers = #tpu.dot_dimension_numbers<[1], [0], [0], [1], [0, 0, 1, 1], [], []>} : vector<2x240xbf16>, vector<240x40xbf16>, vector<2x40xf32> -> vector<2x40xf32>
    %c20 = arith.constant 20 : index
    %c0_136 = arith.constant 0 : index
    %377 = vector.load %arg0[%c20, %c0_136] : memref<52x576xf32, #tpu.memory_space<vmem>>, vector<1x40xf32>
    %378 = vector.broadcast %377 : vector<1x40xf32> to vector<2x40xf32>
    %379 = arith.addf %376, %378 : vector<2x40xf32>
    %380 = arith.addf %379, %319 : vector<2x40xf32>
    %381 = arith.truncf %380 : vector<2x40xf32> to vector<2x40xbf16>
    %c0_137 = arith.constant 0 : index
    %c0_138 = arith.constant 0 : index
    %382 = vector.load %arg28[%c0_137, %c0_138] : memref<40x240xbf16, #tpu.memory_space<vmem>>, vector<40x240xbf16>
    %cst_139 = arith.constant dense<0.000000e+00> : vector<2x240xf32>
    %383 = tpu.matmul %381, %382, %cst_139 {dimension_numbers = #tpu.dot_dimension_numbers<[1], [0], [0], [1], [0, 0, 1, 1], [], []>} : vector<2x40xbf16>, vector<40x240xbf16>, vector<2x240xf32> -> vector<2x240xf32>
    %c21 = arith.constant 21 : index
    %c0_140 = arith.constant 0 : index
    %384 = vector.load %arg0[%c21, %c0_140] : memref<52x576xf32, #tpu.memory_space<vmem>>, vector<1x240xf32>
    %385 = vector.broadcast %384 : vector<1x240xf32> to vector<2x240xf32>
    %386 = arith.addf %383, %385 : vector<2x240xf32>
    %cst_141 = arith.constant 3.000000e+00 : f32
    %387 = vector.broadcast %cst_141 : f32 to vector<2x240xf32>
    %388 = arith.addf %386, %387 : vector<2x240xf32>
    %cst_142 = arith.constant 0.000000e+00 : f32
    %cst_143 = arith.constant 6.000000e+00 : f32
    %389 = vector.broadcast %cst_142 : f32 to vector<2x240xf32>
    %390 = arith.maximumf %389, %388 : vector<2x240xf32>
    %391 = vector.broadcast %cst_143 : f32 to vector<2x240xf32>
    %392 = arith.minimumf %391, %390 : vector<2x240xf32>
    %cst_144 = arith.constant 0.166666672 : f32
    %393 = vector.broadcast %cst_144 : f32 to vector<2x240xf32>
    %394 = arith.mulf %392, %393 : vector<2x240xf32>
    %395 = arith.mulf %386, %394 : vector<2x240xf32>
    %c0_145 = arith.constant 0 : index
    %c0_146 = arith.constant 0 : index
    %396 = vector.load %arg29[%c0_145, %c0_146] : memref<25x240xf32, #tpu.memory_space<vmem>>, vector<25x240xf32>
    %397 = vector.extract_strided_slice %396 {offsets = [12, 0], sizes = [1, 240], strides = [1, 1]} : vector<25x240xf32> to vector<1x240xf32>
    %398 = vector.broadcast %397 : vector<1x240xf32> to vector<2x240xf32>
    %399 = arith.mulf %395, %398 : vector<2x240xf32>
    %c22 = arith.constant 22 : index
    %c0_147 = arith.constant 0 : index
    %400 = vector.load %arg0[%c22, %c0_147] : memref<52x576xf32, #tpu.memory_space<vmem>>, vector<1x240xf32>
    %401 = vector.broadcast %400 : vector<1x240xf32> to vector<2x240xf32>
    %402 = arith.addf %399, %401 : vector<2x240xf32>
    %cst_148 = arith.constant 3.000000e+00 : f32
    %403 = vector.broadcast %cst_148 : f32 to vector<2x240xf32>
    %404 = arith.addf %402, %403 : vector<2x240xf32>
    %cst_149 = arith.constant 0.000000e+00 : f32
    %cst_150 = arith.constant 6.000000e+00 : f32
    %405 = vector.broadcast %cst_149 : f32 to vector<2x240xf32>
    %406 = arith.maximumf %405, %404 : vector<2x240xf32>
    %407 = vector.broadcast %cst_150 : f32 to vector<2x240xf32>
    %408 = arith.minimumf %407, %406 : vector<2x240xf32>
    %cst_151 = arith.constant 0.166666672 : f32
    %409 = vector.broadcast %cst_151 : f32 to vector<2x240xf32>
    %410 = arith.mulf %408, %409 : vector<2x240xf32>
    %411 = arith.mulf %402, %410 : vector<2x240xf32>
    %412 = arith.truncf %411 : vector<2x240xf32> to vector<2x240xbf16>
    %c0_152 = arith.constant 0 : index
    %c0_153 = arith.constant 0 : index
    %413 = vector.load %arg30[%c0_152, %c0_153] : memref<240x64xbf16, #tpu.memory_space<vmem>>, vector<240x64xbf16>
    %cst_154 = arith.constant dense<0.000000e+00> : vector<2x64xf32>
    %414 = tpu.matmul %412, %413, %cst_154 {dimension_numbers = #tpu.dot_dimension_numbers<[1], [0], [0], [1], [0, 0, 1, 1], [], []>} : vector<2x240xbf16>, vector<240x64xbf16>, vector<2x64xf32> -> vector<2x64xf32>
    %c23 = arith.constant 23 : index
    %c0_155 = arith.constant 0 : index
    %415 = vector.load %arg0[%c23, %c0_155] : memref<52x576xf32, #tpu.memory_space<vmem>>, vector<1x64xf32>
    %416 = vector.broadcast %415 : vector<1x64xf32> to vector<2x64xf32>
    %417 = arith.addf %414, %416 : vector<2x64xf32>
    %cst_156 = arith.constant 0.000000e+00 : f32
    %418 = vector.broadcast %cst_156 : f32 to vector<2x64xf32>
    %419 = arith.maximumf %417, %418 : vector<2x64xf32>
    %420 = arith.truncf %419 : vector<2x64xf32> to vector<2x64xbf16>
    %c0_157 = arith.constant 0 : index
    %c0_158 = arith.constant 0 : index
    %421 = vector.load %arg31[%c0_157, %c0_158] : memref<64x240xbf16, #tpu.memory_space<vmem>>, vector<64x240xbf16>
    %cst_159 = arith.constant dense<0.000000e+00> : vector<2x240xf32>
    %422 = tpu.matmul %420, %421, %cst_159 {dimension_numbers = #tpu.dot_dimension_numbers<[1], [0], [0], [1], [0, 0, 1, 1], [], []>} : vector<2x64xbf16>, vector<64x240xbf16>, vector<2x240xf32> -> vector<2x240xf32>
    %c24 = arith.constant 24 : index
    %c0_160 = arith.constant 0 : index
    %423 = vector.load %arg0[%c24, %c0_160] : memref<52x576xf32, #tpu.memory_space<vmem>>, vector<1x240xf32>
    %424 = vector.broadcast %423 : vector<1x240xf32> to vector<2x240xf32>
    %425 = arith.addf %422, %424 : vector<2x240xf32>
    %cst_161 = arith.constant 3.000000e+00 : f32
    %426 = vector.broadcast %cst_161 : f32 to vector<2x240xf32>
    %427 = arith.addf %425, %426 : vector<2x240xf32>
    %cst_162 = arith.constant 0.000000e+00 : f32
    %cst_163 = arith.constant 6.000000e+00 : f32
    %428 = vector.broadcast %cst_162 : f32 to vector<2x240xf32>
    %429 = arith.maximumf %428, %427 : vector<2x240xf32>
    %430 = vector.broadcast %cst_163 : f32 to vector<2x240xf32>
    %431 = arith.minimumf %430, %429 : vector<2x240xf32>
    %cst_164 = arith.constant 0.166666672 : f32
    %432 = vector.broadcast %cst_164 : f32 to vector<2x240xf32>
    %433 = arith.mulf %431, %432 : vector<2x240xf32>
    %434 = arith.mulf %411, %433 : vector<2x240xf32>
    %435 = arith.truncf %434 : vector<2x240xf32> to vector<2x240xbf16>
    %c0_165 = arith.constant 0 : index
    %c0_166 = arith.constant 0 : index
    %436 = vector.load %arg32[%c0_165, %c0_166] : memref<240x40xbf16, #tpu.memory_space<vmem>>, vector<240x40xbf16>
    %cst_167 = arith.constant dense<0.000000e+00> : vector<2x40xf32>
    %437 = tpu.matmul %435, %436, %cst_167 {dimension_numbers = #tpu.dot_dimension_numbers<[1], [0], [0], [1], [0, 0, 1, 1], [], []>} : vector<2x240xbf16>, vector<240x40xbf16>, vector<2x40xf32> -> vector<2x40xf32>
    %c25 = arith.constant 25 : index
    %c0_168 = arith.constant 0 : index
    %438 = vector.load %arg0[%c25, %c0_168] : memref<52x576xf32, #tpu.memory_space<vmem>>, vector<1x40xf32>
    %439 = vector.broadcast %438 : vector<1x40xf32> to vector<2x40xf32>
    %440 = arith.addf %437, %439 : vector<2x40xf32>
    %441 = arith.addf %440, %380 : vector<2x40xf32>
    %442 = arith.truncf %441 : vector<2x40xf32> to vector<2x40xbf16>
    %c0_169 = arith.constant 0 : index
    %c0_170 = arith.constant 0 : index
    %443 = vector.load %arg33[%c0_169, %c0_170] : memref<40x120xbf16, #tpu.memory_space<vmem>>, vector<40x120xbf16>
    %cst_171 = arith.constant dense<0.000000e+00> : vector<2x120xf32>
    %444 = tpu.matmul %442, %443, %cst_171 {dimension_numbers = #tpu.dot_dimension_numbers<[1], [0], [0], [1], [0, 0, 1, 1], [], []>} : vector<2x40xbf16>, vector<40x120xbf16>, vector<2x120xf32> -> vector<2x120xf32>
    %c26 = arith.constant 26 : index
    %c0_172 = arith.constant 0 : index
    %445 = vector.load %arg0[%c26, %c0_172] : memref<52x576xf32, #tpu.memory_space<vmem>>, vector<1x120xf32>
    %446 = vector.broadcast %445 : vector<1x120xf32> to vector<2x120xf32>
    %447 = arith.addf %444, %446 : vector<2x120xf32>
    %cst_173 = arith.constant 3.000000e+00 : f32
    %448 = vector.broadcast %cst_173 : f32 to vector<2x120xf32>
    %449 = arith.addf %447, %448 : vector<2x120xf32>
    %cst_174 = arith.constant 0.000000e+00 : f32
    %cst_175 = arith.constant 6.000000e+00 : f32
    %450 = vector.broadcast %cst_174 : f32 to vector<2x120xf32>
    %451 = arith.maximumf %450, %449 : vector<2x120xf32>
    %452 = vector.broadcast %cst_175 : f32 to vector<2x120xf32>
    %453 = arith.minimumf %452, %451 : vector<2x120xf32>
    %cst_176 = arith.constant 0.166666672 : f32
    %454 = vector.broadcast %cst_176 : f32 to vector<2x120xf32>
    %455 = arith.mulf %453, %454 : vector<2x120xf32>
    %456 = arith.mulf %447, %455 : vector<2x120xf32>
    %c0_177 = arith.constant 0 : index
    %c0_178 = arith.constant 0 : index
    %457 = vector.load %arg34[%c0_177, %c0_178] : memref<25x120xf32, #tpu.memory_space<vmem>>, vector<25x120xf32>
    %458 = vector.extract_strided_slice %457 {offsets = [12, 0], sizes = [1, 120], strides = [1, 1]} : vector<25x120xf32> to vector<1x120xf32>
    %459 = vector.broadcast %458 : vector<1x120xf32> to vector<2x120xf32>
    %460 = arith.mulf %456, %459 : vector<2x120xf32>
    %c27 = arith.constant 27 : index
    %c0_179 = arith.constant 0 : index
    %461 = vector.load %arg0[%c27, %c0_179] : memref<52x576xf32, #tpu.memory_space<vmem>>, vector<1x120xf32>
    %462 = vector.broadcast %461 : vector<1x120xf32> to vector<2x120xf32>
    %463 = arith.addf %460, %462 : vector<2x120xf32>
    %cst_180 = arith.constant 3.000000e+00 : f32
    %464 = vector.broadcast %cst_180 : f32 to vector<2x120xf32>
    %465 = arith.addf %463, %464 : vector<2x120xf32>
    %cst_181 = arith.constant 0.000000e+00 : f32
    %cst_182 = arith.constant 6.000000e+00 : f32
    %466 = vector.broadcast %cst_181 : f32 to vector<2x120xf32>
    %467 = arith.maximumf %466, %465 : vector<2x120xf32>
    %468 = vector.broadcast %cst_182 : f32 to vector<2x120xf32>
    %469 = arith.minimumf %468, %467 : vector<2x120xf32>
    %cst_183 = arith.constant 0.166666672 : f32
    %470 = vector.broadcast %cst_183 : f32 to vector<2x120xf32>
    %471 = arith.mulf %469, %470 : vector<2x120xf32>
    %472 = arith.mulf %463, %471 : vector<2x120xf32>
    %473 = arith.truncf %472 : vector<2x120xf32> to vector<2x120xbf16>
    %c0_184 = arith.constant 0 : index
    %c0_185 = arith.constant 0 : index
    %474 = vector.load %arg35[%c0_184, %c0_185] : memref<120x32xbf16, #tpu.memory_space<vmem>>, vector<120x32xbf16>
    %cst_186 = arith.constant dense<0.000000e+00> : vector<2x32xf32>
    %475 = tpu.matmul %473, %474, %cst_186 {dimension_numbers = #tpu.dot_dimension_numbers<[1], [0], [0], [1], [0, 0, 1, 1], [], []>} : vector<2x120xbf16>, vector<120x32xbf16>, vector<2x32xf32> -> vector<2x32xf32>
    %c28 = arith.constant 28 : index
    %c0_187 = arith.constant 0 : index
    %476 = vector.load %arg0[%c28, %c0_187] : memref<52x576xf32, #tpu.memory_space<vmem>>, vector<1x32xf32>
    %477 = vector.broadcast %476 : vector<1x32xf32> to vector<2x32xf32>
    %478 = arith.addf %475, %477 : vector<2x32xf32>
    %cst_188 = arith.constant 0.000000e+00 : f32
    %479 = vector.broadcast %cst_188 : f32 to vector<2x32xf32>
    %480 = arith.maximumf %478, %479 : vector<2x32xf32>
    %481 = arith.truncf %480 : vector<2x32xf32> to vector<2x32xbf16>
    %c0_189 = arith.constant 0 : index
    %c0_190 = arith.constant 0 : index
    %482 = vector.load %arg36[%c0_189, %c0_190] : memref<32x120xbf16, #tpu.memory_space<vmem>>, vector<32x120xbf16>
    %cst_191 = arith.constant dense<0.000000e+00> : vector<2x120xf32>
    %483 = tpu.matmul %481, %482, %cst_191 {dimension_numbers = #tpu.dot_dimension_numbers<[1], [0], [0], [1], [0, 0, 1, 1], [], []>} : vector<2x32xbf16>, vector<32x120xbf16>, vector<2x120xf32> -> vector<2x120xf32>
    %c29 = arith.constant 29 : index
    %c0_192 = arith.constant 0 : index
    %484 = vector.load %arg0[%c29, %c0_192] : memref<52x576xf32, #tpu.memory_space<vmem>>, vector<1x120xf32>
    %485 = vector.broadcast %484 : vector<1x120xf32> to vector<2x120xf32>
    %486 = arith.addf %483, %485 : vector<2x120xf32>
    %cst_193 = arith.constant 3.000000e+00 : f32
    %487 = vector.broadcast %cst_193 : f32 to vector<2x120xf32>
    %488 = arith.addf %486, %487 : vector<2x120xf32>
    %cst_194 = arith.constant 0.000000e+00 : f32
    %cst_195 = arith.constant 6.000000e+00 : f32
    %489 = vector.broadcast %cst_194 : f32 to vector<2x120xf32>
    %490 = arith.maximumf %489, %488 : vector<2x120xf32>
    %491 = vector.broadcast %cst_195 : f32 to vector<2x120xf32>
    %492 = arith.minimumf %491, %490 : vector<2x120xf32>
    %cst_196 = arith.constant 0.166666672 : f32
    %493 = vector.broadcast %cst_196 : f32 to vector<2x120xf32>
    %494 = arith.mulf %492, %493 : vector<2x120xf32>
    %495 = arith.mulf %472, %494 : vector<2x120xf32>
    %496 = arith.truncf %495 : vector<2x120xf32> to vector<2x120xbf16>
    %c0_197 = arith.constant 0 : index
    %c0_198 = arith.constant 0 : index
    %497 = vector.load %arg37[%c0_197, %c0_198] : memref<120x48xbf16, #tpu.memory_space<vmem>>, vector<120x48xbf16>
    %cst_199 = arith.constant dense<0.000000e+00> : vector<2x48xf32>
    %498 = tpu.matmul %496, %497, %cst_199 {dimension_numbers = #tpu.dot_dimension_numbers<[1], [0], [0], [1], [0, 0, 1, 1], [], []>} : vector<2x120xbf16>, vector<120x48xbf16>, vector<2x48xf32> -> vector<2x48xf32>
    %c30 = arith.constant 30 : index
    %c0_200 = arith.constant 0 : index
    %499 = vector.load %arg0[%c30, %c0_200] : memref<52x576xf32, #tpu.memory_space<vmem>>, vector<1x48xf32>
    %500 = vector.broadcast %499 : vector<1x48xf32> to vector<2x48xf32>
    %501 = arith.addf %498, %500 : vector<2x48xf32>
    %502 = arith.truncf %501 : vector<2x48xf32> to vector<2x48xbf16>
    %c0_201 = arith.constant 0 : index
    %c0_202 = arith.constant 0 : index
    %503 = vector.load %arg38[%c0_201, %c0_202] : memref<48x144xbf16, #tpu.memory_space<vmem>>, vector<48x144xbf16>
    %cst_203 = arith.constant dense<0.000000e+00> : vector<2x144xf32>
    %504 = tpu.matmul %502, %503, %cst_203 {dimension_numbers = #tpu.dot_dimension_numbers<[1], [0], [0], [1], [0, 0, 1, 1], [], []>} : vector<2x48xbf16>, vector<48x144xbf16>, vector<2x144xf32> -> vector<2x144xf32>
    %c31 = arith.constant 31 : index
    %c0_204 = arith.constant 0 : index
    %505 = vector.load %arg0[%c31, %c0_204] : memref<52x576xf32, #tpu.memory_space<vmem>>, vector<1x144xf32>
    %506 = vector.broadcast %505 : vector<1x144xf32> to vector<2x144xf32>
    %507 = arith.addf %504, %506 : vector<2x144xf32>
    %cst_205 = arith.constant 3.000000e+00 : f32
    %508 = vector.broadcast %cst_205 : f32 to vector<2x144xf32>
    %509 = arith.addf %507, %508 : vector<2x144xf32>
    %cst_206 = arith.constant 0.000000e+00 : f32
    %cst_207 = arith.constant 6.000000e+00 : f32
    %510 = vector.broadcast %cst_206 : f32 to vector<2x144xf32>
    %511 = arith.maximumf %510, %509 : vector<2x144xf32>
    %512 = vector.broadcast %cst_207 : f32 to vector<2x144xf32>
    %513 = arith.minimumf %512, %511 : vector<2x144xf32>
    %cst_208 = arith.constant 0.166666672 : f32
    %514 = vector.broadcast %cst_208 : f32 to vector<2x144xf32>
    %515 = arith.mulf %513, %514 : vector<2x144xf32>
    %516 = arith.mulf %507, %515 : vector<2x144xf32>
    %c0_209 = arith.constant 0 : index
    %c0_210 = arith.constant 0 : index
    %517 = vector.load %arg39[%c0_209, %c0_210] : memref<25x144xf32, #tpu.memory_space<vmem>>, vector<25x144xf32>
    %518 = vector.extract_strided_slice %517 {offsets = [12, 0], sizes = [1, 144], strides = [1, 1]} : vector<25x144xf32> to vector<1x144xf32>
    %519 = vector.broadcast %518 : vector<1x144xf32> to vector<2x144xf32>
    %520 = arith.mulf %516, %519 : vector<2x144xf32>
    %c32 = arith.constant 32 : index
    %c0_211 = arith.constant 0 : index
    %521 = vector.load %arg0[%c32, %c0_211] : memref<52x576xf32, #tpu.memory_space<vmem>>, vector<1x144xf32>
    %522 = vector.broadcast %521 : vector<1x144xf32> to vector<2x144xf32>
    %523 = arith.addf %520, %522 : vector<2x144xf32>
    %cst_212 = arith.constant 3.000000e+00 : f32
    %524 = vector.broadcast %cst_212 : f32 to vector<2x144xf32>
    %525 = arith.addf %523, %524 : vector<2x144xf32>
    %cst_213 = arith.constant 0.000000e+00 : f32
    %cst_214 = arith.constant 6.000000e+00 : f32
    %526 = vector.broadcast %cst_213 : f32 to vector<2x144xf32>
    %527 = arith.maximumf %526, %525 : vector<2x144xf32>
    %528 = vector.broadcast %cst_214 : f32 to vector<2x144xf32>
    %529 = arith.minimumf %528, %527 : vector<2x144xf32>
    %cst_215 = arith.constant 0.166666672 : f32
    %530 = vector.broadcast %cst_215 : f32 to vector<2x144xf32>
    %531 = arith.mulf %529, %530 : vector<2x144xf32>
    %532 = arith.mulf %523, %531 : vector<2x144xf32>
    %533 = arith.truncf %532 : vector<2x144xf32> to vector<2x144xbf16>
    %c0_216 = arith.constant 0 : index
    %c0_217 = arith.constant 0 : index
    %534 = vector.load %arg40[%c0_216, %c0_217] : memref<144x40xbf16, #tpu.memory_space<vmem>>, vector<144x40xbf16>
    %cst_218 = arith.constant dense<0.000000e+00> : vector<2x40xf32>
    %535 = tpu.matmul %533, %534, %cst_218 {dimension_numbers = #tpu.dot_dimension_numbers<[1], [0], [0], [1], [0, 0, 1, 1], [], []>} : vector<2x144xbf16>, vector<144x40xbf16>, vector<2x40xf32> -> vector<2x40xf32>
    %c33 = arith.constant 33 : index
    %c0_219 = arith.constant 0 : index
    %536 = vector.load %arg0[%c33, %c0_219] : memref<52x576xf32, #tpu.memory_space<vmem>>, vector<1x40xf32>
    %537 = vector.broadcast %536 : vector<1x40xf32> to vector<2x40xf32>
    %538 = arith.addf %535, %537 : vector<2x40xf32>
    %cst_220 = arith.constant 0.000000e+00 : f32
    %539 = vector.broadcast %cst_220 : f32 to vector<2x40xf32>
    %540 = arith.maximumf %538, %539 : vector<2x40xf32>
    %541 = arith.truncf %540 : vector<2x40xf32> to vector<2x40xbf16>
    %c0_221 = arith.constant 0 : index
    %c0_222 = arith.constant 0 : index
    %542 = vector.load %arg41[%c0_221, %c0_222] : memref<40x144xbf16, #tpu.memory_space<vmem>>, vector<40x144xbf16>
    %cst_223 = arith.constant dense<0.000000e+00> : vector<2x144xf32>
    %543 = tpu.matmul %541, %542, %cst_223 {dimension_numbers = #tpu.dot_dimension_numbers<[1], [0], [0], [1], [0, 0, 1, 1], [], []>} : vector<2x40xbf16>, vector<40x144xbf16>, vector<2x144xf32> -> vector<2x144xf32>
    %c34 = arith.constant 34 : index
    %c0_224 = arith.constant 0 : index
    %544 = vector.load %arg0[%c34, %c0_224] : memref<52x576xf32, #tpu.memory_space<vmem>>, vector<1x144xf32>
    %545 = vector.broadcast %544 : vector<1x144xf32> to vector<2x144xf32>
    %546 = arith.addf %543, %545 : vector<2x144xf32>
    %cst_225 = arith.constant 3.000000e+00 : f32
    %547 = vector.broadcast %cst_225 : f32 to vector<2x144xf32>
    %548 = arith.addf %546, %547 : vector<2x144xf32>
    %cst_226 = arith.constant 0.000000e+00 : f32
    %cst_227 = arith.constant 6.000000e+00 : f32
    %549 = vector.broadcast %cst_226 : f32 to vector<2x144xf32>
    %550 = arith.maximumf %549, %548 : vector<2x144xf32>
    %551 = vector.broadcast %cst_227 : f32 to vector<2x144xf32>
    %552 = arith.minimumf %551, %550 : vector<2x144xf32>
    %cst_228 = arith.constant 0.166666672 : f32
    %553 = vector.broadcast %cst_228 : f32 to vector<2x144xf32>
    %554 = arith.mulf %552, %553 : vector<2x144xf32>
    %555 = arith.mulf %532, %554 : vector<2x144xf32>
    %556 = arith.truncf %555 : vector<2x144xf32> to vector<2x144xbf16>
    %c0_229 = arith.constant 0 : index
    %c0_230 = arith.constant 0 : index
    %557 = vector.load %arg42[%c0_229, %c0_230] : memref<144x48xbf16, #tpu.memory_space<vmem>>, vector<144x48xbf16>
    %cst_231 = arith.constant dense<0.000000e+00> : vector<2x48xf32>
    %558 = tpu.matmul %556, %557, %cst_231 {dimension_numbers = #tpu.dot_dimension_numbers<[1], [0], [0], [1], [0, 0, 1, 1], [], []>} : vector<2x144xbf16>, vector<144x48xbf16>, vector<2x48xf32> -> vector<2x48xf32>
    %c35 = arith.constant 35 : index
    %c0_232 = arith.constant 0 : index
    %559 = vector.load %arg0[%c35, %c0_232] : memref<52x576xf32, #tpu.memory_space<vmem>>, vector<1x48xf32>
    %560 = vector.broadcast %559 : vector<1x48xf32> to vector<2x48xf32>
    %561 = arith.addf %558, %560 : vector<2x48xf32>
    %562 = arith.addf %561, %501 : vector<2x48xf32>
    %c0_233 = arith.constant 0 : index
    %c0_234 = arith.constant 0 : index
    %563 = vector.load %arg60[%c0_233, %c0_234] : memref<2x48xf32, #tpu.memory_space<vmem>>, vector<2x48xf32>
    tpu.vector_store %arg60[%c0_233, %c0_234], %562 {strides = array<i32>} : memref<2x48xf32, #tpu.memory_space<vmem>>, vector<2x48xf32>,
    %564 = arith.truncf %562 : vector<2x48xf32> to vector<2x48xbf16>
    %c0_235 = arith.constant 0 : index
    %c0_236 = arith.constant 0 : index
    %565 = vector.load %arg43[%c0_235, %c0_236] : memref<48x288xbf16, #tpu.memory_space<vmem>>, vector<48x288xbf16>
    %cst_237 = arith.constant dense<0.000000e+00> : vector<2x288xf32>
    %566 = tpu.matmul %564, %565, %cst_237 {dimension_numbers = #tpu.dot_dimension_numbers<[1], [0], [0], [1], [0, 0, 1, 1], [], []>} : vector<2x48xbf16>, vector<48x288xbf16>, vector<2x288xf32> -> vector<2x288xf32>
    %c36 = arith.constant 36 : index
    %c0_238 = arith.constant 0 : index
    %567 = vector.load %arg0[%c36, %c0_238] : memref<52x576xf32, #tpu.memory_space<vmem>>, vector<1x288xf32>
    %568 = vector.broadcast %567 : vector<1x288xf32> to vector<2x288xf32>
    %569 = arith.addf %566, %568 : vector<2x288xf32>
    %cst_239 = arith.constant 3.000000e+00 : f32
    %570 = vector.broadcast %cst_239 : f32 to vector<2x288xf32>
    %571 = arith.addf %569, %570 : vector<2x288xf32>
    %cst_240 = arith.constant 0.000000e+00 : f32
    %cst_241 = arith.constant 6.000000e+00 : f32
    %572 = vector.broadcast %cst_240 : f32 to vector<2x288xf32>
    %573 = arith.maximumf %572, %571 : vector<2x288xf32>
    %574 = vector.broadcast %cst_241 : f32 to vector<2x288xf32>
    %575 = arith.minimumf %574, %573 : vector<2x288xf32>
    %cst_242 = arith.constant 0.166666672 : f32
    %576 = vector.broadcast %cst_242 : f32 to vector<2x288xf32>
    %577 = arith.mulf %575, %576 : vector<2x288xf32>
    %578 = arith.mulf %569, %577 : vector<2x288xf32>
    %c0_243 = arith.constant 0 : index
    %c0_244 = arith.constant 0 : index
    %579 = vector.load %arg44[%c0_243, %c0_244] : memref<25x288xf32, #tpu.memory_space<vmem>>, vector<25x288xf32>
    %580 = vector.extract_strided_slice %579 {offsets = [12, 0], sizes = [1, 288], strides = [1, 1]} : vector<25x288xf32> to vector<1x288xf32>
    %581 = vector.broadcast %580 : vector<1x288xf32> to vector<2x288xf32>
    %582 = arith.mulf %578, %581 : vector<2x288xf32>
    %c37 = arith.constant 37 : index
    %c0_245 = arith.constant 0 : index
    %583 = vector.load %arg0[%c37, %c0_245] : memref<52x576xf32, #tpu.memory_space<vmem>>, vector<1x288xf32>
    %584 = vector.broadcast %583 : vector<1x288xf32> to vector<2x288xf32>
    %585 = arith.addf %582, %584 : vector<2x288xf32>
    %cst_246 = arith.constant 3.000000e+00 : f32
    %586 = vector.broadcast %cst_246 : f32 to vector<2x288xf32>
    %587 = arith.addf %585, %586 : vector<2x288xf32>
    %cst_247 = arith.constant 0.000000e+00 : f32
    %cst_248 = arith.constant 6.000000e+00 : f32
    %588 = vector.broadcast %cst_247 : f32 to vector<2x288xf32>
    %589 = arith.maximumf %588, %587 : vector<2x288xf32>
    %590 = vector.broadcast %cst_248 : f32 to vector<2x288xf32>
    %591 = arith.minimumf %590, %589 : vector<2x288xf32>
    %cst_249 = arith.constant 0.166666672 : f32
    %592 = vector.broadcast %cst_249 : f32 to vector<2x288xf32>
    %593 = arith.mulf %591, %592 : vector<2x288xf32>
    %594 = arith.mulf %585, %593 : vector<2x288xf32>
    %595 = arith.truncf %594 : vector<2x288xf32> to vector<2x288xbf16>
    %c0_250 = arith.constant 0 : index
    %c0_251 = arith.constant 0 : index
    %596 = vector.load %arg45[%c0_250, %c0_251] : memref<288x72xbf16, #tpu.memory_space<vmem>>, vector<288x72xbf16>
    %cst_252 = arith.constant dense<0.000000e+00> : vector<2x72xf32>
    %597 = tpu.matmul %595, %596, %cst_252 {dimension_numbers = #tpu.dot_dimension_numbers<[1], [0], [0], [1], [0, 0, 1, 1], [], []>} : vector<2x288xbf16>, vector<288x72xbf16>, vector<2x72xf32> -> vector<2x72xf32>
    %c38 = arith.constant 38 : index
    %c0_253 = arith.constant 0 : index
    %598 = vector.load %arg0[%c38, %c0_253] : memref<52x576xf32, #tpu.memory_space<vmem>>, vector<1x72xf32>
    %599 = vector.broadcast %598 : vector<1x72xf32> to vector<2x72xf32>
    %600 = arith.addf %597, %599 : vector<2x72xf32>
    %cst_254 = arith.constant 0.000000e+00 : f32
    %601 = vector.broadcast %cst_254 : f32 to vector<2x72xf32>
    %602 = arith.maximumf %600, %601 : vector<2x72xf32>
    %603 = arith.truncf %602 : vector<2x72xf32> to vector<2x72xbf16>
    %c0_255 = arith.constant 0 : index
    %c0_256 = arith.constant 0 : index
    %604 = vector.load %arg46[%c0_255, %c0_256] : memref<72x288xbf16, #tpu.memory_space<vmem>>, vector<72x288xbf16>
    %cst_257 = arith.constant dense<0.000000e+00> : vector<2x288xf32>
    %605 = tpu.matmul %603, %604, %cst_257 {dimension_numbers = #tpu.dot_dimension_numbers<[1], [0], [0], [1], [0, 0, 1, 1], [], []>} : vector<2x72xbf16>, vector<72x288xbf16>, vector<2x288xf32> -> vector<2x288xf32>
    %c39 = arith.constant 39 : index
    %c0_258 = arith.constant 0 : index
    %606 = vector.load %arg0[%c39, %c0_258] : memref<52x576xf32, #tpu.memory_space<vmem>>, vector<1x288xf32>
    %607 = vector.broadcast %606 : vector<1x288xf32> to vector<2x288xf32>
    %608 = arith.addf %605, %607 : vector<2x288xf32>
    %cst_259 = arith.constant 3.000000e+00 : f32
    %609 = vector.broadcast %cst_259 : f32 to vector<2x288xf32>
    %610 = arith.addf %608, %609 : vector<2x288xf32>
    %cst_260 = arith.constant 0.000000e+00 : f32
    %cst_261 = arith.constant 6.000000e+00 : f32
    %611 = vector.broadcast %cst_260 : f32 to vector<2x288xf32>
    %612 = arith.maximumf %611, %610 : vector<2x288xf32>
    %613 = vector.broadcast %cst_261 : f32 to vector<2x288xf32>
    %614 = arith.minimumf %613, %612 : vector<2x288xf32>
    %cst_262 = arith.constant 0.166666672 : f32
    %615 = vector.broadcast %cst_262 : f32 to vector<2x288xf32>
    %616 = arith.mulf %614, %615 : vector<2x288xf32>
    %617 = arith.mulf %594, %616 : vector<2x288xf32>
    %618 = arith.truncf %617 : vector<2x288xf32> to vector<2x288xbf16>
    %c0_263 = arith.constant 0 : index
    %c0_264 = arith.constant 0 : index
    %619 = vector.load %arg47[%c0_263, %c0_264] : memref<288x96xbf16, #tpu.memory_space<vmem>>, vector<288x96xbf16>
    %cst_265 = arith.constant dense<0.000000e+00> : vector<2x96xf32>
    %620 = tpu.matmul %618, %619, %cst_265 {dimension_numbers = #tpu.dot_dimension_numbers<[1], [0], [0], [1], [0, 0, 1, 1], [], []>} : vector<2x288xbf16>, vector<288x96xbf16>, vector<2x96xf32> -> vector<2x96xf32>
    %c40 = arith.constant 40 : index
    %c0_266 = arith.constant 0 : index
    %621 = vector.load %arg0[%c40, %c0_266] : memref<52x576xf32, #tpu.memory_space<vmem>>, vector<1x96xf32>
    %622 = vector.broadcast %621 : vector<1x96xf32> to vector<2x96xf32>
    %623 = arith.addf %620, %622 : vector<2x96xf32>
    %624 = arith.truncf %623 : vector<2x96xf32> to vector<2x96xbf16>
    %c0_267 = arith.constant 0 : index
    %c0_268 = arith.constant 0 : index
    %625 = vector.load %arg48[%c0_267, %c0_268] : memref<96x576xbf16, #tpu.memory_space<vmem>>, vector<96x576xbf16>
    %cst_269 = arith.constant dense<0.000000e+00> : vector<2x576xf32>
    %626 = tpu.matmul %624, %625, %cst_269 {dimension_numbers = #tpu.dot_dimension_numbers<[1], [0], [0], [1], [0, 0, 1, 1], [], []>} : vector<2x96xbf16>, vector<96x576xbf16>, vector<2x576xf32> -> vector<2x576xf32>
    %c41 = arith.constant 41 : index
    %c0_270 = arith.constant 0 : index
    %627 = vector.load %arg0[%c41, %c0_270] : memref<52x576xf32, #tpu.memory_space<vmem>>, vector<1x576xf32>
    %628 = vector.broadcast %627 : vector<1x576xf32> to vector<2x576xf32>
    %629 = arith.addf %626, %628 : vector<2x576xf32>
    %cst_271 = arith.constant 3.000000e+00 : f32
    %630 = vector.broadcast %cst_271 : f32 to vector<2x576xf32>
    %631 = arith.addf %629, %630 : vector<2x576xf32>
    %cst_272 = arith.constant 0.000000e+00 : f32
    %cst_273 = arith.constant 6.000000e+00 : f32
    %632 = vector.broadcast %cst_272 : f32 to vector<2x576xf32>
    %633 = arith.maximumf %632, %631 : vector<2x576xf32>
    %634 = vector.broadcast %cst_273 : f32 to vector<2x576xf32>
    %635 = arith.minimumf %634, %633 : vector<2x576xf32>
    %cst_274 = arith.constant 0.166666672 : f32
    %636 = vector.broadcast %cst_274 : f32 to vector<2x576xf32>
    %637 = arith.mulf %635, %636 : vector<2x576xf32>
    %638 = arith.mulf %629, %637 : vector<2x576xf32>
    %c0_275 = arith.constant 0 : index
    %c0_276 = arith.constant 0 : index
    %639 = vector.load %arg49[%c0_275, %c0_276] : memref<25x576xf32, #tpu.memory_space<vmem>>, vector<25x576xf32>
    %640 = vector.extract_strided_slice %639 {offsets = [12, 0], sizes = [1, 576], strides = [1, 1]} : vector<25x576xf32> to vector<1x576xf32>
    %641 = vector.broadcast %640 : vector<1x576xf32> to vector<2x576xf32>
    %642 = arith.mulf %638, %641 : vector<2x576xf32>
    %c42 = arith.constant 42 : index
    %c0_277 = arith.constant 0 : index
    %643 = vector.load %arg0[%c42, %c0_277] : memref<52x576xf32, #tpu.memory_space<vmem>>, vector<1x576xf32>
    %644 = vector.broadcast %643 : vector<1x576xf32> to vector<2x576xf32>
    %645 = arith.addf %642, %644 : vector<2x576xf32>
    %cst_278 = arith.constant 3.000000e+00 : f32
    %646 = vector.broadcast %cst_278 : f32 to vector<2x576xf32>
    %647 = arith.addf %645, %646 : vector<2x576xf32>
    %cst_279 = arith.constant 0.000000e+00 : f32
    %cst_280 = arith.constant 6.000000e+00 : f32
    %648 = vector.broadcast %cst_279 : f32 to vector<2x576xf32>
    %649 = arith.maximumf %648, %647 : vector<2x576xf32>
    %650 = vector.broadcast %cst_280 : f32 to vector<2x576xf32>
    %651 = arith.minimumf %650, %649 : vector<2x576xf32>
    %cst_281 = arith.constant 0.166666672 : f32
    %652 = vector.broadcast %cst_281 : f32 to vector<2x576xf32>
    %653 = arith.mulf %651, %652 : vector<2x576xf32>
    %654 = arith.mulf %645, %653 : vector<2x576xf32>
    %655 = arith.truncf %654 : vector<2x576xf32> to vector<2x576xbf16>
    %c0_282 = arith.constant 0 : index
    %c0_283 = arith.constant 0 : index
    %656 = vector.load %arg50[%c0_282, %c0_283] : memref<576x144xbf16, #tpu.memory_space<vmem>>, vector<576x144xbf16>
    %cst_284 = arith.constant dense<0.000000e+00> : vector<2x144xf32>
    %657 = tpu.matmul %655, %656, %cst_284 {dimension_numbers = #tpu.dot_dimension_numbers<[1], [0], [0], [1], [0, 0, 1, 1], [], []>} : vector<2x576xbf16>, vector<576x144xbf16>, vector<2x144xf32> -> vector<2x144xf32>
    %c43 = arith.constant 43 : index
    %c0_285 = arith.constant 0 : index
    %658 = vector.load %arg0[%c43, %c0_285] : memref<52x576xf32, #tpu.memory_space<vmem>>, vector<1x144xf32>
    %659 = vector.broadcast %658 : vector<1x144xf32> to vector<2x144xf32>
    %660 = arith.addf %657, %659 : vector<2x144xf32>
    %cst_286 = arith.constant 0.000000e+00 : f32
    %661 = vector.broadcast %cst_286 : f32 to vector<2x144xf32>
    %662 = arith.maximumf %660, %661 : vector<2x144xf32>
    %663 = arith.truncf %662 : vector<2x144xf32> to vector<2x144xbf16>
    %c0_287 = arith.constant 0 : index
    %c0_288 = arith.constant 0 : index
    %664 = vector.load %arg51[%c0_287, %c0_288] : memref<144x576xbf16, #tpu.memory_space<vmem>>, vector<144x576xbf16>
    %cst_289 = arith.constant dense<0.000000e+00> : vector<2x576xf32>
    %665 = tpu.matmul %663, %664, %cst_289 {dimension_numbers = #tpu.dot_dimension_numbers<[1], [0], [0], [1], [0, 0, 1, 1], [], []>} : vector<2x144xbf16>, vector<144x576xbf16>, vector<2x576xf32> -> vector<2x576xf32>
    %c44 = arith.constant 44 : index
    %c0_290 = arith.constant 0 : index
    %666 = vector.load %arg0[%c44, %c0_290] : memref<52x576xf32, #tpu.memory_space<vmem>>, vector<1x576xf32>
    %667 = vector.broadcast %666 : vector<1x576xf32> to vector<2x576xf32>
    %668 = arith.addf %665, %667 : vector<2x576xf32>
    %cst_291 = arith.constant 3.000000e+00 : f32
    %669 = vector.broadcast %cst_291 : f32 to vector<2x576xf32>
    %670 = arith.addf %668, %669 : vector<2x576xf32>
    %cst_292 = arith.constant 0.000000e+00 : f32
    %cst_293 = arith.constant 6.000000e+00 : f32
    %671 = vector.broadcast %cst_292 : f32 to vector<2x576xf32>
    %672 = arith.maximumf %671, %670 : vector<2x576xf32>
    %673 = vector.broadcast %cst_293 : f32 to vector<2x576xf32>
    %674 = arith.minimumf %673, %672 : vector<2x576xf32>
    %cst_294 = arith.constant 0.166666672 : f32
    %675 = vector.broadcast %cst_294 : f32 to vector<2x576xf32>
    %676 = arith.mulf %674, %675 : vector<2x576xf32>
    %677 = arith.mulf %654, %676 : vector<2x576xf32>
    %678 = arith.truncf %677 : vector<2x576xf32> to vector<2x576xbf16>
    %c0_295 = arith.constant 0 : index
    %c0_296 = arith.constant 0 : index
    %679 = vector.load %arg52[%c0_295, %c0_296] : memref<576x96xbf16, #tpu.memory_space<vmem>>, vector<576x96xbf16>
    %cst_297 = arith.constant dense<0.000000e+00> : vector<2x96xf32>
    %680 = tpu.matmul %678, %679, %cst_297 {dimension_numbers = #tpu.dot_dimension_numbers<[1], [0], [0], [1], [0, 0, 1, 1], [], []>} : vector<2x576xbf16>, vector<576x96xbf16>, vector<2x96xf32> -> vector<2x96xf32>
    %c45 = arith.constant 45 : index
    %c0_298 = arith.constant 0 : index
    %681 = vector.load %arg0[%c45, %c0_298] : memref<52x576xf32, #tpu.memory_space<vmem>>, vector<1x96xf32>
    %682 = vector.broadcast %681 : vector<1x96xf32> to vector<2x96xf32>
    %683 = arith.addf %680, %682 : vector<2x96xf32>
    %684 = arith.addf %683, %623 : vector<2x96xf32>
    %685 = arith.truncf %684 : vector<2x96xf32> to vector<2x96xbf16>
    %c0_299 = arith.constant 0 : index
    %c0_300 = arith.constant 0 : index
    %686 = vector.load %arg53[%c0_299, %c0_300] : memref<96x576xbf16, #tpu.memory_space<vmem>>, vector<96x576xbf16>
    %cst_301 = arith.constant dense<0.000000e+00> : vector<2x576xf32>
    %687 = tpu.matmul %685, %686, %cst_301 {dimension_numbers = #tpu.dot_dimension_numbers<[1], [0], [0], [1], [0, 0, 1, 1], [], []>} : vector<2x96xbf16>, vector<96x576xbf16>, vector<2x576xf32> -> vector<2x576xf32>
    %c46 = arith.constant 46 : index
    %c0_302 = arith.constant 0 : index
    %688 = vector.load %arg0[%c46, %c0_302] : memref<52x576xf32, #tpu.memory_space<vmem>>, vector<1x576xf32>
    %689 = vector.broadcast %688 : vector<1x576xf32> to vector<2x576xf32>
    %690 = arith.addf %687, %689 : vector<2x576xf32>
    %cst_303 = arith.constant 3.000000e+00 : f32
    %691 = vector.broadcast %cst_303 : f32 to vector<2x576xf32>
    %692 = arith.addf %690, %691 : vector<2x576xf32>
    %cst_304 = arith.constant 0.000000e+00 : f32
    %cst_305 = arith.constant 6.000000e+00 : f32
    %693 = vector.broadcast %cst_304 : f32 to vector<2x576xf32>
    %694 = arith.maximumf %693, %692 : vector<2x576xf32>
    %695 = vector.broadcast %cst_305 : f32 to vector<2x576xf32>
    %696 = arith.minimumf %695, %694 : vector<2x576xf32>
    %cst_306 = arith.constant 0.166666672 : f32
    %697 = vector.broadcast %cst_306 : f32 to vector<2x576xf32>
    %698 = arith.mulf %696, %697 : vector<2x576xf32>
    %699 = arith.mulf %690, %698 : vector<2x576xf32>
    %c0_307 = arith.constant 0 : index
    %c0_308 = arith.constant 0 : index
    %700 = vector.load %arg54[%c0_307, %c0_308] : memref<25x576xf32, #tpu.memory_space<vmem>>, vector<25x576xf32>
    %701 = vector.extract_strided_slice %700 {offsets = [12, 0], sizes = [1, 576], strides = [1, 1]} : vector<25x576xf32> to vector<1x576xf32>
    %702 = vector.broadcast %701 : vector<1x576xf32> to vector<2x576xf32>
    %703 = arith.mulf %699, %702 : vector<2x576xf32>
    %c47 = arith.constant 47 : index
    %c0_309 = arith.constant 0 : index
    %704 = vector.load %arg0[%c47, %c0_309] : memref<52x576xf32, #tpu.memory_space<vmem>>, vector<1x576xf32>
    %705 = vector.broadcast %704 : vector<1x576xf32> to vector<2x576xf32>
    %706 = arith.addf %703, %705 : vector<2x576xf32>
    %cst_310 = arith.constant 3.000000e+00 : f32
    %707 = vector.broadcast %cst_310 : f32 to vector<2x576xf32>
    %708 = arith.addf %706, %707 : vector<2x576xf32>
    %cst_311 = arith.constant 0.000000e+00 : f32
    %cst_312 = arith.constant 6.000000e+00 : f32
    %709 = vector.broadcast %cst_311 : f32 to vector<2x576xf32>
    %710 = arith.maximumf %709, %708 : vector<2x576xf32>
    %711 = vector.broadcast %cst_312 : f32 to vector<2x576xf32>
    %712 = arith.minimumf %711, %710 : vector<2x576xf32>
    %cst_313 = arith.constant 0.166666672 : f32
    %713 = vector.broadcast %cst_313 : f32 to vector<2x576xf32>
    %714 = arith.mulf %712, %713 : vector<2x576xf32>
    %715 = arith.mulf %706, %714 : vector<2x576xf32>
    %716 = arith.truncf %715 : vector<2x576xf32> to vector<2x576xbf16>
    %c0_314 = arith.constant 0 : index
    %c0_315 = arith.constant 0 : index
    %717 = vector.load %arg55[%c0_314, %c0_315] : memref<576x144xbf16, #tpu.memory_space<vmem>>, vector<576x144xbf16>
    %cst_316 = arith.constant dense<0.000000e+00> : vector<2x144xf32>
    %718 = tpu.matmul %716, %717, %cst_316 {dimension_numbers = #tpu.dot_dimension_numbers<[1], [0], [0], [1], [0, 0, 1, 1], [], []>} : vector<2x576xbf16>, vector<576x144xbf16>, vector<2x144xf32> -> vector<2x144xf32>
    %c48 = arith.constant 48 : index
    %c0_317 = arith.constant 0 : index
    %719 = vector.load %arg0[%c48, %c0_317] : memref<52x576xf32, #tpu.memory_space<vmem>>, vector<1x144xf32>
    %720 = vector.broadcast %719 : vector<1x144xf32> to vector<2x144xf32>
    %721 = arith.addf %718, %720 : vector<2x144xf32>
    %cst_318 = arith.constant 0.000000e+00 : f32
    %722 = vector.broadcast %cst_318 : f32 to vector<2x144xf32>
    %723 = arith.maximumf %721, %722 : vector<2x144xf32>
    %724 = arith.truncf %723 : vector<2x144xf32> to vector<2x144xbf16>
    %c0_319 = arith.constant 0 : index
    %c0_320 = arith.constant 0 : index
    %725 = vector.load %arg56[%c0_319, %c0_320] : memref<144x576xbf16, #tpu.memory_space<vmem>>, vector<144x576xbf16>
    %cst_321 = arith.constant dense<0.000000e+00> : vector<2x576xf32>
    %726 = tpu.matmul %724, %725, %cst_321 {dimension_numbers = #tpu.dot_dimension_numbers<[1], [0], [0], [1], [0, 0, 1, 1], [], []>} : vector<2x144xbf16>, vector<144x576xbf16>, vector<2x576xf32> -> vector<2x576xf32>
    %c49 = arith.constant 49 : index
    %c0_322 = arith.constant 0 : index
    %727 = vector.load %arg0[%c49, %c0_322] : memref<52x576xf32, #tpu.memory_space<vmem>>, vector<1x576xf32>
    %728 = vector.broadcast %727 : vector<1x576xf32> to vector<2x576xf32>
    %729 = arith.addf %726, %728 : vector<2x576xf32>
    %cst_323 = arith.constant 3.000000e+00 : f32
    %730 = vector.broadcast %cst_323 : f32 to vector<2x576xf32>
    %731 = arith.addf %729, %730 : vector<2x576xf32>
    %cst_324 = arith.constant 0.000000e+00 : f32
    %cst_325 = arith.constant 6.000000e+00 : f32
    %732 = vector.broadcast %cst_324 : f32 to vector<2x576xf32>
    %733 = arith.maximumf %732, %731 : vector<2x576xf32>
    %734 = vector.broadcast %cst_325 : f32 to vector<2x576xf32>
    %735 = arith.minimumf %734, %733 : vector<2x576xf32>
    %cst_326 = arith.constant 0.166666672 : f32
    %736 = vector.broadcast %cst_326 : f32 to vector<2x576xf32>
    %737 = arith.mulf %735, %736 : vector<2x576xf32>
    %738 = arith.mulf %715, %737 : vector<2x576xf32>
    %739 = arith.truncf %738 : vector<2x576xf32> to vector<2x576xbf16>
    %c0_327 = arith.constant 0 : index
    %c0_328 = arith.constant 0 : index
    %740 = vector.load %arg57[%c0_327, %c0_328] : memref<576x96xbf16, #tpu.memory_space<vmem>>, vector<576x96xbf16>
    %cst_329 = arith.constant dense<0.000000e+00> : vector<2x96xf32>
    %741 = tpu.matmul %739, %740, %cst_329 {dimension_numbers = #tpu.dot_dimension_numbers<[1], [0], [0], [1], [0, 0, 1, 1], [], []>} : vector<2x576xbf16>, vector<576x96xbf16>, vector<2x96xf32> -> vector<2x96xf32>
    %c50 = arith.constant 50 : index
    %c0_330 = arith.constant 0 : index
    %742 = vector.load %arg0[%c50, %c0_330] : memref<52x576xf32, #tpu.memory_space<vmem>>, vector<1x96xf32>
    %743 = vector.broadcast %742 : vector<1x96xf32> to vector<2x96xf32>
    %744 = arith.addf %741, %743 : vector<2x96xf32>
    %745 = arith.addf %744, %684 : vector<2x96xf32>
    %746 = arith.truncf %745 : vector<2x96xf32> to vector<2x96xbf16>
    %c0_331 = arith.constant 0 : index
    %c0_332 = arith.constant 0 : index
    %747 = vector.load %arg58[%c0_331, %c0_332] : memref<96x576xbf16, #tpu.memory_space<vmem>>, vector<96x576xbf16>
    %cst_333 = arith.constant dense<0.000000e+00> : vector<2x576xf32>
    %748 = tpu.matmul %746, %747, %cst_333 {dimension_numbers = #tpu.dot_dimension_numbers<[1], [0], [0], [1], [0, 0, 1, 1], [], []>} : vector<2x96xbf16>, vector<96x576xbf16>, vector<2x576xf32> -> vector<2x576xf32>
    %c51 = arith.constant 51 : index
    %c0_334 = arith.constant 0 : index
    %749 = vector.load %arg0[%c51, %c0_334] : memref<52x576xf32, #tpu.memory_space<vmem>>, vector<1x576xf32>
    %750 = vector.broadcast %749 : vector<1x576xf32> to vector<2x576xf32>
    %751 = arith.addf %748, %750 : vector<2x576xf32>
    %cst_335 = arith.constant 3.000000e+00 : f32
    %752 = vector.broadcast %cst_335 : f32 to vector<2x576xf32>
    %753 = arith.addf %751, %752 : vector<2x576xf32>
    %cst_336 = arith.constant 0.000000e+00 : f32
    %cst_337 = arith.constant 6.000000e+00 : f32
    %754 = vector.broadcast %cst_336 : f32 to vector<2x576xf32>
    %755 = arith.maximumf %754, %753 : vector<2x576xf32>
    %756 = vector.broadcast %cst_337 : f32 to vector<2x576xf32>
    %757 = arith.minimumf %756, %755 : vector<2x576xf32>
    %cst_338 = arith.constant 0.166666672 : f32
    %758 = vector.broadcast %cst_338 : f32 to vector<2x576xf32>
    %759 = arith.mulf %757, %758 : vector<2x576xf32>
    %760 = arith.mulf %751, %759 : vector<2x576xf32>
    %c0_339 = arith.constant 0 : index
    %c0_340 = arith.constant 0 : index
    %761 = vector.load %arg59[%c0_339, %c0_340] : memref<2x576xf32, #tpu.memory_space<vmem>>, vector<2x576xf32>
    tpu.vector_store %arg59[%c0_339, %c0_340], %760 {strides = array<i32>} : memref<2x576xf32, #tpu.memory_space<vmem>>, vector<2x576xf32>,
    return
  }
}

</mosaic_0001>

<llo_original>
// kernel: mobilenet_small_forward.1
$region0: #{mobilenet_small_forward.1}
  #allocation0 [shape = 'u32[]', space=smem, size = 0x4, offset = 0x4, fixed_abs, tag = 'smem constant byte address 0x4 - core index']
  #allocation1 [shape = 'u32[144,128]{1,0:T(1,128)}', space=vmem, size = 0x12000, scoped, tag = 'internal scratch']
  %s0 = inlined_call_operand.smem [shape: u32[62], index: -1, kind: input, shape index: {}]
  %s1 = sld [smem:[%s0]]
  %s2 = scalar_lea.smem %s0, 1
  %s3 = sld [smem:[%s2]]
  %s4 = scalar_lea.smem %s0, 2
  %s5 = sld [smem:[%s4]]
  %s6 = scalar_lea.smem %s0, 3
  %s7 = sld [smem:[%s6]]
  %s8 = scalar_lea.smem %s0, 4
  %s9 = sld [smem:[%s8]]
  %s10 = scalar_lea.smem %s0, 5
  %s11 = sld [smem:[%s10]]
  %s12 = scalar_lea.smem %s0, 6
  %s13 = sld [smem:[%s12]]
  %s14 = scalar_lea.smem %s0, 7
  %s15 = sld [smem:[%s14]]
  %s16 = scalar_lea.smem %s0, 8
  %s17 = sld [smem:[%s16]]
  %s18 = scalar_lea.smem %s0, 9
  %s19 = sld [smem:[%s18]]
  %s20 = scalar_lea.smem %s0, 10
  %s21 = sld [smem:[%s20]]
  %s22 = scalar_lea.smem %s0, 11
  %s23 = sld [smem:[%s22]]
  %s24 = scalar_lea.smem %s0, 12
  %s25 = sld [smem:[%s24]]
  %s26 = scalar_lea.smem %s0, 13
  %s27 = sld [smem:[%s26]]
  %s28 = scalar_lea.smem %s0, 14
  %s29 = sld [smem:[%s28]]
  %s30 = scalar_lea.smem %s0, 15
  %s31 = sld [smem:[%s30]]
  %s32 = scalar_lea.smem %s0, 16
  %s33 = sld [smem:[%s32]]
  %s34 = scalar_lea.smem %s0, 17
  %s35 = sld [smem:[%s34]]
  %s36 = scalar_lea.smem %s0, 18
  %s37 = sld [smem:[%s36]]
  %s38 = scalar_lea.smem %s0, 19
  %s39 = sld [smem:[%s38]]
  %s40 = scalar_lea.smem %s0, 20
  %s41 = sld [smem:[%s40]]
  %s42 = scalar_lea.smem %s0, 21
  %s43 = sld [smem:[%s42]]
  %s44 = scalar_lea.smem %s0, 22
  %s45 = sld [smem:[%s44]]
  %s46 = scalar_lea.smem %s0, 23
  %s47 = sld [smem:[%s46]]
  %s48 = scalar_lea.smem %s0, 24
  %s49 = sld [smem:[%s48]]
  %s50 = scalar_lea.smem %s0, 25
  %s51 = sld [smem:[%s50]]
  %s52 = scalar_lea.smem %s0, 26
  %s53 = sld [smem:[%s52]]
  %s54 = scalar_lea.smem %s0, 27
  %s55 = sld [smem:[%s54]]
  %s56 = scalar_lea.smem %s0, 28
  %s57 = sld [smem:[%s56]]
  %s58 = scalar_lea.smem %s0, 29
  %s59 = sld [smem:[%s58]]
  %s60 = scalar_lea.smem %s0, 30
  %s61 = sld [smem:[%s60]]
  %s62 = scalar_lea.smem %s0, 31
  %s63 = sld [smem:[%s62]]
  %s64 = scalar_lea.smem %s0, 32
  %s65 = sld [smem:[%s64]]
  %s66 = scalar_lea.smem %s0, 33
  %s67 = sld [smem:[%s66]]
  %s68 = scalar_lea.smem %s0, 34
  %s69 = sld [smem:[%s68]]
  %s70 = scalar_lea.smem %s0, 35
  %s71 = sld [smem:[%s70]]
  %s72 = scalar_lea.smem %s0, 36
  %s73 = sld [smem:[%s72]]
  %s74 = scalar_lea.smem %s0, 37
  %s75 = sld [smem:[%s74]]
  %s76 = scalar_lea.smem %s0, 38
  %s77 = sld [smem:[%s76]]
  %s78 = scalar_lea.smem %s0, 39
  %s79 = sld [smem:[%s78]]
  %s80 = scalar_lea.smem %s0, 40
  %s81 = sld [smem:[%s80]]
  %s82 = scalar_lea.smem %s0, 41
  %s83 = sld [smem:[%s82]]
  %s84 = scalar_lea.smem %s0, 42
  %s85 = sld [smem:[%s84]]
  %s86 = scalar_lea.smem %s0, 43
  %s87 = sld [smem:[%s86]]
  %s88 = scalar_lea.smem %s0, 44
  %s89 = sld [smem:[%s88]]
  %s90 = scalar_lea.smem %s0, 45
  %s91 = sld [smem:[%s90]]
  %s92 = scalar_lea.smem %s0, 46
  %s93 = sld [smem:[%s92]]
  %s94 = scalar_lea.smem %s0, 47
  %s95 = sld [smem:[%s94]]
  %s96 = scalar_lea.smem %s0, 48
  %s97 = sld [smem:[%s96]]
  %s98 = scalar_lea.smem %s0, 49
  %s99 = sld [smem:[%s98]]
  %s100 = scalar_lea.smem %s0, 50
  %s101 = sld [smem:[%s100]]
  %s102 = scalar_lea.smem %s0, 51
  %s103 = sld [smem:[%s102]]
  %s104 = scalar_lea.smem %s0, 52
  %s105 = sld [smem:[%s104]]
  %s106 = scalar_lea.smem %s0, 53
  %s107 = sld [smem:[%s106]]
  %s108 = scalar_lea.smem %s0, 54
  %s109 = sld [smem:[%s108]]
  %s110 = scalar_lea.smem %s0, 55
  %s111 = sld [smem:[%s110]]
  %s112 = scalar_lea.smem %s0, 56
  %s113 = sld [smem:[%s112]]
  %s114 = scalar_lea.smem %s0, 57
  %s115 = sld [smem:[%s114]]
  %s116 = scalar_lea.smem %s0, 58
  %s117 = sld [smem:[%s116]]
  %s118 = scalar_lea.smem %s0, 59
  %s119 = sld [smem:[%s118]]
  %s120 = scalar_lea.smem %s0, 60
  %s121 = sld [smem:[%s120]]
  %s122 = scalar_lea.smem %s0, 61
  %s123 = sld [smem:[%s122]]
  %124 = xla_tuple %s119, %s121, %s123
  %s125 = sld [smem:[#allocation0]]
  $region266: #{mobilenet_small_forward.1} parent=0
    _
  %s127 = ssub.s32 1, %s125
  %s128 = scalar_select 0, %s127, %s125
  $region1: #{mobilenet_small_forward.1} parent=0
    #allocation2 [shape = 'u8[512]{0}', space=vmem, size = 0x400, scoped, tag = 'input window, operand 5, single buffered']
    #allocation3 [shape = 's32[1]{0}', space=sflag, size = 0x4, scoped, tag = 'scoped memory for mobilenet_small_forward.1']
    #allocation4 [shape = 's32[1]{0}', space=sflag, size = 0x4, scoped, tag = 'scoped memory for mobilenet_small_forward.1']
    #allocation5 [shape = 'u8[1024]{0}', space=vmem, size = 0x400, scoped, tag = 'output window, operand 1, single buffered']
    #allocation6 [shape = 'u8[4096]{0}', space=vmem, size = 0x1000, scoped, tag = 'output window, operand 2, single buffered']
    #allocation7 [shape = 's32[1]{0}', space=sflag, size = 0x4, scoped, tag = 'scoped memory for mobilenet_small_forward.1']
    %129 = vsyncpa [#allocation3], 0
    %130 = vsyncpa [#allocation4], 0
    %131 = vsyncpa [#allocation7], 0
    // Predicated region
    $region2: #{mobilenet_small_forward.1} parent=1 // pred_check
      _
    $region3: #{mobilenet_small_forward.1} parent=1 // pred_check_branch
      %133 = sbr.rel (0) target = $region5
    $region4: #{mobilenet_small_forward.1} parent=1 // pred_region
      _
    $region5: #{mobilenet_small_forward.1} parent=1 // pred_fallthru
      _
    // Predicated region
    $region6: #{mobilenet_small_forward.1} parent=1 // pred_check
      _
    $region7: #{mobilenet_small_forward.1} parent=1 // pred_check_branch
      %135 = sbr.rel (0) target = $region9
    $region8: #{mobilenet_small_forward.1} parent=1 // pred_region
      _
    $region9: #{mobilenet_small_forward.1} parent=1 // pred_fallthru
      _
    // Predicated region
    $region10: #{mobilenet_small_forward.1} parent=1 // pred_check
      _
    $region11: #{mobilenet_small_forward.1} parent=1 // pred_check_branch
      %137 = sbr.rel (0) target = $region13
    $region12: #{mobilenet_small_forward.1} parent=1 // pred_region
      _
    $region13: #{mobilenet_small_forward.1} parent=1 // pred_fallthru
      _
    // Predicated region
    $region14: #{mobilenet_small_forward.1} parent=1 // pred_check
      _
    $region15: #{mobilenet_small_forward.1} parent=1 // pred_check_branch
      %139 = sbr.rel (0) target = $region17
    $region16: #{mobilenet_small_forward.1} parent=1 // pred_region
      _
    $region17: #{mobilenet_small_forward.1} parent=1 // pred_fallthru
      _
    // Predicated region
    $region18: #{mobilenet_small_forward.1} parent=1 // pred_check
      _
    $region19: #{mobilenet_small_forward.1} parent=1 // pred_check_branch
      %141 = sbr.rel (0) target = $region21
    $region20: #{mobilenet_small_forward.1} parent=1 // pred_region
      _
    $region21: #{mobilenet_small_forward.1} parent=1 // pred_fallthru
      _
    // Predicated region
    $region22: #{mobilenet_small_forward.1} parent=1 // pred_check
      _
    $region23: #{mobilenet_small_forward.1} parent=1 // pred_check_branch
      %143 = sbr.rel (0) target = $region25
    $region24: #{mobilenet_small_forward.1} parent=1 // pred_region
      %s145 = ssub.s32 16, 16
      %146 = vsyncadd [#allocation3], %s145
      %s148 = sshll.u32 [#allocation2], 4
      %s149 = int_to_ptr.vmem [resolvable:$true] %s148
      %151 = dma.hbm_to_vmem [thread:$0]  %s11, 16, %s149, [#allocation3]
    $region25: #{mobilenet_small_forward.1} parent=1 // pred_fallthru
      _
    // Predicated region
    $region26: #{mobilenet_small_forward.1} parent=1 // pred_check
      _
    $region27: #{mobilenet_small_forward.1} parent=1 // pred_check_branch
      %153 = sbr.rel (0) target = $region29
    $region28: #{mobilenet_small_forward.1} parent=1 // pred_region
      _
    $region29: #{mobilenet_small_forward.1} parent=1 // pred_fallthru
      _
    // Predicated region
    $region30: #{mobilenet_small_forward.1} parent=1 // pred_check
      _
    $region31: #{mobilenet_small_forward.1} parent=1 // pred_check_branch
      %155 = sbr.rel (0) target = $region33
    $region32: #{mobilenet_small_forward.1} parent=1 // pred_region
      _
    $region33: #{mobilenet_small_forward.1} parent=1 // pred_fallthru
      _
    // Predicated region
    $region34: #{mobilenet_small_forward.1} parent=1 // pred_check
      _
    $region35: #{mobilenet_small_forward.1} parent=1 // pred_check_branch
      %157 = sbr.rel (0) target = $region37
    $region36: #{mobilenet_small_forward.1} parent=1 // pred_region
      _
    $region37: #{mobilenet_small_forward.1} parent=1 // pred_fallthru
      _
    // Predicated region
    $region38: #{mobilenet_small_forward.1} parent=1 // pred_check
      _
    $region39: #{mobilenet_small_forward.1} parent=1 // pred_check_branch
      %159 = sbr.rel (0) target = $region41
    $region40: #{mobilenet_small_forward.1} parent=1 // pred_region
      _
    $region41: #{mobilenet_small_forward.1} parent=1 // pred_fallthru
      _
    // Predicated region
    $region42: #{mobilenet_small_forward.1} parent=1 // pred_check
      _
    $region43: #{mobilenet_small_forward.1} parent=1 // pred_check_branch
      %161 = sbr.rel (0) target = $region45
    $region44: #{mobilenet_small_forward.1} parent=1 // pred_region
      _
    $region45: #{mobilenet_small_forward.1} parent=1 // pred_fallthru
      _
    // Predicated region
    $region46: #{mobilenet_small_forward.1} parent=1 // pred_check
      _
    $region47: #{mobilenet_small_forward.1} parent=1 // pred_check_branch
      %163 = sbr.rel (0) target = $region49
    $region48: #{mobilenet_small_forward.1} parent=1 // pred_region
      _
    $region49: #{mobilenet_small_forward.1} parent=1 // pred_fallthru
      _
    // Predicated region
    $region50: #{mobilenet_small_forward.1} parent=1 // pred_check
      _
    $region51: #{mobilenet_small_forward.1} parent=1 // pred_check_branch
      %165 = sbr.rel (0) target = $region53
    $region52: #{mobilenet_small_forward.1} parent=1 // pred_region
      _
    $region53: #{mobilenet_small_forward.1} parent=1 // pred_fallthru
      _
    // Predicated region
    $region54: #{mobilenet_small_forward.1} parent=1 // pred_check
      _
    $region55: #{mobilenet_small_forward.1} parent=1 // pred_check_branch
      %167 = sbr.rel (0) target = $region57
    $region56: #{mobilenet_small_forward.1} parent=1 // pred_region
      _
    $region57: #{mobilenet_small_forward.1} parent=1 // pred_fallthru
      _
    // Predicated region
    $region58: #{mobilenet_small_forward.1} parent=1 // pred_check
      _
    $region59: #{mobilenet_small_forward.1} parent=1 // pred_check_branch
      %169 = sbr.rel (0) target = $region61
    $region60: #{mobilenet_small_forward.1} parent=1 // pred_region
      _
    $region61: #{mobilenet_small_forward.1} parent=1 // pred_fallthru
      _
    // Predicated region
    $region62: #{mobilenet_small_forward.1} parent=1 // pred_check
      _
    $region63: #{mobilenet_small_forward.1} parent=1 // pred_check_branch
      %171 = sbr.rel (0) target = $region65
    $region64: #{mobilenet_small_forward.1} parent=1 // pred_region
      _
    $region65: #{mobilenet_small_forward.1} parent=1 // pred_fallthru
      _
    // Predicated region
    $region66: #{mobilenet_small_forward.1} parent=1 // pred_check
      _
    $region67: #{mobilenet_small_forward.1} parent=1 // pred_check_branch
      %173 = sbr.rel (0) target = $region69
    $region68: #{mobilenet_small_forward.1} parent=1 // pred_region
      _
    $region69: #{mobilenet_small_forward.1} parent=1 // pred_fallthru
      _
    // Predicated region
    $region70: #{mobilenet_small_forward.1} parent=1 // pred_check
      _
    $region71: #{mobilenet_small_forward.1} parent=1 // pred_check_branch
      %175 = sbr.rel (0) target = $region73
    $region72: #{mobilenet_small_forward.1} parent=1 // pred_region
      _
    $region73: #{mobilenet_small_forward.1} parent=1 // pred_fallthru
      _
    // Predicated region
    $region74: #{mobilenet_small_forward.1} parent=1 // pred_check
      _
    $region75: #{mobilenet_small_forward.1} parent=1 // pred_check_branch
      %177 = sbr.rel (0) target = $region77
    $region76: #{mobilenet_small_forward.1} parent=1 // pred_region
      _
    $region77: #{mobilenet_small_forward.1} parent=1 // pred_fallthru
      _
    // Predicated region
    $region78: #{mobilenet_small_forward.1} parent=1 // pred_check
      _
    $region79: #{mobilenet_small_forward.1} parent=1 // pred_check_branch
      %179 = sbr.rel (0) target = $region81
    $region80: #{mobilenet_small_forward.1} parent=1 // pred_region
      _
    $region81: #{mobilenet_small_forward.1} parent=1 // pred_fallthru
      _
    // Predicated region
    $region82: #{mobilenet_small_forward.1} parent=1 // pred_check
      _
    $region83: #{mobilenet_small_forward.1} parent=1 // pred_check_branch
      %181 = sbr.rel (0) target = $region85
    $region84: #{mobilenet_small_forward.1} parent=1 // pred_region
      _
    $region85: #{mobilenet_small_forward.1} parent=1 // pred_fallthru
      _
    // Predicated region
    $region86: #{mobilenet_small_forward.1} parent=1 // pred_check
      _
    $region87: #{mobilenet_small_forward.1} parent=1 // pred_check_branch
      %183 = sbr.rel (0) target = $region89
    $region88: #{mobilenet_small_forward.1} parent=1 // pred_region
      _
    $region89: #{mobilenet_small_forward.1} parent=1 // pred_fallthru
      _
    // Predicated region
    $region90: #{mobilenet_small_forward.1} parent=1 // pred_check
      _
    $region91: #{mobilenet_small_forward.1} parent=1 // pred_check_branch
      %185 = sbr.rel (0) target = $region93
    $region92: #{mobilenet_small_forward.1} parent=1 // pred_region
      _
    $region93: #{mobilenet_small_forward.1} parent=1 // pred_fallthru
      _
    // Predicated region
    $region94: #{mobilenet_small_forward.1} parent=1 // pred_check
      _
    $region95: #{mobilenet_small_forward.1} parent=1 // pred_check_branch
      %187 = sbr.rel (0) target = $region97
    $region96: #{mobilenet_small_forward.1} parent=1 // pred_region
      _
    $region97: #{mobilenet_small_forward.1} parent=1 // pred_fallthru
      _
    // Predicated region
    $region98: #{mobilenet_small_forward.1} parent=1 // pred_check
      _
    $region99: #{mobilenet_small_forward.1} parent=1 // pred_check_branch
      %189 = sbr.rel (0) target = $region101
    $region100: #{mobilenet_small_forward.1} parent=1 // pred_region
      _
    $region101: #{mobilenet_small_forward.1} parent=1 // pred_fallthru
      _
    // Predicated region
    $region102: #{mobilenet_small_forward.1} parent=1 // pred_check
      _
    $region103: #{mobilenet_small_forward.1} parent=1 // pred_check_branch
      %191 = sbr.rel (0) target = $region105
    $region104: #{mobilenet_small_forward.1} parent=1 // pred_region
      _
    $region105: #{mobilenet_small_forward.1} parent=1 // pred_fallthru
      _
    // Predicated region
    $region106: #{mobilenet_small_forward.1} parent=1 // pred_check
      _
    $region107: #{mobilenet_small_forward.1} parent=1 // pred_check_branch
      %193 = sbr.rel (0) target = $region109
    $region108: #{mobilenet_small_forward.1} parent=1 // pred_region
      _
    $region109: #{mobilenet_small_forward.1} parent=1 // pred_fallthru
      _
    // Predicated region
    $region110: #{mobilenet_small_forward.1} parent=1 // pred_check
      _
    $region111: #{mobilenet_small_forward.1} parent=1 // pred_check_branch
      %195 = sbr.rel (0) target = $region113
    $region112: #{mobilenet_small_forward.1} parent=1 // pred_region
      _
    $region113: #{mobilenet_small_forward.1} parent=1 // pred_fallthru
      _
    // Predicated region
    $region114: #{mobilenet_small_forward.1} parent=1 // pred_check
      _
    $region115: #{mobilenet_small_forward.1} parent=1 // pred_check_branch
      %197 = sbr.rel (0) target = $region117
    $region116: #{mobilenet_small_forward.1} parent=1 // pred_region
      _
    $region117: #{mobilenet_small_forward.1} parent=1 // pred_fallthru
      _
    // Predicated region
    $region118: #{mobilenet_small_forward.1} parent=1 // pred_check
      _
    $region119: #{mobilenet_small_forward.1} parent=1 // pred_check_branch
      %199 = sbr.rel (0) target = $region121
    $region120: #{mobilenet_small_forward.1} parent=1 // pred_region
      _
    $region121: #{mobilenet_small_forward.1} parent=1 // pred_fallthru
      _
    // Predicated region
    $region122: #{mobilenet_small_forward.1} parent=1 // pred_check
      _
    $region123: #{mobilenet_small_forward.1} parent=1 // pred_check_branch
      %201 = sbr.rel (0) target = $region125
    $region124: #{mobilenet_small_forward.1} parent=1 // pred_region
      _
    $region125: #{mobilenet_small_forward.1} parent=1 // pred_fallthru
      _
    // Predicated region
    $region126: #{mobilenet_small_forward.1} parent=1 // pred_check
      _
    $region127: #{mobilenet_small_forward.1} parent=1 // pred_check_branch
      %203 = sbr.rel (0) target = $region129
    $region128: #{mobilenet_small_forward.1} parent=1 // pred_region
      _
    $region129: #{mobilenet_small_forward.1} parent=1 // pred_fallthru
      _
    // Predicated region
    $region130: #{mobilenet_small_forward.1} parent=1 // pred_check
      _
    $region131: #{mobilenet_small_forward.1} parent=1 // pred_check_branch
      %205 = sbr.rel (0) target = $region133
    $region132: #{mobilenet_small_forward.1} parent=1 // pred_region
      _
    $region133: #{mobilenet_small_forward.1} parent=1 // pred_fallthru
      _
    // Predicated region
    $region134: #{mobilenet_small_forward.1} parent=1 // pred_check
      _
    $region135: #{mobilenet_small_forward.1} parent=1 // pred_check_branch
      %207 = sbr.rel (0) target = $region137
    $region136: #{mobilenet_small_forward.1} parent=1 // pred_region
      _
    $region137: #{mobilenet_small_forward.1} parent=1 // pred_fallthru
      _
    // Predicated region
    $region138: #{mobilenet_small_forward.1} parent=1 // pred_check
      _
    $region139: #{mobilenet_small_forward.1} parent=1 // pred_check_branch
      %209 = sbr.rel (0) target = $region141
    $region140: #{mobilenet_small_forward.1} parent=1 // pred_region
      _
    $region141: #{mobilenet_small_forward.1} parent=1 // pred_fallthru
      _
    // Predicated region
    $region142: #{mobilenet_small_forward.1} parent=1 // pred_check
      _
    $region143: #{mobilenet_small_forward.1} parent=1 // pred_check_branch
      %211 = sbr.rel (0) target = $region145
    $region144: #{mobilenet_small_forward.1} parent=1 // pred_region
      _
    $region145: #{mobilenet_small_forward.1} parent=1 // pred_fallthru
      _
    // Predicated region
    $region146: #{mobilenet_small_forward.1} parent=1 // pred_check
      _
    $region147: #{mobilenet_small_forward.1} parent=1 // pred_check_branch
      %213 = sbr.rel (0) target = $region149
    $region148: #{mobilenet_small_forward.1} parent=1 // pred_region
      _
    $region149: #{mobilenet_small_forward.1} parent=1 // pred_fallthru
      _
    // Predicated region
    $region150: #{mobilenet_small_forward.1} parent=1 // pred_check
      _
    $region151: #{mobilenet_small_forward.1} parent=1 // pred_check_branch
      %215 = sbr.rel (0) target = $region153
    $region152: #{mobilenet_small_forward.1} parent=1 // pred_region
      _
    $region153: #{mobilenet_small_forward.1} parent=1 // pred_fallthru
      _
    // Predicated region
    $region154: #{mobilenet_small_forward.1} parent=1 // pred_check
      _
    $region155: #{mobilenet_small_forward.1} parent=1 // pred_check_branch
      %217 = sbr.rel (0) target = $region157
    $region156: #{mobilenet_small_forward.1} parent=1 // pred_region
      _
    $region157: #{mobilenet_small_forward.1} parent=1 // pred_fallthru
      _
    // Predicated region
    $region158: #{mobilenet_small_forward.1} parent=1 // pred_check
      _
    $region159: #{mobilenet_small_forward.1} parent=1 // pred_check_branch
      %219 = sbr.rel (0) target = $region161
    $region160: #{mobilenet_small_forward.1} parent=1 // pred_region
      _
    $region161: #{mobilenet_small_forward.1} parent=1 // pred_fallthru
      _
    // Predicated region
    $region162: #{mobilenet_small_forward.1} parent=1 // pred_check
      _
    $region163: #{mobilenet_small_forward.1} parent=1 // pred_check_branch
      %221 = sbr.rel (0) target = $region165
    $region164: #{mobilenet_small_forward.1} parent=1 // pred_region
      _
    $region165: #{mobilenet_small_forward.1} parent=1 // pred_fallthru
      _
    // Predicated region
    $region166: #{mobilenet_small_forward.1} parent=1 // pred_check
      _
    $region167: #{mobilenet_small_forward.1} parent=1 // pred_check_branch
      %223 = sbr.rel (0) target = $region169
    $region168: #{mobilenet_small_forward.1} parent=1 // pred_region
      _
    $region169: #{mobilenet_small_forward.1} parent=1 // pred_fallthru
      _
    // Predicated region
    $region170: #{mobilenet_small_forward.1} parent=1 // pred_check
      _
    $region171: #{mobilenet_small_forward.1} parent=1 // pred_check_branch
      %225 = sbr.rel (0) target = $region173
    $region172: #{mobilenet_small_forward.1} parent=1 // pred_region
      _
    $region173: #{mobilenet_small_forward.1} parent=1 // pred_fallthru
      _
    // Predicated region
    $region174: #{mobilenet_small_forward.1} parent=1 // pred_check
      _
    $region175: #{mobilenet_small_forward.1} parent=1 // pred_check_branch
      %227 = sbr.rel (0) target = $region177
    $region176: #{mobilenet_small_forward.1} parent=1 // pred_region
      _
    $region177: #{mobilenet_small_forward.1} parent=1 // pred_fallthru
      _
    // Predicated region
    $region178: #{mobilenet_small_forward.1} parent=1 // pred_check
      _
    $region179: #{mobilenet_small_forward.1} parent=1 // pred_check_branch
      %229 = sbr.rel (0) target = $region181
    $region180: #{mobilenet_small_forward.1} parent=1 // pred_region
      _
    $region181: #{mobilenet_small_forward.1} parent=1 // pred_fallthru
      _
    // Predicated region
    $region182: #{mobilenet_small_forward.1} parent=1 // pred_check
      _
    $region183: #{mobilenet_small_forward.1} parent=1 // pred_check_branch
      %231 = sbr.rel (0) target = $region185
    $region184: #{mobilenet_small_forward.1} parent=1 // pred_region
      _
    $region185: #{mobilenet_small_forward.1} parent=1 // pred_fallthru
      _
    // Predicated region
    $region186: #{mobilenet_small_forward.1} parent=1 // pred_check
      _
    $region187: #{mobilenet_small_forward.1} parent=1 // pred_check_branch
      %233 = sbr.rel (0) target = $region189
    $region188: #{mobilenet_small_forward.1} parent=1 // pred_region
      _
    $region189: #{mobilenet_small_forward.1} parent=1 // pred_fallthru
      _
    // Predicated region
    $region190: #{mobilenet_small_forward.1} parent=1 // pred_check
      _
    $region191: #{mobilenet_small_forward.1} parent=1 // pred_check_branch
      %235 = sbr.rel (0) target = $region193
    $region192: #{mobilenet_small_forward.1} parent=1 // pred_region
      _
    $region193: #{mobilenet_small_forward.1} parent=1 // pred_fallthru
      _
    // Predicated region
    $region194: #{mobilenet_small_forward.1} parent=1 // pred_check
      _
    $region195: #{mobilenet_small_forward.1} parent=1 // pred_check_branch
      %237 = sbr.rel (0) target = $region197
    $region196: #{mobilenet_small_forward.1} parent=1 // pred_region
      _
    $region197: #{mobilenet_small_forward.1} parent=1 // pred_fallthru
      _
    // Predicated region
    $region198: #{mobilenet_small_forward.1} parent=1 // pred_check
      _
    $region199: #{mobilenet_small_forward.1} parent=1 // pred_check_branch
      %239 = sbr.rel (0) target = $region201
    $region200: #{mobilenet_small_forward.1} parent=1 // pred_region
      _
    $region201: #{mobilenet_small_forward.1} parent=1 // pred_fallthru
      _
    // Predicated region
    $region202: #{mobilenet_small_forward.1} parent=1 // pred_check
      _
    $region203: #{mobilenet_small_forward.1} parent=1 // pred_check_branch
      %241 = sbr.rel (0) target = $region205
    $region204: #{mobilenet_small_forward.1} parent=1 // pred_region
      _
    $region205: #{mobilenet_small_forward.1} parent=1 // pred_fallthru
      _
    // Predicated region
    $region206: #{mobilenet_small_forward.1} parent=1 // pred_check
      _
    $region207: #{mobilenet_small_forward.1} parent=1 // pred_check_branch
      %243 = sbr.rel (0) target = $region209
    $region208: #{mobilenet_small_forward.1} parent=1 // pred_region
      _
    $region209: #{mobilenet_small_forward.1} parent=1 // pred_fallthru
      _
    // Predicated region
    $region210: #{mobilenet_small_forward.1} parent=1 // pred_check
      _
    $region211: #{mobilenet_small_forward.1} parent=1 // pred_check_branch
      %245 = sbr.rel (0) target = $region213
    $region212: #{mobilenet_small_forward.1} parent=1 // pred_region
      _
    $region213: #{mobilenet_small_forward.1} parent=1 // pred_fallthru
      _
    // Predicated region
    $region214: #{mobilenet_small_forward.1} parent=1 // pred_check
      _
    $region215: #{mobilenet_small_forward.1} parent=1 // pred_check_branch
      %247 = sbr.rel (0) target = $region217
    $region216: #{mobilenet_small_forward.1} parent=1 // pred_region
      _
    $region217: #{mobilenet_small_forward.1} parent=1 // pred_fallthru
      _
    // Predicated region
    $region218: #{mobilenet_small_forward.1} parent=1 // pred_check
      _
    $region219: #{mobilenet_small_forward.1} parent=1 // pred_check_branch
      %249 = sbr.rel (0) target = $region221
    $region220: #{mobilenet_small_forward.1} parent=1 // pred_region
      _
    $region221: #{mobilenet_small_forward.1} parent=1 // pred_fallthru
      _
    // Predicated region
    $region222: #{mobilenet_small_forward.1} parent=1 // pred_check
      _
    $region223: #{mobilenet_small_forward.1} parent=1 // pred_check_branch
      %251 = sbr.rel (0) target = $region225
    $region224: #{mobilenet_small_forward.1} parent=1 // pred_region
      _
    $region225: #{mobilenet_small_forward.1} parent=1 // pred_fallthru
      _
    // Predicated region
    $region226: #{mobilenet_small_forward.1} parent=1 // pred_check
      _
    $region227: #{mobilenet_small_forward.1} parent=1 // pred_check_branch
      %253 = sbr.rel (0) target = $region229
    $region228: #{mobilenet_small_forward.1} parent=1 // pred_region
      _
    $region229: #{mobilenet_small_forward.1} parent=1 // pred_fallthru
      _
    // Predicated region
    $region230: #{mobilenet_small_forward.1} parent=1 // pred_check
      _
    $region231: #{mobilenet_small_forward.1} parent=1 // pred_check_branch
      %255 = sbr.rel (0) target = $region233
    $region232: #{mobilenet_small_forward.1} parent=1 // pred_region
      _
    $region233: #{mobilenet_small_forward.1} parent=1 // pred_fallthru
      _
    // Predicated region
    $region234: #{mobilenet_small_forward.1} parent=1 // pred_check
      _
    $region235: #{mobilenet_small_forward.1} parent=1 // pred_check_branch
      %257 = sbr.rel (0) target = $region237
    $region236: #{mobilenet_small_forward.1} parent=1 // pred_region
      _
    $region237: #{mobilenet_small_forward.1} parent=1 // pred_fallthru
      _
    // Predicated region
    $region238: #{mobilenet_small_forward.1} parent=1 // pred_check
      _
    $region239: #{mobilenet_small_forward.1} parent=1 // pred_check_branch
      %259 = sbr.rel (0) target = $region241
    $region240: #{mobilenet_small_forward.1} parent=1 // pred_region
      %260 = dma.done [#allocation3], 16
    $region241: #{mobilenet_small_forward.1} parent=1 // pred_fallthru
      _
    %v262 = vld [vmem:[%s3] sm:$0xff]
    %v263 = vld [vmem:[%s3 + $0x8] sm:$0xff]
    %v264 = vld [vmem:[%s3 + $0x10] sm:$0xff]
    %v265 = vld [vmem:[%s3 + $0x18] sm:$0xff]
    %v266 = vld [vmem:[%s3 + $0x20] sm:$0xff]
    %v267 = vld [vmem:[%s3 + $0x28] sm:$0xff]
    %v268 = vld [vmem:[%s3 + $0x30] sm:$0xff]
    %v269 = vld [vmem:[%s3 + $0x38] sm:$0xff]
    %v270 = vld [vmem:[%s3 + $0x40] sm:$0xff]
    %v271 = vld [vmem:[%s3 + $0x48] sm:$0xff]
    %v272 = vld [vmem:[%s3 + $0x50] sm:$0xff]
    %v273 = vld [vmem:[%s3 + $0x58] sm:$0xff]
    %v274 = vld [vmem:[%s3 + $0x60] sm:$0xff]
    %v275 = vld [vmem:[%s3 + $0x68] sm:$0xff]
    %v276 = vld [vmem:[%s3 + $0x70] sm:$0xff]
    %v277 = vld [vmem:[%s3 + $0x78] sm:$0xff]
    %v278 = vpack.c.bf16 %v263, %v262
    %v279 = vpack.c.bf16 %v265, %v264
    %v280 = vpack.c.bf16 %v267, %v266
    %v281 = vpack.c.bf16 %v269, %v268
    %v282 = vpack.c.bf16 %v271, %v270
    %v283 = vpack.c.bf16 %v273, %v272
    %v284 = vpack.c.bf16 %v275, %v274
    %v285 = vpack.c.bf16 %v277, %v276
    %v286 = vld [vmem:[%s5] sm:$0xf]
    %v287 = vld [vmem:[%s5 + $0x4] sm:$0xf]
    %v288 = vld [vmem:[%s5 + $0x8] sm:$0xf]
    %v289 = vld [vmem:[%s5 + $0xc] sm:$0xf]
    %v290 = vld [vmem:[%s1] ss:$0 sm:$0xff]
    %v295 = vunpack.c.l.b16 %v286
    %v296 = vunpack.c.l.b16 %v287
    %v297 = vunpack.c.l.b16 %v288
    %v298 = vunpack.c.l.b16 %v289
    %v299 = vpack.c.b16 %v296, %v295
    %v300 = vpack.c.b16 %v298, %v297
    %vm303 = vcmask 261120
    %v305 = vsel %vm303, %v278, 0
    %v308 = vsel %vm303, %v279, 0
    %v311 = vsel %vm303, %v280, 0
    %v314 = vsel %vm303, %v281, 0
    %v317 = vsel %vm303, %v282, 0
    %v320 = vsel %vm303, %v283, 0
    %v323 = vsel %vm303, %v284, 0
    %v326 = vsel %vm303, %v285, 0
    %328 = vmatprep.subr.bf16.mxu0 0
    %329 = vmatpush1.bf16.msra.mxu0 %v299
    %330 = vmatprep.subr.bf16.mxu0 0
    %331 = vmatpush1.bf16.msra.mxu0 %v300
    %332 = vmatprep.subr.bf16.mxu0 0
    %333 = vmatpush1.bf16.msra.mxu0 0
    %334 = vmatprep.subr.bf16.mxu0 0
    %335 = vmatpush1.bf16.msra.mxu0 0
    %336 = vmatprep.subr.bf16.mxu0 0
    %337 = vmatpush1.bf16.msra.mxu0 0
    %338 = vmatprep.subr.bf16.mxu0 0
    %339 = vmatpush1.bf16.msra.mxu0 0
    %340 = vmatprep.subr.bf16.mxu0 0
    %341 = vmatpush1.bf16.msra.mxu0 0
    %342 = vmatprep.subr.bf16.mxu0 0
    %343 = vmatpush1.bf16.msra.mxu0 0
    %344 = vmatprep.subr.bf16.mxu0 0
    %345 = vmatpush1.bf16.msra.mxu0 0
    %346 = vmatprep.subr.bf16.mxu0 0
    %347 = vmatpush1.bf16.msra.mxu0 0
    %348 = vmatprep.subr.bf16.mxu0 0
    %349 = vmatpush1.bf16.msra.mxu0 0
    %350 = vmatprep.subr.bf16.mxu0 0
    %351 = vmatpush1.bf16.msra.mxu0 0
    %352 = vmatprep.subr.bf16.mxu0 0
    %353 = vmatpush1.bf16.msra.mxu0 0
    %354 = vmatprep.subr.bf16.mxu0 0
    %355 = vmatpush1.bf16.msra.mxu0 0
    %356 = vmatprep.subr.bf16.mxu0 0
    %357 = vmatpush1.bf16.msra.mxu0 0
    %358 = vmatprep.subr.bf16.mxu0 0
    %359 = vmatpush1.bf16.msra.mxu0 0
    %360 = vmatprep.mubr.bf16.mxu0 0
    %361 = vmatmul.mubr.bf16.gmra.mrb[0].mxu0 %v305
    %v362 = vpop.f32.mrb[0].mxu0
    %v363 = vadd.f32 %v290, %v362
    %v364 = vpop.f32.mrb[0].mxu0
    %v365 = vpop.f32.mrb[0].mxu0
    %v366 = vadd.f32 %v290, %v365
    %v367 = vpop.f32.mrb[0].mxu0
    %368 = vmatprep.mubr.bf16.mxu0 0
    %369 = vmatmul.mubr.bf16.gmra.mrb[0].mxu0 %v308
    %v370 = vpop.f32.mrb[0].mxu0
    %v371 = vadd.f32 %v290, %v370
    %v372 = vpop.f32.mrb[0].mxu0
    %v373 = vpop.f32.mrb[0].mxu0
    %v374 = vadd.f32 %v290, %v373
    %v375 = vpop.f32.mrb[0].mxu0
    %376 = vmatprep.mubr.bf16.mxu0 0
    %377 = vmatmul.mubr.bf16.gmra.mrb[0].mxu0 %v311
    %v378 = vpop.f32.mrb[0].mxu0
    %v379 = vadd.f32 %v290, %v378
    %v380 = vpop.f32.mrb[0].mxu0
    %v381 = vpop.f32.mrb[0].mxu0
    %v382 = vadd.f32 %v290, %v381
    %v383 = vpop.f32.mrb[0].mxu0
    %384 = vmatprep.mubr.bf16.mxu0 0
    %385 = vmatmul.mubr.bf16.gmra.mrb[0].mxu0 %v314
    %v386 = vpop.f32.mrb[0].mxu0
    %v387 = vadd.f32 %v290, %v386
    %v388 = vpop.f32.mrb[0].mxu0
    %v389 = vpop.f32.mrb[0].mxu0
    %v390 = vadd.f32 %v290, %v389
    %v391 = vpop.f32.mrb[0].mxu0
    %392 = vmatprep.mubr.bf16.mxu0 0
    %393 = vmatmul.mubr.bf16.gmra.mrb[0].mxu0 %v317
    %v394 = vpop.f32.mrb[0].mxu0
    %v395 = vadd.f32 %v290, %v394
    %v396 = vpop.f32.mrb[0].mxu0
    %v397 = vpop.f32.mrb[0].mxu0
    %v398 = vadd.f32 %v290, %v397
    %v399 = vpop.f32.mrb[0].mxu0
    %400 = vmatprep.mubr.bf16.mxu0 0
    %401 = vmatmul.mubr.bf16.gmra.mrb[0].mxu0 %v320
    %v402 = vpop.f32.mrb[0].mxu0
    %v403 = vadd.f32 %v290, %v402
    %v404 = vpop.f32.mrb[0].mxu0
    %v405 = vpop.f32.mrb[0].mxu0
    %v406 = vadd.f32 %v290, %v405
    %v407 = vpop.f32.mrb[0].mxu0
    %408 = vmatprep.mubr.bf16.mxu0 0
    %409 = vmatmul.mubr.bf16.gmra.mrb[0].mxu0 %v323
    %v410 = vpop.f32.mrb[0].mxu0
    %v411 = vadd.f32 %v290, %v410
    %v412 = vpop.f32.mrb[0].mxu0
    %v413 = vpop.f32.mrb[0].mxu0
    %v414 = vadd.f32 %v290, %v413
    %v415 = vpop.f32.mrb[0].mxu0
    %416 = vmatprep.mubr.bf16.mxu0 0
    %417 = vmatmul.mubr.bf16.gmra.mrb[0].mxu0 %v326
    %v418 = vpop.f32.mrb[0].mxu0
    %v419 = vadd.f32 %v290, %v418
    %v420 = vpop.f32.mrb[0].mxu0
    %v421 = vpop.f32.mrb[0].mxu0
    %v422 = vadd.f32 %v290, %v421
    %v423 = vpop.f32.mrb[0].mxu0
    %424 = vdwg.mxu0
    %v425 = vadd.f32 %v363, 3.0
    %v426 = vadd.f32 %v366, 3.0
    %v427 = vadd.f32 %v371, 3.0
    %v428 = vadd.f32 %v374, 3.0
    %v429 = vadd.f32 %v379, 3.0
    %v430 = vadd.f32 %v382, 3.0
    %v431 = vadd.f32 %v387, 3.0
    %v432 = vadd.f32 %v390, 3.0
    %v433 = vadd.f32 %v395, 3.0
    %v434 = vadd.f32 %v398, 3.0
    %v435 = vadd.f32 %v403, 3.0
    %v436 = vadd.f32 %v406, 3.0
    %v437 = vadd.f32 %v411, 3.0
    %v438 = vadd.f32 %v414, 3.0
    %v439 = vadd.f32 %v419, 3.0
    %v440 = vadd.f32 %v422, 3.0
    %v441 = vmax.f32 %v425, 0.0
    %v442 = vmax.f32 %v426, 0.0
    %v443 = vmax.f32 %v427, 0.0
    %v444 = vmax.f32 %v428, 0.0
    %v445 = vmax.f32 %v429, 0.0
    %v446 = vmax.f32 %v430, 0.0
    %v447 = vmax.f32 %v431, 0.0
    %v448 = vmax.f32 %v432, 0.0
    %v449 = vmax.f32 %v433, 0.0
    %v450 = vmax.f32 %v434, 0.0
    %v451 = vmax.f32 %v435, 0.0
    %v452 = vmax.f32 %v436, 0.0
    %v453 = vmax.f32 %v437, 0.0
    %v454 = vmax.f32 %v438, 0.0
    %v455 = vmax.f32 %v439, 0.0
    %v456 = vmax.f32 %v440, 0.0
    %v457 = vmin.f32 %v441, 6.0
    %v458 = vmin.f32 %v442, 6.0
    %v459 = vmin.f32 %v443, 6.0
    %v460 = vmin.f32 %v444, 6.0
    %v461 = vmin.f32 %v445, 6.0
    %v462 = vmin.f32 %v446, 6.0
    %v463 = vmin.f32 %v447, 6.0
    %v464 = vmin.f32 %v448, 6.0
    %v465 = vmin.f32 %v449, 6.0
    %v466 = vmin.f32 %v450, 6.0
    %v467 = vmin.f32 %v451, 6.0
    %v468 = vmin.f32 %v452, 6.0
    %v469 = vmin.f32 %v453, 6.0
    %v470 = vmin.f32 %v454, 6.0
    %v471 = vmin.f32 %v455, 6.0
    %v472 = vmin.f32 %v456, 6.0
    %v473 = vmul.f32 %v457, 0.16666667
    %v474 = vmul.f32 %v458, 0.16666667
    %v475 = vmul.f32 %v459, 0.16666667
    %v476 = vmul.f32 %v460, 0.16666667
    %v477 = vmul.f32 %v461, 0.16666667
    %v478 = vmul.f32 %v462, 0.16666667
    %v479 = vmul.f32 %v463, 0.16666667
    %v480 = vmul.f32 %v464, 0.16666667
    %v481 = vmul.f32 %v465, 0.16666667
    %v482 = vmul.f32 %v466, 0.16666667
    %v483 = vmul.f32 %v467, 0.16666667
    %v484 = vmul.f32 %v468, 0.16666667
    %v485 = vmul.f32 %v469, 0.16666667
    %v486 = vmul.f32 %v470, 0.16666667
    %v487 = vmul.f32 %v471, 0.16666667
    %v488 = vmul.f32 %v472, 0.16666667
    %v489 = vmul.f32 %v363, %v473
    %v490 = vmul.f32 %v366, %v474
    %v491 = vmul.f32 %v371, %v475
    %v492 = vmul.f32 %v374, %v476
    %v493 = vmul.f32 %v379, %v477
    %v494 = vmul.f32 %v382, %v478
    %v495 = vmul.f32 %v387, %v479
    %v496 = vmul.f32 %v390, %v480
    %v497 = vmul.f32 %v395, %v481
    %v498 = vmul.f32 %v398, %v482
    %v499 = vmul.f32 %v403, %v483
    %v500 = vmul.f32 %v406, %v484
    %v501 = vmul.f32 %v411, %v485
    %v502 = vmul.f32 %v414, %v486
    %v503 = vmul.f32 %v419, %v487
    %v504 = vmul.f32 %v422, %v488
    %v505 = vld [vmem:[%s7] sm:$0xff]
    %v506 = vld [vmem:[%s7 + $0x8] sm:$0x1]
    %v507 = vld [vmem:[%s9] sm:$0xf]
    %v508 = vld [vmem:[%s9 + $0x4] sm:$0xf]
    %v509 = vld [vmem:[%s9 + $0x8] sm:$0xf]
    %v510 = vld [vmem:[%s9 + $0xc] sm:$0xf]
    %v511 = vld [vmem:[%s9 + $0x10] sm:$0xf]
    %v512 = vld [vmem:[%s9 + $0x14] sm:$0xf]
    %v513 = vld [vmem:[%s9 + $0x18] sm:$0xf]
    %v514 = vld [vmem:[%s9 + $0x1c] sm:$0xf]
    %v515 = vld [vmem:[%s9 + $0x20] sm:$0xf]
    %v516 = vld [vmem:[%s9 + $0x24] sm:$0xf]
    %v517 = vld [vmem:[%s9 + $0x28] sm:$0xf]
    %v518 = vld [vmem:[%s9 + $0x2c] sm:$0xf]
    %v519 = vld [vmem:[%s9 + $0x30] sm:$0xf]
    %v520 = vld [vmem:[%s9 + $0x34] sm:$0xf]
    %v521 = vld [vmem:[%s9 + $0x38] sm:$0xf]
    %v522 = vld [vmem:[%s9 + $0x3c] sm:$0xf]
    %v523 = vld [vmem:[%s9 + $0x40] sm:$0xf]
    %v524 = vld [vmem:[%s9 + $0x44] sm:$0xf]
    %v525 = vld [vmem:[%s9 + $0x48] sm:$0xf]
    %v526 = vld [vmem:[%s9 + $0x4c] sm:$0xf]
    %v527 = vld [vmem:[%s9 + $0x50] sm:$0xf]
    %v528 = vld [vmem:[%s9 + $0x54] sm:$0xf]
    %v529 = vld [vmem:[%s9 + $0x58] sm:$0xf]
    %v530 = vld [vmem:[%s9 + $0x5c] sm:$0xf]
    %v531 = vld [vmem:[%s9 + $0x60] sm:$0xf]
    %v532 = vld [vmem:[%s9 + $0x64] sm:$0xf]
    %v533 = vld [vmem:[%s9 + $0x68] sm:$0xf]
    %v534 = vld [vmem:[%s9 + $0x6c] sm:$0xf]
    %v535 = vld [vmem:[%s9 + $0x70] sm:$0xf]
    %v536 = vld [vmem:[%s9 + $0x74] sm:$0xf]
    %v537 = vld [vmem:[%s9 + $0x78] sm:$0xf]
    %v538 = vld [vmem:[%s9 + $0x7c] sm:$0xf]
    %v539 = vld [vmem:[%s9 + $0x80] sm:$0xf]
    %v540 = vld [vmem:[%s9 + $0x84] sm:$0xf]
    %v541 = vld [vmem:[%s9 + $0x88] sm:$0xf]
    %v542 = vld [vmem:[%s9 + $0x8c] sm:$0xf]
    %v543 = vpack.c.bf16 %v490, %v489
    %v544 = vpack.c.bf16 %v492, %v491
    %v545 = vpack.c.bf16 %v494, %v493
    %v546 = vpack.c.bf16 %v496, %v495
    %v547 = vpack.c.bf16 %v498, %v497
    %v548 = vpack.c.bf16 %v500, %v499
    %v549 = vpack.c.bf16 %v502, %v501
    %v550 = vpack.c.bf16 %v504, %v503
    %v587 = vunpack.c.l.b16 %v507
    %v588 = vunpack.c.l.b16 %v508
    %v589 = vunpack.c.l.b16 %v509
    %v590 = vunpack.c.l.b16 %v510
    %v591 = vunpack.c.l.b16 %v511
    %v592 = vunpack.c.l.b16 %v512
    %v593 = vunpack.c.l.b16 %v513
    %v594 = vunpack.c.l.b16 %v514
    %v595 = vunpack.c.l.b16 %v515
    %v596 = vunpack.c.l.b16 %v516
    %v597 = vunpack.c.l.b16 %v517
    %v598 = vunpack.c.l.b16 %v518
    %v599 = vunpack.c.l.b16 %v519
    %v600 = vunpack.c.l.b16 %v520
    %v601 = vunpack.c.l.b16 %v521
    %v602 = vunpack.c.l.b16 %v522
    %v603 = vunpack.c.l.b16 %v523
    %v604 = vunpack.c.l.b16 %v524
    %v605 = vunpack.c.l.b16 %v525
    %v606 = vunpack.c.l.b16 %v526
    %v607 = vunpack.c.l.b16 %v527
    %v608 = vunpack.c.l.b16 %v528
    %v609 = vunpack.c.l.b16 %v529
    %v610 = vunpack.c.l.b16 %v530
    %v611 = vunpack.c.l.b16 %v531
    %v612 = vunpack.c.l.b16 %v532
    %v613 = vunpack.c.l.b16 %v533
    %v614 = vunpack.c.l.b16 %v534
    %v615 = vunpack.c.l.b16 %v535
    %v616 = vunpack.c.l.b16 %v536
    %v617 = vunpack.c.l.b16 %v537
    %v618 = vunpack.c.l.b16 %v538
    %v619 = vunpack.c.l.b16 %v539
    %v620 = vunpack.c.l.b16 %v540
    %v621 = vunpack.c.l.b16 %v541
    %v622 = vunpack.c.l.b16 %v542
    %v623 = vpack.c.b16 %v588, %v587
    %v624 = vpack.c.b16 %v590, %v589
    %v625 = vpack.c.b16 %v592, %v591
    %v626 = vpack.c.b16 %v594, %v593
    %v627 = vpack.c.b16 %v596, %v595
    %v628 = vpack.c.b16 %v598, %v597
    %v629 = vpack.c.b16 %v600, %v599
    %v630 = vpack.c.b16 %v602, %v601
    %v631 = vpack.c.b16 %v604, %v603
    %v632 = vpack.c.b16 %v606, %v605
    %v633 = vpack.c.b16 %v608, %v607
    %v634 = vpack.c.b16 %v610, %v609
    %v635 = vpack.c.b16 %v612, %v611
    %v636 = vpack.c.b16 %v614, %v613
    %v637 = vpack.c.b16 %v616, %v615
    %v638 = vpack.c.b16 %v618, %v617
    %v639 = vpack.c.b16 %v620, %v619
    %v640 = vpack.c.b16 %v622, %v621
    %659 = vmatprep.subr.bf16.mxu0 0
    %660 = vmatpush1.bf16.msra.mxu0 %v543
    %661 = vmatprep.subr.bf16.mxu0 0
    %662 = vmatpush1.bf16.msra.mxu0 %v544
    %663 = vmatprep.subr.bf16.mxu0 0
    %664 = vmatpush1.bf16.msra.mxu0 %v545
    %665 = vmatprep.subr.bf16.mxu0 0
    %666 = vmatpush1.bf16.msra.mxu0 %v546
    %667 = vmatprep.subr.bf16.mxu0 0
    %668 = vmatpush1.bf16.msra.mxu0 %v547
    %669 = vmatprep.subr.bf16.mxu0 0
    %670 = vmatpush1.bf16.msra.mxu0 %v548
    %671 = vmatprep.subr.bf16.mxu0 0
    %672 = vmatpush1.bf16.msra.mxu0 %v549
    %673 = vmatprep.subr.bf16.mxu0 0
    %674 = vmatpush1.bf16.msra.mxu0 %v550
    %675 = vmatprep.subr.bf16.mxu0 0
    %676 = vmatpush1.bf16.msra.mxu0 0
    %677 = vmatprep.subr.bf16.mxu0 0
    %678 = vmatpush1.bf16.msra.mxu0 0
    %679 = vmatprep.subr.bf16.mxu0 0
    %680 = vmatpush1.bf16.msra.mxu0 0
    %681 = vmatprep.subr.bf16.mxu0 0
    %682 = vmatpush1.bf16.msra.mxu0 0
    %683 = vmatprep.subr.bf16.mxu0 0
    %684 = vmatpush1.bf16.msra.mxu0 0
    %685 = vmatprep.subr.bf16.mxu0 0
    %686 = vmatpush1.bf16.msra.mxu0 0
    %687 = vmatprep.subr.bf16.mxu0 0
    %688 = vmatpush1.bf16.msra.mxu0 0
    %689 = vmatprep.subr.bf16.mxu0 0
    %690 = vmatpush1.bf16.msra.mxu0 0
    %691 = vmatprep.mubr.bf16.mxu0 0
    %692 = vmatmul.mubr.bf16.gmra.mrb[0].mxu0 %v623
    %v693 = vpop.f32.mrb[0].mxu0
    %v694 = vadd.f32 0.0, %v693
    %v695 = vpop.f32.mrb[0].mxu0
    %v696 = vpop.f32.mrb[0].mxu0
    %v697 = vadd.f32 0.0, %v696
    %v698 = vpop.f32.mrb[0].mxu0
    %699 = vmatprep.mubr.bf16.mxu0 0
    %700 = vmatmul.mubr.bf16.gmra.mrb[0].mxu0 %v624
    %v701 = vpop.f32.mrb[0].mxu0
    %v702 = vadd.f32 0.0, %v701
    %v703 = vpop.f32.mrb[0].mxu0
    %v704 = vpop.f32.mrb[0].mxu0
    %v705 = vadd.f32 0.0, %v704
    %v706 = vpop.f32.mrb[0].mxu0
    %707 = vmatprep.mubr.bf16.mxu0 0
    %708 = vmatmul.mubr.bf16.gmra.mrb[0].mxu0 %v625
    %v709 = vpop.f32.mrb[0].mxu0
    %v710 = vadd.f32 0.0, %v709
    %v711 = vpop.f32.mrb[0].mxu0
    %v712 = vpop.f32.mrb[0].mxu0
    %v713 = vadd.f32 0.0, %v712
    %v714 = vpop.f32.mrb[0].mxu0
    %715 = vmatprep.mubr.bf16.mxu0 0
    %716 = vmatmul.mubr.bf16.gmra.mrb[0].mxu0 %v626
    %v717 = vpop.f32.mrb[0].mxu0
    %v718 = vadd.f32 0.0, %v717
    %v719 = vpop.f32.mrb[0].mxu0
    %v720 = vpop.f32.mrb[0].mxu0
    %v721 = vadd.f32 0.0, %v720
    %v722 = vpop.f32.mrb[0].mxu0
    %723 = vmatprep.mubr.bf16.mxu0 0
    %724 = vmatmul.mubr.bf16.gmra.mrb[0].mxu0 %v627
    %v725 = vpop.f32.mrb[0].mxu0
    %v726 = vadd.f32 0.0, %v725
    %v727 = vpop.f32.mrb[0].mxu0
    %v728 = vpop.f32.mrb[0].mxu0
    %v729 = vadd.f32 0.0, %v728
    %v730 = vpop.f32.mrb[0].mxu0
    %731 = vmatprep.mubr.bf16.mxu0 0
    %732 = vmatmul.mubr.bf16.gmra.mrb[0].mxu0 %v628
    %v733 = vpop.f32.mrb[0].mxu0
    %v734 = vadd.f32 0.0, %v733
    %v735 = vpop.f32.mrb[0].mxu0
    %v736 = vpop.f32.mrb[0].mxu0
    %v737 = vadd.f32 0.0, %v736
    %v738 = vpop.f32.mrb[0].mxu0
    %739 = vmatprep.mubr.bf16.mxu0 0
    %740 = vmatmul.mubr.bf16.gmra.mrb[0].mxu0 %v629
    %v741 = vpop.f32.mrb[0].mxu0
    %v742 = vadd.f32 0.0, %v741
    %v743 = vpop.f32.mrb[0].mxu0
    %v744 = vpop.f32.mrb[0].mxu0
    %v745 = vadd.f32 0.0, %v744
    %v746 = vpop.f32.mrb[0].mxu0
    %747 = vmatprep.mubr.bf16.mxu0 0
    %748 = vmatmul.mubr.bf16.gmra.mrb[0].mxu0 %v630
    %v749 = vpop.f32.mrb[0].mxu0
    %v750 = vadd.f32 0.0, %v749
    %v751 = vpop.f32.mrb[0].mxu0
    %v752 = vpop.f32.mrb[0].mxu0
    %v753 = vadd.f32 0.0, %v752
    %v754 = vpop.f32.mrb[0].mxu0
    %755 = vmatprep.mubr.bf16.mxu0 0
    %756 = vmatmul.mubr.bf16.gmra.mrb[0].mxu0 %v631
    %v757 = vpop.f32.mrb[0].mxu0
    %v758 = vadd.f32 0.0, %v757
    %v759 = vpop.f32.mrb[0].mxu0
    %v760 = vpop.f32.mrb[0].mxu0
    %v761 = vadd.f32 0.0, %v760
    %v762 = vpop.f32.mrb[0].mxu0
    %763 = vmatprep.mubr.bf16.mxu0 0
    %764 = vmatmul.mubr.bf16.gmra.mrb[0].mxu0 %v632
    %v765 = vpop.f32.mrb[0].mxu0
    %v766 = vadd.f32 0.0, %v765
    %v767 = vpop.f32.mrb[0].mxu0
    %v768 = vpop.f32.mrb[0].mxu0
    %v769 = vadd.f32 0.0, %v768
    %v770 = vpop.f32.mrb[0].mxu0
    %771 = vmatprep.mubr.bf16.mxu0 0
    %772 = vmatmul.mubr.bf16.gmra.mrb[0].mxu0 %v633
    %v773 = vpop.f32.mrb[0].mxu0
    %v774 = vadd.f32 0.0, %v773
    %v775 = vpop.f32.mrb[0].mxu0
    %v776 = vpop.f32.mrb[0].mxu0
    %v777 = vadd.f32 0.0, %v776
    %v778 = vpop.f32.mrb[0].mxu0
    %779 = vmatprep.mubr.bf16.mxu0 0
    %780 = vmatmul.mubr.bf16.gmra.mrb[0].mxu0 %v634
    %v781 = vpop.f32.mrb[0].mxu0
    %v782 = vadd.f32 0.0, %v781
    %v783 = vpop.f32.mrb[0].mxu0
    %v784 = vpop.f32.mrb[0].mxu0
    %v785 = vadd.f32 0.0, %v784
    %v786 = vpop.f32.mrb[0].mxu0
    %787 = vmatprep.mubr.bf16.mxu0 0
    %788 = vmatmul.mubr.bf16.gmra.mrb[0].mxu0 %v635
    %v789 = vpop.f32.mrb[0].mxu0
    %v790 = vadd.f32 0.0, %v789
    %v791 = vpop.f32.mrb[0].mxu0
    %v792 = vpop.f32.mrb[0].mxu0
    %v793 = vadd.f32 0.0, %v792
    %v794 = vpop.f32.mrb[0].mxu0
    %795 = vmatprep.mubr.bf16.mxu0 0
    %796 = vmatmul.mubr.bf16.gmra.mrb[0].mxu0 %v636
    %v797 = vpop.f32.mrb[0].mxu0
    %v798 = vadd.f32 0.0, %v797
    %v799 = vpop.f32.mrb[0].mxu0
    %v800 = vpop.f32.mrb[0].mxu0
    %v801 = vadd.f32 0.0, %v800
    %v802 = vpop.f32.mrb[0].mxu0
    %803 = vmatprep.mubr.bf16.mxu0 0
    %804 = vmatmul.mubr.bf16.gmra.mrb[0].mxu0 %v637
    %v805 = vpop.f32.mrb[0].mxu0
    %v806 = vadd.f32 0.0, %v805
    %v807 = vpop.f32.mrb[0].mxu0
    %v808 = vpop.f32.mrb[0].mxu0
    %v809 = vadd.f32 0.0, %v808
    %v810 = vpop.f32.mrb[0].mxu0
    %811 = vmatprep.mubr.bf16.mxu0 0
    %812 = vmatmul.mubr.bf16.gmra.mrb[0].mxu0 %v638
    %v813 = vpop.f32.mrb[0].mxu0
    %v814 = vadd.f32 0.0, %v813
    %v815 = vpop.f32.mrb[0].mxu0
    %v816 = vpop.f32.mrb[0].mxu0
    %v817 = vadd.f32 0.0, %v816
    %v818 = vpop.f32.mrb[0].mxu0
    %819 = vmatprep.mubr.bf16.mxu0 0
    %820 = vmatmul.mubr.bf16.gmra.mrb[0].mxu0 %v639
    %v821 = vpop.f32.mrb[0].mxu0
    %v822 = vadd.f32 0.0, %v821
    %v823 = vpop.f32.mrb[0].mxu0
    %v824 = vpop.f32.mrb[0].mxu0
    %v825 = vadd.f32 0.0, %v824
    %v826 = vpop.f32.mrb[0].mxu0
    %827 = vmatprep.mubr.bf16.mxu0 0
    %828 = vmatmul.mubr.bf16.gmra.mrb[0].mxu0 %v640
    %v829 = vpop.f32.mrb[0].mxu0
    %v830 = vadd.f32 0.0, %v829
    %v831 = vpop.f32.mrb[0].mxu0
    %v832 = vpop.f32.mrb[0].mxu0
    %v833 = vadd.f32 0.0, %v832
    %v834 = vpop.f32.mrb[0].mxu0
    %835 = vdwg.mxu0
    %v836 = vlaneseq
    %v837 = vshrl.u32 %v836, 7
    %v838 = vsub.s32 0, %v837
    %v839 = vrot.slane %v505, %v838
    %v840 = vmul.f32 %v694, %v839
    %v841 = vmul.f32 %v697, %v839
    %v842 = vmul.f32 %v702, %v839
    %v843 = vmul.f32 %v705, %v839
    %v844 = vlaneseq
    %v845 = vshrl.u32 %v844, 7
    %v846 = vsub.s32 1, %v845
    %v847 = vrot.slane %v505, %v846
    %v848 = vmul.f32 %v710, %v847
    %v849 = vmul.f32 %v713, %v847
    %v850 = vmul.f32 %v718, %v847
    %v851 = vmul.f32 %v721, %v847
    %v852 = vadd.f32 %v840, %v848
    %v853 = vadd.f32 %v841, %v849
    %v854 = vadd.f32 %v842, %v850
    %v855 = vadd.f32 %v843, %v851
    %v856 = vlaneseq
    %v857 = vshrl.u32 %v856, 7
    %v858 = vsub.s32 2, %v857
    %v859 = vrot.slane %v505, %v858
    %v860 = vmul.f32 %v726, %v859
    %v861 = vmul.f32 %v729, %v859
    %v862 = vmul.f32 %v734, %v859
    %v863 = vmul.f32 %v737, %v859
    %v864 = vadd.f32 %v852, %v860
    %v865 = vadd.f32 %v853, %v861
    %v866 = vadd.f32 %v854, %v862
    %v867 = vadd.f32 %v855, %v863
    %v868 = vlaneseq
    %v869 = vshrl.u32 %v868, 7
    %v870 = vsub.s32 3, %v869
    %v871 = vrot.slane %v505, %v870
    %v872 = vmul.f32 %v742, %v871
    %v873 = vmul.f32 %v745, %v871
    %v874 = vmul.f32 %v750, %v871
    %v875 = vmul.f32 %v753, %v871
    %v876 = vadd.f32 %v864, %v872
    %v877 = vadd.f32 %v865, %v873
    %v878 = vadd.f32 %v866, %v874
    %v879 = vadd.f32 %v867, %v875
    %v880 = vlaneseq
    %v881 = vshrl.u32 %v880, 7
    %v882 = vsub.s32 4, %v881
    %v883 = vrot.slane %v505, %v882
    %v884 = vmul.f32 %v758, %v883
    %v885 = vmul.f32 %v761, %v883
    %v886 = vmul.f32 %v766, %v883
    %v887 = vmul.f32 %v769, %v883
    %v888 = vadd.f32 %v876, %v884
    %v889 = vadd.f32 %v877, %v885
    %v890 = vadd.f32 %v878, %v886
    %v891 = vadd.f32 %v879, %v887
    %v892 = vlaneseq
    %v893 = vshrl.u32 %v892, 7
    %v894 = vsub.s32 5, %v893
    %v895 = vrot.slane %v505, %v894
    %v896 = vmul.f32 %v774, %v895
    %v897 = vmul.f32 %v777, %v895
    %v898 = vmul.f32 %v782, %v895
    %v899 = vmul.f32 %v785, %v895
    %v900 = vadd.f32 %v888, %v896
    %v901 = vadd.f32 %v889, %v897
    %v902 = vadd.f32 %v890, %v898
    %v903 = vadd.f32 %v891, %v899
    %v904 = vlaneseq
    %v905 = vshrl.u32 %v904, 7
    %v906 = vsub.s32 6, %v905
    %v907 = vrot.slane %v505, %v906
    %v908 = vmul.f32 %v790, %v907
    %v909 = vmul.f32 %v793, %v907
    %v910 = vmul.f32 %v798, %v907
    %v911 = vmul.f32 %v801, %v907
    %v912 = vadd.f32 %v900, %v908
    %v913 = vadd.f32 %v901, %v909
    %v914 = vadd.f32 %v902, %v910
    %v915 = vadd.f32 %v903, %v911
    %v916 = vlaneseq
    %v917 = vshrl.u32 %v916, 7
    %v918 = vsub.s32 7, %v917
    %v919 = vrot.slane %v505, %v918
    %v920 = vmul.f32 %v806, %v919
    %v921 = vmul.f32 %v809, %v919
    %v922 = vmul.f32 %v814, %v919
    %v923 = vmul.f32 %v817, %v919
    %v924 = vadd.f32 %v912, %v920
    %v925 = vadd.f32 %v913, %v921
    %v926 = vadd.f32 %v914, %v922
    %v927 = vadd.f32 %v915, %v923
    %v928 = vlaneseq
    %v929 = vshrl.u32 %v928, 7
    %v930 = vsub.s32 0, %v929
    %v931 = vrot.slane %v506, %v930
    %v932 = vmul.f32 %v822, %v931
    %v933 = vmul.f32 %v825, %v931
    %v934 = vmul.f32 %v830, %v931
    %v935 = vmul.f32 %v833, %v931
    %v936 = vadd.f32 %v924, %v932
    %v937 = vadd.f32 %v925, %v933
    %v938 = vadd.f32 %v926, %v934
    %v939 = vadd.f32 %v927, %v935
    %v940 = vld [vmem:[%s1 + $0x1] ss:$0 sm:$0xff]
    %v941 = vadd.f32 %v936, %v940
    %v942 = vadd.f32 %v937, %v940
    %v943 = vadd.f32 %v938, %v940
    %v944 = vadd.f32 %v939, %v940
    %v945 = vmax.f32 %v941, 0.0
    %v946 = vmax.f32 %v942, 0.0
    %v947 = vmax.f32 %v943, 0.0
    %v948 = vmax.f32 %v944, 0.0
    %v949 = vld [vmem:[#allocation2] sm:$0x1]
    %v950 = vpack.c.bf16 %v946, %v945
    %v951 = vpack.c.bf16 %v948, %v947
    %v953 = vsel %vm303, %v949, 0
    %955 = vmatprep.subr.bf16.mxu0 0
    %956 = vmatpush1.bf16.msra.mxu0 %v950
    %957 = vmatprep.subr.bf16.mxu0 0
    %958 = vmatpush1.bf16.msra.mxu0 %v951
    %959 = vmatprep.subr.bf16.mxu0 0
    %960 = vmatpush1.bf16.msra.mxu0 0
    %961 = vmatprep.subr.bf16.mxu0 0
    %962 = vmatpush1.bf16.msra.mxu0 0
    %963 = vmatprep.subr.bf16.mxu0 0
    %964 = vmatpush1.bf16.msra.mxu0 0
    %965 = vmatprep.subr.bf16.mxu0 0
    %966 = vmatpush1.bf16.msra.mxu0 0
    %967 = vmatprep.subr.bf16.mxu0 0
    %968 = vmatpush1.bf16.msra.mxu0 0
    %969 = vmatprep.subr.bf16.mxu0 0
    %970 = vmatpush1.bf16.msra.mxu0 0
    %971 = vmatprep.subr.bf16.mxu0 0
    %972 = vmatpush1.bf16.msra.mxu0 0
    %973 = vmatprep.subr.bf16.mxu0 0
    %974 = vmatpush1.bf16.msra.mxu0 0
    %975 = vmatprep.subr.bf16.mxu0 0
    %976 = vmatpush1.bf16.msra.mxu0 0
    %977 = vmatprep.subr.bf16.mxu0 0
    %978 = vmatpush1.bf16.msra.mxu0 0
    %979 = vmatprep.subr.bf16.mxu0 0
    %980 = vmatpush1.bf16.msra.mxu0 0
    %981 = vmatprep.subr.bf16.mxu0 0
    %982 = vmatpush1.bf16.msra.mxu0 0
    %983 = vmatprep.subr.bf16.mxu0 0
    %984 = vmatpush1.bf16.msra.mxu0 0
    %985 = vmatprep.subr.bf16.mxu0 0
    %986 = vmatpush1.bf16.msra.mxu0 0
    %987 = vmatprep.mubr.bf16.mxu0 0
    %988 = vmatmul.mubr.bf16.gmra.mrb[0].mxu0 %v953
    %v989 = vpop.f32.mrb[0].mxu0
    %v990 = vadd.f32 0.0, %v989
    %v991 = vpop.f32.mrb[0].mxu0
    %v992 = vpop.f32.mrb[0].mxu0
    %v993 = vpop.f32.mrb[0].mxu0
    %994 = vdwg.mxu0
    %v995 = vpack.c.bf16 %v990, %v990
    %v996 = vld [vmem:[%s13] sm:$0xf]
    %v997 = vld [vmem:[%s13 + $0x4] sm:$0xf]
    %v998 = vld [vmem:[%s1 + $0x2] ss:$0 sm:$0xff]
    %v1001 = vunpack.c.l.b16 %v996
    %v1002 = vunpack.c.l.b16 %v997
    %v1003 = vpack.c.b16 %v1002, %v1001
    %vm1005 = vcmask 130048
    %v1007 = vsel %vm1005, %v995, 0
    %1009 = vmatprep.subr.bf16.mxu0 0
    %1010 = vmatpush1.bf16.msra.mxu0 %v1003
    %1011 = vmatprep.subr.bf16.mxu0 0
    %1012 = vmatpush1.bf16.msra.mxu0 0
    %1013 = vmatprep.subr.bf16.mxu0 0
    %1014 = vmatpush1.bf16.msra.mxu0 0
    %1015 = vmatprep.subr.bf16.mxu0 0
    %1016 = vmatpush1.bf16.msra.mxu0 0
    %1017 = vmatprep.subr.bf16.mxu0 0
    %1018 = vmatpush1.bf16.msra.mxu0 0
    %1019 = vmatprep.subr.bf16.mxu0 0
    %1020 = vmatpush1.bf16.msra.mxu0 0
    %1021 = vmatprep.subr.bf16.mxu0 0
    %1022 = vmatpush1.bf16.msra.mxu0 0
    %1023 = vmatprep.subr.bf16.mxu0 0
    %1024 = vmatpush1.bf16.msra.mxu0 0
    %1025 = vmatprep.subr.bf16.mxu0 0
    %1026 = vmatpush1.bf16.msra.mxu0 0
    %1027 = vmatprep.subr.bf16.mxu0 0
    %1028 = vmatpush1.bf16.msra.mxu0 0
    %1029 = vmatprep.subr.bf16.mxu0 0
    %1030 = vmatpush1.bf16.msra.mxu0 0
    %1031 = vmatprep.subr.bf16.mxu0 0
    %1032 = vmatpush1.bf16.msra.mxu0 0
    %1033 = vmatprep.subr.bf16.mxu0 0
    %1034 = vmatpush1.bf16.msra.mxu0 0
    %1035 = vmatprep.subr.bf16.mxu0 0
    %1036 = vmatpush1.bf16.msra.mxu0 0
    %1037 = vmatprep.subr.bf16.mxu0 0
    %1038 = vmatpush1.bf16.msra.mxu0 0
    %1039 = vmatprep.subr.bf16.mxu0 0
    %1040 = vmatpush1.bf16.msra.mxu0 0
    %1041 = vmatprep.mubr.bf16.mxu0 0
    %1042 = vmatmul.mubr.bf16.gmra.mrb[0].mxu0 %v1007
    %v1043 = vpop.f32.mrb[0].mxu0
    %v1044 = vadd.f32 %v998, %v1043
    %v1045 = vpop.f32.mrb[0].mxu0
    %v1046 = vpop.f32.mrb[0].mxu0
    %v1047 = vpop.f32.mrb[0].mxu0
    %1048 = vdwg.mxu0
    %v1049 = vmax.f32 %v1044, 0.0
    %v1050 = vpack.c.bf16 %v1049, %v1049
    %v1051 = vld [vmem:[%s15] sm:$0xf]
    %v1052 = vld [vmem:[%s1 + $0x3] ss:$0 sm:$0xff]
    %vm1053 = vcmask 64512
    %v1055 = vsel %vm1053, %v1050, 0
    %vm1057 = vcmask 1043456
    %v1059 = vsel %vm1057, %v1051, 0
    %1061 = vmatprep.subr.bf16.mxu0 0
    %1062 = vmatpush1.bf16.msra.mxu0 %v1059
    %1063 = vmatprep.subr.bf16.mxu0 0
    %1064 = vmatpush1.bf16.msra.mxu0 0
    %1065 = vmatprep.subr.bf16.mxu0 0
    %1066 = vmatpush1.bf16.msra.mxu0 0
    %1067 = vmatprep.subr.bf16.mxu0 0
    %1068 = vmatpush1.bf16.msra.mxu0 0
    %1069 = vmatprep.subr.bf16.mxu0 0
    %1070 = vmatpush1.bf16.msra.mxu0 0
    %1071 = vmatprep.subr.bf16.mxu0 0
    %1072 = vmatpush1.bf16.msra.mxu0 0
    %1073 = vmatprep.subr.bf16.mxu0 0
    %1074 = vmatpush1.bf16.msra.mxu0 0
    %1075 = vmatprep.subr.bf16.mxu0 0
    %1076 = vmatpush1.bf16.msra.mxu0 0
    %1077 = vmatprep.subr.bf16.mxu0 0
    %1078 = vmatpush1.bf16.msra.mxu0 0
    %1079 = vmatprep.subr.bf16.mxu0 0
    %1080 = vmatpush1.bf16.msra.mxu0 0
    %1081 = vmatprep.subr.bf16.mxu0 0
    %1082 = vmatpush1.bf16.msra.mxu0 0
    %1083 = vmatprep.subr.bf16.mxu0 0
    %1084 = vmatpush1.bf16.msra.mxu0 0
    %1085 = vmatprep.subr.bf16.mxu0 0
    %1086 = vmatpush1.bf16.msra.mxu0 0
    %1087 = vmatprep.subr.bf16.mxu0 0
    %1088 = vmatpush1.bf16.msra.mxu0 0
    %1089 = vmatprep.subr.bf16.mxu0 0
    %1090 = vmatpush1.bf16.msra.mxu0 0
    %1091 = vmatprep.subr.bf16.mxu0 0
    %1092 = vmatpush1.bf16.msra.mxu0 0
    %1093 = vmatprep.mubr.bf16.mxu0 0
    %1094 = vmatmul.mubr.bf16.gmra.mrb[0].mxu0 %v1055
    %v1095 = vpop.f32.mrb[0].mxu0
    %v1096 = vadd.f32 %v1052, %v1095
    %v1097 = vpop.f32.mrb[0].mxu0
    %v1098 = vpop.f32.mrb[0].mxu0
    %v1099 = vpop.f32.mrb[0].mxu0
    %1100 = vdwg.mxu0
    %v1101 = vadd.f32 %v1096, 3.0
    %v1102 = vmax.f32 %v1101, 0.0
    %v1103 = vmin.f32 %v1102, 6.0
    %v1104 = vmul.f32 %v1103, 0.16666667
    %v1107 = vunpack.c.l.s4 1966171168
    %v1108 = vunpack.c.0.s8 %v1107
    %v1109 = vlaneseq
    %v1110 = vshrl.u32 %v1109, 7
    %v1111 = vsub.s32 %v1108, %v1110
    %v1112 = vrot.slane %v1104, %v1111
    %v1113 = vcombine.high %v1112, %v1112
    %v1115 = vunpack.c.l.s4 1966171168
    %v1116 = vunpack.c.0.s8 %v1115
    %v1117 = vlaneseq
    %v1118 = vshrl.u32 %v1117, 7
    %v1119 = vsub.s32 %v1116, %v1118
    %v1120 = vrot.slane %v1112, %v1119
    %v1122 = vunpack.c.l.s4 1966171168
    %v1123 = vunpack.c.0.s8 %v1122
    %v1124 = vlaneseq
    %v1125 = vshrl.u32 %v1124, 7
    %v1126 = vsub.s32 %v1123, %v1125
    %v1127 = vrot.slane %v1113, %v1126
    %v1128 = vlaneseq
    %v1129 = vshrl.u32 %v1128, 7
    %v1130 = vsub.s32 0, %v1129
    %v1131 = vrot.slane %v1120, %v1130
    %v1132 = vlaneseq
    %v1133 = vshrl.u32 %v1132, 7
    %v1134 = vsub.s32 0, %v1133
    %v1135 = vrot.slane %v1127, %v1134
    %v1138 = vmul.f32 %v945, %v1131
    %v1139 = vmul.f32 %v946, %v1131
    %v1140 = vmul.f32 %v947, %v1135
    %v1141 = vmul.f32 %v948, %v1135
    %v1142 = vpack.c.bf16 %v1139, %v1138
    %v1143 = vpack.c.bf16 %v1141, %v1140
    %v1144 = vld [vmem:[%s17] sm:$0xf]
    %v1145 = vld [vmem:[%s17 + $0x4] sm:$0xf]
    %v1146 = vld [vmem:[%s1 + $0x4] ss:$0 sm:$0xff]
    %v1149 = vunpack.c.l.b16 %v1144
    %v1150 = vunpack.c.l.b16 %v1145
    %v1151 = vpack.c.b16 %v1150, %v1149
    %v1154 = vsel %vm1005, %v1142, 0
    %v1157 = vsel %vm1005, %v1143, 0
    %1159 = vmatprep.subr.bf16.mxu0 0
    %1160 = vmatpush1.bf16.msra.mxu0 %v1151
    %1161 = vmatprep.subr.bf16.mxu0 0
    %1162 = vmatpush1.bf16.msra.mxu0 0
    %1163 = vmatprep.subr.bf16.mxu0 0
    %1164 = vmatpush1.bf16.msra.mxu0 0
    %1165 = vmatprep.subr.bf16.mxu0 0
    %1166 = vmatpush1.bf16.msra.mxu0 0
    %1167 = vmatprep.subr.bf16.mxu0 0
    %1168 = vmatpush1.bf16.msra.mxu0 0
    %1169 = vmatprep.subr.bf16.mxu0 0
    %1170 = vmatpush1.bf16.msra.mxu0 0
    %1171 = vmatprep.subr.bf16.mxu0 0
    %1172 = vmatpush1.bf16.msra.mxu0 0
    %1173 = vmatprep.subr.bf16.mxu0 0
    %1174 = vmatpush1.bf16.msra.mxu0 0
    %1175 = vmatprep.subr.bf16.mxu0 0
    %1176 = vmatpush1.bf16.msra.mxu0 0
    %1177 = vmatprep.subr.bf16.mxu0 0
    %1178 = vmatpush1.bf16.msra.mxu0 0
    %1179 = vmatprep.subr.bf16.mxu0 0
    %1180 = vmatpush1.bf16.msra.mxu0 0
    %1181 = vmatprep.subr.bf16.mxu0 0
    %1182 = vmatpush1.bf16.msra.mxu0 0
    %1183 = vmatprep.subr.bf16.mxu0 0
    %1184 = vmatpush1.bf16.msra.mxu0 0
    %1185 = vmatprep.subr.bf16.mxu0 0
    %1186 = vmatpush1.bf16.msra.mxu0 0
    %1187 = vmatprep.subr.bf16.mxu0 0
    %1188 = vmatpush1.bf16.msra.mxu0 0
    %1189 = vmatprep.subr.bf16.mxu0 0
    %1190 = vmatpush1.bf16.msra.mxu0 0
    %1191 = vmatprep.mubr.bf16.mxu0 0
    %1192 = vmatmul.mubr.bf16.gmra.mrb[0].mxu0 %v1154
    %v1193 = vpop.f32.mrb[0].mxu0
    %v1194 = vadd.f32 %v1146, %v1193
    %v1195 = vpop.f32.mrb[0].mxu0
    %v1196 = vpop.f32.mrb[0].mxu0
    %v1197 = vadd.f32 %v1146, %v1196
    %v1198 = vpop.f32.mrb[0].mxu0
    %1199 = vmatprep.mubr.bf16.mxu0 0
    %1200 = vmatmul.mubr.bf16.gmra.mrb[0].mxu0 %v1157
    %v1201 = vpop.f32.mrb[0].mxu0
    %v1202 = vadd.f32 %v1146, %v1201
    %v1203 = vpop.f32.mrb[0].mxu0
    %v1204 = vpop.f32.mrb[0].mxu0
    %v1205 = vadd.f32 %v1146, %v1204
    %v1206 = vpop.f32.mrb[0].mxu0
    %1207 = vdwg.mxu0
    %v1208 = vpack.c.bf16 %v1197, %v1194
    %v1209 = vpack.c.bf16 %v1205, %v1202
    %v1210 = vld [vmem:[%s19] sm:$0xf]
    %v1211 = vld [vmem:[%s19 + $0x4] sm:$0xf]
    %v1212 = vld [vmem:[%s1 + $0x5] ss:$0 sm:$0xff]
    %v1215 = vunpack.c.l.b16 %v1210
    %v1216 = vunpack.c.l.b16 %v1211
    %v1217 = vpack.c.b16 %v1216, %v1215
    %v1220 = vsel %vm1005, %v1208, 0
    %v1223 = vsel %vm1005, %v1209, 0
    %1225 = vmatprep.subr.bf16.mxu0 0
    %1226 = vmatpush1.bf16.msra.mxu0 %v1217
    %1227 = vmatprep.subr.bf16.mxu0 0
    %1228 = vmatpush1.bf16.msra.mxu0 0
    %1229 = vmatprep.subr.bf16.mxu0 0
    %1230 = vmatpush1.bf16.msra.mxu0 0
    %1231 = vmatprep.subr.bf16.mxu0 0
    %1232 = vmatpush1.bf16.msra.mxu0 0
    %1233 = vmatprep.subr.bf16.mxu0 0
    %1234 = vmatpush1.bf16.msra.mxu0 0
    %1235 = vmatprep.subr.bf16.mxu0 0
    %1236 = vmatpush1.bf16.msra.mxu0 0
    %1237 = vmatprep.subr.bf16.mxu0 0
    %1238 = vmatpush1.bf16.msra.mxu0 0
    %1239 = vmatprep.subr.bf16.mxu0 0
    %1240 = vmatpush1.bf16.msra.mxu0 0
    %1241 = vmatprep.subr.bf16.mxu0 0
    %1242 = vmatpush1.bf16.msra.mxu0 0
    %1243 = vmatprep.subr.bf16.mxu0 0
    %1244 = vmatpush1.bf16.msra.mxu0 0
    %1245 = vmatprep.subr.bf16.mxu0 0
    %1246 = vmatpush1.bf16.msra.mxu0 0
    %1247 = vmatprep.subr.bf16.mxu0 0
    %1248 = vmatpush1.bf16.msra.mxu0 0
    %1249 = vmatprep.subr.bf16.mxu0 0
    %1250 = vmatpush1.bf16.msra.mxu0 0
    %1251 = vmatprep.subr.bf16.mxu0 0
    %1252 = vmatpush1.bf16.msra.mxu0 0
    %1253 = vmatprep.subr.bf16.mxu0 0
    %1254 = vmatpush1.bf16.msra.mxu0 0
    %1255 = vmatprep.subr.bf16.mxu0 0
    %1256 = vmatpush1.bf16.msra.mxu0 0
    %1257 = vmatprep.mubr.bf16.mxu0 0
    %1258 = vmatmul.mubr.bf16.gmra.mrb[0].mxu0 %v1220
    %v1259 = vpop.f32.mrb[0].mxu0
    %v1260 = vadd.f32 %v1212, %v1259
    %v1261 = vpop.f32.mrb[0].mxu0
    %v1262 = vpop.f32.mrb[0].mxu0
    %v1263 = vadd.f32 %v1212, %v1262
    %v1264 = vpop.f32.mrb[0].mxu0
    %1265 = vmatprep.mubr.bf16.mxu0 0
    %1266 = vmatmul.mubr.bf16.gmra.mrb[0].mxu0 %v1223
    %v1267 = vpop.f32.mrb[0].mxu0
    %v1268 = vadd.f32 %v1212, %v1267
    %v1269 = vpop.f32.mrb[0].mxu0
    %v1270 = vpop.f32.mrb[0].mxu0
    %v1271 = vadd.f32 %v1212, %v1270
    %v1272 = vpop.f32.mrb[0].mxu0
    %1273 = vdwg.mxu0
    %v1274 = vmax.f32 %v1260, 0.0
    %v1275 = vmax.f32 %v1263, 0.0
    %v1276 = vmax.f32 %v1268, 0.0
    %v1277 = vmax.f32 %v1271, 0.0
    %v1278 = vld [vmem:[%s21] sm:$0xff]
    %v1279 = vld [vmem:[%s21 + $0x8] sm:$0x1]
    %v1280 = vld [vmem:[%s23] sm:$0xf]
    %v1281 = vld [vmem:[%s23 + $0x4] sm:$0xf]
    %v1282 = vld [vmem:[%s23 + $0x8] sm:$0xf]
    %v1283 = vld [vmem:[%s23 + $0xc] sm:$0xf]
    %v1284 = vld [vmem:[%s23 + $0x10] sm:$0xf]
    %v1285 = vld [vmem:[%s23 + $0x14] sm:$0xf]
    %v1286 = vld [vmem:[%s23 + $0x18] sm:$0xf]
    %v1287 = vld [vmem:[%s23 + $0x1c] sm:$0xf]
    %v1288 = vld [vmem:[%s23 + $0x20] sm:$0xf]
    %v1289 = vpack.c.bf16 %v1275, %v1274
    %v1290 = vpack.c.bf16 %v1277, %v1276
    %v1300 = vunpack.c.l.b16 %v1280
    %v1301 = vunpack.c.l.b16 %v1281
    %v1302 = vunpack.c.l.b16 %v1282
    %v1303 = vunpack.c.l.b16 %v1283
    %v1304 = vunpack.c.l.b16 %v1284
    %v1305 = vunpack.c.l.b16 %v1285
    %v1306 = vunpack.c.l.b16 %v1286
    %v1307 = vunpack.c.l.b16 %v1287
    %v1308 = vunpack.c.l.b16 %v1288
    %v1309 = vpack.c.b16 %v1301, %v1300
    %v1310 = vpack.c.b16 %v1303, %v1302
    %v1311 = vpack.c.b16 %v1305, %v1304
    %v1312 = vpack.c.b16 %v1307, %v1306
    %v1313 = vpack.c.b16 %v1308, %v1308
    %v1315 = vsel %vm303, %v1309, 0
    %v1318 = vsel %vm303, %v1310, 0
    %v1321 = vsel %vm303, %v1311, 0
    %v1324 = vsel %vm303, %v1312, 0
    %v1327 = vsel %vm303, %v1313, 0
    %1329 = vmatprep.subr.bf16.mxu0 0
    %1330 = vmatpush1.bf16.msra.mxu0 %v1289
    %1331 = vmatprep.subr.bf16.mxu0 0
    %1332 = vmatpush1.bf16.msra.mxu0 %v1290
    %1333 = vmatprep.subr.bf16.mxu0 0
    %1334 = vmatpush1.bf16.msra.mxu0 0
    %1335 = vmatprep.subr.bf16.mxu0 0
    %1336 = vmatpush1.bf16.msra.mxu0 0
    %1337 = vmatprep.subr.bf16.mxu0 0
    %1338 = vmatpush1.bf16.msra.mxu0 0
    %1339 = vmatprep.subr.bf16.mxu0 0
    %1340 = vmatpush1.bf16.msra.mxu0 0
    %1341 = vmatprep.subr.bf16.mxu0 0
    %1342 = vmatpush1.bf16.msra.mxu0 0
    %1343 = vmatprep.subr.bf16.mxu0 0
    %1344 = vmatpush1.bf16.msra.mxu0 0
    %1345 = vmatprep.subr.bf16.mxu0 0
    %1346 = vmatpush1.bf16.msra.mxu0 0
    %1347 = vmatprep.subr.bf16.mxu0 0
    %1348 = vmatpush1.bf16.msra.mxu0 0
    %1349 = vmatprep.subr.bf16.mxu0 0
    %1350 = vmatpush1.bf16.msra.mxu0 0
    %1351 = vmatprep.subr.bf16.mxu0 0
    %1352 = vmatpush1.bf16.msra.mxu0 0
    %1353 = vmatprep.subr.bf16.mxu0 0
    %1354 = vmatpush1.bf16.msra.mxu0 0
    %1355 = vmatprep.subr.bf16.mxu0 0
    %1356 = vmatpush1.bf16.msra.mxu0 0
    %1357 = vmatprep.subr.bf16.mxu0 0
    %1358 = vmatpush1.bf16.msra.mxu0 0
    %1359 = vmatprep.subr.bf16.mxu0 0
    %1360 = vmatpush1.bf16.msra.mxu0 0
    %1361 = vmatprep.mubr.bf16.mxu0 0
    %1362 = vmatmul.mubr.bf16.gmra.mrb[0].mxu0 %v1315
    %v1363 = vpop.f32.mrb[0].mxu0
    %v1364 = vadd.f32 0.0, %v1363
    %v1365 = vpop.f32.mrb[0].mxu0
    %v1366 = vpop.f32.mrb[0].mxu0
    %v1367 = vadd.f32 0.0, %v1366
    %v1368 = vpop.f32.mrb[0].mxu0
    %1369 = vmatprep.mubr.bf16.mxu0 0
    %1370 = vmatmul.mubr.bf16.gmra.mrb[0].mxu0 %v1318
    %v1371 = vpop.f32.mrb[0].mxu0
    %v1372 = vadd.f32 0.0, %v1371
    %v1373 = vpop.f32.mrb[0].mxu0
    %v1374 = vpop.f32.mrb[0].mxu0
    %v1375 = vadd.f32 0.0, %v1374
    %v1376 = vpop.f32.mrb[0].mxu0
    %1377 = vmatprep.mubr.bf16.mxu0 0
    %1378 = vmatmul.mubr.bf16.gmra.mrb[0].mxu0 %v1321
    %v1379 = vpop.f32.mrb[0].mxu0
    %v1380 = vadd.f32 0.0, %v1379
    %v1381 = vpop.f32.mrb[0].mxu0
    %v1382 = vpop.f32.mrb[0].mxu0
    %v1383 = vadd.f32 0.0, %v1382
    %v1384 = vpop.f32.mrb[0].mxu0
    %1385 = vmatprep.mubr.bf16.mxu0 0
    %1386 = vmatmul.mubr.bf16.gmra.mrb[0].mxu0 %v1324
    %v1387 = vpop.f32.mrb[0].mxu0
    %v1388 = vadd.f32 0.0, %v1387
    %v1389 = vpop.f32.mrb[0].mxu0
    %v1390 = vpop.f32.mrb[0].mxu0
    %v1391 = vadd.f32 0.0, %v1390
    %v1392 = vpop.f32.mrb[0].mxu0
    %1393 = vmatprep.mubr.bf16.mxu0 0
    %1394 = vmatmul.mubr.bf16.gmra.mrb[0].mxu0 %v1327
    %v1395 = vpop.f32.mrb[0].mxu0
    %v1396 = vadd.f32 0.0, %v1395
    %v1397 = vpop.f32.mrb[0].mxu0
    %v1398 = vpop.f32.mrb[0].mxu0
    %v1399 = vpop.f32.mrb[0].mxu0
    %1400 = vdwg.mxu0
    %v1401 = vlaneseq
    %v1402 = vshrl.u32 %v1401, 7
    %v1403 = vsub.s32 0, %v1402
    %v1404 = vrot.slane %v1278, %v1403
    %v1405 = vmul.f32 %v1364, %v1404
    %v1406 = vlaneseq
    %v1407 = vshrl.u32 %v1406, 7
    %v1408 = vsub.s32 1, %v1407
    %v1409 = vrot.slane %v1278, %v1408
    %v1410 = vmul.f32 %v1367, %v1409
    %v1411 = vadd.f32 %v1405, %v1410
    %v1412 = vlaneseq
    %v1413 = vshrl.u32 %v1412, 7
    %v1414 = vsub.s32 2, %v1413
    %v1415 = vrot.slane %v1278, %v1414
    %v1416 = vmul.f32 %v1372, %v1415
    %v1417 = vadd.f32 %v1411, %v1416
    %v1418 = vlaneseq
    %v1419 = vshrl.u32 %v1418, 7
    %v1420 = vsub.s32 3, %v1419
    %v1421 = vrot.slane %v1278, %v1420
    %v1422 = vmul.f32 %v1375, %v1421
    %v1423 = vadd.f32 %v1417, %v1422
    %v1424 = vlaneseq
    %v1425 = vshrl.u32 %v1424, 7
    %v1426 = vsub.s32 4, %v1425
    %v1427 = vrot.slane %v1278, %v1426
    %v1428 = vmul.f32 %v1380, %v1427
    %v1429 = vadd.f32 %v1423, %v1428
    %v1430 = vlaneseq
    %v1431 = vshrl.u32 %v1430, 7
    %v1432 = vsub.s32 5, %v1431
    %v1433 = vrot.slane %v1278, %v1432
    %v1434 = vmul.f32 %v1383, %v1433
    %v1435 = vadd.f32 %v1429, %v1434
    %v1436 = vlaneseq
    %v1437 = vshrl.u32 %v1436, 7
    %v1438 = vsub.s32 6, %v1437
    %v1439 = vrot.slane %v1278, %v1438
    %v1440 = vmul.f32 %v1388, %v1439
    %v1441 = vadd.f32 %v1435, %v1440
    %v1442 = vlaneseq
    %v1443 = vshrl.u32 %v1442, 7
    %v1444 = vsub.s32 7, %v1443
    %v1445 = vrot.slane %v1278, %v1444
    %v1446 = vmul.f32 %v1391, %v1445
    %v1447 = vadd.f32 %v1441, %v1446
    %v1448 = vlaneseq
    %v1449 = vshrl.u32 %v1448, 7
    %v1450 = vsub.s32 0, %v1449
    %v1451 = vrot.slane %v1279, %v1450
    %v1452 = vmul.f32 %v1396, %v1451
    %v1453 = vadd.f32 %v1447, %v1452
    %v1454 = vld [vmem:[%s1 + $0x6] ss:$0 sm:$0xff]
    %v1455 = vadd.f32 %v1453, %v1454
    %v1456 = vmax.f32 %v1455, 0.0
    %v1457 = vpack.c.bf16 %v1456, %v1456
    %v1458 = vld [vmem:[%s25] sm:$0xf]
    %v1459 = vld [vmem:[%s25 + $0x4] sm:$0xf]
    %v1460 = vld [vmem:[%s25 + $0x8] sm:$0xf]
    %v1461 = vld [vmem:[%s25 + $0xc] sm:$0xf]
    %v1462 = vld [vmem:[%s25 + $0x10] sm:$0xf]
    %v1463 = vld [vmem:[%s25 + $0x14] sm:$0xf]
    %v1464 = vld [vmem:[%s25 + $0x18] sm:$0xf]
    %v1465 = vld [vmem:[%s25 + $0x1c] sm:$0xf]
    %v1466 = vld [vmem:[%s25 + $0x20] sm:$0xf]
    %v1467 = vld [vmem:[%s1 + $0x7] ss:$0 sm:$0xff]
    %v1477 = vunpack.c.l.b16 %v1458
    %v1478 = vunpack.c.l.b16 %v1459
    %v1479 = vunpack.c.l.b16 %v1460
    %v1480 = vunpack.c.l.b16 %v1461
    %v1481 = vunpack.c.l.b16 %v1462
    %v1482 = vunpack.c.l.b16 %v1463
    %v1483 = vunpack.c.l.b16 %v1464
    %v1484 = vunpack.c.l.b16 %v1465
    %v1485 = vunpack.c.l.b16 %v1466
    %v1486 = vpack.c.b16 %v1478, %v1477
    %v1487 = vpack.c.b16 %v1480, %v1479
    %v1488 = vpack.c.b16 %v1482, %v1481
    %v1489 = vpack.c.b16 %v1484, %v1483
    %v1490 = vpack.c.b16 %v1485, %v1485
    %vm1495 = vcmask 588800
    %v1497 = vsel %vm1495, %v1457, 0
    %v1500 = vsel %vm1057, %v1490, 0
    %1502 = vmatprep.subr.bf16.mxu0 0
    %1503 = vmatpush1.bf16.msra.mxu0 %v1486
    %1504 = vmatprep.subr.bf16.mxu0 0
    %1505 = vmatpush1.bf16.msra.mxu0 %v1487
    %1506 = vmatprep.subr.bf16.mxu0 0
    %1507 = vmatpush1.bf16.msra.mxu0 %v1488
    %1508 = vmatprep.subr.bf16.mxu0 0
    %1509 = vmatpush1.bf16.msra.mxu0 %v1489
    %1510 = vmatprep.subr.bf16.mxu0 0
    %1511 = vmatpush1.bf16.msra.mxu0 %v1500
    %1512 = vmatprep.subr.bf16.mxu0 0
    %1513 = vmatpush1.bf16.msra.mxu0 0
    %1514 = vmatprep.subr.bf16.mxu0 0
    %1515 = vmatpush1.bf16.msra.mxu0 0
    %1516 = vmatprep.subr.bf16.mxu0 0
    %1517 = vmatpush1.bf16.msra.mxu0 0
    %1518 = vmatprep.subr.bf16.mxu0 0
    %1519 = vmatpush1.bf16.msra.mxu0 0
    %1520 = vmatprep.subr.bf16.mxu0 0
    %1521 = vmatpush1.bf16.msra.mxu0 0
    %1522 = vmatprep.subr.bf16.mxu0 0
    %1523 = vmatpush1.bf16.msra.mxu0 0
    %1524 = vmatprep.subr.bf16.mxu0 0
    %1525 = vmatpush1.bf16.msra.mxu0 0
    %1526 = vmatprep.subr.bf16.mxu0 0
    %1527 = vmatpush1.bf16.msra.mxu0 0
    %1528 = vmatprep.subr.bf16.mxu0 0
    %1529 = vmatpush1.bf16.msra.mxu0 0
    %1530 = vmatprep.subr.bf16.mxu0 0
    %1531 = vmatpush1.bf16.msra.mxu0 0
    %1532 = vmatprep.subr.bf16.mxu0 0
    %1533 = vmatpush1.bf16.msra.mxu0 0
    %1534 = vmatprep.mubr.bf16.mxu0 0
    %1535 = vmatmul.mubr.bf16.gmra.mrb[0].mxu0 %v1497
    %v1536 = vpop.f32.mrb[0].mxu0
    %v1537 = vadd.f32 %v1467, %v1536
    %v1538 = vpop.f32.mrb[0].mxu0
    %v1539 = vpop.f32.mrb[0].mxu0
    %v1540 = vpop.f32.mrb[0].mxu0
    %1541 = vdwg.mxu0
    %v1542 = vpack.c.bf16 %v1537, %v1537
    %v1543 = vld [vmem:[%s27] sm:$0xf]
    %v1544 = vld [vmem:[%s27 + $0x4] sm:$0xf]
    %v1545 = vld [vmem:[%s27 + $0x8] sm:$0xf]
    %v1546 = vld [vmem:[%s1 + $0x28] ss:$0 sm:$0xff]
    %v1550 = vunpack.c.l.b16 %v1543
    %v1551 = vunpack.c.l.b16 %v1544
    %v1552 = vunpack.c.l.b16 %v1545
    %v1553 = vpack.c.b16 %v1551, %v1550
    %v1554 = vpack.c.b16 %v1552, %v1552
    %vm1556 = vcmask 195584
    %v1558 = vsel %vm1556, %v1542, 0
    %v1561 = vsel %vm1057, %v1554, 0
    %1563 = vmatprep.subr.bf16.mxu0 0
    %1564 = vmatpush1.bf16.msra.mxu0 %v1553
    %1565 = vmatprep.subr.bf16.mxu0 0
    %1566 = vmatpush1.bf16.msra.mxu0 %v1561
    %1567 = vmatprep.subr.bf16.mxu0 0
    %1568 = vmatpush1.bf16.msra.mxu0 0
    %1569 = vmatprep.subr.bf16.mxu0 0
    %1570 = vmatpush1.bf16.msra.mxu0 0
    %1571 = vmatprep.subr.bf16.mxu0 0
    %1572 = vmatpush1.bf16.msra.mxu0 0
    %1573 = vmatprep.subr.bf16.mxu0 0
    %1574 = vmatpush1.bf16.msra.mxu0 0
    %1575 = vmatprep.subr.bf16.mxu0 0
    %1576 = vmatpush1.bf16.msra.mxu0 0
    %1577 = vmatprep.subr.bf16.mxu0 0
    %1578 = vmatpush1.bf16.msra.mxu0 0
    %1579 = vmatprep.subr.bf16.mxu0 0
    %1580 = vmatpush1.bf16.msra.mxu0 0
    %1581 = vmatprep.subr.bf16.mxu0 0
    %1582 = vmatpush1.bf16.msra.mxu0 0
    %1583 = vmatprep.subr.bf16.mxu0 0
    %1584 = vmatpush1.bf16.msra.mxu0 0
    %1585 = vmatprep.subr.bf16.mxu0 0
    %1586 = vmatpush1.bf16.msra.mxu0 0
    %1587 = vmatprep.subr.bf16.mxu0 0
    %1588 = vmatpush1.bf16.msra.mxu0 0
    %1589 = vmatprep.subr.bf16.mxu0 0
    %1590 = vmatpush1.bf16.msra.mxu0 0
    %1591 = vmatprep.subr.bf16.mxu0 0
    %1592 = vmatpush1.bf16.msra.mxu0 0
    %1593 = vmatprep.subr.bf16.mxu0 0
    %1594 = vmatpush1.bf16.msra.mxu0 0
    %1595 = vmatprep.mubr.bf16.mxu0 0
    %1596 = vmatmul.mubr.bf16.gmra.mrb[0].mxu0 %v1558
    %v1597 = vpop.f32.mrb[0].mxu0
    %v1598 = vadd.f32 %v1546, %v1597
    %v1599 = vpop.f32.mrb[0].mxu0
    %v1600 = vpop.f32.mrb[0].mxu0
    %v1601 = vpop.f32.mrb[0].mxu0
    %1602 = vdwg.mxu0
    %v1603 = vmax.f32 %v1598, 0.0
    %v1604 = vld [vmem:[%s29] sm:$0xff]
    %v1605 = vld [vmem:[%s29 + $0x8] sm:$0x1]
    %v1606 = vld [vmem:[%s31] sm:$0xf]
    %v1607 = vld [vmem:[%s31 + $0x4] sm:$0xf]
    %v1608 = vld [vmem:[%s31 + $0x8] sm:$0xf]
    %v1609 = vld [vmem:[%s31 + $0xc] sm:$0xf]
    %v1610 = vld [vmem:[%s31 + $0x10] sm:$0xf]
    %v1611 = vld [vmem:[%s31 + $0x14] sm:$0xf]
    %v1612 = vld [vmem:[%s31 + $0x18] sm:$0xf]
    %v1613 = vld [vmem:[%s31 + $0x1c] sm:$0xf]
    %v1614 = vld [vmem:[%s31 + $0x20] sm:$0xf]
    %v1615 = vpack.c.bf16 %v1603, %v1603
    %v1625 = vunpack.c.l.b16 %v1606
    %v1626 = vunpack.c.l.b16 %v1607
    %v1627 = vunpack.c.l.b16 %v1608
    %v1628 = vunpack.c.l.b16 %v1609
    %v1629 = vunpack.c.l.b16 %v1610
    %v1630 = vunpack.c.l.b16 %v1611
    %v1631 = vunpack.c.l.b16 %v1612
    %v1632 = vunpack.c.l.b16 %v1613
    %v1633 = vunpack.c.l.b16 %v1614
    %v1634 = vpack.c.b16 %v1626, %v1625
    %v1635 = vpack.c.b16 %v1628, %v1627
    %v1636 = vpack.c.b16 %v1630, %v1629
    %v1637 = vpack.c.b16 %v1632, %v1631
    %v1638 = vpack.c.b16 %v1633, %v1633
    %v1640 = vsel %vm1053, %v1634, 0
    %v1643 = vsel %vm1053, %v1635, 0
    %v1646 = vsel %vm1053, %v1636, 0
    %v1649 = vsel %vm1053, %v1637, 0
    %v1652 = vsel %vm1053, %v1638, 0
    %v1655 = vsel %vm1057, %v1615, 0
    %1657 = vmatprep.subr.bf16.mxu0 0
    %1658 = vmatpush1.bf16.msra.mxu0 %v1655
    %1659 = vmatprep.subr.bf16.mxu0 0
    %1660 = vmatpush1.bf16.msra.mxu0 0
    %1661 = vmatprep.subr.bf16.mxu0 0
    %1662 = vmatpush1.bf16.msra.mxu0 0
    %1663 = vmatprep.subr.bf16.mxu0 0
    %1664 = vmatpush1.bf16.msra.mxu0 0
    %1665 = vmatprep.subr.bf16.mxu0 0
    %1666 = vmatpush1.bf16.msra.mxu0 0
    %1667 = vmatprep.subr.bf16.mxu0 0
    %1668 = vmatpush1.bf16.msra.mxu0 0
    %1669 = vmatprep.subr.bf16.mxu0 0
    %1670 = vmatpush1.bf16.msra.mxu0 0
    %1671 = vmatprep.subr.bf16.mxu0 0
    %1672 = vmatpush1.bf16.msra.mxu0 0
    %1673 = vmatprep.subr.bf16.mxu0 0
    %1674 = vmatpush1.bf16.msra.mxu0 0
    %1675 = vmatprep.subr.bf16.mxu0 0
    %1676 = vmatpush1.bf16.msra.mxu0 0
    %1677 = vmatprep.subr.bf16.mxu0 0
    %1678 = vmatpush1.bf16.msra.mxu0 0
    %1679 = vmatprep.subr.bf16.mxu0 0
    %1680 = vmatpush1.bf16.msra.mxu0 0
    %1681 = vmatprep.subr.bf16.mxu0 0
    %1682 = vmatpush1.bf16.msra.mxu0 0
    %1683 = vmatprep.subr.bf16.mxu0 0
    %1684 = vmatpush1.bf16.msra.mxu0 0
    %1685 = vmatprep.subr.bf16.mxu0 0
    %1686 = vmatpush1.bf16.msra.mxu0 0
    %1687 = vmatprep.subr.bf16.mxu0 0
    %1688 = vmatpush1.bf16.msra.mxu0 0
    %1689 = vmatprep.mubr.bf16.mxu0 0
    %1690 = vmatmul.mubr.bf16.gmra.mrb[0].mxu0 %v1640
    %v1691 = vpop.f32.mrb[0].mxu0
    %v1692 = vadd.f32 0.0, %v1691
    %v1693 = vpop.f32.mrb[0].mxu0
    %v1694 = vpop.f32.mrb[0].mxu0
    %v1695 = vadd.f32 0.0, %v1694
    %v1696 = vpop.f32.mrb[0].mxu0
    %1697 = vmatprep.mubr.bf16.mxu0 0
    %1698 = vmatmul.mubr.bf16.gmra.mrb[0].mxu0 %v1643
    %v1699 = vpop.f32.mrb[0].mxu0
    %v1700 = vadd.f32 0.0, %v1699
    %v1701 = vpop.f32.mrb[0].mxu0
    %v1702 = vpop.f32.mrb[0].mxu0
    %v1703 = vadd.f32 0.0, %v1702
    %v1704 = vpop.f32.mrb[0].mxu0
    %1705 = vmatprep.mubr.bf16.mxu0 0
    %1706 = vmatmul.mubr.bf16.gmra.mrb[0].mxu0 %v1646
    %v1707 = vpop.f32.mrb[0].mxu0
    %v1708 = vadd.f32 0.0, %v1707
    %v1709 = vpop.f32.mrb[0].mxu0
    %v1710 = vpop.f32.mrb[0].mxu0
    %v1711 = vadd.f32 0.0, %v1710
    %v1712 = vpop.f32.mrb[0].mxu0
    %1713 = vmatprep.mubr.bf16.mxu0 0
    %1714 = vmatmul.mubr.bf16.gmra.mrb[0].mxu0 %v1649
    %v1715 = vpop.f32.mrb[0].mxu0
    %v1716 = vadd.f32 0.0, %v1715
    %v1717 = vpop.f32.mrb[0].mxu0
    %v1718 = vpop.f32.mrb[0].mxu0
    %v1719 = vadd.f32 0.0, %v1718
    %v1720 = vpop.f32.mrb[0].mxu0
    %1721 = vmatprep.mubr.bf16.mxu0 0
    %1722 = vmatmul.mubr.bf16.gmra.mrb[0].mxu0 %v1652
    %v1723 = vpop.f32.mrb[0].mxu0
    %v1724 = vadd.f32 0.0, %v1723
    %v1725 = vpop.f32.mrb[0].mxu0
    %v1726 = vpop.f32.mrb[0].mxu0
    %v1727 = vpop.f32.mrb[0].mxu0
    %1728 = vdwg.mxu0
    %v1729 = vlaneseq
    %v1730 = vshrl.u32 %v1729, 7
    %v1731 = vsub.s32 0, %v1730
    %v1732 = vrot.slane %v1604, %v1731
    %v1733 = vmul.f32 %v1692, %v1732
    %v1734 = vlaneseq
    %v1735 = vshrl.u32 %v1734, 7
    %v1736 = vsub.s32 1, %v1735
    %v1737 = vrot.slane %v1604, %v1736
    %v1738 = vmul.f32 %v1695, %v1737
    %v1739 = vadd.f32 %v1733, %v1738
    %v1740 = vlaneseq
    %v1741 = vshrl.u32 %v1740, 7
    %v1742 = vsub.s32 2, %v1741
    %v1743 = vrot.slane %v1604, %v1742
    %v1744 = vmul.f32 %v1700, %v1743
    %v1745 = vadd.f32 %v1739, %v1744
    %v1746 = vlaneseq
    %v1747 = vshrl.u32 %v1746, 7
    %v1748 = vsub.s32 3, %v1747
    %v1749 = vrot.slane %v1604, %v1748
    %v1750 = vmul.f32 %v1703, %v1749
    %v1751 = vadd.f32 %v1745, %v1750
    %v1752 = vlaneseq
    %v1753 = vshrl.u32 %v1752, 7
    %v1754 = vsub.s32 4, %v1753
    %v1755 = vrot.slane %v1604, %v1754
    %v1756 = vmul.f32 %v1708, %v1755
    %v1757 = vadd.f32 %v1751, %v1756
    %v1758 = vlaneseq
    %v1759 = vshrl.u32 %v1758, 7
    %v1760 = vsub.s32 5, %v1759
    %v1761 = vrot.slane %v1604, %v1760
    %v1762 = vmul.f32 %v1711, %v1761
    %v1763 = vadd.f32 %v1757, %v1762
    %v1764 = vlaneseq
    %v1765 = vshrl.u32 %v1764, 7
    %v1766 = vsub.s32 6, %v1765
    %v1767 = vrot.slane %v1604, %v1766
    %v1768 = vmul.f32 %v1716, %v1767
    %v1769 = vadd.f32 %v1763, %v1768
    %v1770 = vlaneseq
    %v1771 = vshrl.u32 %v1770, 7
    %v1772 = vsub.s32 7, %v1771
    %v1773 = vrot.slane %v1604, %v1772
    %v1774 = vmul.f32 %v1719, %v1773
    %v1775 = vadd.f32 %v1769, %v1774
    %v1776 = vlaneseq
    %v1777 = vshrl.u32 %v1776, 7
    %v1778 = vsub.s32 0, %v1777
    %v1779 = vrot.slane %v1605, %v1778
    %v1780 = vmul.f32 %v1724, %v1779
    %v1781 = vadd.f32 %v1775, %v1780
    %v1782 = vld [vmem:[%s1 + $0x29] ss:$0 sm:$0xff]
    %v1783 = vadd.f32 %v1781, %v1782
    %v1784 = vmax.f32 %v1783, 0.0
    %v1785 = vpack.c.bf16 %v1784, %v1784
    %v1786 = vld [vmem:[%s33] sm:$0xf]
    %v1787 = vld [vmem:[%s33 + $0x4] sm:$0xf]
    %v1788 = vld [vmem:[%s33 + $0x8] sm:$0xf]
    %v1789 = vld [vmem:[%s33 + $0xc] sm:$0xf]
    %v1790 = vld [vmem:[%s33 + $0x10] sm:$0xf]
    %v1791 = vld [vmem:[%s33 + $0x14] sm:$0xf]
    %v1792 = vld [vmem:[%s33 + $0x18] sm:$0xf]
    %v1793 = vld [vmem:[%s33 + $0x1c] sm:$0xf]
    %v1794 = vld [vmem:[%s33 + $0x20] sm:$0xf]
    %v1795 = vld [vmem:[%s33 + $0x24] sm:$0xf]
    %v1796 = vld [vmem:[%s33 + $0x28] sm:$0xf]
    %v1797 = vld [vmem:[%s1 + $0x2a] ss:$0 sm:$0xff]
    %v1809 = vunpack.c.l.b16 %v1786
    %v1810 = vunpack.c.l.b16 %v1787
    %v1811 = vunpack.c.l.b16 %v1788
    %v1812 = vunpack.c.l.b16 %v1789
    %v1813 = vunpack.c.l.b16 %v1790
    %v1814 = vunpack.c.l.b16 %v1791
    %v1815 = vunpack.c.l.b16 %v1792
    %v1816 = vunpack.c.l.b16 %v1793
    %v1817 = vunpack.c.l.b16 %v1794
    %v1818 = vunpack.c.l.b16 %v1795
    %v1819 = vunpack.c.l.b16 %v1796
    %v1820 = vpack.c.b16 %v1810, %v1809
    %v1821 = vpack.c.b16 %v1812, %v1811
    %v1822 = vpack.c.b16 %v1814, %v1813
    %v1823 = vpack.c.b16 %v1816, %v1815
    %v1824 = vpack.c.b16 %v1818, %v1817
    %v1825 = vpack.c.b16 %v1819, %v1819
    %vm1831 = vcmask 719872
    %v1833 = vsel %vm1831, %v1785, 0
    %v1836 = vsel %vm1057, %v1825, 0
    %1838 = vmatprep.subr.bf16.mxu0 0
    %1839 = vmatpush1.bf16.msra.mxu0 %v1820
    %1840 = vmatprep.subr.bf16.mxu0 0
    %1841 = vmatpush1.bf16.msra.mxu0 %v1821
    %1842 = vmatprep.subr.bf16.mxu0 0
    %1843 = vmatpush1.bf16.msra.mxu0 %v1822
    %1844 = vmatprep.subr.bf16.mxu0 0
    %1845 = vmatpush1.bf16.msra.mxu0 %v1823
    %1846 = vmatprep.subr.bf16.mxu0 0
    %1847 = vmatpush1.bf16.msra.mxu0 %v1824
    %1848 = vmatprep.subr.bf16.mxu0 0
    %1849 = vmatpush1.bf16.msra.mxu0 %v1836
    %1850 = vmatprep.subr.bf16.mxu0 0
    %1851 = vmatpush1.bf16.msra.mxu0 0
    %1852 = vmatprep.subr.bf16.mxu0 0
    %1853 = vmatpush1.bf16.msra.mxu0 0
    %1854 = vmatprep.subr.bf16.mxu0 0
    %1855 = vmatpush1.bf16.msra.mxu0 0
    %1856 = vmatprep.subr.bf16.mxu0 0
    %1857 = vmatpush1.bf16.msra.mxu0 0
    %1858 = vmatprep.subr.bf16.mxu0 0
    %1859 = vmatpush1.bf16.msra.mxu0 0
    %1860 = vmatprep.subr.bf16.mxu0 0
    %1861 = vmatpush1.bf16.msra.mxu0 0
    %1862 = vmatprep.subr.bf16.mxu0 0
    %1863 = vmatpush1.bf16.msra.mxu0 0
    %1864 = vmatprep.subr.bf16.mxu0 0
    %1865 = vmatpush1.bf16.msra.mxu0 0
    %1866 = vmatprep.subr.bf16.mxu0 0
    %1867 = vmatpush1.bf16.msra.mxu0 0
    %1868 = vmatprep.subr.bf16.mxu0 0
    %1869 = vmatpush1.bf16.msra.mxu0 0
    %1870 = vmatprep.mubr.bf16.mxu0 0
    %1871 = vmatmul.mubr.bf16.gmra.mrb[0].mxu0 %v1833
    %v1872 = vpop.f32.mrb[0].mxu0
    %v1873 = vadd.f32 %v1797, %v1872
    %v1874 = vpop.f32.mrb[0].mxu0
    %v1875 = vpop.f32.mrb[0].mxu0
    %v1876 = vpop.f32.mrb[0].mxu0
    %1877 = vdwg.mxu0
    %v1878 = vadd.f32 %v1873, %v1537
    %1879 = vst.msk [vmem:[#allocation6] sm:$0xff] %vm1556, %v1878
    %v1880 = vpack.c.bf16 %v1878, %v1878
    %v1881 = vld [vmem:[%s35] sm:$0xf]
    %v1882 = vld [vmem:[%s35 + $0x4] sm:$0xf]
    %v1883 = vld [vmem:[%s35 + $0x8] sm:$0xf]
    %v1884 = vld [vmem:[%s1 + $0x2b] ss:$0 sm:$0xff]
    %v1888 = vunpack.c.l.b16 %v1881
    %v1889 = vunpack.c.l.b16 %v1882
    %v1890 = vunpack.c.l.b16 %v1883
    %v1891 = vpack.c.b16 %v1889, %v1888
    %v1892 = vpack.c.b16 %v1890, %v1890
    %v1895 = vsel %vm1556, %v1880, 0
    %v1898 = vsel %vm1057, %v1892, 0
    %1900 = vmatprep.subr.bf16.mxu0 0
    %1901 = vmatpush1.bf16.msra.mxu0 %v1891
    %1902 = vmatprep.subr.bf16.mxu0 0
    %1903 = vmatpush1.bf16.msra.mxu0 %v1898
    %1904 = vmatprep.subr.bf16.mxu0 0
    %1905 = vmatpush1.bf16.msra.mxu0 0
    %1906 = vmatprep.subr.bf16.mxu0 0
    %1907 = vmatpush1.bf16.msra.mxu0 0
    %1908 = vmatprep.subr.bf16.mxu0 0
    %1909 = vmatpush1.bf16.msra.mxu0 0
    %1910 = vmatprep.subr.bf16.mxu0 0
    %1911 = vmatpush1.bf16.msra.mxu0 0
    %1912 = vmatprep.subr.bf16.mxu0 0
    %1913 = vmatpush1.bf16.msra.mxu0 0
    %1914 = vmatprep.subr.bf16.mxu0 0
    %1915 = vmatpush1.bf16.msra.mxu0 0
    %1916 = vmatprep.subr.bf16.mxu0 0
    %1917 = vmatpush1.bf16.msra.mxu0 0
    %1918 = vmatprep.subr.bf16.mxu0 0
    %1919 = vmatpush1.bf16.msra.mxu0 0
    %1920 = vmatprep.subr.bf16.mxu0 0
    %1921 = vmatpush1.bf16.msra.mxu0 0
    %1922 = vmatprep.subr.bf16.mxu0 0
    %1923 = vmatpush1.bf16.msra.mxu0 0
    %1924 = vmatprep.subr.bf16.mxu0 0
    %1925 = vmatpush1.bf16.msra.mxu0 0
    %1926 = vmatprep.subr.bf16.mxu0 0
    %1927 = vmatpush1.bf16.msra.mxu0 0
    %1928 = vmatprep.subr.bf16.mxu0 0
    %1929 = vmatpush1.bf16.msra.mxu0 0
    %1930 = vmatprep.subr.bf16.mxu0 0
    %1931 = vmatpush1.bf16.msra.mxu0 0
    %1932 = vmatprep.mubr.bf16.mxu0 0
    %1933 = vmatmul.mubr.bf16.gmra.mrb[0].mxu0 %v1895
    %v1934 = vpop.f32.mrb[0].mxu0
    %v1935 = vadd.f32 %v1884, %v1934
    %v1936 = vpop.f32.mrb[0].mxu0
    %v1937 = vpop.f32.mrb[0].mxu0
    %v1938 = vpop.f32.mrb[0].mxu0
    %1939 = vdwg.mxu0
    %v1940 = vadd.f32 %v1935, 3.0
    %v1941 = vmax.f32 %v1940, 0.0
    %v1942 = vmin.f32 %v1941, 6.0
    %v1943 = vmul.f32 %v1942, 0.16666667
    %v1944 = vmul.f32 %v1935, %v1943
    %v1945 = vld [vmem:[%s37 + $0x8] sm:$0xff]
    %v1946 = vld [vmem:[%s37 + $0x10] sm:$0xff]
    %v1947 = vld [vmem:[%s39] sm:$0xf]
    %v1948 = vpack.c.bf16 %v1944, %v1944
    %v1950 = vsel %vm1053, %v1947, 0
    %v1953 = vsel %vm1057, %v1948, 0
    %1955 = vmatprep.subr.bf16.mxu0 0
    %1956 = vmatpush1.bf16.msra.mxu0 %v1953
    %1957 = vmatprep.subr.bf16.mxu0 0
    %1958 = vmatpush1.bf16.msra.mxu0 0
    %1959 = vmatprep.subr.bf16.mxu0 0
    %1960 = vmatpush1.bf16.msra.mxu0 0
    %1961 = vmatprep.subr.bf16.mxu0 0
    %1962 = vmatpush1.bf16.msra.mxu0 0
    %1963 = vmatprep.subr.bf16.mxu0 0
    %1964 = vmatpush1.bf16.msra.mxu0 0
    %1965 = vmatprep.subr.bf16.mxu0 0
    %1966 = vmatpush1.bf16.msra.mxu0 0
    %1967 = vmatprep.subr.bf16.mxu0 0
    %1968 = vmatpush1.bf16.msra.mxu0 0
    %1969 = vmatprep.subr.bf16.mxu0 0
    %1970 = vmatpush1.bf16.msra.mxu0 0
    %1971 = vmatprep.subr.bf16.mxu0 0
    %1972 = vmatpush1.bf16.msra.mxu0 0
    %1973 = vmatprep.subr.bf16.mxu0 0
    %1974 = vmatpush1.bf16.msra.mxu0 0
    %1975 = vmatprep.subr.bf16.mxu0 0
    %1976 = vmatpush1.bf16.msra.mxu0 0
    %1977 = vmatprep.subr.bf16.mxu0 0
    %1978 = vmatpush1.bf16.msra.mxu0 0
    %1979 = vmatprep.subr.bf16.mxu0 0
    %1980 = vmatpush1.bf16.msra.mxu0 0
    %1981 = vmatprep.subr.bf16.mxu0 0
    %1982 = vmatpush1.bf16.msra.mxu0 0
    %1983 = vmatprep.subr.bf16.mxu0 0
    %1984 = vmatpush1.bf16.msra.mxu0 0
    %1985 = vmatprep.subr.bf16.mxu0 0
    %1986 = vmatpush1.bf16.msra.mxu0 0
    %1987 = vmatprep.mubr.bf16.mxu0 0
    %1988 = vmatmul.mubr.bf16.gmra.mrb[0].mxu0 %v1950
    %v1989 = vpop.f32.mrb[0].mxu0
    %v1990 = vadd.f32 0.0, %v1989
    %v1991 = vpop.f32.mrb[0].mxu0
    %v1992 = vpop.f32.mrb[0].mxu0
    %v1993 = vpop.f32.mrb[0].mxu0
    %1994 = vdwg.mxu0
    %v1995 = vlaneseq
    %v1996 = vshrl.u32 %v1995, 7
    %v1997 = vsub.s32 4, %v1996
    %v1998 = vrot.slane %v1945, %v1997
    %v1999 = vmul.f32 %v1990, %v1998
    %v2000 = vlaneseq
    %v2001 = vshrl.u32 %v2000, 7
    %v2002 = vsub.s32 5, %v2001
    %v2003 = vrot.slane %v1945, %v2002
    %v2004 = vmul.f32 %v1990, %v2003
    %v2006 = vrot.slane %v2004, 2
    %v2008 = vadd.f32 %v1999, %v2006
    %v2009 = vlaneseq
    %v2010 = vshrl.u32 %v2009, 7
    %v2011 = vsub.s32 1, %v2010
    %v2012 = vrot.slane %v1946, %v2011
    %v2013 = vmul.f32 %v1990, %v2012
    %v2015 = vrot.slane %v2013, 4
    %v2017 = vadd.f32 %v2008, %v2015
    %v2018 = vlaneseq
    %v2019 = vshrl.u32 %v2018, 7
    %v2020 = vsub.s32 2, %v2019
    %v2021 = vrot.slane %v1946, %v2020
    %v2022 = vmul.f32 %v1990, %v2021
    %v2024 = vrot.slane %v2022, 6
    %v2026 = vadd.f32 %v2017, %v2024
    %v2027 = vld [vmem:[%s1 + $0x2c] ss:$0 sm:$0xff]
    %v2028 = vadd.f32 %v2026, %v2027
    %v2029 = vadd.f32 %v2028, 3.0
    %v2030 = vmax.f32 %v2029, 0.0
    %v2031 = vmin.f32 %v2030, 6.0
    %v2032 = vmul.f32 %v2031, 0.16666667
    %v2033 = vmul.f32 %v2028, %v2032
    %v2034 = vpack.c.bf16 %v2033, %v2033
    %v2035 = vld [vmem:[%s41] sm:$0xf]
    %v2036 = vld [vmem:[%s41 + $0x4] sm:$0xf]
    %v2037 = vld [vmem:[%s41 + $0x8] sm:$0xf]
    %v2038 = vld [vmem:[%s41 + $0xc] sm:$0xf]
    %v2039 = vld [vmem:[%s41 + $0x10] sm:$0xf]
    %v2040 = vld [vmem:[%s41 + $0x14] sm:$0xf]
    %v2041 = vld [vmem:[%s41 + $0x18] sm:$0xf]
    %v2042 = vld [vmem:[%s41 + $0x1c] sm:$0xf]
    %v2043 = vld [vmem:[%s41 + $0x20] sm:$0xf]
    %v2044 = vld [vmem:[%s41 + $0x24] sm:$0xf]
    %v2045 = vld [vmem:[%s41 + $0x28] sm:$0xf]
    %v2046 = vld [vmem:[%s41 + $0x2c] sm:$0xf]
    %v2047 = vld [vmem:[%s1 + $0x2d] ss:$0 sm:$0xff]
    %v2060 = vunpack.c.l.b16 %v2035
    %v2061 = vunpack.c.l.b16 %v2036
    %v2062 = vunpack.c.l.b16 %v2037
    %v2063 = vunpack.c.l.b16 %v2038
    %v2064 = vunpack.c.l.b16 %v2039
    %v2065 = vunpack.c.l.b16 %v2040
    %v2066 = vunpack.c.l.b16 %v2041
    %v2067 = vunpack.c.l.b16 %v2042
    %v2068 = vunpack.c.l.b16 %v2043
    %v2069 = vunpack.c.l.b16 %v2044
    %v2070 = vunpack.c.l.b16 %v2045
    %v2071 = vunpack.c.l.b16 %v2046
    %v2072 = vpack.c.b16 %v2061, %v2060
    %v2073 = vpack.c.b16 %v2063, %v2062
    %v2074 = vpack.c.b16 %v2065, %v2064
    %v2075 = vpack.c.b16 %v2067, %v2066
    %v2076 = vpack.c.b16 %v2069, %v2068
    %v2077 = vpack.c.b16 %v2071, %v2070
    %vm2084 = vcmask 785408
    %v2086 = vsel %vm2084, %v2034, 0
    %2088 = vmatprep.subr.bf16.mxu0 0
    %2089 = vmatpush1.bf16.msra.mxu0 %v2072
    %2090 = vmatprep.subr.bf16.mxu0 0
    %2091 = vmatpush1.bf16.msra.mxu0 %v2073
    %2092 = vmatprep.subr.bf16.mxu0 0
    %2093 = vmatpush1.bf16.msra.mxu0 %v2074
    %2094 = vmatprep.subr.bf16.mxu0 0
    %2095 = vmatpush1.bf16.msra.mxu0 %v2075
    %2096 = vmatprep.subr.bf16.mxu0 0
    %2097 = vmatpush1.bf16.msra.mxu0 %v2076
    %2098 = vmatprep.subr.bf16.mxu0 0
    %2099 = vmatpush1.bf16.msra.mxu0 %v2077
    %2100 = vmatprep.subr.bf16.mxu0 0
    %2101 = vmatpush1.bf16.msra.mxu0 0
    %2102 = vmatprep.subr.bf16.mxu0 0
    %2103 = vmatpush1.bf16.msra.mxu0 0
    %2104 = vmatprep.subr.bf16.mxu0 0
    %2105 = vmatpush1.bf16.msra.mxu0 0
    %2106 = vmatprep.subr.bf16.mxu0 0
    %2107 = vmatpush1.bf16.msra.mxu0 0
    %2108 = vmatprep.subr.bf16.mxu0 0
    %2109 = vmatpush1.bf16.msra.mxu0 0
    %2110 = vmatprep.subr.bf16.mxu0 0
    %2111 = vmatpush1.bf16.msra.mxu0 0
    %2112 = vmatprep.subr.bf16.mxu0 0
    %2113 = vmatpush1.bf16.msra.mxu0 0
    %2114 = vmatprep.subr.bf16.mxu0 0
    %2115 = vmatpush1.bf16.msra.mxu0 0
    %2116 = vmatprep.subr.bf16.mxu0 0
    %2117 = vmatpush1.bf16.msra.mxu0 0
    %2118 = vmatprep.subr.bf16.mxu0 0
    %2119 = vmatpush1.bf16.msra.mxu0 0
    %2120 = vmatprep.mubr.bf16.mxu0 0
    %2121 = vmatmul.mubr.bf16.gmra.mrb[0].mxu0 %v2086
    %v2122 = vpop.f32.mrb[0].mxu0
    %v2123 = vadd.f32 %v2047, %v2122
    %v2124 = vpop.f32.mrb[0].mxu0
    %v2125 = vpop.f32.mrb[0].mxu0
    %v2126 = vpop.f32.mrb[0].mxu0
    %2127 = vdwg.mxu0
    %v2128 = vmax.f32 %v2123, 0.0
    %v2129 = vpack.c.bf16 %v2128, %v2128
    %v2130 = vld [vmem:[%s43] sm:$0xf]
    %v2131 = vld [vmem:[%s43 + $0x4] sm:$0xf]
    %v2132 = vld [vmem:[%s43 + $0x8] sm:$0xf]
    %v2133 = vld [vmem:[%s1 + $0x2e] ss:$0 sm:$0xff]
    %v2137 = vunpack.c.l.b16 %v2130
    %v2138 = vunpack.c.l.b16 %v2131
    %v2139 = vunpack.c.l.b16 %v2132
    %v2140 = vpack.c.b16 %v2138, %v2137
    %v2141 = vpack.c.b16 %v2139, %v2139
    %v2144 = vsel %vm1556, %v2129, 0
    %v2147 = vsel %vm1057, %v2141, 0
    %2149 = vmatprep.subr.bf16.mxu0 0
    %2150 = vmatpush1.bf16.msra.mxu0 %v2140
    %2151 = vmatprep.subr.bf16.mxu0 0
    %2152 = vmatpush1.bf16.msra.mxu0 %v2147
    %2153 = vmatprep.subr.bf16.mxu0 0
    %2154 = vmatpush1.bf16.msra.mxu0 0
    %2155 = vmatprep.subr.bf16.mxu0 0
    %2156 = vmatpush1.bf16.msra.mxu0 0
    %2157 = vmatprep.subr.bf16.mxu0 0
    %2158 = vmatpush1.bf16.msra.mxu0 0
    %2159 = vmatprep.subr.bf16.mxu0 0
    %2160 = vmatpush1.bf16.msra.mxu0 0
    %2161 = vmatprep.subr.bf16.mxu0 0
    %2162 = vmatpush1.bf16.msra.mxu0 0
    %2163 = vmatprep.subr.bf16.mxu0 0
    %2164 = vmatpush1.bf16.msra.mxu0 0
    %2165 = vmatprep.subr.bf16.mxu0 0
    %2166 = vmatpush1.bf16.msra.mxu0 0
    %2167 = vmatprep.subr.bf16.mxu0 0
    %2168 = vmatpush1.bf16.msra.mxu0 0
    %2169 = vmatprep.subr.bf16.mxu0 0
    %2170 = vmatpush1.bf16.msra.mxu0 0
    %2171 = vmatprep.subr.bf16.mxu0 0
    %2172 = vmatpush1.bf16.msra.mxu0 0
    %2173 = vmatprep.subr.bf16.mxu0 0
    %2174 = vmatpush1.bf16.msra.mxu0 0
    %2175 = vmatprep.subr.bf16.mxu0 0
    %2176 = vmatpush1.bf16.msra.mxu0 0
    %2177 = vmatprep.subr.bf16.mxu0 0
    %2178 = vmatpush1.bf16.msra.mxu0 0
    %2179 = vmatprep.subr.bf16.mxu0 0
    %2180 = vmatpush1.bf16.msra.mxu0 0
    %2181 = vmatprep.mubr.bf16.mxu0 0
    %2182 = vmatmul.mubr.bf16.gmra.mrb[0].mxu0 %v2144
    %v2183 = vpop.f32.mrb[0].mxu0
    %v2184 = vadd.f32 %v2133, %v2183
    %v2185 = vpop.f32.mrb[0].mxu0
    %v2186 = vpop.f32.mrb[0].mxu0
    %v2187 = vpop.f32.mrb[0].mxu0
    %2188 = vdwg.mxu0
    %v2189 = vadd.f32 %v2184, 3.0
    %v2190 = vmax.f32 %v2189, 0.0
    %v2191 = vmin.f32 %v2190, 6.0
    %v2192 = vmul.f32 %v2191, 0.16666667
    %v2193 = vmul.f32 %v2033, %v2192
    %v2194 = vpack.c.bf16 %v2193, %v2193
    %v2195 = vld [vmem:[%s45] sm:$0xf]
    %v2196 = vld [vmem:[%s45 + $0x4] sm:$0xf]
    %v2197 = vld [vmem:[%s45 + $0x8] sm:$0xf]
    %v2198 = vld [vmem:[%s45 + $0xc] sm:$0xf]
    %v2199 = vld [vmem:[%s45 + $0x10] sm:$0xf]
    %v2200 = vld [vmem:[%s45 + $0x14] sm:$0xf]
    %v2201 = vld [vmem:[%s45 + $0x18] sm:$0xf]
    %v2202 = vld [vmem:[%s45 + $0x1c] sm:$0xf]
    %v2203 = vld [vmem:[%s45 + $0x20] sm:$0xf]
    %v2204 = vld [vmem:[%s45 + $0x24] sm:$0xf]
    %v2205 = vld [vmem:[%s45 + $0x28] sm:$0xf]
    %v2206 = vld [vmem:[%s45 + $0x2c] sm:$0xf]
    %v2207 = vld [vmem:[%s1 + $0x2f] ss:$0 sm:$0xff]
    %v2220 = vunpack.c.l.b16 %v2195
    %v2221 = vunpack.c.l.b16 %v2196
    %v2222 = vunpack.c.l.b16 %v2197
    %v2223 = vunpack.c.l.b16 %v2198
    %v2224 = vunpack.c.l.b16 %v2199
    %v2225 = vunpack.c.l.b16 %v2200
    %v2226 = vunpack.c.l.b16 %v2201
    %v2227 = vunpack.c.l.b16 %v2202
    %v2228 = vunpack.c.l.b16 %v2203
    %v2229 = vunpack.c.l.b16 %v2204
    %v2230 = vunpack.c.l.b16 %v2205
    %v2231 = vunpack.c.l.b16 %v2206
    %v2232 = vpack.c.b16 %v2221, %v2220
    %v2233 = vpack.c.b16 %v2223, %v2222
    %v2234 = vpack.c.b16 %v2225, %v2224
    %v2235 = vpack.c.b16 %v2227, %v2226
    %v2236 = vpack.c.b16 %v2229, %v2228
    %v2237 = vpack.c.b16 %v2231, %v2230
    %v2245 = vsel %vm2084, %v2194, 0
    %2247 = vmatprep.subr.bf16.mxu0 0
    %2248 = vmatpush1.bf16.msra.mxu0 %v2232
    %2249 = vmatprep.subr.bf16.mxu0 0
    %2250 = vmatpush1.bf16.msra.mxu0 %v2233
    %2251 = vmatprep.subr.bf16.mxu0 0
    %2252 = vmatpush1.bf16.msra.mxu0 %v2234
    %2253 = vmatprep.subr.bf16.mxu0 0
    %2254 = vmatpush1.bf16.msra.mxu0 %v2235
    %2255 = vmatprep.subr.bf16.mxu0 0
    %2256 = vmatpush1.bf16.msra.mxu0 %v2236
    %2257 = vmatprep.subr.bf16.mxu0 0
    %2258 = vmatpush1.bf16.msra.mxu0 %v2237
    %2259 = vmatprep.subr.bf16.mxu0 0
    %2260 = vmatpush1.bf16.msra.mxu0 0
    %2261 = vmatprep.subr.bf16.mxu0 0
    %2262 = vmatpush1.bf16.msra.mxu0 0
    %2263 = vmatprep.subr.bf16.mxu0 0
    %2264 = vmatpush1.bf16.msra.mxu0 0
    %2265 = vmatprep.subr.bf16.mxu0 0
    %2266 = vmatpush1.bf16.msra.mxu0 0
    %2267 = vmatprep.subr.bf16.mxu0 0
    %2268 = vmatpush1.bf16.msra.mxu0 0
    %2269 = vmatprep.subr.bf16.mxu0 0
    %2270 = vmatpush1.bf16.msra.mxu0 0
    %2271 = vmatprep.subr.bf16.mxu0 0
    %2272 = vmatpush1.bf16.msra.mxu0 0
    %2273 = vmatprep.subr.bf16.mxu0 0
    %2274 = vmatpush1.bf16.msra.mxu0 0
    %2275 = vmatprep.subr.bf16.mxu0 0
    %2276 = vmatpush1.bf16.msra.mxu0 0
    %2277 = vmatprep.subr.bf16.mxu0 0
    %2278 = vmatpush1.bf16.msra.mxu0 0
    %2279 = vmatprep.mubr.bf16.mxu0 0
    %2280 = vmatmul.mubr.bf16.gmra.mrb[0].mxu0 %v2245
    %v2281 = vpop.f32.mrb[0].mxu0
    %v2282 = vadd.f32 %v2207, %v2281
    %v2283 = vpop.f32.mrb[0].mxu0
    %v2284 = vpop.f32.mrb[0].mxu0
    %v2285 = vpop.f32.mrb[0].mxu0
    %2286 = vdwg.mxu0
    %v2287 = vpack.c.bf16 %v2282, %v2282
    %v2288 = vld [vmem:[%s47] sm:$0xff]
    %v2289 = vld [vmem:[%s47 + $0x8] sm:$0xff]
    %v2290 = vld [vmem:[%s47 + $0x10] sm:$0xff]
    %v2291 = vld [vmem:[%s47 + $0x18] sm:$0xff]
    %v2292 = vld [vmem:[%s47 + $0x20] sm:$0xff]
    %s2293 = scalar_lea.vmem %s1, 80
    %v2294 = vld [vmem:[%s2293] ss:$8 sm:$0x3]
    %v2296 = vlaneseq
    %v2297 = vshrl.u32 %v2296, 7
    %v2298 = vsub.s32 0, %v2297
    %v2299 = vrot.slane %v2294, %v2298
    %v2300 = vlaneseq
    %v2301 = vshrl.u32 %v2300, 7
    %v2302 = vsub.s32 1, %v2301
    %v2303 = vrot.slane %v2294, %v2302
    %v2311 = vunpack.c.l.b16 %v2288
    %v2312 = vunpack.c.h.b16 %v2288
    %v2313 = vunpack.c.l.b16 %v2289
    %v2314 = vunpack.c.h.b16 %v2289
    %v2315 = vunpack.c.l.b16 %v2290
    %v2316 = vunpack.c.h.b16 %v2290
    %v2317 = vunpack.c.l.b16 %v2291
    %v2318 = vunpack.c.h.b16 %v2291
    %v2319 = vunpack.c.l.b16 %v2292
    %v2320 = vunpack.c.h.b16 %v2292
    %v2321 = vpack.c.b16 %v2313, %v2311
    %v2322 = vpack.c.b16 %v2314, %v2312
    %v2323 = vpack.c.b16 %v2317, %v2315
    %v2324 = vpack.c.b16 %v2318, %v2316
    %v2325 = vpack.c.b16 %v2319, %v2319
    %v2326 = vpack.c.b16 %v2320, %v2320
    %vm2331 = vcmask 326656
    %v2333 = vsel %vm2331, %v2287, 0
    %v2336 = vsel %vm1057, %v2325, 0
    %v2339 = vsel %vm1057, %v2326, 0
    %2341 = vmatprep.subr.bf16.mxu0 %v2322
    %2342 = vmatpush1.bf16.msra.mxu0 %v2321
    %2343 = vmatprep.subr.bf16.mxu0 %v2324
    %2344 = vmatpush1.bf16.msra.mxu0 %v2323
    %2345 = vmatprep.subr.bf16.mxu0 %v2339
    %2346 = vmatpush1.bf16.msra.mxu0 %v2336
    %2347 = vmatprep.subr.bf16.mxu0 0
    %2348 = vmatpush1.bf16.msra.mxu0 0
    %2349 = vmatprep.subr.bf16.mxu0 0
    %2350 = vmatpush1.bf16.msra.mxu0 0
    %2351 = vmatprep.subr.bf16.mxu0 0
    %2352 = vmatpush1.bf16.msra.mxu0 0
    %2353 = vmatprep.subr.bf16.mxu0 0
    %2354 = vmatpush1.bf16.msra.mxu0 0
    %2355 = vmatprep.subr.bf16.mxu0 0
    %2356 = vmatpush1.bf16.msra.mxu0 0
    %2357 = vmatprep.subr.bf16.mxu0 0
    %2358 = vmatpush1.bf16.msra.mxu0 0
    %2359 = vmatprep.subr.bf16.mxu0 0
    %2360 = vmatpush1.bf16.msra.mxu0 0
    %2361 = vmatprep.subr.bf16.mxu0 0
    %2362 = vmatpush1.bf16.msra.mxu0 0
    %2363 = vmatprep.subr.bf16.mxu0 0
    %2364 = vmatpush1.bf16.msra.mxu0 0
    %2365 = vmatprep.subr.bf16.mxu0 0
    %2366 = vmatpush1.bf16.msra.mxu0 0
    %2367 = vmatprep.subr.bf16.mxu0 0
    %2368 = vmatpush1.bf16.msra.mxu0 0
    %2369 = vmatprep.subr.bf16.mxu0 0
    %2370 = vmatpush1.bf16.msra.mxu0 0
    %2371 = vmatprep.subr.bf16.mxu0 0
    %2372 = vmatpush1.bf16.msra.mxu0 0
    %2373 = vmatprep.mubr.bf16.mxu0 0
    %2374 = vmatmul.mubr.bf16.gmra.mrb[0].mxu0 %v2333
    %v2375 = vpop.f32.mrb[0].mxu0
    %v2376 = vadd.f32 %v2299, %v2375
    %v2377 = vpop.f32.mrb[0].mxu0
    %v2378 = vadd.f32 %v2303, %v2377
    %v2379 = vpop.f32.mrb[0].mxu0
    %v2380 = vpop.f32.mrb[0].mxu0
    %2381 = vdwg.mxu0
    %v2382 = vadd.f32 %v2376, 3.0
    %v2383 = vadd.f32 %v2378, 3.0
    %v2384 = vmax.f32 %v2382, 0.0
    %v2385 = vmax.f32 %v2383, 0.0
    %v2386 = vmin.f32 %v2384, 6.0
    %v2387 = vmin.f32 %v2385, 6.0
    %v2388 = vmul.f32 %v2386, 0.16666667
    %v2389 = vmul.f32 %v2387, 0.16666667
    %v2390 = vmul.f32 %v2376, %v2388
    %v2391 = vmul.f32 %v2378, %v2389
    %v2392 = vld [vmem:[%s49 + $0x10] sm:$0xff]
    %v2393 = vld [vmem:[%s49 + $0x18] sm:$0xff]
    %v2394 = vlaneseq
    %v2395 = vshrl.u32 %v2394, 7
    %v2396 = vsub.s32 4, %v2395
    %v2397 = vrot.slane %v2392, %v2396
    %v2398 = vlaneseq
    %v2399 = vshrl.u32 %v2398, 7
    %v2400 = vsub.s32 4, %v2399
    %v2401 = vrot.slane %v2393, %v2400
    %v2402 = vmul.f32 %v2390, %v2397
    %v2403 = vmul.f32 %v2391, %v2401
    %s2404 = scalar_lea.vmem %s1, 81
    %v2405 = vld [vmem:[%s2404] ss:$8 sm:$0x3]
    %v2407 = vlaneseq
    %v2408 = vshrl.u32 %v2407, 7
    %v2409 = vsub.s32 0, %v2408
    %v2410 = vrot.slane %v2405, %v2409
    %v2411 = vlaneseq
    %v2412 = vshrl.u32 %v2411, 7
    %v2413 = vsub.s32 1, %v2412
    %v2414 = vrot.slane %v2405, %v2413
    %v2417 = vadd.f32 %v2402, %v2410
    %v2418 = vadd.f32 %v2403, %v2414
    %v2419 = vadd.f32 %v2417, 3.0
    %v2420 = vadd.f32 %v2418, 3.0
    %v2421 = vmax.f32 %v2419, 0.0
    %v2422 = vmax.f32 %v2420, 0.0
    %v2423 = vmin.f32 %v2421, 6.0
    %v2424 = vmin.f32 %v2422, 6.0
    %v2425 = vmul.f32 %v2423, 0.16666667
    %v2426 = vmul.f32 %v2424, 0.16666667
    %v2427 = vmul.f32 %v2417, %v2425
    %v2428 = vmul.f32 %v2418, %v2426
    %v2429 = vpack.c.bf16 %v2427, %v2427
    %v2430 = vpack.c.bf16 %v2428, %v2428
    %v2431 = vld [vmem:[%s51] sm:$0xf]
    %v2432 = vld [vmem:[%s51 + $0x4] sm:$0xf]
    %v2433 = vld [vmem:[%s51 + $0x8] sm:$0xf]
    %v2434 = vld [vmem:[%s51 + $0xc] sm:$0xf]
    %v2435 = vld [vmem:[%s51 + $0x10] sm:$0xf]
    %v2436 = vld [vmem:[%s51 + $0x14] sm:$0xf]
    %v2437 = vld [vmem:[%s51 + $0x18] sm:$0xf]
    %v2438 = vld [vmem:[%s51 + $0x1c] sm:$0xf]
    %v2439 = vld [vmem:[%s51 + $0x20] sm:$0xf]
    %v2440 = vld [vmem:[%s51 + $0x24] sm:$0xf]
    %v2441 = vld [vmem:[%s51 + $0x28] sm:$0xf]
    %v2442 = vld [vmem:[%s51 + $0x2c] sm:$0xf]
    %v2443 = vld [vmem:[%s51 + $0x30] sm:$0xf]
    %v2444 = vld [vmem:[%s51 + $0x34] sm:$0xf]
    %v2445 = vld [vmem:[%s51 + $0x38] sm:$0xf]
    %v2446 = vld [vmem:[%s51 + $0x3c] sm:$0xf]
    %v2447 = vld [vmem:[%s51 + $0x40] sm:$0xf]
    %v2448 = vld [vmem:[%s51 + $0x44] sm:$0xf]
    %v2449 = vld [vmem:[%s51 + $0x48] sm:$0xf]
    %v2450 = vld [vmem:[%s51 + $0x4c] sm:$0xf]
    %v2451 = vld [vmem:[%s51 + $0x50] sm:$0xf]
    %v2452 = vld [vmem:[%s51 + $0x54] sm:$0xf]
    %v2453 = vld [vmem:[%s51 + $0x58] sm:$0xf]
    %v2454 = vld [vmem:[%s51 + $0x5c] sm:$0xf]
    %v2455 = vld [vmem:[%s51 + $0x60] sm:$0xf]
    %v2456 = vld [vmem:[%s51 + $0x64] sm:$0xf]
    %v2457 = vld [vmem:[%s51 + $0x68] sm:$0xf]
    %v2458 = vld [vmem:[%s51 + $0x6c] sm:$0xf]
    %v2459 = vld [vmem:[%s51 + $0x70] sm:$0xf]
    %v2460 = vld [vmem:[%s51 + $0x74] sm:$0xf]
    %v2461 = vld [vmem:[%s1 + $0x52] ss:$0 sm:$0xff]
    %v2492 = vunpack.c.l.b16 %v2431
    %v2493 = vunpack.c.l.b16 %v2432
    %v2494 = vunpack.c.l.b16 %v2433
    %v2495 = vunpack.c.l.b16 %v2434
    %v2496 = vunpack.c.l.b16 %v2435
    %v2497 = vunpack.c.l.b16 %v2436
    %v2498 = vunpack.c.l.b16 %v2437
    %v2499 = vunpack.c.l.b16 %v2438
    %v2500 = vunpack.c.l.b16 %v2439
    %v2501 = vunpack.c.l.b16 %v2440
    %v2502 = vunpack.c.l.b16 %v2441
    %v2503 = vunpack.c.l.b16 %v2442
    %v2504 = vunpack.c.l.b16 %v2443
    %v2505 = vunpack.c.l.b16 %v2444
    %v2506 = vunpack.c.l.b16 %v2445
    %v2507 = vunpack.c.l.b16 %v2446
    %v2508 = vunpack.c.l.b16 %v2447
    %v2509 = vunpack.c.l.b16 %v2448
    %v2510 = vunpack.c.l.b16 %v2449
    %v2511 = vunpack.c.l.b16 %v2450
    %v2512 = vunpack.c.l.b16 %v2451
    %v2513 = vunpack.c.l.b16 %v2452
    %v2514 = vunpack.c.l.b16 %v2453
    %v2515 = vunpack.c.l.b16 %v2454
    %v2516 = vunpack.c.l.b16 %v2455
    %v2517 = vunpack.c.l.b16 %v2456
    %v2518 = vunpack.c.l.b16 %v2457
    %v2519 = vunpack.c.l.b16 %v2458
    %v2520 = vunpack.c.l.b16 %v2459
    %v2521 = vunpack.c.l.b16 %v2460
    %v2522 = vpack.c.b16 %v2493, %v2492
    %v2523 = vpack.c.b16 %v2495, %v2494
    %v2524 = vpack.c.b16 %v2497, %v2496
    %v2525 = vpack.c.b16 %v2499, %v2498
    %v2526 = vpack.c.b16 %v2501, %v2500
    %v2527 = vpack.c.b16 %v2503, %v2502
    %v2528 = vpack.c.b16 %v2505, %v2504
    %v2529 = vpack.c.b16 %v2507, %v2506
    %v2530 = vpack.c.b16 %v2509, %v2508
    %v2531 = vpack.c.b16 %v2511, %v2510
    %v2532 = vpack.c.b16 %v2513, %v2512
    %v2533 = vpack.c.b16 %v2515, %v2514
    %v2534 = vpack.c.b16 %v2517, %v2516
    %v2535 = vpack.c.b16 %v2519, %v2518
    %v2536 = vpack.c.b16 %v2521, %v2520
    %vm2552 = vcmask 916480
    %v2554 = vsel %vm2552, %v2430, 0
    %2556 = vmatprep.subr.bf16.mxu0 0
    %2557 = vmatpush1.bf16.msra.mxu0 %v2522
    %2558 = vmatprep.subr.bf16.mxu0 0
    %2559 = vmatpush1.bf16.msra.mxu0 %v2523
    %2560 = vmatprep.subr.bf16.mxu0 0
    %2561 = vmatpush1.bf16.msra.mxu0 %v2524
    %2562 = vmatprep.subr.bf16.mxu0 0
    %2563 = vmatpush1.bf16.msra.mxu0 %v2525
    %2564 = vmatprep.subr.bf16.mxu0 0
    %2565 = vmatpush1.bf16.msra.mxu0 %v2526
    %2566 = vmatprep.subr.bf16.mxu0 0
    %2567 = vmatpush1.bf16.msra.mxu0 %v2527
    %2568 = vmatprep.subr.bf16.mxu0 0
    %2569 = vmatpush1.bf16.msra.mxu0 %v2528
    %2570 = vmatprep.subr.bf16.mxu0 0
    %2571 = vmatpush1.bf16.msra.mxu0 %v2529
    %2572 = vmatprep.subr.bf16.mxu0 0
    %2573 = vmatpush1.bf16.msra.mxu0 %v2530
    %2574 = vmatprep.subr.bf16.mxu0 0
    %2575 = vmatpush1.bf16.msra.mxu0 %v2531
    %2576 = vmatprep.subr.bf16.mxu0 0
    %2577 = vmatpush1.bf16.msra.mxu0 %v2532
    %2578 = vmatprep.subr.bf16.mxu0 0
    %2579 = vmatpush1.bf16.msra.mxu0 %v2533
    %2580 = vmatprep.subr.bf16.mxu0 0
    %2581 = vmatpush1.bf16.msra.mxu0 %v2534
    %2582 = vmatprep.subr.bf16.mxu0 0
    %2583 = vmatpush1.bf16.msra.mxu0 %v2535
    %2584 = vmatprep.subr.bf16.mxu0 0
    %2585 = vmatpush1.bf16.msra.mxu0 %v2536
    %2586 = vmatprep.subr.bf16.mxu0 0
    %2587 = vmatpush1.bf16.msra.mxu0 0
    %2588 = vmatprep.mubr.bf16.mxu0 %v2554
    %2589 = vmatmul.mubr.bf16.gmra.mrb[0].mxu0 %v2429
    %v2590 = vpop.f32.mrb[0].mxu0
    %v2591 = vadd.f32 %v2461, %v2590
    %v2592 = vpop.f32.mrb[0].mxu0
    %v2593 = vpop.f32.mrb[0].mxu0
    %v2594 = vpop.f32.mrb[0].mxu0
    %2595 = vdwg.mxu0
    %v2596 = vmax.f32 %v2591, 0.0
    %v2597 = vpack.c.bf16 %v2596, %v2596
    %v2598 = vld [vmem:[%s53] sm:$0xff]
    %v2599 = vld [vmem:[%s53 + $0x8] sm:$0xff]
    %v2600 = vld [vmem:[%s53 + $0x10] sm:$0xff]
    %v2601 = vld [vmem:[%s53 + $0x18] sm:$0xff]
    %v2602 = vld [vmem:[%s53 + $0x20] sm:$0xff]
    %v2603 = vld [vmem:[%s53 + $0x28] sm:$0xff]
    %v2604 = vld [vmem:[%s53 + $0x30] sm:$0xff]
    %v2605 = vld [vmem:[%s53 + $0x38] sm:$0xff]
    %s2606 = scalar_lea.vmem %s1, 83
    %v2607 = vld [vmem:[%s2606] ss:$8 sm:$0x3]
    %v2609 = vlaneseq
    %v2610 = vshrl.u32 %v2609, 7
    %v2611 = vsub.s32 0, %v2610
    %v2612 = vrot.slane %v2607, %v2611
    %v2613 = vlaneseq
    %v2614 = vshrl.u32 %v2613, 7
    %v2615 = vsub.s32 1, %v2614
    %v2616 = vrot.slane %v2607, %v2615
    %v2627 = vunpack.c.l.b16 %v2598
    %v2628 = vunpack.c.h.b16 %v2598
    %v2629 = vunpack.c.l.b16 %v2599
    %v2630 = vunpack.c.h.b16 %v2599
    %v2631 = vunpack.c.l.b16 %v2600
    %v2632 = vunpack.c.h.b16 %v2600
    %v2633 = vunpack.c.l.b16 %v2601
    %v2634 = vunpack.c.h.b16 %v2601
    %v2635 = vunpack.c.l.b16 %v2602
    %v2636 = vunpack.c.h.b16 %v2602
    %v2637 = vunpack.c.l.b16 %v2603
    %v2638 = vunpack.c.h.b16 %v2603
    %v2639 = vunpack.c.l.b16 %v2604
    %v2640 = vunpack.c.h.b16 %v2604
    %v2641 = vunpack.c.l.b16 %v2605
    %v2642 = vunpack.c.h.b16 %v2605
    %v2643 = vpack.c.b16 %v2629, %v2627
    %v2644 = vpack.c.b16 %v2630, %v2628
    %v2645 = vpack.c.b16 %v2633, %v2631
    %v2646 = vpack.c.b16 %v2634, %v2632
    %v2647 = vpack.c.b16 %v2637, %v2635
    %v2648 = vpack.c.b16 %v2638, %v2636
    %v2649 = vpack.c.b16 %v2641, %v2639
    %v2650 = vpack.c.b16 %v2642, %v2640
    %vm2659 = vcmask 523264
    %v2661 = vsel %vm2659, %v2597, 0
    %2663 = vmatprep.subr.bf16.mxu0 %v2644
    %2664 = vmatpush1.bf16.msra.mxu0 %v2643
    %2665 = vmatprep.subr.bf16.mxu0 %v2646
    %2666 = vmatpush1.bf16.msra.mxu0 %v2645
    %2667 = vmatprep.subr.bf16.mxu0 %v2648
    %2668 = vmatpush1.bf16.msra.mxu0 %v2647
    %2669 = vmatprep.subr.bf16.mxu0 %v2650
    %2670 = vmatpush1.bf16.msra.mxu0 %v2649
    %2671 = vmatprep.subr.bf16.mxu0 0
    %2672 = vmatpush1.bf16.msra.mxu0 0
    %2673 = vmatprep.subr.bf16.mxu0 0
    %2674 = vmatpush1.bf16.msra.mxu0 0
    %2675 = vmatprep.subr.bf16.mxu0 0
    %2676 = vmatpush1.bf16.msra.mxu0 0
    %2677 = vmatprep.subr.bf16.mxu0 0
    %2678 = vmatpush1.bf16.msra.mxu0 0
    %2679 = vmatprep.subr.bf16.mxu0 0
    %2680 = vmatpush1.bf16.msra.mxu0 0
    %2681 = vmatprep.subr.bf16.mxu0 0
    %2682 = vmatpush1.bf16.msra.mxu0 0
    %2683 = vmatprep.subr.bf16.mxu0 0
    %2684 = vmatpush1.bf16.msra.mxu0 0
    %2685 = vmatprep.subr.bf16.mxu0 0
    %2686 = vmatpush1.bf16.msra.mxu0 0
    %2687 = vmatprep.subr.bf16.mxu0 0
    %2688 = vmatpush1.bf16.msra.mxu0 0
    %2689 = vmatprep.subr.bf16.mxu0 0
    %2690 = vmatpush1.bf16.msra.mxu0 0
    %2691 = vmatprep.subr.bf16.mxu0 0
    %2692 = vmatpush1.bf16.msra.mxu0 0
    %2693 = vmatprep.subr.bf16.mxu0 0
    %2694 = vmatpush1.bf16.msra.mxu0 0
    %2695 = vmatprep.mubr.bf16.mxu0 0
    %2696 = vmatmul.mubr.bf16.gmra.mrb[0].mxu0 %v2661
    %v2697 = vpop.f32.mrb[0].mxu0
    %v2698 = vadd.f32 %v2612, %v2697
    %v2699 = vpop.f32.mrb[0].mxu0
    %v2700 = vadd.f32 %v2616, %v2699
    %v2701 = vpop.f32.mrb[0].mxu0
    %v2702 = vpop.f32.mrb[0].mxu0
    %2703 = vdwg.mxu0
    %v2704 = vadd.f32 %v2698, 3.0
    %v2705 = vadd.f32 %v2700, 3.0
    %v2706 = vmax.f32 %v2704, 0.0
    %v2707 = vmax.f32 %v2705, 0.0
    %v2708 = vmin.f32 %v2706, 6.0
    %v2709 = vmin.f32 %v2707, 6.0
    %v2710 = vmul.f32 %v2708, 0.16666667
    %v2711 = vmul.f32 %v2709, 0.16666667
    %v2712 = vmul.f32 %v2427, %v2710
    %v2713 = vmul.f32 %v2428, %v2711
    %v2714 = vpack.c.bf16 %v2712, %v2712
    %v2715 = vpack.c.bf16 %v2713, %v2713
    %v2716 = vld [vmem:[%s55] sm:$0xf]
    %v2717 = vld [vmem:[%s55 + $0x4] sm:$0xf]
    %v2718 = vld [vmem:[%s55 + $0x8] sm:$0xf]
    %v2719 = vld [vmem:[%s55 + $0xc] sm:$0xf]
    %v2720 = vld [vmem:[%s55 + $0x10] sm:$0xf]
    %v2721 = vld [vmem:[%s55 + $0x14] sm:$0xf]
    %v2722 = vld [vmem:[%s55 + $0x18] sm:$0xf]
    %v2723 = vld [vmem:[%s55 + $0x1c] sm:$0xf]
    %v2724 = vld [vmem:[%s55 + $0x20] sm:$0xf]
    %v2725 = vld [vmem:[%s55 + $0x24] sm:$0xf]
    %v2726 = vld [vmem:[%s55 + $0x28] sm:$0xf]
    %v2727 = vld [vmem:[%s55 + $0x2c] sm:$0xf]
    %v2728 = vld [vmem:[%s55 + $0x30] sm:$0xf]
    %v2729 = vld [vmem:[%s55 + $0x34] sm:$0xf]
    %v2730 = vld [vmem:[%s55 + $0x38] sm:$0xf]
    %v2731 = vld [vmem:[%s55 + $0x3c] sm:$0xf]
    %v2732 = vld [vmem:[%s55 + $0x40] sm:$0xf]
    %v2733 = vld [vmem:[%s55 + $0x44] sm:$0xf]
    %v2734 = vld [vmem:[%s55 + $0x48] sm:$0xf]
    %v2735 = vld [vmem:[%s55 + $0x4c] sm:$0xf]
    %v2736 = vld [vmem:[%s55 + $0x50] sm:$0xf]
    %v2737 = vld [vmem:[%s55 + $0x54] sm:$0xf]
    %v2738 = vld [vmem:[%s55 + $0x58] sm:$0xf]
    %v2739 = vld [vmem:[%s55 + $0x5c] sm:$0xf]
    %v2740 = vld [vmem:[%s55 + $0x60] sm:$0xf]
    %v2741 = vld [vmem:[%s55 + $0x64] sm:$0xf]
    %v2742 = vld [vmem:[%s55 + $0x68] sm:$0xf]
    %v2743 = vld [vmem:[%s55 + $0x6c] sm:$0xf]
    %v2744 = vld [vmem:[%s55 + $0x70] sm:$0xf]
    %v2745 = vld [vmem:[%s55 + $0x74] sm:$0xf]
    %v2746 = vld [vmem:[%s1 + $0x54] ss:$0 sm:$0xff]
    %v2777 = vunpack.c.l.b16 %v2716
    %v2778 = vunpack.c.l.b16 %v2717
    %v2779 = vunpack.c.l.b16 %v2718
    %v2780 = vunpack.c.l.b16 %v2719
    %v2781 = vunpack.c.l.b16 %v2720
    %v2782 = vunpack.c.l.b16 %v2721
    %v2783 = vunpack.c.l.b16 %v2722
    %v2784 = vunpack.c.l.b16 %v2723
    %v2785 = vunpack.c.l.b16 %v2724
    %v2786 = vunpack.c.l.b16 %v2725
    %v2787 = vunpack.c.l.b16 %v2726
    %v2788 = vunpack.c.l.b16 %v2727
    %v2789 = vunpack.c.l.b16 %v2728
    %v2790 = vunpack.c.l.b16 %v2729
    %v2791 = vunpack.c.l.b16 %v2730
    %v2792 = vunpack.c.l.b16 %v2731
    %v2793 = vunpack.c.l.b16 %v2732
    %v2794 = vunpack.c.l.b16 %v2733
    %v2795 = vunpack.c.l.b16 %v2734
    %v2796 = vunpack.c.l.b16 %v2735
    %v2797 = vunpack.c.l.b16 %v2736
    %v2798 = vunpack.c.l.b16 %v2737
    %v2799 = vunpack.c.l.b16 %v2738
    %v2800 = vunpack.c.l.b16 %v2739
    %v2801 = vunpack.c.l.b16 %v2740
    %v2802 = vunpack.c.l.b16 %v2741
    %v2803 = vunpack.c.l.b16 %v2742
    %v2804 = vunpack.c.l.b16 %v2743
    %v2805 = vunpack.c.l.b16 %v2744
    %v2806 = vunpack.c.l.b16 %v2745
    %v2807 = vpack.c.b16 %v2778, %v2777
    %v2808 = vpack.c.b16 %v2780, %v2779
    %v2809 = vpack.c.b16 %v2782, %v2781
    %v2810 = vpack.c.b16 %v2784, %v2783
    %v2811 = vpack.c.b16 %v2786, %v2785
    %v2812 = vpack.c.b16 %v2788, %v2787
    %v2813 = vpack.c.b16 %v2790, %v2789
    %v2814 = vpack.c.b16 %v2792, %v2791
    %v2815 = vpack.c.b16 %v2794, %v2793
    %v2816 = vpack.c.b16 %v2796, %v2795
    %v2817 = vpack.c.b16 %v2798, %v2797
    %v2818 = vpack.c.b16 %v2800, %v2799
    %v2819 = vpack.c.b16 %v2802, %v2801
    %v2820 = vpack.c.b16 %v2804, %v2803
    %v2821 = vpack.c.b16 %v2806, %v2805
    %v2838 = vsel %vm2552, %v2715, 0
    %2840 = vmatprep.subr.bf16.mxu0 0
    %2841 = vmatpush1.bf16.msra.mxu0 %v2807
    %2842 = vmatprep.subr.bf16.mxu0 0
    %2843 = vmatpush1.bf16.msra.mxu0 %v2808
    %2844 = vmatprep.subr.bf16.mxu0 0
    %2845 = vmatpush1.bf16.msra.mxu0 %v2809
    %2846 = vmatprep.subr.bf16.mxu0 0
    %2847 = vmatpush1.bf16.msra.mxu0 %v2810
    %2848 = vmatprep.subr.bf16.mxu0 0
    %2849 = vmatpush1.bf16.msra.mxu0 %v2811
    %2850 = vmatprep.subr.bf16.mxu0 0
    %2851 = vmatpush1.bf16.msra.mxu0 %v2812
    %2852 = vmatprep.subr.bf16.mxu0 0
    %2853 = vmatpush1.bf16.msra.mxu0 %v2813
    %2854 = vmatprep.subr.bf16.mxu0 0
    %2855 = vmatpush1.bf16.msra.mxu0 %v2814
    %2856 = vmatprep.subr.bf16.mxu0 0
    %2857 = vmatpush1.bf16.msra.mxu0 %v2815
    %2858 = vmatprep.subr.bf16.mxu0 0
    %2859 = vmatpush1.bf16.msra.mxu0 %v2816
    %2860 = vmatprep.subr.bf16.mxu0 0
    %2861 = vmatpush1.bf16.msra.mxu0 %v2817
    %2862 = vmatprep.subr.bf16.mxu0 0
    %2863 = vmatpush1.bf16.msra.mxu0 %v2818
    %2864 = vmatprep.subr.bf16.mxu0 0
    %2865 = vmatpush1.bf16.msra.mxu0 %v2819
    %2866 = vmatprep.subr.bf16.mxu0 0
    %2867 = vmatpush1.bf16.msra.mxu0 %v2820
    %2868 = vmatprep.subr.bf16.mxu0 0
    %2869 = vmatpush1.bf16.msra.mxu0 %v2821
    %2870 = vmatprep.subr.bf16.mxu0 0
    %2871 = vmatpush1.bf16.msra.mxu0 0
    %2872 = vmatprep.mubr.bf16.mxu0 %v2838
    %2873 = vmatmul.mubr.bf16.gmra.mrb[0].mxu0 %v2714
    %v2874 = vpop.f32.mrb[0].mxu0
    %v2875 = vadd.f32 %v2746, %v2874
    %v2876 = vpop.f32.mrb[0].mxu0
    %v2877 = vpop.f32.mrb[0].mxu0
    %v2878 = vpop.f32.mrb[0].mxu0
    %2879 = vdwg.mxu0
    %v2880 = vadd.f32 %v2875, %v2282
    %v2881 = vpack.c.bf16 %v2880, %v2880
    %v2882 = vld [vmem:[%s57] sm:$0xff]
    %v2883 = vld [vmem:[%s57 + $0x8] sm:$0xff]
    %v2884 = vld [vmem:[%s57 + $0x10] sm:$0xff]
    %v2885 = vld [vmem:[%s57 + $0x18] sm:$0xff]
    %v2886 = vld [vmem:[%s57 + $0x20] sm:$0xff]
    %s2887 = scalar_lea.vmem %s1, 85
    %v2888 = vld [vmem:[%s2887] ss:$8 sm:$0x3]
    %v2890 = vlaneseq
    %v2891 = vshrl.u32 %v2890, 7
    %v2892 = vsub.s32 0, %v2891
    %v2893 = vrot.slane %v2888, %v2892
    %v2894 = vlaneseq
    %v2895 = vshrl.u32 %v2894, 7
    %v2896 = vsub.s32 1, %v2895
    %v2897 = vrot.slane %v2888, %v2896
    %v2905 = vunpack.c.l.b16 %v2882
    %v2906 = vunpack.c.h.b16 %v2882
    %v2907 = vunpack.c.l.b16 %v2883
    %v2908 = vunpack.c.h.b16 %v2883
    %v2909 = vunpack.c.l.b16 %v2884
    %v2910 = vunpack.c.h.b16 %v2884
    %v2911 = vunpack.c.l.b16 %v2885
    %v2912 = vunpack.c.h.b16 %v2885
    %v2913 = vunpack.c.l.b16 %v2886
    %v2914 = vunpack.c.h.b16 %v2886
    %v2915 = vpack.c.b16 %v2907, %v2905
    %v2916 = vpack.c.b16 %v2908, %v2906
    %v2917 = vpack.c.b16 %v2911, %v2909
    %v2918 = vpack.c.b16 %v2912, %v2910
    %v2919 = vpack.c.b16 %v2913, %v2913
    %v2920 = vpack.c.b16 %v2914, %v2914
    %v2926 = vsel %vm2331, %v2881, 0
    %v2929 = vsel %vm1057, %v2919, 0
    %v2932 = vsel %vm1057, %v2920, 0
    %2934 = vmatprep.subr.bf16.mxu0 %v2916
    %2935 = vmatpush1.bf16.msra.mxu0 %v2915
    %2936 = vmatprep.subr.bf16.mxu0 %v2918
    %2937 = vmatpush1.bf16.msra.mxu0 %v2917
    %2938 = vmatprep.subr.bf16.mxu0 %v2932
    %2939 = vmatpush1.bf16.msra.mxu0 %v2929
    %2940 = vmatprep.subr.bf16.mxu0 0
    %2941 = vmatpush1.bf16.msra.mxu0 0
    %2942 = vmatprep.subr.bf16.mxu0 0
    %2943 = vmatpush1.bf16.msra.mxu0 0
    %2944 = vmatprep.subr.bf16.mxu0 0
    %2945 = vmatpush1.bf16.msra.mxu0 0
    %2946 = vmatprep.subr.bf16.mxu0 0
    %2947 = vmatpush1.bf16.msra.mxu0 0
    %2948 = vmatprep.subr.bf16.mxu0 0
    %2949 = vmatpush1.bf16.msra.mxu0 0
    %2950 = vmatprep.subr.bf16.mxu0 0
    %2951 = vmatpush1.bf16.msra.mxu0 0
    %2952 = vmatprep.subr.bf16.mxu0 0
    %2953 = vmatpush1.bf16.msra.mxu0 0
    %2954 = vmatprep.subr.bf16.mxu0 0
    %2955 = vmatpush1.bf16.msra.mxu0 0
    %2956 = vmatprep.subr.bf16.mxu0 0
    %2957 = vmatpush1.bf16.msra.mxu0 0
    %2958 = vmatprep.subr.bf16.mxu0 0
    %2959 = vmatpush1.bf16.msra.mxu0 0
    %2960 = vmatprep.subr.bf16.mxu0 0
    %2961 = vmatpush1.bf16.msra.mxu0 0
    %2962 = vmatprep.subr.bf16.mxu0 0
    %2963 = vmatpush1.bf16.msra.mxu0 0
    %2964 = vmatprep.subr.bf16.mxu0 0
    %2965 = vmatpush1.bf16.msra.mxu0 0
    %2966 = vmatprep.mubr.bf16.mxu0 0
    %2967 = vmatmul.mubr.bf16.gmra.mrb[0].mxu0 %v2926
    %v2968 = vpop.f32.mrb[0].mxu0
    %v2969 = vadd.f32 %v2893, %v2968
    %v2970 = vpop.f32.mrb[0].mxu0
    %v2971 = vadd.f32 %v2897, %v2970
    %v2972 = vpop.f32.mrb[0].mxu0
    %v2973 = vpop.f32.mrb[0].mxu0
    %2974 = vdwg.mxu0
    %v2975 = vadd.f32 %v2969, 3.0
    %v2976 = vadd.f32 %v2971, 3.0
    %v2977 = vmax.f32 %v2975, 0.0
    %v2978 = vmax.f32 %v2976, 0.0
    %v2979 = vmin.f32 %v2977, 6.0
    %v2980 = vmin.f32 %v2978, 6.0
    %v2981 = vmul.f32 %v2979, 0.16666667
    %v2982 = vmul.f32 %v2980, 0.16666667
    %v2983 = vmul.f32 %v2969, %v2981
    %v2984 = vmul.f32 %v2971, %v2982
    %v2985 = vld [vmem:[%s59 + $0x10] sm:$0xff]
    %v2986 = vld [vmem:[%s59 + $0x18] sm:$0xff]
    %v2987 = vlaneseq
    %v2988 = vshrl.u32 %v2987, 7
    %v2989 = vsub.s32 4, %v2988
    %v2990 = vrot.slane %v2985, %v2989
    %v2991 = vlaneseq
    %v2992 = vshrl.u32 %v2991, 7
    %v2993 = vsub.s32 4, %v2992
    %v2994 = vrot.slane %v2986, %v2993
    %v2995 = vmul.f32 %v2983, %v2990
    %v2996 = vmul.f32 %v2984, %v2994
    %s2997 = scalar_lea.vmem %s1, 86
    %v2998 = vld [vmem:[%s2997] ss:$8 sm:$0x3]
    %v3000 = vlaneseq
    %v3001 = vshrl.u32 %v3000, 7
    %v3002 = vsub.s32 0, %v3001
    %v3003 = vrot.slane %v2998, %v3002
    %v3004 = vlaneseq
    %v3005 = vshrl.u32 %v3004, 7
    %v3006 = vsub.s32 1, %v3005
    %v3007 = vrot.slane %v2998, %v3006
    %v3010 = vadd.f32 %v2995, %v3003
    %v3011 = vadd.f32 %v2996, %v3007
    %v3012 = vadd.f32 %v3010, 3.0
    %v3013 = vadd.f32 %v3011, 3.0
    %v3014 = vmax.f32 %v3012, 0.0
    %v3015 = vmax.f32 %v3013, 0.0
    %v3016 = vmin.f32 %v3014, 6.0
    %v3017 = vmin.f32 %v3015, 6.0
    %v3018 = vmul.f32 %v3016, 0.16666667
    %v3019 = vmul.f32 %v3017, 0.16666667
    %v3020 = vmul.f32 %v3010, %v3018
    %v3021 = vmul.f32 %v3011, %v3019
    %v3022 = vpack.c.bf16 %v3020, %v3020
    %v3023 = vpack.c.bf16 %v3021, %v3021
    %v3024 = vld [vmem:[%s61] sm:$0xf]
    %v3025 = vld [vmem:[%s61 + $0x4] sm:$0xf]
    %v3026 = vld [vmem:[%s61 + $0x8] sm:$0xf]
    %v3027 = vld [vmem:[%s61 + $0xc] sm:$0xf]
    %v3028 = vld [vmem:[%s61 + $0x10] sm:$0xf]
    %v3029 = vld [vmem:[%s61 + $0x14] sm:$0xf]
    %v3030 = vld [vmem:[%s61 + $0x18] sm:$0xf]
    %v3031 = vld [vmem:[%s61 + $0x1c] sm:$0xf]
    %v3032 = vld [vmem:[%s61 + $0x20] sm:$0xf]
    %v3033 = vld [vmem:[%s61 + $0x24] sm:$0xf]
    %v3034 = vld [vmem:[%s61 + $0x28] sm:$0xf]
    %v3035 = vld [vmem:[%s61 + $0x2c] sm:$0xf]
    %v3036 = vld [vmem:[%s61 + $0x30] sm:$0xf]
    %v3037 = vld [vmem:[%s61 + $0x34] sm:$0xf]
    %v3038 = vld [vmem:[%s61 + $0x38] sm:$0xf]
    %v3039 = vld [vmem:[%s61 + $0x3c] sm:$0xf]
    %v3040 = vld [vmem:[%s61 + $0x40] sm:$0xf]
    %v3041 = vld [vmem:[%s61 + $0x44] sm:$0xf]
    %v3042 = vld [vmem:[%s61 + $0x48] sm:$0xf]
    %v3043 = vld [vmem:[%s61 + $0x4c] sm:$0xf]
    %v3044 = vld [vmem:[%s61 + $0x50] sm:$0xf]
    %v3045 = vld [vmem:[%s61 + $0x54] sm:$0xf]
    %v3046 = vld [vmem:[%s61 + $0x58] sm:$0xf]
    %v3047 = vld [vmem:[%s61 + $0x5c] sm:$0xf]
    %v3048 = vld [vmem:[%s61 + $0x60] sm:$0xf]
    %v3049 = vld [vmem:[%s61 + $0x64] sm:$0xf]
    %v3050 = vld [vmem:[%s61 + $0x68] sm:$0xf]
    %v3051 = vld [vmem:[%s61 + $0x6c] sm:$0xf]
    %v3052 = vld [vmem:[%s61 + $0x70] sm:$0xf]
    %v3053 = vld [vmem:[%s61 + $0x74] sm:$0xf]
    %v3054 = vld [vmem:[%s1 + $0x57] ss:$0 sm:$0xff]
    %v3085 = vunpack.c.l.b16 %v3024
    %v3086 = vunpack.c.l.b16 %v3025
    %v3087 = vunpack.c.l.b16 %v3026
    %v3088 = vunpack.c.l.b16 %v3027
    %v3089 = vunpack.c.l.b16 %v3028
    %v3090 = vunpack.c.l.b16 %v3029
    %v3091 = vunpack.c.l.b16 %v3030
    %v3092 = vunpack.c.l.b16 %v3031
    %v3093 = vunpack.c.l.b16 %v3032
    %v3094 = vunpack.c.l.b16 %v3033
    %v3095 = vunpack.c.l.b16 %v3034
    %v3096 = vunpack.c.l.b16 %v3035
    %v3097 = vunpack.c.l.b16 %v3036
    %v3098 = vunpack.c.l.b16 %v3037
    %v3099 = vunpack.c.l.b16 %v3038
    %v3100 = vunpack.c.l.b16 %v3039
    %v3101 = vunpack.c.l.b16 %v3040
    %v3102 = vunpack.c.l.b16 %v3041
    %v3103 = vunpack.c.l.b16 %v3042
    %v3104 = vunpack.c.l.b16 %v3043
    %v3105 = vunpack.c.l.b16 %v3044
    %v3106 = vunpack.c.l.b16 %v3045
    %v3107 = vunpack.c.l.b16 %v3046
    %v3108 = vunpack.c.l.b16 %v3047
    %v3109 = vunpack.c.l.b16 %v3048
    %v3110 = vunpack.c.l.b16 %v3049
    %v3111 = vunpack.c.l.b16 %v3050
    %v3112 = vunpack.c.l.b16 %v3051
    %v3113 = vunpack.c.l.b16 %v3052
    %v3114 = vunpack.c.l.b16 %v3053
    %v3115 = vpack.c.b16 %v3086, %v3085
    %v3116 = vpack.c.b16 %v3088, %v3087
    %v3117 = vpack.c.b16 %v3090, %v3089
    %v3118 = vpack.c.b16 %v3092, %v3091
    %v3119 = vpack.c.b16 %v3094, %v3093
    %v3120 = vpack.c.b16 %v3096, %v3095
    %v3121 = vpack.c.b16 %v3098, %v3097
    %v3122 = vpack.c.b16 %v3100, %v3099
    %v3123 = vpack.c.b16 %v3102, %v3101
    %v3124 = vpack.c.b16 %v3104, %v3103
    %v3125 = vpack.c.b16 %v3106, %v3105
    %v3126 = vpack.c.b16 %v3108, %v3107
    %v3127 = vpack.c.b16 %v3110, %v3109
    %v3128 = vpack.c.b16 %v3112, %v3111
    %v3129 = vpack.c.b16 %v3114, %v3113
    %v3146 = vsel %vm2552, %v3023, 0
    %3148 = vmatprep.subr.bf16.mxu0 0
    %3149 = vmatpush1.bf16.msra.mxu0 %v3115
    %3150 = vmatprep.subr.bf16.mxu0 0
    %3151 = vmatpush1.bf16.msra.mxu0 %v3116
    %3152 = vmatprep.subr.bf16.mxu0 0
    %3153 = vmatpush1.bf16.msra.mxu0 %v3117
    %3154 = vmatprep.subr.bf16.mxu0 0
    %3155 = vmatpush1.bf16.msra.mxu0 %v3118
    %3156 = vmatprep.subr.bf16.mxu0 0
    %3157 = vmatpush1.bf16.msra.mxu0 %v3119
    %3158 = vmatprep.subr.bf16.mxu0 0
    %3159 = vmatpush1.bf16.msra.mxu0 %v3120
    %3160 = vmatprep.subr.bf16.mxu0 0
    %3161 = vmatpush1.bf16.msra.mxu0 %v3121
    %3162 = vmatprep.subr.bf16.mxu0 0
    %3163 = vmatpush1.bf16.msra.mxu0 %v3122
    %3164 = vmatprep.subr.bf16.mxu0 0
    %3165 = vmatpush1.bf16.msra.mxu0 %v3123
    %3166 = vmatprep.subr.bf16.mxu0 0
    %3167 = vmatpush1.bf16.msra.mxu0 %v3124
    %3168 = vmatprep.subr.bf16.mxu0 0
    %3169 = vmatpush1.bf16.msra.mxu0 %v3125
    %3170 = vmatprep.subr.bf16.mxu0 0
    %3171 = vmatpush1.bf16.msra.mxu0 %v3126
    %3172 = vmatprep.subr.bf16.mxu0 0
    %3173 = vmatpush1.bf16.msra.mxu0 %v3127
    %3174 = vmatprep.subr.bf16.mxu0 0
    %3175 = vmatpush1.bf16.msra.mxu0 %v3128
    %3176 = vmatprep.subr.bf16.mxu0 0
    %3177 = vmatpush1.bf16.msra.mxu0 %v3129
    %3178 = vmatprep.subr.bf16.mxu0 0
    %3179 = vmatpush1.bf16.msra.mxu0 0
    %3180 = vmatprep.mubr.bf16.mxu0 %v3146
    %3181 = vmatmul.mubr.bf16.gmra.mrb[0].mxu0 %v3022
    %v3182 = vpop.f32.mrb[0].mxu0
    %v3183 = vadd.f32 %v3054, %v3182
    %v3184 = vpop.f32.mrb[0].mxu0
    %v3185 = vpop.f32.mrb[0].mxu0
    %v3186 = vpop.f32.mrb[0].mxu0
    %3187 = vdwg.mxu0
    %v3188 = vmax.f32 %v3183, 0.0
    %v3189 = vpack.c.bf16 %v3188, %v3188
    %v3190 = vld [vmem:[%s63] sm:$0xff]
    %v3191 = vld [vmem:[%s63 + $0x8] sm:$0xff]
    %v3192 = vld [vmem:[%s63 + $0x10] sm:$0xff]
    %v3193 = vld [vmem:[%s63 + $0x18] sm:$0xff]
    %v3194 = vld [vmem:[%s63 + $0x20] sm:$0xff]
    %v3195 = vld [vmem:[%s63 + $0x28] sm:$0xff]
    %v3196 = vld [vmem:[%s63 + $0x30] sm:$0xff]
    %v3197 = vld [vmem:[%s63 + $0x38] sm:$0xff]
    %s3198 = scalar_lea.vmem %s1, 120
    %v3199 = vld [vmem:[%s3198] ss:$8 sm:$0x3]
    %v3201 = vlaneseq
    %v3202 = vshrl.u32 %v3201, 7
    %v3203 = vsub.s32 0, %v3202
    %v3204 = vrot.slane %v3199, %v3203
    %v3205 = vlaneseq
    %v3206 = vshrl.u32 %v3205, 7
    %v3207 = vsub.s32 1, %v3206
    %v3208 = vrot.slane %v3199, %v3207
    %v3219 = vunpack.c.l.b16 %v3190
    %v3220 = vunpack.c.h.b16 %v3190
    %v3221 = vunpack.c.l.b16 %v3191
    %v3222 = vunpack.c.h.b16 %v3191
    %v3223 = vunpack.c.l.b16 %v3192
    %v3224 = vunpack.c.h.b16 %v3192
    %v3225 = vunpack.c.l.b16 %v3193
    %v3226 = vunpack.c.h.b16 %v3193
    %v3227 = vunpack.c.l.b16 %v3194
    %v3228 = vunpack.c.h.b16 %v3194
    %v3229 = vunpack.c.l.b16 %v3195
    %v3230 = vunpack.c.h.b16 %v3195
    %v3231 = vunpack.c.l.b16 %v3196
    %v3232 = vunpack.c.h.b16 %v3196
    %v3233 = vunpack.c.l.b16 %v3197
    %v3234 = vunpack.c.h.b16 %v3197
    %v3235 = vpack.c.b16 %v3221, %v3219
    %v3236 = vpack.c.b16 %v3222, %v3220
    %v3237 = vpack.c.b16 %v3225, %v3223
    %v3238 = vpack.c.b16 %v3226, %v3224
    %v3239 = vpack.c.b16 %v3229, %v3227
    %v3240 = vpack.c.b16 %v3230, %v3228
    %v3241 = vpack.c.b16 %v3233, %v3231
    %v3242 = vpack.c.b16 %v3234, %v3232
    %v3252 = vsel %vm2659, %v3189, 0
    %3254 = vmatprep.subr.bf16.mxu0 %v3236
    %3255 = vmatpush1.bf16.msra.mxu0 %v3235
    %3256 = vmatprep.subr.bf16.mxu0 %v3238
    %3257 = vmatpush1.bf16.msra.mxu0 %v3237
    %3258 = vmatprep.subr.bf16.mxu0 %v3240
    %3259 = vmatpush1.bf16.msra.mxu0 %v3239
    %3260 = vmatprep.subr.bf16.mxu0 %v3242
    %3261 = vmatpush1.bf16.msra.mxu0 %v3241
    %3262 = vmatprep.subr.bf16.mxu0 0
    %3263 = vmatpush1.bf16.msra.mxu0 0
    %3264 = vmatprep.subr.bf16.mxu0 0
    %3265 = vmatpush1.bf16.msra.mxu0 0
    %3266 = vmatprep.subr.bf16.mxu0 0
    %3267 = vmatpush1.bf16.msra.mxu0 0
    %3268 = vmatprep.subr.bf16.mxu0 0
    %3269 = vmatpush1.bf16.msra.mxu0 0
    %3270 = vmatprep.subr.bf16.mxu0 0
    %3271 = vmatpush1.bf16.msra.mxu0 0
    %3272 = vmatprep.subr.bf16.mxu0 0
    %3273 = vmatpush1.bf16.msra.mxu0 0
    %3274 = vmatprep.subr.bf16.mxu0 0
    %3275 = vmatpush1.bf16.msra.mxu0 0
    %3276 = vmatprep.subr.bf16.mxu0 0
    %3277 = vmatpush1.bf16.msra.mxu0 0
    %3278 = vmatprep.subr.bf16.mxu0 0
    %3279 = vmatpush1.bf16.msra.mxu0 0
    %3280 = vmatprep.subr.bf16.mxu0 0
    %3281 = vmatpush1.bf16.msra.mxu0 0
    %3282 = vmatprep.subr.bf16.mxu0 0
    %3283 = vmatpush1.bf16.msra.mxu0 0
    %3284 = vmatprep.subr.bf16.mxu0 0
    %3285 = vmatpush1.bf16.msra.mxu0 0
    %3286 = vmatprep.mubr.bf16.mxu0 0
    %3287 = vmatmul.mubr.bf16.gmra.mrb[0].mxu0 %v3252
    %v3288 = vpop.f32.mrb[0].mxu0
    %v3289 = vadd.f32 %v3204, %v3288
    %v3290 = vpop.f32.mrb[0].mxu0
    %v3291 = vadd.f32 %v3208, %v3290
    %v3292 = vpop.f32.mrb[0].mxu0
    %v3293 = vpop.f32.mrb[0].mxu0
    %3294 = vdwg.mxu0
    %v3295 = vadd.f32 %v3289, 3.0
    %v3296 = vadd.f32 %v3291, 3.0
    %v3297 = vmax.f32 %v3295, 0.0
    %v3298 = vmax.f32 %v3296, 0.0
    %v3299 = vmin.f32 %v3297, 6.0
    %v3300 = vmin.f32 %v3298, 6.0
    %v3301 = vmul.f32 %v3299, 0.16666667
    %v3302 = vmul.f32 %v3300, 0.16666667
    %v3303 = vmul.f32 %v3020, %v3301
    %v3304 = vmul.f32 %v3021, %v3302
    %v3305 = vpack.c.bf16 %v3303, %v3303
    %v3306 = vpack.c.bf16 %v3304, %v3304
    %v3307 = vld [vmem:[%s65] sm:$0xf]
    %v3308 = vld [vmem:[%s65 + $0x4] sm:$0xf]
    %v3309 = vld [vmem:[%s65 + $0x8] sm:$0xf]
    %v3310 = vld [vmem:[%s65 + $0xc] sm:$0xf]
    %v3311 = vld [vmem:[%s65 + $0x10] sm:$0xf]
    %v3312 = vld [vmem:[%s65 + $0x14] sm:$0xf]
    %v3313 = vld [vmem:[%s65 + $0x18] sm:$0xf]
    %v3314 = vld [vmem:[%s65 + $0x1c] sm:$0xf]
    %v3315 = vld [vmem:[%s65 + $0x20] sm:$0xf]
    %v3316 = vld [vmem:[%s65 + $0x24] sm:$0xf]
    %v3317 = vld [vmem:[%s65 + $0x28] sm:$0xf]
    %v3318 = vld [vmem:[%s65 + $0x2c] sm:$0xf]
    %v3319 = vld [vmem:[%s65 + $0x30] sm:$0xf]
    %v3320 = vld [vmem:[%s65 + $0x34] sm:$0xf]
    %v3321 = vld [vmem:[%s65 + $0x38] sm:$0xf]
    %v3322 = vld [vmem:[%s65 + $0x3c] sm:$0xf]
    %v3323 = vld [vmem:[%s65 + $0x40] sm:$0xf]
    %v3324 = vld [vmem:[%s65 + $0x44] sm:$0xf]
    %v3325 = vld [vmem:[%s65 + $0x48] sm:$0xf]
    %v3326 = vld [vmem:[%s65 + $0x4c] sm:$0xf]
    %v3327 = vld [vmem:[%s65 + $0x50] sm:$0xf]
    %v3328 = vld [vmem:[%s65 + $0x54] sm:$0xf]
    %v3329 = vld [vmem:[%s65 + $0x58] sm:$0xf]
    %v3330 = vld [vmem:[%s65 + $0x5c] sm:$0xf]
    %v3331 = vld [vmem:[%s65 + $0x60] sm:$0xf]
    %v3332 = vld [vmem:[%s65 + $0x64] sm:$0xf]
    %v3333 = vld [vmem:[%s65 + $0x68] sm:$0xf]
    %v3334 = vld [vmem:[%s65 + $0x6c] sm:$0xf]
    %v3335 = vld [vmem:[%s65 + $0x70] sm:$0xf]
    %v3336 = vld [vmem:[%s65 + $0x74] sm:$0xf]
    %v3337 = vld [vmem:[%s1 + $0x79] ss:$0 sm:$0xff]
    %v3368 = vunpack.c.l.b16 %v3307
    %v3369 = vunpack.c.l.b16 %v3308
    %v3370 = vunpack.c.l.b16 %v3309
    %v3371 = vunpack.c.l.b16 %v3310
    %v3372 = vunpack.c.l.b16 %v3311
    %v3373 = vunpack.c.l.b16 %v3312
    %v3374 = vunpack.c.l.b16 %v3313
    %v3375 = vunpack.c.l.b16 %v3314
    %v3376 = vunpack.c.l.b16 %v3315
    %v3377 = vunpack.c.l.b16 %v3316
    %v3378 = vunpack.c.l.b16 %v3317
    %v3379 = vunpack.c.l.b16 %v3318
    %v3380 = vunpack.c.l.b16 %v3319
    %v3381 = vunpack.c.l.b16 %v3320
    %v3382 = vunpack.c.l.b16 %v3321
    %v3383 = vunpack.c.l.b16 %v3322
    %v3384 = vunpack.c.l.b16 %v3323
    %v3385 = vunpack.c.l.b16 %v3324
    %v3386 = vunpack.c.l.b16 %v3325
    %v3387 = vunpack.c.l.b16 %v3326
    %v3388 = vunpack.c.l.b16 %v3327
    %v3389 = vunpack.c.l.b16 %v3328
    %v3390 = vunpack.c.l.b16 %v3329
    %v3391 = vunpack.c.l.b16 %v3330
    %v3392 = vunpack.c.l.b16 %v3331
    %v3393 = vunpack.c.l.b16 %v3332
    %v3394 = vunpack.c.l.b16 %v3333
    %v3395 = vunpack.c.l.b16 %v3334
    %v3396 = vunpack.c.l.b16 %v3335
    %v3397 = vunpack.c.l.b16 %v3336
    %v3398 = vpack.c.b16 %v3369, %v3368
    %v3399 = vpack.c.b16 %v3371, %v3370
    %v3400 = vpack.c.b16 %v3373, %v3372
    %v3401 = vpack.c.b16 %v3375, %v3374
    %v3402 = vpack.c.b16 %v3377, %v3376
    %v3403 = vpack.c.b16 %v3379, %v3378
    %v3404 = vpack.c.b16 %v3381, %v3380
    %v3405 = vpack.c.b16 %v3383, %v3382
    %v3406 = vpack.c.b16 %v3385, %v3384
    %v3407 = vpack.c.b16 %v3387, %v3386
    %v3408 = vpack.c.b16 %v3389, %v3388
    %v3409 = vpack.c.b16 %v3391, %v3390
    %v3410 = vpack.c.b16 %v3393, %v3392
    %v3411 = vpack.c.b16 %v3395, %v3394
    %v3412 = vpack.c.b16 %v3397, %v3396
    %v3429 = vsel %vm2552, %v3306, 0
    %3431 = vmatprep.subr.bf16.mxu0 0
    %3432 = vmatpush1.bf16.msra.mxu0 %v3398
    %3433 = vmatprep.subr.bf16.mxu0 0
    %3434 = vmatpush1.bf16.msra.mxu0 %v3399
    %3435 = vmatprep.subr.bf16.mxu0 0
    %3436 = vmatpush1.bf16.msra.mxu0 %v3400
    %3437 = vmatprep.subr.bf16.mxu0 0
    %3438 = vmatpush1.bf16.msra.mxu0 %v3401
    %3439 = vmatprep.subr.bf16.mxu0 0
    %3440 = vmatpush1.bf16.msra.mxu0 %v3402
    %3441 = vmatprep.subr.bf16.mxu0 0
    %3442 = vmatpush1.bf16.msra.mxu0 %v3403
    %3443 = vmatprep.subr.bf16.mxu0 0
    %3444 = vmatpush1.bf16.msra.mxu0 %v3404
    %3445 = vmatprep.subr.bf16.mxu0 0
    %3446 = vmatpush1.bf16.msra.mxu0 %v3405
    %3447 = vmatprep.subr.bf16.mxu0 0
    %3448 = vmatpush1.bf16.msra.mxu0 %v3406
    %3449 = vmatprep.subr.bf16.mxu0 0
    %3450 = vmatpush1.bf16.msra.mxu0 %v3407
    %3451 = vmatprep.subr.bf16.mxu0 0
    %3452 = vmatpush1.bf16.msra.mxu0 %v3408
    %3453 = vmatprep.subr.bf16.mxu0 0
    %3454 = vmatpush1.bf16.msra.mxu0 %v3409
    %3455 = vmatprep.subr.bf16.mxu0 0
    %3456 = vmatpush1.bf16.msra.mxu0 %v3410
    %3457 = vmatprep.subr.bf16.mxu0 0
    %3458 = vmatpush1.bf16.msra.mxu0 %v3411
    %3459 = vmatprep.subr.bf16.mxu0 0
    %3460 = vmatpush1.bf16.msra.mxu0 %v3412
    %3461 = vmatprep.subr.bf16.mxu0 0
    %3462 = vmatpush1.bf16.msra.mxu0 0
    %3463 = vmatprep.mubr.bf16.mxu0 %v3429
    %3464 = vmatmul.mubr.bf16.gmra.mrb[0].mxu0 %v3305
    %v3465 = vpop.f32.mrb[0].mxu0
    %v3466 = vadd.f32 %v3337, %v3465
    %v3467 = vpop.f32.mrb[0].mxu0
    %v3468 = vpop.f32.mrb[0].mxu0
    %v3469 = vpop.f32.mrb[0].mxu0
    %3470 = vdwg.mxu0
    %v3471 = vadd.f32 %v3466, %v2880
    %v3472 = vpack.c.bf16 %v3471, %v3471
    %v3473 = vld [vmem:[%s67] sm:$0xf]
    %v3474 = vld [vmem:[%s67 + $0x4] sm:$0xf]
    %v3475 = vld [vmem:[%s67 + $0x8] sm:$0xf]
    %v3476 = vld [vmem:[%s67 + $0xc] sm:$0xf]
    %v3477 = vld [vmem:[%s67 + $0x10] sm:$0xf]
    %v3478 = vld [vmem:[%s1 + $0x7a] ss:$0 sm:$0xff]
    %v3484 = vunpack.c.l.b16 %v3473
    %v3485 = vunpack.c.l.b16 %v3474
    %v3486 = vunpack.c.l.b16 %v3475
    %v3487 = vunpack.c.l.b16 %v3476
    %v3488 = vunpack.c.l.b16 %v3477
    %v3489 = vpack.c.b16 %v3485, %v3484
    %v3490 = vpack.c.b16 %v3487, %v3486
    %v3491 = vpack.c.b16 %v3488, %v3488
    %v3495 = vsel %vm2331, %v3472, 0
    %v3498 = vsel %vm1057, %v3491, 0
    %3500 = vmatprep.subr.bf16.mxu0 0
    %3501 = vmatpush1.bf16.msra.mxu0 %v3489
    %3502 = vmatprep.subr.bf16.mxu0 0
    %3503 = vmatpush1.bf16.msra.mxu0 %v3490
    %3504 = vmatprep.subr.bf16.mxu0 0
    %3505 = vmatpush1.bf16.msra.mxu0 %v3498
    %3506 = vmatprep.subr.bf16.mxu0 0
    %3507 = vmatpush1.bf16.msra.mxu0 0
    %3508 = vmatprep.subr.bf16.mxu0 0
    %3509 = vmatpush1.bf16.msra.mxu0 0
    %3510 = vmatprep.subr.bf16.mxu0 0
    %3511 = vmatpush1.bf16.msra.mxu0 0
    %3512 = vmatprep.subr.bf16.mxu0 0
    %3513 = vmatpush1.bf16.msra.mxu0 0
    %3514 = vmatprep.subr.bf16.mxu0 0
    %3515 = vmatpush1.bf16.msra.mxu0 0
    %3516 = vmatprep.subr.bf16.mxu0 0
    %3517 = vmatpush1.bf16.msra.mxu0 0
    %3518 = vmatprep.subr.bf16.mxu0 0
    %3519 = vmatpush1.bf16.msra.mxu0 0
    %3520 = vmatprep.subr.bf16.mxu0 0
    %3521 = vmatpush1.bf16.msra.mxu0 0
    %3522 = vmatprep.subr.bf16.mxu0 0
    %3523 = vmatpush1.bf16.msra.mxu0 0
    %3524 = vmatprep.subr.bf16.mxu0 0
    %3525 = vmatpush1.bf16.msra.mxu0 0
    %3526 = vmatprep.subr.bf16.mxu0 0
    %3527 = vmatpush1.bf16.msra.mxu0 0
    %3528 = vmatprep.subr.bf16.mxu0 0
    %3529 = vmatpush1.bf16.msra.mxu0 0
    %3530 = vmatprep.subr.bf16.mxu0 0
    %3531 = vmatpush1.bf16.msra.mxu0 0
    %3532 = vmatprep.mubr.bf16.mxu0 0
    %3533 = vmatmul.mubr.bf16.gmra.mrb[0].mxu0 %v3495
    %v3534 = vpop.f32.mrb[0].mxu0
    %v3535 = vadd.f32 %v3478, %v3534
    %v3536 = vpop.f32.mrb[0].mxu0
    %v3537 = vpop.f32.mrb[0].mxu0
    %v3538 = vpop.f32.mrb[0].mxu0
    %3539 = vdwg.mxu0
    %v3540 = vadd.f32 %v3535, 3.0
    %v3541 = vmax.f32 %v3540, 0.0
    %v3542 = vmin.f32 %v3541, 6.0
    %v3543 = vmul.f32 %v3542, 0.16666667
    %v3544 = vmul.f32 %v3535, %v3543
    %v3545 = vld [vmem:[%s69 + $0x8] sm:$0xff]
    %v3546 = vlaneseq
    %v3547 = vshrl.u32 %v3546, 7
    %v3548 = vsub.s32 4, %v3547
    %v3549 = vrot.slane %v3545, %v3548
    %v3550 = vmul.f32 %v3544, %v3549
    %v3551 = vld [vmem:[%s1 + $0x7b] ss:$0 sm:$0xff]
    %v3552 = vadd.f32 %v3550, %v3551
    %v3553 = vadd.f32 %v3552, 3.0
    %v3554 = vmax.f32 %v3553, 0.0
    %v3555 = vmin.f32 %v3554, 6.0
    %v3556 = vmul.f32 %v3555, 0.16666667
    %v3557 = vmul.f32 %v3552, %v3556
    %v3558 = vpack.c.bf16 %v3557, %v3557
    %v3559 = vld [vmem:[%s71] sm:$0xf]
    %v3560 = vld [vmem:[%s71 + $0x4] sm:$0xf]
    %v3561 = vld [vmem:[%s71 + $0x8] sm:$0xf]
    %v3562 = vld [vmem:[%s71 + $0xc] sm:$0xf]
    %v3563 = vld [vmem:[%s71 + $0x10] sm:$0xf]
    %v3564 = vld [vmem:[%s71 + $0x14] sm:$0xf]
    %v3565 = vld [vmem:[%s71 + $0x18] sm:$0xf]
    %v3566 = vld [vmem:[%s71 + $0x1c] sm:$0xf]
    %v3567 = vld [vmem:[%s71 + $0x20] sm:$0xf]
    %v3568 = vld [vmem:[%s71 + $0x24] sm:$0xf]
    %v3569 = vld [vmem:[%s71 + $0x28] sm:$0xf]
    %v3570 = vld [vmem:[%s71 + $0x2c] sm:$0xf]
    %v3571 = vld [vmem:[%s71 + $0x30] sm:$0xf]
    %v3572 = vld [vmem:[%s71 + $0x34] sm:$0xf]
    %v3573 = vld [vmem:[%s71 + $0x38] sm:$0xf]
    %v3574 = vld [vmem:[%s1 + $0x7c] ss:$0 sm:$0xff]
    %v3590 = vunpack.c.l.b16 %v3559
    %v3591 = vunpack.c.l.b16 %v3560
    %v3592 = vunpack.c.l.b16 %v3561
    %v3593 = vunpack.c.l.b16 %v3562
    %v3594 = vunpack.c.l.b16 %v3563
    %v3595 = vunpack.c.l.b16 %v3564
    %v3596 = vunpack.c.l.b16 %v3565
    %v3597 = vunpack.c.l.b16 %v3566
    %v3598 = vunpack.c.l.b16 %v3567
    %v3599 = vunpack.c.l.b16 %v3568
    %v3600 = vunpack.c.l.b16 %v3569
    %v3601 = vunpack.c.l.b16 %v3570
    %v3602 = vunpack.c.l.b16 %v3571
    %v3603 = vunpack.c.l.b16 %v3572
    %v3604 = vunpack.c.l.b16 %v3573
    %v3605 = vpack.c.b16 %v3591, %v3590
    %v3606 = vpack.c.b16 %v3593, %v3592
    %v3607 = vpack.c.b16 %v3595, %v3594
    %v3608 = vpack.c.b16 %v3597, %v3596
    %v3609 = vpack.c.b16 %v3599, %v3598
    %v3610 = vpack.c.b16 %v3601, %v3600
    %v3611 = vpack.c.b16 %v3603, %v3602
    %v3612 = vpack.c.b16 %v3604, %v3604
    %vm3620 = vcmask 982016
    %v3622 = vsel %vm3620, %v3558, 0
    %v3625 = vsel %vm1057, %v3612, 0
    %3627 = vmatprep.subr.bf16.mxu0 0
    %3628 = vmatpush1.bf16.msra.mxu0 %v3605
    %3629 = vmatprep.subr.bf16.mxu0 0
    %3630 = vmatpush1.bf16.msra.mxu0 %v3606
    %3631 = vmatprep.subr.bf16.mxu0 0
    %3632 = vmatpush1.bf16.msra.mxu0 %v3607
    %3633 = vmatprep.subr.bf16.mxu0 0
    %3634 = vmatpush1.bf16.msra.mxu0 %v3608
    %3635 = vmatprep.subr.bf16.mxu0 0
    %3636 = vmatpush1.bf16.msra.mxu0 %v3609
    %3637 = vmatprep.subr.bf16.mxu0 0
    %3638 = vmatpush1.bf16.msra.mxu0 %v3610
    %3639 = vmatprep.subr.bf16.mxu0 0
    %3640 = vmatpush1.bf16.msra.mxu0 %v3611
    %3641 = vmatprep.subr.bf16.mxu0 0
    %3642 = vmatpush1.bf16.msra.mxu0 %v3625
    %3643 = vmatprep.subr.bf16.mxu0 0
    %3644 = vmatpush1.bf16.msra.mxu0 0
    %3645 = vmatprep.subr.bf16.mxu0 0
    %3646 = vmatpush1.bf16.msra.mxu0 0
    %3647 = vmatprep.subr.bf16.mxu0 0
    %3648 = vmatpush1.bf16.msra.mxu0 0
    %3649 = vmatprep.subr.bf16.mxu0 0
    %3650 = vmatpush1.bf16.msra.mxu0 0
    %3651 = vmatprep.subr.bf16.mxu0 0
    %3652 = vmatpush1.bf16.msra.mxu0 0
    %3653 = vmatprep.subr.bf16.mxu0 0
    %3654 = vmatpush1.bf16.msra.mxu0 0
    %3655 = vmatprep.subr.bf16.mxu0 0
    %3656 = vmatpush1.bf16.msra.mxu0 0
    %3657 = vmatprep.subr.bf16.mxu0 0
    %3658 = vmatpush1.bf16.msra.mxu0 0
    %3659 = vmatprep.mubr.bf16.mxu0 0
    %3660 = vmatmul.mubr.bf16.gmra.mrb[0].mxu0 %v3622
    %v3661 = vpop.f32.mrb[0].mxu0
    %v3662 = vadd.f32 %v3574, %v3661
    %v3663 = vpop.f32.mrb[0].mxu0
    %v3664 = vpop.f32.mrb[0].mxu0
    %v3665 = vpop.f32.mrb[0].mxu0
    %3666 = vdwg.mxu0
    %v3667 = vmax.f32 %v3662, 0.0
    %v3668 = vpack.c.bf16 %v3667, %v3667
    %v3669 = vld [vmem:[%s73] sm:$0xf]
    %v3670 = vld [vmem:[%s73 + $0x4] sm:$0xf]
    %v3671 = vld [vmem:[%s73 + $0x8] sm:$0xf]
    %v3672 = vld [vmem:[%s73 + $0xc] sm:$0xf]
    %v3673 = vld [vmem:[%s1 + $0x7d] ss:$0 sm:$0xff]
    %v3678 = vunpack.c.l.b16 %v3669
    %v3679 = vunpack.c.l.b16 %v3670
    %v3680 = vunpack.c.l.b16 %v3671
    %v3681 = vunpack.c.l.b16 %v3672
    %v3682 = vpack.c.b16 %v3679, %v3678
    %v3683 = vpack.c.b16 %v3681, %v3680
    %v3687 = vsel %vm303, %v3668, 0
    %3689 = vmatprep.subr.bf16.mxu0 0
    %3690 = vmatpush1.bf16.msra.mxu0 %v3682
    %3691 = vmatprep.subr.bf16.mxu0 0
    %3692 = vmatpush1.bf16.msra.mxu0 %v3683
    %3693 = vmatprep.subr.bf16.mxu0 0
    %3694 = vmatpush1.bf16.msra.mxu0 0
    %3695 = vmatprep.subr.bf16.mxu0 0
    %3696 = vmatpush1.bf16.msra.mxu0 0
    %3697 = vmatprep.subr.bf16.mxu0 0
    %3698 = vmatpush1.bf16.msra.mxu0 0
    %3699 = vmatprep.subr.bf16.mxu0 0
    %3700 = vmatpush1.bf16.msra.mxu0 0
    %3701 = vmatprep.subr.bf16.mxu0 0
    %3702 = vmatpush1.bf16.msra.mxu0 0
    %3703 = vmatprep.subr.bf16.mxu0 0
    %3704 = vmatpush1.bf16.msra.mxu0 0
    %3705 = vmatprep.subr.bf16.mxu0 0
    %3706 = vmatpush1.bf16.msra.mxu0 0
    %3707 = vmatprep.subr.bf16.mxu0 0
    %3708 = vmatpush1.bf16.msra.mxu0 0
    %3709 = vmatprep.subr.bf16.mxu0 0
    %3710 = vmatpush1.bf16.msra.mxu0 0
    %3711 = vmatprep.subr.bf16.mxu0 0
    %3712 = vmatpush1.bf16.msra.mxu0 0
    %3713 = vmatprep.subr.bf16.mxu0 0
    %3714 = vmatpush1.bf16.msra.mxu0 0
    %3715 = vmatprep.subr.bf16.mxu0 0
    %3716 = vmatpush1.bf16.msra.mxu0 0
    %3717 = vmatprep.subr.bf16.mxu0 0
    %3718 = vmatpush1.bf16.msra.mxu0 0
    %3719 = vmatprep.subr.bf16.mxu0 0
    %3720 = vmatpush1.bf16.msra.mxu0 0
    %3721 = vmatprep.mubr.bf16.mxu0 0
    %3722 = vmatmul.mubr.bf16.gmra.mrb[0].mxu0 %v3687
    %v3723 = vpop.f32.mrb[0].mxu0
    %v3724 = vadd.f32 %v3673, %v3723
    %v3725 = vpop.f32.mrb[0].mxu0
    %v3726 = vpop.f32.mrb[0].mxu0
    %v3727 = vpop.f32.mrb[0].mxu0
    %3728 = vdwg.mxu0
    %v3729 = vadd.f32 %v3724, 3.0
    %v3730 = vmax.f32 %v3729, 0.0
    %v3731 = vmin.f32 %v3730, 6.0
    %v3732 = vmul.f32 %v3731, 0.16666667
    %v3733 = vmul.f32 %v3557, %v3732
    %v3734 = vpack.c.bf16 %v3733, %v3733
    %v3735 = vld [vmem:[%s75] sm:$0xf]
    %v3736 = vld [vmem:[%s75 + $0x4] sm:$0xf]
    %v3737 = vld [vmem:[%s75 + $0x8] sm:$0xf]
    %v3738 = vld [vmem:[%s75 + $0xc] sm:$0xf]
    %v3739 = vld [vmem:[%s75 + $0x10] sm:$0xf]
    %v3740 = vld [vmem:[%s75 + $0x14] sm:$0xf]
    %v3741 = vld [vmem:[%s75 + $0x18] sm:$0xf]
    %v3742 = vld [vmem:[%s75 + $0x1c] sm:$0xf]
    %v3743 = vld [vmem:[%s75 + $0x20] sm:$0xf]
    %v3744 = vld [vmem:[%s75 + $0x24] sm:$0xf]
    %v3745 = vld [vmem:[%s75 + $0x28] sm:$0xf]
    %v3746 = vld [vmem:[%s75 + $0x2c] sm:$0xf]
    %v3747 = vld [vmem:[%s75 + $0x30] sm:$0xf]
    %v3748 = vld [vmem:[%s75 + $0x34] sm:$0xf]
    %v3749 = vld [vmem:[%s75 + $0x38] sm:$0xf]
    %v3750 = vld [vmem:[%s1 + $0x7e] ss:$0 sm:$0xff]
    %v3766 = vunpack.c.l.b16 %v3735
    %v3767 = vunpack.c.l.b16 %v3736
    %v3768 = vunpack.c.l.b16 %v3737
    %v3769 = vunpack.c.l.b16 %v3738
    %v3770 = vunpack.c.l.b16 %v3739
    %v3771 = vunpack.c.l.b16 %v3740
    %v3772 = vunpack.c.l.b16 %v3741
    %v3773 = vunpack.c.l.b16 %v3742
    %v3774 = vunpack.c.l.b16 %v3743
    %v3775 = vunpack.c.l.b16 %v3744
    %v3776 = vunpack.c.l.b16 %v3745
    %v3777 = vunpack.c.l.b16 %v3746
    %v3778 = vunpack.c.l.b16 %v3747
    %v3779 = vunpack.c.l.b16 %v3748
    %v3780 = vunpack.c.l.b16 %v3749
    %v3781 = vpack.c.b16 %v3767, %v3766
    %v3782 = vpack.c.b16 %v3769, %v3768
    %v3783 = vpack.c.b16 %v3771, %v3770
    %v3784 = vpack.c.b16 %v3773, %v3772
    %v3785 = vpack.c.b16 %v3775, %v3774
    %v3786 = vpack.c.b16 %v3777, %v3776
    %v3787 = vpack.c.b16 %v3779, %v3778
    %v3788 = vpack.c.b16 %v3780, %v3780
    %v3797 = vsel %vm3620, %v3734, 0
    %v3800 = vsel %vm1057, %v3788, 0
    %3802 = vmatprep.subr.bf16.mxu0 0
    %3803 = vmatpush1.bf16.msra.mxu0 %v3781
    %3804 = vmatprep.subr.bf16.mxu0 0
    %3805 = vmatpush1.bf16.msra.mxu0 %v3782
    %3806 = vmatprep.subr.bf16.mxu0 0
    %3807 = vmatpush1.bf16.msra.mxu0 %v3783
    %3808 = vmatprep.subr.bf16.mxu0 0
    %3809 = vmatpush1.bf16.msra.mxu0 %v3784
    %3810 = vmatprep.subr.bf16.mxu0 0
    %3811 = vmatpush1.bf16.msra.mxu0 %v3785
    %3812 = vmatprep.subr.bf16.mxu0 0
    %3813 = vmatpush1.bf16.msra.mxu0 %v3786
    %3814 = vmatprep.subr.bf16.mxu0 0
    %3815 = vmatpush1.bf16.msra.mxu0 %v3787
    %3816 = vmatprep.subr.bf16.mxu0 0
    %3817 = vmatpush1.bf16.msra.mxu0 %v3800
    %3818 = vmatprep.subr.bf16.mxu0 0
    %3819 = vmatpush1.bf16.msra.mxu0 0
    %3820 = vmatprep.subr.bf16.mxu0 0
    %3821 = vmatpush1.bf16.msra.mxu0 0
    %3822 = vmatprep.subr.bf16.mxu0 0
    %3823 = vmatpush1.bf16.msra.mxu0 0
    %3824 = vmatprep.subr.bf16.mxu0 0
    %3825 = vmatpush1.bf16.msra.mxu0 0
    %3826 = vmatprep.subr.bf16.mxu0 0
    %3827 = vmatpush1.bf16.msra.mxu0 0
    %3828 = vmatprep.subr.bf16.mxu0 0
    %3829 = vmatpush1.bf16.msra.mxu0 0
    %3830 = vmatprep.subr.bf16.mxu0 0
    %3831 = vmatpush1.bf16.msra.mxu0 0
    %3832 = vmatprep.subr.bf16.mxu0 0
    %3833 = vmatpush1.bf16.msra.mxu0 0
    %3834 = vmatprep.mubr.bf16.mxu0 0
    %3835 = vmatmul.mubr.bf16.gmra.mrb[0].mxu0 %v3797
    %v3836 = vpop.f32.mrb[0].mxu0
    %v3837 = vadd.f32 %v3750, %v3836
    %v3838 = vpop.f32.mrb[0].mxu0
    %v3839 = vpop.f32.mrb[0].mxu0
    %v3840 = vpop.f32.mrb[0].mxu0
    %3841 = vdwg.mxu0
    %v3842 = vpack.c.bf16 %v3837, %v3837
    %v3843 = vld [vmem:[%s77] sm:$0xff]
    %v3844 = vld [vmem:[%s77 + $0x8] sm:$0xff]
    %v3845 = vld [vmem:[%s77 + $0x10] sm:$0xff]
    %v3846 = vld [vmem:[%s77 + $0x18] sm:$0xff]
    %v3847 = vld [vmem:[%s77 + $0x20] sm:$0xff]
    %v3848 = vld [vmem:[%s77 + $0x28] sm:$0xff]
    %s3849 = scalar_lea.vmem %s1, 127
    %v3850 = vld [vmem:[%s3849] ss:$8 sm:$0x3]
    %v3852 = vlaneseq
    %v3853 = vshrl.u32 %v3852, 7
    %v3854 = vsub.s32 0, %v3853
    %v3855 = vrot.slane %v3850, %v3854
    %v3856 = vlaneseq
    %v3857 = vshrl.u32 %v3856, 7
    %v3858 = vsub.s32 1, %v3857
    %v3859 = vrot.slane %v3850, %v3858
    %v3868 = vunpack.c.l.b16 %v3843
    %v3869 = vunpack.c.h.b16 %v3843
    %v3870 = vunpack.c.l.b16 %v3844
    %v3871 = vunpack.c.h.b16 %v3844
    %v3872 = vunpack.c.l.b16 %v3845
    %v3873 = vunpack.c.h.b16 %v3845
    %v3874 = vunpack.c.l.b16 %v3846
    %v3875 = vunpack.c.h.b16 %v3846
    %v3876 = vunpack.c.l.b16 %v3847
    %v3877 = vunpack.c.h.b16 %v3847
    %v3878 = vunpack.c.l.b16 %v3848
    %v3879 = vunpack.c.h.b16 %v3848
    %v3880 = vpack.c.b16 %v3870, %v3868
    %v3881 = vpack.c.b16 %v3871, %v3869
    %v3882 = vpack.c.b16 %v3874, %v3872
    %v3883 = vpack.c.b16 %v3875, %v3873
    %v3884 = vpack.c.b16 %v3878, %v3876
    %v3885 = vpack.c.b16 %v3879, %v3877
    %vm3892 = vcmask 392192
    %v3894 = vsel %vm3892, %v3842, 0
    %3896 = vmatprep.subr.bf16.mxu0 %v3881
    %3897 = vmatpush1.bf16.msra.mxu0 %v3880
    %3898 = vmatprep.subr.bf16.mxu0 %v3883
    %3899 = vmatpush1.bf16.msra.mxu0 %v3882
    %3900 = vmatprep.subr.bf16.mxu0 %v3885
    %3901 = vmatpush1.bf16.msra.mxu0 %v3884
    %3902 = vmatprep.subr.bf16.mxu0 0
    %3903 = vmatpush1.bf16.msra.mxu0 0
    %3904 = vmatprep.subr.bf16.mxu0 0
    %3905 = vmatpush1.bf16.msra.mxu0 0
    %3906 = vmatprep.subr.bf16.mxu0 0
    %3907 = vmatpush1.bf16.msra.mxu0 0
    %3908 = vmatprep.subr.bf16.mxu0 0
    %3909 = vmatpush1.bf16.msra.mxu0 0
    %3910 = vmatprep.subr.bf16.mxu0 0
    %3911 = vmatpush1.bf16.msra.mxu0 0
    %3912 = vmatprep.subr.bf16.mxu0 0
    %3913 = vmatpush1.bf16.msra.mxu0 0
    %3914 = vmatprep.subr.bf16.mxu0 0
    %3915 = vmatpush1.bf16.msra.mxu0 0
    %3916 = vmatprep.subr.bf16.mxu0 0
    %3917 = vmatpush1.bf16.msra.mxu0 0
    %3918 = vmatprep.subr.bf16.mxu0 0
    %3919 = vmatpush1.bf16.msra.mxu0 0
    %3920 = vmatprep.subr.bf16.mxu0 0
    %3921 = vmatpush1.bf16.msra.mxu0 0
    %3922 = vmatprep.subr.bf16.mxu0 0
    %3923 = vmatpush1.bf16.msra.mxu0 0
    %3924 = vmatprep.subr.bf16.mxu0 0
    %3925 = vmatpush1.bf16.msra.mxu0 0
    %3926 = vmatprep.subr.bf16.mxu0 0
    %3927 = vmatpush1.bf16.msra.mxu0 0
    %3928 = vmatprep.mubr.bf16.mxu0 0
    %3929 = vmatmul.mubr.bf16.gmra.mrb[0].mxu0 %v3894
    %v3930 = vpop.f32.mrb[0].mxu0
    %v3931 = vadd.f32 %v3855, %v3930
    %v3932 = vpop.f32.mrb[0].mxu0
    %v3933 = vadd.f32 %v3859, %v3932
    %v3934 = vpop.f32.mrb[0].mxu0
    %v3935 = vpop.f32.mrb[0].mxu0
    %3936 = vdwg.mxu0
    %v3937 = vadd.f32 %v3931, 3.0
    %v3938 = vadd.f32 %v3933, 3.0
    %v3939 = vmax.f32 %v3937, 0.0
    %v3940 = vmax.f32 %v3938, 0.0
    %v3941 = vmin.f32 %v3939, 6.0
    %v3942 = vmin.f32 %v3940, 6.0
    %v3943 = vmul.f32 %v3941, 0.16666667
    %v3944 = vmul.f32 %v3942, 0.16666667
    %v3945 = vmul.f32 %v3931, %v3943
    %v3946 = vmul.f32 %v3933, %v3944
    %v3947 = vld [vmem:[%s79 + $0x10] sm:$0xff]
    %v3948 = vld [vmem:[%s79 + $0x18] sm:$0xff]
    %v3949 = vlaneseq
    %v3950 = vshrl.u32 %v3949, 7
    %v3951 = vsub.s32 4, %v3950
    %v3952 = vrot.slane %v3947, %v3951
    %v3953 = vlaneseq
    %v3954 = vshrl.u32 %v3953, 7
    %v3955 = vsub.s32 4, %v3954
    %v3956 = vrot.slane %v3948, %v3955
    %v3957 = vmul.f32 %v3945, %v3952
    %v3958 = vmul.f32 %v3946, %v3956
    %s3959 = scalar_lea.vmem %s1, 160
    %v3960 = vld [vmem:[%s3959] ss:$8 sm:$0x3]
    %v3962 = vlaneseq
    %v3963 = vshrl.u32 %v3962, 7
    %v3964 = vsub.s32 0, %v3963
    %v3965 = vrot.slane %v3960, %v3964
    %v3966 = vlaneseq
    %v3967 = vshrl.u32 %v3966, 7
    %v3968 = vsub.s32 1, %v3967
    %v3969 = vrot.slane %v3960, %v3968
    %v3972 = vadd.f32 %v3957, %v3965
    %v3973 = vadd.f32 %v3958, %v3969
    %v3974 = vadd.f32 %v3972, 3.0
    %v3975 = vadd.f32 %v3973, 3.0
    %v3976 = vmax.f32 %v3974, 0.0
    %v3977 = vmax.f32 %v3975, 0.0
    %v3978 = vmin.f32 %v3976, 6.0
    %v3979 = vmin.f32 %v3977, 6.0
    %v3980 = vmul.f32 %v3978, 0.16666667
    %v3981 = vmul.f32 %v3979, 0.16666667
    %v3982 = vmul.f32 %v3972, %v3980
    %v3983 = vmul.f32 %v3973, %v3981
    %v3984 = vpack.c.bf16 %v3982, %v3982
    %v3985 = vpack.c.bf16 %v3983, %v3983
    %v3986 = vld [vmem:[%s81] sm:$0xf]
    %v3987 = vld [vmem:[%s81 + $0x4] sm:$0xf]
    %v3988 = vld [vmem:[%s81 + $0x8] sm:$0xf]
    %v3989 = vld [vmem:[%s81 + $0xc] sm:$0xf]
    %v3990 = vld [vmem:[%s81 + $0x10] sm:$0xf]
    %v3991 = vld [vmem:[%s81 + $0x14] sm:$0xf]
    %v3992 = vld [vmem:[%s81 + $0x18] sm:$0xf]
    %v3993 = vld [vmem:[%s81 + $0x1c] sm:$0xf]
    %v3994 = vld [vmem:[%s81 + $0x20] sm:$0xf]
    %v3995 = vld [vmem:[%s81 + $0x24] sm:$0xf]
    %v3996 = vld [vmem:[%s81 + $0x28] sm:$0xf]
    %v3997 = vld [vmem:[%s81 + $0x2c] sm:$0xf]
    %v3998 = vld [vmem:[%s81 + $0x30] sm:$0xf]
    %v3999 = vld [vmem:[%s81 + $0x34] sm:$0xf]
    %v4000 = vld [vmem:[%s81 + $0x38] sm:$0xf]
    %v4001 = vld [vmem:[%s81 + $0x3c] sm:$0xf]
    %v4002 = vld [vmem:[%s81 + $0x40] sm:$0xf]
    %v4003 = vld [vmem:[%s81 + $0x44] sm:$0xf]
    %v4004 = vld [vmem:[%s1 + $0xa1] ss:$0 sm:$0xff]
    %v4023 = vunpack.c.l.b16 %v3986
    %v4024 = vunpack.c.l.b16 %v3987
    %v4025 = vunpack.c.l.b16 %v3988
    %v4026 = vunpack.c.l.b16 %v3989
    %v4027 = vunpack.c.l.b16 %v3990
    %v4028 = vunpack.c.l.b16 %v3991
    %v4029 = vunpack.c.l.b16 %v3992
    %v4030 = vunpack.c.l.b16 %v3993
    %v4031 = vunpack.c.l.b16 %v3994
    %v4032 = vunpack.c.l.b16 %v3995
    %v4033 = vunpack.c.l.b16 %v3996
    %v4034 = vunpack.c.l.b16 %v3997
    %v4035 = vunpack.c.l.b16 %v3998
    %v4036 = vunpack.c.l.b16 %v3999
    %v4037 = vunpack.c.l.b16 %v4000
    %v4038 = vunpack.c.l.b16 %v4001
    %v4039 = vunpack.c.l.b16 %v4002
    %v4040 = vunpack.c.l.b16 %v4003
    %v4041 = vpack.c.b16 %v4024, %v4023
    %v4042 = vpack.c.b16 %v4026, %v4025
    %v4043 = vpack.c.b16 %v4028, %v4027
    %v4044 = vpack.c.b16 %v4030, %v4029
    %v4045 = vpack.c.b16 %v4032, %v4031
    %v4046 = vpack.c.b16 %v4034, %v4033
    %v4047 = vpack.c.b16 %v4036, %v4035
    %v4048 = vpack.c.b16 %v4038, %v4037
    %v4049 = vpack.c.b16 %v4040, %v4039
    %v4060 = vsel %vm1005, %v3985, 0
    %4062 = vmatprep.subr.bf16.mxu0 0
    %4063 = vmatpush1.bf16.msra.mxu0 %v4041
    %4064 = vmatprep.subr.bf16.mxu0 0
    %4065 = vmatpush1.bf16.msra.mxu0 %v4042
    %4066 = vmatprep.subr.bf16.mxu0 0
    %4067 = vmatpush1.bf16.msra.mxu0 %v4043
    %4068 = vmatprep.subr.bf16.mxu0 0
    %4069 = vmatpush1.bf16.msra.mxu0 %v4044
    %4070 = vmatprep.subr.bf16.mxu0 0
    %4071 = vmatpush1.bf16.msra.mxu0 %v4045
    %4072 = vmatprep.subr.bf16.mxu0 0
    %4073 = vmatpush1.bf16.msra.mxu0 %v4046
    %4074 = vmatprep.subr.bf16.mxu0 0
    %4075 = vmatpush1.bf16.msra.mxu0 %v4047
    %4076 = vmatprep.subr.bf16.mxu0 0
    %4077 = vmatpush1.bf16.msra.mxu0 %v4048
    %4078 = vmatprep.subr.bf16.mxu0 0
    %4079 = vmatpush1.bf16.msra.mxu0 %v4049
    %4080 = vmatprep.subr.bf16.mxu0 0
    %4081 = vmatpush1.bf16.msra.mxu0 0
    %4082 = vmatprep.subr.bf16.mxu0 0
    %4083 = vmatpush1.bf16.msra.mxu0 0
    %4084 = vmatprep.subr.bf16.mxu0 0
    %4085 = vmatpush1.bf16.msra.mxu0 0
    %4086 = vmatprep.subr.bf16.mxu0 0
    %4087 = vmatpush1.bf16.msra.mxu0 0
    %4088 = vmatprep.subr.bf16.mxu0 0
    %4089 = vmatpush1.bf16.msra.mxu0 0
    %4090 = vmatprep.subr.bf16.mxu0 0
    %4091 = vmatpush1.bf16.msra.mxu0 0
    %4092 = vmatprep.subr.bf16.mxu0 0
    %4093 = vmatpush1.bf16.msra.mxu0 0
    %4094 = vmatprep.mubr.bf16.mxu0 %v4060
    %4095 = vmatmul.mubr.bf16.gmra.mrb[0].mxu0 %v3984
    %v4096 = vpop.f32.mrb[0].mxu0
    %v4097 = vadd.f32 %v4004, %v4096
    %v4098 = vpop.f32.mrb[0].mxu0
    %v4099 = vpop.f32.mrb[0].mxu0
    %v4100 = vpop.f32.mrb[0].mxu0
    %4101 = vdwg.mxu0
    %v4102 = vmax.f32 %v4097, 0.0
    %v4103 = vpack.c.bf16 %v4102, %v4102
    %v4104 = vld [vmem:[%s83] sm:$0xff]
    %v4105 = vld [vmem:[%s83 + $0x8] sm:$0xff]
    %v4106 = vld [vmem:[%s83 + $0x10] sm:$0xff]
    %v4107 = vld [vmem:[%s83 + $0x18] sm:$0xff]
    %v4108 = vld [vmem:[%s83 + $0x20] sm:$0xff]
    %s4109 = scalar_lea.vmem %s1, 162
    %v4110 = vld [vmem:[%s4109] ss:$8 sm:$0x3]
    %v4112 = vlaneseq
    %v4113 = vshrl.u32 %v4112, 7
    %v4114 = vsub.s32 0, %v4113
    %v4115 = vrot.slane %v4110, %v4114
    %v4116 = vlaneseq
    %v4117 = vshrl.u32 %v4116, 7
    %v4118 = vsub.s32 1, %v4117
    %v4119 = vrot.slane %v4110, %v4118
    %v4127 = vunpack.c.l.b16 %v4104
    %v4128 = vunpack.c.h.b16 %v4104
    %v4129 = vunpack.c.l.b16 %v4105
    %v4130 = vunpack.c.h.b16 %v4105
    %v4131 = vunpack.c.l.b16 %v4106
    %v4132 = vunpack.c.h.b16 %v4106
    %v4133 = vunpack.c.l.b16 %v4107
    %v4134 = vunpack.c.h.b16 %v4107
    %v4135 = vunpack.c.l.b16 %v4108
    %v4136 = vunpack.c.h.b16 %v4108
    %v4137 = vpack.c.b16 %v4129, %v4127
    %v4138 = vpack.c.b16 %v4130, %v4128
    %v4139 = vpack.c.b16 %v4133, %v4131
    %v4140 = vpack.c.b16 %v4134, %v4132
    %v4141 = vpack.c.b16 %v4135, %v4135
    %v4142 = vpack.c.b16 %v4136, %v4136
    %v4148 = vsel %vm2331, %v4103, 0
    %v4151 = vsel %vm1057, %v4141, 0
    %v4154 = vsel %vm1057, %v4142, 0
    %4156 = vmatprep.subr.bf16.mxu0 %v4138
    %4157 = vmatpush1.bf16.msra.mxu0 %v4137
    %4158 = vmatprep.subr.bf16.mxu0 %v4140
    %4159 = vmatpush1.bf16.msra.mxu0 %v4139
    %4160 = vmatprep.subr.bf16.mxu0 %v4154
    %4161 = vmatpush1.bf16.msra.mxu0 %v4151
    %4162 = vmatprep.subr.bf16.mxu0 0
    %4163 = vmatpush1.bf16.msra.mxu0 0
    %4164 = vmatprep.subr.bf16.mxu0 0
    %4165 = vmatpush1.bf16.msra.mxu0 0
    %4166 = vmatprep.subr.bf16.mxu0 0
    %4167 = vmatpush1.bf16.msra.mxu0 0
    %4168 = vmatprep.subr.bf16.mxu0 0
    %4169 = vmatpush1.bf16.msra.mxu0 0
    %4170 = vmatprep.subr.bf16.mxu0 0
    %4171 = vmatpush1.bf16.msra.mxu0 0
    %4172 = vmatprep.subr.bf16.mxu0 0
    %4173 = vmatpush1.bf16.msra.mxu0 0
    %4174 = vmatprep.subr.bf16.mxu0 0
    %4175 = vmatpush1.bf16.msra.mxu0 0
    %4176 = vmatprep.subr.bf16.mxu0 0
    %4177 = vmatpush1.bf16.msra.mxu0 0
    %4178 = vmatprep.subr.bf16.mxu0 0
    %4179 = vmatpush1.bf16.msra.mxu0 0
    %4180 = vmatprep.subr.bf16.mxu0 0
    %4181 = vmatpush1.bf16.msra.mxu0 0
    %4182 = vmatprep.subr.bf16.mxu0 0
    %4183 = vmatpush1.bf16.msra.mxu0 0
    %4184 = vmatprep.subr.bf16.mxu0 0
    %4185 = vmatpush1.bf16.msra.mxu0 0
    %4186 = vmatprep.subr.bf16.mxu0 0
    %4187 = vmatpush1.bf16.msra.mxu0 0
    %4188 = vmatprep.mubr.bf16.mxu0 0
    %4189 = vmatmul.mubr.bf16.gmra.mrb[0].mxu0 %v4148
    %v4190 = vpop.f32.mrb[0].mxu0
    %v4191 = vadd.f32 %v4115, %v4190
    %v4192 = vpop.f32.mrb[0].mxu0
    %v4193 = vadd.f32 %v4119, %v4192
    %v4194 = vpop.f32.mrb[0].mxu0
    %v4195 = vpop.f32.mrb[0].mxu0
    %4196 = vdwg.mxu0
    %v4197 = vadd.f32 %v4191, 3.0
    %v4198 = vadd.f32 %v4193, 3.0
    %v4199 = vmax.f32 %v4197, 0.0
    %v4200 = vmax.f32 %v4198, 0.0
    %v4201 = vmin.f32 %v4199, 6.0
    %v4202 = vmin.f32 %v4200, 6.0
    %v4203 = vmul.f32 %v4201, 0.16666667
    %v4204 = vmul.f32 %v4202, 0.16666667
    %v4205 = vmul.f32 %v3982, %v4203
    %v4206 = vmul.f32 %v3983, %v4204
    %v4207 = vpack.c.bf16 %v4205, %v4205
    %v4208 = vpack.c.bf16 %v4206, %v4206
    %v4209 = vld [vmem:[%s85] sm:$0xf]
    %v4210 = vld [vmem:[%s85 + $0x4] sm:$0xf]
    %v4211 = vld [vmem:[%s85 + $0x8] sm:$0xf]
    %v4212 = vld [vmem:[%s85 + $0xc] sm:$0xf]
    %v4213 = vld [vmem:[%s85 + $0x10] sm:$0xf]
    %v4214 = vld [vmem:[%s85 + $0x14] sm:$0xf]
    %v4215 = vld [vmem:[%s85 + $0x18] sm:$0xf]
    %v4216 = vld [vmem:[%s85 + $0x1c] sm:$0xf]
    %v4217 = vld [vmem:[%s85 + $0x20] sm:$0xf]
    %v4218 = vld [vmem:[%s85 + $0x24] sm:$0xf]
    %v4219 = vld [vmem:[%s85 + $0x28] sm:$0xf]
    %v4220 = vld [vmem:[%s85 + $0x2c] sm:$0xf]
    %v4221 = vld [vmem:[%s85 + $0x30] sm:$0xf]
    %v4222 = vld [vmem:[%s85 + $0x34] sm:$0xf]
    %v4223 = vld [vmem:[%s85 + $0x38] sm:$0xf]
    %v4224 = vld [vmem:[%s85 + $0x3c] sm:$0xf]
    %v4225 = vld [vmem:[%s85 + $0x40] sm:$0xf]
    %v4226 = vld [vmem:[%s85 + $0x44] sm:$0xf]
    %v4227 = vld [vmem:[%s1 + $0xa3] ss:$0 sm:$0xff]
    %v4246 = vunpack.c.l.b16 %v4209
    %v4247 = vunpack.c.l.b16 %v4210
    %v4248 = vunpack.c.l.b16 %v4211
    %v4249 = vunpack.c.l.b16 %v4212
    %v4250 = vunpack.c.l.b16 %v4213
    %v4251 = vunpack.c.l.b16 %v4214
    %v4252 = vunpack.c.l.b16 %v4215
    %v4253 = vunpack.c.l.b16 %v4216
    %v4254 = vunpack.c.l.b16 %v4217
    %v4255 = vunpack.c.l.b16 %v4218
    %v4256 = vunpack.c.l.b16 %v4219
    %v4257 = vunpack.c.l.b16 %v4220
    %v4258 = vunpack.c.l.b16 %v4221
    %v4259 = vunpack.c.l.b16 %v4222
    %v4260 = vunpack.c.l.b16 %v4223
    %v4261 = vunpack.c.l.b16 %v4224
    %v4262 = vunpack.c.l.b16 %v4225
    %v4263 = vunpack.c.l.b16 %v4226
    %v4264 = vpack.c.b16 %v4247, %v4246
    %v4265 = vpack.c.b16 %v4249, %v4248
    %v4266 = vpack.c.b16 %v4251, %v4250
    %v4267 = vpack.c.b16 %v4253, %v4252
    %v4268 = vpack.c.b16 %v4255, %v4254
    %v4269 = vpack.c.b16 %v4257, %v4256
    %v4270 = vpack.c.b16 %v4259, %v4258
    %v4271 = vpack.c.b16 %v4261, %v4260
    %v4272 = vpack.c.b16 %v4263, %v4262
    %v4283 = vsel %vm1005, %v4208, 0
    %4285 = vmatprep.subr.bf16.mxu0 0
    %4286 = vmatpush1.bf16.msra.mxu0 %v4264
    %4287 = vmatprep.subr.bf16.mxu0 0
    %4288 = vmatpush1.bf16.msra.mxu0 %v4265
    %4289 = vmatprep.subr.bf16.mxu0 0
    %4290 = vmatpush1.bf16.msra.mxu0 %v4266
    %4291 = vmatprep.subr.bf16.mxu0 0
    %4292 = vmatpush1.bf16.msra.mxu0 %v4267
    %4293 = vmatprep.subr.bf16.mxu0 0
    %4294 = vmatpush1.bf16.msra.mxu0 %v4268
    %4295 = vmatprep.subr.bf16.mxu0 0
    %4296 = vmatpush1.bf16.msra.mxu0 %v4269
    %4297 = vmatprep.subr.bf16.mxu0 0
    %4298 = vmatpush1.bf16.msra.mxu0 %v4270
    %4299 = vmatprep.subr.bf16.mxu0 0
    %4300 = vmatpush1.bf16.msra.mxu0 %v4271
    %4301 = vmatprep.subr.bf16.mxu0 0
    %4302 = vmatpush1.bf16.msra.mxu0 %v4272
    %4303 = vmatprep.subr.bf16.mxu0 0
    %4304 = vmatpush1.bf16.msra.mxu0 0
    %4305 = vmatprep.subr.bf16.mxu0 0
    %4306 = vmatpush1.bf16.msra.mxu0 0
    %4307 = vmatprep.subr.bf16.mxu0 0
    %4308 = vmatpush1.bf16.msra.mxu0 0
    %4309 = vmatprep.subr.bf16.mxu0 0
    %4310 = vmatpush1.bf16.msra.mxu0 0
    %4311 = vmatprep.subr.bf16.mxu0 0
    %4312 = vmatpush1.bf16.msra.mxu0 0
    %4313 = vmatprep.subr.bf16.mxu0 0
    %4314 = vmatpush1.bf16.msra.mxu0 0
    %4315 = vmatprep.subr.bf16.mxu0 0
    %4316 = vmatpush1.bf16.msra.mxu0 0
    %4317 = vmatprep.mubr.bf16.mxu0 %v4283
    %4318 = vmatmul.mubr.bf16.gmra.mrb[0].mxu0 %v4207
    %v4319 = vpop.f32.mrb[0].mxu0
    %v4320 = vadd.f32 %v4227, %v4319
    %v4321 = vpop.f32.mrb[0].mxu0
    %v4322 = vpop.f32.mrb[0].mxu0
    %v4323 = vpop.f32.mrb[0].mxu0
    %4324 = vdwg.mxu0
    %v4325 = vadd.f32 %v4320, %v3837
    %vm4326 = vcmask 386048
    %4327 = vst.msk [vmem:[#allocation5] sm:$0x3] %vm4326, %v4325
    %v4328 = vpack.c.bf16 %v4325, %v4325
    %v4329 = vld [vmem:[%s87] sm:$0xff]
    %v4330 = vld [vmem:[%s87 + $0x8] sm:$0xf]
    %v4331 = vld [vmem:[%s87 + $0xc] sm:$0xff]
    %v4332 = vld [vmem:[%s87 + $0x14] sm:$0xf]
    %v4333 = vld [vmem:[%s87 + $0x18] sm:$0xff]
    %v4334 = vld [vmem:[%s87 + $0x20] sm:$0xf]
    %v4335 = vld [vmem:[%s87 + $0x24] sm:$0xff]
    %v4336 = vld [vmem:[%s87 + $0x2c] sm:$0xf]
    %v4337 = vld [vmem:[%s87 + $0x30] sm:$0xff]
    %v4338 = vld [vmem:[%s87 + $0x38] sm:$0xf]
    %v4339 = vld [vmem:[%s87 + $0x3c] sm:$0xff]
    %v4340 = vld [vmem:[%s87 + $0x44] sm:$0xf]
    %s4341 = scalar_lea.vmem %s1, 164
    %v4342 = vld [vmem:[%s4341] ss:$8 sm:$0x7]
    %v4344 = vlaneseq
    %v4345 = vshrl.u32 %v4344, 7
    %v4346 = vsub.s32 0, %v4345
    %v4347 = vrot.slane %v4342, %v4346
    %v4348 = vlaneseq
    %v4349 = vshrl.u32 %v4348, 7
    %v4350 = vsub.s32 1, %v4349
    %v4351 = vrot.slane %v4342, %v4350
    %v4352 = vlaneseq
    %v4353 = vshrl.u32 %v4352, 7
    %v4354 = vsub.s32 2, %v4353
    %v4355 = vrot.slane %v4342, %v4354
    %v4371 = vunpack.c.l.b16 %v4329
    %v4372 = vunpack.c.h.b16 %v4329
    %v4373 = vunpack.c.l.b16 %v4330
    %v4374 = vunpack.c.l.b16 %v4331
    %v4375 = vunpack.c.h.b16 %v4331
    %v4376 = vunpack.c.l.b16 %v4332
    %v4377 = vunpack.c.l.b16 %v4333
    %v4378 = vunpack.c.h.b16 %v4333
    %v4379 = vunpack.c.l.b16 %v4334
    %v4380 = vunpack.c.l.b16 %v4335
    %v4381 = vunpack.c.h.b16 %v4335
    %v4382 = vunpack.c.l.b16 %v4336
    %v4383 = vunpack.c.l.b16 %v4337
    %v4384 = vunpack.c.h.b16 %v4337
    %v4385 = vunpack.c.l.b16 %v4338
    %v4386 = vunpack.c.l.b16 %v4339
    %v4387 = vunpack.c.h.b16 %v4339
    %v4388 = vunpack.c.l.b16 %v4340
    %v4389 = vpack.c.b16 %v4374, %v4371
    %v4390 = vpack.c.b16 %v4375, %v4372
    %v4391 = vpack.c.b16 %v4376, %v4373
    %v4392 = vpack.c.b16 %v4380, %v4377
    %v4393 = vpack.c.b16 %v4381, %v4378
    %v4394 = vpack.c.b16 %v4382, %v4379
    %v4395 = vpack.c.b16 %v4386, %v4383
    %v4396 = vpack.c.b16 %v4387, %v4384
    %v4397 = vpack.c.b16 %v4388, %v4385
    %v4408 = vsel %vm3892, %v4328, 0
    %4410 = vmatprep.subr.bf16.mxu0 %v4390
    %4411 = vmatpush1.bf16.msra.mxu0 %v4389
    %4412 = vmatprep.subr.bf16.mxu0 %v4393
    %4413 = vmatpush1.bf16.msra.mxu0 %v4392
    %4414 = vmatprep.subr.bf16.mxu0 %v4396
    %4415 = vmatpush1.bf16.msra.mxu0 %v4395
    %4416 = vmatprep.subr.bf16.mxu0 0
    %4417 = vmatpush1.bf16.msra.mxu0 0
    %4418 = vmatprep.subr.bf16.mxu0 0
    %4419 = vmatpush1.bf16.msra.mxu0 0
    %4420 = vmatprep.subr.bf16.mxu0 0
    %4421 = vmatpush1.bf16.msra.mxu0 0
    %4422 = vmatprep.subr.bf16.mxu0 0
    %4423 = vmatpush1.bf16.msra.mxu0 0
    %4424 = vmatprep.subr.bf16.mxu0 0
    %4425 = vmatpush1.bf16.msra.mxu0 0
    %4426 = vmatprep.subr.bf16.mxu0 0
    %4427 = vmatpush1.bf16.msra.mxu0 0
    %4428 = vmatprep.subr.bf16.mxu0 0
    %4429 = vmatpush1.bf16.msra.mxu0 0
    %4430 = vmatprep.subr.bf16.mxu0 0
    %4431 = vmatpush1.bf16.msra.mxu0 0
    %4432 = vmatprep.subr.bf16.mxu0 0
    %4433 = vmatpush1.bf16.msra.mxu0 0
    %4434 = vmatprep.subr.bf16.mxu0 0
    %4435 = vmatpush1.bf16.msra.mxu0 0
    %4436 = vmatprep.subr.bf16.mxu0 0
    %4437 = vmatpush1.bf16.msra.mxu0 0
    %4438 = vmatprep.subr.bf16.mxu0 0
    %4439 = vmatpush1.bf16.msra.mxu0 0
    %4440 = vmatprep.subr.bf16.mxu0 0
    %4441 = vmatpush1.bf16.msra.mxu0 0
    %4442 = vmatprep.mubr.bf16.mxu0 0
    %4443 = vmatmul.mubr.bf16.gmra.mrb[0].mxu0 %v4408
    %v4444 = vpop.f32.mrb[0].mxu0
    %v4445 = vadd.f32 %v4347, %v4444
    %v4446 = vpop.f32.mrb[0].mxu0
    %v4447 = vadd.f32 %v4351, %v4446
    %v4448 = vpop.f32.mrb[0].mxu0
    %v4449 = vpop.f32.mrb[0].mxu0
    %4450 = vdwg.mxu0
    %4451 = vmatprep.subr.bf16.mxu0 0
    %4452 = vmatpush1.bf16.msra.mxu0 %v4391
    %4453 = vmatprep.subr.bf16.mxu0 0
    %4454 = vmatpush1.bf16.msra.mxu0 %v4394
    %4455 = vmatprep.subr.bf16.mxu0 0
    %4456 = vmatpush1.bf16.msra.mxu0 %v4397
    %4457 = vmatprep.subr.bf16.mxu0 0
    %4458 = vmatpush1.bf16.msra.mxu0 0
    %4459 = vmatprep.subr.bf16.mxu0 0
    %4460 = vmatpush1.bf16.msra.mxu0 0
    %4461 = vmatprep.subr.bf16.mxu0 0
    %4462 = vmatpush1.bf16.msra.mxu0 0
    %4463 = vmatprep.subr.bf16.mxu0 0
    %4464 = vmatpush1.bf16.msra.mxu0 0
    %4465 = vmatprep.subr.bf16.mxu0 0
    %4466 = vmatpush1.bf16.msra.mxu0 0
    %4467 = vmatprep.subr.bf16.mxu0 0
    %4468 = vmatpush1.bf16.msra.mxu0 0
    %4469 = vmatprep.subr.bf16.mxu0 0
    %4470 = vmatpush1.bf16.msra.mxu0 0
    %4471 = vmatprep.subr.bf16.mxu0 0
    %4472 = vmatpush1.bf16.msra.mxu0 0
    %4473 = vmatprep.subr.bf16.mxu0 0
    %4474 = vmatpush1.bf16.msra.mxu0 0
    %4475 = vmatprep.subr.bf16.mxu0 0
    %4476 = vmatpush1.bf16.msra.mxu0 0
    %4477 = vmatprep.subr.bf16.mxu0 0
    %4478 = vmatpush1.bf16.msra.mxu0 0
    %4479 = vmatprep.subr.bf16.mxu0 0
    %4480 = vmatpush1.bf16.msra.mxu0 0
    %4481 = vmatprep.subr.bf16.mxu0 0
    %4482 = vmatpush1.bf16.msra.mxu0 0
    %4483 = vmatprep.mubr.bf16.mxu0 0
    %4484 = vmatmul.mubr.bf16.gmra.mrb[0].mxu0 %v4408
    %v4485 = vpop.f32.mrb[0].mxu0
    %v4486 = vadd.f32 %v4355, %v4485
    %v4487 = vpop.f32.mrb[0].mxu0
    %v4488 = vpop.f32.mrb[0].mxu0
    %v4489 = vpop.f32.mrb[0].mxu0
    %4490 = vdwg.mxu0
    %v4491 = vadd.f32 %v4445, 3.0
    %v4492 = vadd.f32 %v4447, 3.0
    %v4493 = vadd.f32 %v4486, 3.0
    %v4494 = vmax.f32 %v4491, 0.0
    %v4495 = vmax.f32 %v4492, 0.0
    %v4496 = vmax.f32 %v4493, 0.0
    %v4497 = vmin.f32 %v4494, 6.0
    %v4498 = vmin.f32 %v4495, 6.0
    %v4499 = vmin.f32 %v4496, 6.0
    %v4500 = vmul.f32 %v4497, 0.16666667
    %v4501 = vmul.f32 %v4498, 0.16666667
    %v4502 = vmul.f32 %v4499, 0.16666667
    %v4503 = vmul.f32 %v4445, %v4500
    %v4504 = vmul.f32 %v4447, %v4501
    %v4505 = vmul.f32 %v4486, %v4502
    %v4506 = vld [vmem:[%s89 + $0x18] sm:$0xff]
    %v4507 = vld [vmem:[%s89 + $0x20] sm:$0xff]
    %v4508 = vld [vmem:[%s89 + $0x28] sm:$0xff]
    %v4509 = vlaneseq
    %v4510 = vshrl.u32 %v4509, 7
    %v4511 = vsub.s32 4, %v4510
    %v4512 = vrot.slane %v4506, %v4511
    %v4513 = vlaneseq
    %v4514 = vshrl.u32 %v4513, 7
    %v4515 = vsub.s32 4, %v4514
    %v4516 = vrot.slane %v4507, %v4515
    %v4517 = vlaneseq
    %v4518 = vshrl.u32 %v4517, 7
    %v4519 = vsub.s32 4, %v4518
    %v4520 = vrot.slane %v4508, %v4519
    %v4521 = vmul.f32 %v4503, %v4512
    %v4522 = vmul.f32 %v4504, %v4516
    %v4523 = vmul.f32 %v4505, %v4520
    %s4524 = scalar_lea.vmem %s1, 165
    %v4525 = vld [vmem:[%s4524] ss:$8 sm:$0x7]
    %v4527 = vlaneseq
    %v4528 = vshrl.u32 %v4527, 7
    %v4529 = vsub.s32 0, %v4528
    %v4530 = vrot.slane %v4525, %v4529
    %v4531 = vlaneseq
    %v4532 = vshrl.u32 %v4531, 7
    %v4533 = vsub.s32 1, %v4532
    %v4534 = vrot.slane %v4525, %v4533
    %v4535 = vlaneseq
    %v4536 = vshrl.u32 %v4535, 7
    %v4537 = vsub.s32 2, %v4536
    %v4538 = vrot.slane %v4525, %v4537
    %v4542 = vadd.f32 %v4521, %v4530
    %v4543 = vadd.f32 %v4522, %v4534
    %v4544 = vadd.f32 %v4523, %v4538
    %v4545 = vadd.f32 %v4542, 3.0
    %v4546 = vadd.f32 %v4543, 3.0
    %v4547 = vadd.f32 %v4544, 3.0
    %v4548 = vmax.f32 %v4545, 0.0
    %v4549 = vmax.f32 %v4546, 0.0
    %v4550 = vmax.f32 %v4547, 0.0
    %v4551 = vmin.f32 %v4548, 6.0
    %v4552 = vmin.f32 %v4549, 6.0
    %v4553 = vmin.f32 %v4550, 6.0
    %v4554 = vmul.f32 %v4551, 0.16666667
    %v4555 = vmul.f32 %v4552, 0.16666667
    %v4556 = vmul.f32 %v4553, 0.16666667
    %v4557 = vmul.f32 %v4542, %v4554
    %v4558 = vmul.f32 %v4543, %v4555
    %v4559 = vmul.f32 %v4544, %v4556
    %v4560 = vpack.c.bf16 %v4557, %v4557
    %v4561 = vpack.c.bf16 %v4558, %v4558
    %v4562 = vpack.c.bf16 %v4559, %v4559
    %v4563 = vld [vmem:[%s91] sm:$0xf]
    %v4564 = vld [vmem:[%s91 + $0x4] sm:$0xf]
    %v4565 = vld [vmem:[%s91 + $0x8] sm:$0xf]
    %v4566 = vld [vmem:[%s91 + $0xc] sm:$0xf]
    %v4567 = vld [vmem:[%s91 + $0x10] sm:$0xf]
    %v4568 = vld [vmem:[%s91 + $0x14] sm:$0xf]
    %v4569 = vld [vmem:[%s91 + $0x18] sm:$0xf]
    %v4570 = vld [vmem:[%s91 + $0x1c] sm:$0xf]
    %v4571 = vld [vmem:[%s91 + $0x20] sm:$0xf]
    %v4572 = vld [vmem:[%s91 + $0x24] sm:$0xf]
    %v4573 = vld [vmem:[%s91 + $0x28] sm:$0xf]
    %v4574 = vld [vmem:[%s91 + $0x2c] sm:$0xf]
    %v4575 = vld [vmem:[%s91 + $0x30] sm:$0xf]
    %v4576 = vld [vmem:[%s91 + $0x34] sm:$0xf]
    %v4577 = vld [vmem:[%s91 + $0x38] sm:$0xf]
    %v4578 = vld [vmem:[%s91 + $0x3c] sm:$0xf]
    %v4579 = vld [vmem:[%s91 + $0x40] sm:$0xf]
    %v4580 = vld [vmem:[%s91 + $0x44] sm:$0xf]
    %v4581 = vld [vmem:[%s91 + $0x48] sm:$0xf]
    %v4582 = vld [vmem:[%s91 + $0x4c] sm:$0xf]
    %v4583 = vld [vmem:[%s91 + $0x50] sm:$0xf]
    %v4584 = vld [vmem:[%s91 + $0x54] sm:$0xf]
    %v4585 = vld [vmem:[%s91 + $0x58] sm:$0xf]
    %v4586 = vld [vmem:[%s91 + $0x5c] sm:$0xf]
    %v4587 = vld [vmem:[%s91 + $0x60] sm:$0xf]
    %v4588 = vld [vmem:[%s91 + $0x64] sm:$0xf]
    %v4589 = vld [vmem:[%s91 + $0x68] sm:$0xf]
    %v4590 = vld [vmem:[%s91 + $0x6c] sm:$0xf]
    %v4591 = vld [vmem:[%s91 + $0x70] sm:$0xf]
    %v4592 = vld [vmem:[%s91 + $0x74] sm:$0xf]
    %v4593 = vld [vmem:[%s91 + $0x78] sm:$0xf]
    %v4594 = vld [vmem:[%s91 + $0x7c] sm:$0xf]
    %v4595 = vld [vmem:[%s91 + $0x80] sm:$0xf]
    %v4596 = vld [vmem:[%s91 + $0x84] sm:$0xf]
    %v4597 = vld [vmem:[%s91 + $0x88] sm:$0xf]
    %v4598 = vld [vmem:[%s91 + $0x8c] sm:$0xf]
    %v4599 = vld [vmem:[%s1 + $0xa6] ss:$0 sm:$0xff]
    %v4636 = vunpack.c.l.b16 %v4563
    %v4637 = vunpack.c.l.b16 %v4564
    %v4638 = vunpack.c.l.b16 %v4565
    %v4639 = vunpack.c.l.b16 %v4566
    %v4640 = vunpack.c.l.b16 %v4567
    %v4641 = vunpack.c.l.b16 %v4568
    %v4642 = vunpack.c.l.b16 %v4569
    %v4643 = vunpack.c.l.b16 %v4570
    %v4644 = vunpack.c.l.b16 %v4571
    %v4645 = vunpack.c.l.b16 %v4572
    %v4646 = vunpack.c.l.b16 %v4573
    %v4647 = vunpack.c.l.b16 %v4574
    %v4648 = vunpack.c.l.b16 %v4575
    %v4649 = vunpack.c.l.b16 %v4576
    %v4650 = vunpack.c.l.b16 %v4577
    %v4651 = vunpack.c.l.b16 %v4578
    %v4652 = vunpack.c.l.b16 %v4579
    %v4653 = vunpack.c.l.b16 %v4580
    %v4654 = vunpack.c.l.b16 %v4581
    %v4655 = vunpack.c.l.b16 %v4582
    %v4656 = vunpack.c.l.b16 %v4583
    %v4657 = vunpack.c.l.b16 %v4584
    %v4658 = vunpack.c.l.b16 %v4585
    %v4659 = vunpack.c.l.b16 %v4586
    %v4660 = vunpack.c.l.b16 %v4587
    %v4661 = vunpack.c.l.b16 %v4588
    %v4662 = vunpack.c.l.b16 %v4589
    %v4663 = vunpack.c.l.b16 %v4590
    %v4664 = vunpack.c.l.b16 %v4591
    %v4665 = vunpack.c.l.b16 %v4592
    %v4666 = vunpack.c.l.b16 %v4593
    %v4667 = vunpack.c.l.b16 %v4594
    %v4668 = vunpack.c.l.b16 %v4595
    %v4669 = vunpack.c.l.b16 %v4596
    %v4670 = vunpack.c.l.b16 %v4597
    %v4671 = vunpack.c.l.b16 %v4598
    %v4672 = vpack.c.b16 %v4637, %v4636
    %v4673 = vpack.c.b16 %v4639, %v4638
    %v4674 = vpack.c.b16 %v4641, %v4640
    %v4675 = vpack.c.b16 %v4643, %v4642
    %v4676 = vpack.c.b16 %v4645, %v4644
    %v4677 = vpack.c.b16 %v4647, %v4646
    %v4678 = vpack.c.b16 %v4649, %v4648
    %v4679 = vpack.c.b16 %v4651, %v4650
    %v4680 = vpack.c.b16 %v4653, %v4652
    %v4681 = vpack.c.b16 %v4655, %v4654
    %v4682 = vpack.c.b16 %v4657, %v4656
    %v4683 = vpack.c.b16 %v4659, %v4658
    %v4684 = vpack.c.b16 %v4661, %v4660
    %v4685 = vpack.c.b16 %v4663, %v4662
    %v4686 = vpack.c.b16 %v4665, %v4664
    %v4687 = vpack.c.b16 %v4667, %v4666
    %v4688 = vpack.c.b16 %v4669, %v4668
    %v4689 = vpack.c.b16 %v4671, %v4670
    %v4709 = vsel %vm303, %v4562, 0
    %4711 = vmatprep.subr.bf16.mxu0 0
    %4712 = vmatpush1.bf16.msra.mxu0 %v4672
    %4713 = vmatprep.subr.bf16.mxu0 0
    %4714 = vmatpush1.bf16.msra.mxu0 %v4673
    %4715 = vmatprep.subr.bf16.mxu0 0
    %4716 = vmatpush1.bf16.msra.mxu0 %v4674
    %4717 = vmatprep.subr.bf16.mxu0 0
    %4718 = vmatpush1.bf16.msra.mxu0 %v4675
    %4719 = vmatprep.subr.bf16.mxu0 0
    %4720 = vmatpush1.bf16.msra.mxu0 %v4676
    %4721 = vmatprep.subr.bf16.mxu0 0
    %4722 = vmatpush1.bf16.msra.mxu0 %v4677
    %4723 = vmatprep.subr.bf16.mxu0 0
    %4724 = vmatpush1.bf16.msra.mxu0 %v4678
    %4725 = vmatprep.subr.bf16.mxu0 0
    %4726 = vmatpush1.bf16.msra.mxu0 %v4679
    %4727 = vmatprep.subr.bf16.mxu0 0
    %4728 = vmatpush1.bf16.msra.mxu0 %v4680
    %4729 = vmatprep.subr.bf16.mxu0 0
    %4730 = vmatpush1.bf16.msra.mxu0 %v4681
    %4731 = vmatprep.subr.bf16.mxu0 0
    %4732 = vmatpush1.bf16.msra.mxu0 %v4682
    %4733 = vmatprep.subr.bf16.mxu0 0
    %4734 = vmatpush1.bf16.msra.mxu0 %v4683
    %4735 = vmatprep.subr.bf16.mxu0 0
    %4736 = vmatpush1.bf16.msra.mxu0 %v4684
    %4737 = vmatprep.subr.bf16.mxu0 0
    %4738 = vmatpush1.bf16.msra.mxu0 %v4685
    %4739 = vmatprep.subr.bf16.mxu0 0
    %4740 = vmatpush1.bf16.msra.mxu0 %v4686
    %4741 = vmatprep.subr.bf16.mxu0 0
    %4742 = vmatpush1.bf16.msra.mxu0 %v4687
    %4743 = vmatprep.mubr.bf16.mxu0 %v4561
    %4744 = vmatmul.mubr.bf16.gmra.mrb[0].mxu0 %v4560
    %v4745 = vpop.f32.mrb[0].mxu0
    %v4746 = vadd.f32 %v4599, %v4745
    %v4747 = vpop.f32.mrb[0].mxu0
    %v4748 = vpop.f32.mrb[0].mxu0
    %v4749 = vpop.f32.mrb[0].mxu0
    %4750 = vdwg.mxu0
    %4751 = vmatprep.subr.bf16.mxu0 0
    %4752 = vmatpush1.bf16.msra.mxu0 %v4688
    %4753 = vmatprep.subr.bf16.mxu0 0
    %4754 = vmatpush1.bf16.msra.mxu0 %v4689
    %4755 = vmatprep.subr.bf16.mxu0 0
    %4756 = vmatpush1.bf16.msra.mxu0 0
    %4757 = vmatprep.subr.bf16.mxu0 0
    %4758 = vmatpush1.bf16.msra.mxu0 0
    %4759 = vmatprep.subr.bf16.mxu0 0
    %4760 = vmatpush1.bf16.msra.mxu0 0
    %4761 = vmatprep.subr.bf16.mxu0 0
    %4762 = vmatpush1.bf16.msra.mxu0 0
    %4763 = vmatprep.subr.bf16.mxu0 0
    %4764 = vmatpush1.bf16.msra.mxu0 0
    %4765 = vmatprep.subr.bf16.mxu0 0
    %4766 = vmatpush1.bf16.msra.mxu0 0
    %4767 = vmatprep.subr.bf16.mxu0 0
    %4768 = vmatpush1.bf16.msra.mxu0 0
    %4769 = vmatprep.subr.bf16.mxu0 0
    %4770 = vmatpush1.bf16.msra.mxu0 0
    %4771 = vmatprep.subr.bf16.mxu0 0
    %4772 = vmatpush1.bf16.msra.mxu0 0
    %4773 = vmatprep.subr.bf16.mxu0 0
    %4774 = vmatpush1.bf16.msra.mxu0 0
    %4775 = vmatprep.subr.bf16.mxu0 0
    %4776 = vmatpush1.bf16.msra.mxu0 0
    %4777 = vmatprep.subr.bf16.mxu0 0
    %4778 = vmatpush1.bf16.msra.mxu0 0
    %4779 = vmatprep.subr.bf16.mxu0 0
    %4780 = vmatpush1.bf16.msra.mxu0 0
    %4781 = vmatprep.subr.bf16.mxu0 0
    %4782 = vmatpush1.bf16.msra.mxu0 0
    %4783 = vmatprep.mubr.bf16.mxu0 0
    %4784 = vmatmul.mubr.bf16.gmra.mrb[0].mxu0 %v4709
    %v4785 = vpop.f32.mrb[0].mxu0
    %v4786 = vadd.f32 %v4746, %v4785
    %v4787 = vpop.f32.mrb[0].mxu0
    %v4788 = vpop.f32.mrb[0].mxu0
    %v4789 = vpop.f32.mrb[0].mxu0
    %4790 = vdwg.mxu0
    %v4791 = vmax.f32 %v4786, 0.0
    %v4792 = vpack.c.bf16 %v4791, %v4791
    %v4793 = vld [vmem:[%s93] sm:$0xff]
    %v4794 = vld [vmem:[%s93 + $0x8] sm:$0xf]
    %v4795 = vld [vmem:[%s93 + $0xc] sm:$0xff]
    %v4796 = vld [vmem:[%s93 + $0x14] sm:$0xf]
    %v4797 = vld [vmem:[%s93 + $0x18] sm:$0xff]
    %v4798 = vld [vmem:[%s93 + $0x20] sm:$0xf]
    %v4799 = vld [vmem:[%s93 + $0x24] sm:$0xff]
    %v4800 = vld [vmem:[%s93 + $0x2c] sm:$0xf]
    %v4801 = vld [vmem:[%s93 + $0x30] sm:$0xff]
    %v4802 = vld [vmem:[%s93 + $0x38] sm:$0xf]
    %v4803 = vld [vmem:[%s93 + $0x3c] sm:$0xff]
    %v4804 = vld [vmem:[%s93 + $0x44] sm:$0xf]
    %v4805 = vld [vmem:[%s93 + $0x48] sm:$0xff]
    %v4806 = vld [vmem:[%s93 + $0x50] sm:$0xf]
    %v4807 = vld [vmem:[%s93 + $0x54] sm:$0xff]
    %v4808 = vld [vmem:[%s93 + $0x5c] sm:$0xf]
    %v4809 = vld [vmem:[%s93 + $0x60] sm:$0xff]
    %v4810 = vld [vmem:[%s93 + $0x68] sm:$0xf]
    %s4811 = scalar_lea.vmem %s1, 167
    %v4812 = vld [vmem:[%s4811] ss:$8 sm:$0x7]
    %v4814 = vlaneseq
    %v4815 = vshrl.u32 %v4814, 7
    %v4816 = vsub.s32 0, %v4815
    %v4817 = vrot.slane %v4812, %v4816
    %v4818 = vlaneseq
    %v4819 = vshrl.u32 %v4818, 7
    %v4820 = vsub.s32 1, %v4819
    %v4821 = vrot.slane %v4812, %v4820
    %v4822 = vlaneseq
    %v4823 = vshrl.u32 %v4822, 7
    %v4824 = vsub.s32 2, %v4823
    %v4825 = vrot.slane %v4812, %v4824
    %v4847 = vunpack.c.l.b16 %v4793
    %v4848 = vunpack.c.h.b16 %v4793
    %v4849 = vunpack.c.l.b16 %v4794
    %v4850 = vunpack.c.l.b16 %v4795
    %v4851 = vunpack.c.h.b16 %v4795
    %v4852 = vunpack.c.l.b16 %v4796
    %v4853 = vunpack.c.l.b16 %v4797
    %v4854 = vunpack.c.h.b16 %v4797
    %v4855 = vunpack.c.l.b16 %v4798
    %v4856 = vunpack.c.l.b16 %v4799
    %v4857 = vunpack.c.h.b16 %v4799
    %v4858 = vunpack.c.l.b16 %v4800
    %v4859 = vunpack.c.l.b16 %v4801
    %v4860 = vunpack.c.h.b16 %v4801
    %v4861 = vunpack.c.l.b16 %v4802
    %v4862 = vunpack.c.l.b16 %v4803
    %v4863 = vunpack.c.h.b16 %v4803
    %v4864 = vunpack.c.l.b16 %v4804
    %v4865 = vunpack.c.l.b16 %v4805
    %v4866 = vunpack.c.h.b16 %v4805
    %v4867 = vunpack.c.l.b16 %v4806
    %v4868 = vunpack.c.l.b16 %v4807
    %v4869 = vunpack.c.h.b16 %v4807
    %v4870 = vunpack.c.l.b16 %v4808
    %v4871 = vunpack.c.l.b16 %v4809
    %v4872 = vunpack.c.h.b16 %v4809
    %v4873 = vunpack.c.l.b16 %v4810
    %v4874 = vpack.c.b16 %v4850, %v4847
    %v4875 = vpack.c.b16 %v4851, %v4848
    %v4876 = vpack.c.b16 %v4852, %v4849
    %v4877 = vpack.c.b16 %v4856, %v4853
    %v4878 = vpack.c.b16 %v4857, %v4854
    %v4879 = vpack.c.b16 %v4858, %v4855
    %v4880 = vpack.c.b16 %v4862, %v4859
    %v4881 = vpack.c.b16 %v4863, %v4860
    %v4882 = vpack.c.b16 %v4864, %v4861
    %v4883 = vpack.c.b16 %v4868, %v4865
    %v4884 = vpack.c.b16 %v4869, %v4866
    %v4885 = vpack.c.b16 %v4870, %v4867
    %v4886 = vpack.c.b16 %v4871, %v4871
    %v4887 = vpack.c.b16 %v4872, %v4872
    %v4888 = vpack.c.b16 %v4873, %v4873
    %v4902 = vsel %vm1495, %v4792, 0
    %v4905 = vsel %vm1057, %v4886, 0
    %v4908 = vsel %vm1057, %v4887, 0
    %v4911 = vsel %vm1057, %v4888, 0
    %4913 = vmatprep.subr.bf16.mxu0 %v4875
    %4914 = vmatpush1.bf16.msra.mxu0 %v4874
    %4915 = vmatprep.subr.bf16.mxu0 %v4878
    %4916 = vmatpush1.bf16.msra.mxu0 %v4877
    %4917 = vmatprep.subr.bf16.mxu0 %v4881
    %4918 = vmatpush1.bf16.msra.mxu0 %v4880
    %4919 = vmatprep.subr.bf16.mxu0 %v4884
    %4920 = vmatpush1.bf16.msra.mxu0 %v4883
    %4921 = vmatprep.subr.bf16.mxu0 %v4908
    %4922 = vmatpush1.bf16.msra.mxu0 %v4905
    %4923 = vmatprep.subr.bf16.mxu0 0
    %4924 = vmatpush1.bf16.msra.mxu0 0
    %4925 = vmatprep.subr.bf16.mxu0 0
    %4926 = vmatpush1.bf16.msra.mxu0 0
    %4927 = vmatprep.subr.bf16.mxu0 0
    %4928 = vmatpush1.bf16.msra.mxu0 0
    %4929 = vmatprep.subr.bf16.mxu0 0
    %4930 = vmatpush1.bf16.msra.mxu0 0
    %4931 = vmatprep.subr.bf16.mxu0 0
    %4932 = vmatpush1.bf16.msra.mxu0 0
    %4933 = vmatprep.subr.bf16.mxu0 0
    %4934 = vmatpush1.bf16.msra.mxu0 0
    %4935 = vmatprep.subr.bf16.mxu0 0
    %4936 = vmatpush1.bf16.msra.mxu0 0
    %4937 = vmatprep.subr.bf16.mxu0 0
    %4938 = vmatpush1.bf16.msra.mxu0 0
    %4939 = vmatprep.subr.bf16.mxu0 0
    %4940 = vmatpush1.bf16.msra.mxu0 0
    %4941 = vmatprep.subr.bf16.mxu0 0
    %4942 = vmatpush1.bf16.msra.mxu0 0
    %4943 = vmatprep.subr.bf16.mxu0 0
    %4944 = vmatpush1.bf16.msra.mxu0 0
    %4945 = vmatprep.mubr.bf16.mxu0 0
    %4946 = vmatmul.mubr.bf16.gmra.mrb[0].mxu0 %v4902
    %v4947 = vpop.f32.mrb[0].mxu0
    %v4948 = vadd.f32 %v4817, %v4947
    %v4949 = vpop.f32.mrb[0].mxu0
    %v4950 = vadd.f32 %v4821, %v4949
    %v4951 = vpop.f32.mrb[0].mxu0
    %v4952 = vpop.f32.mrb[0].mxu0
    %4953 = vdwg.mxu0
    %4954 = vmatprep.subr.bf16.mxu0 0
    %4955 = vmatpush1.bf16.msra.mxu0 %v4876
    %4956 = vmatprep.subr.bf16.mxu0 0
    %4957 = vmatpush1.bf16.msra.mxu0 %v4879
    %4958 = vmatprep.subr.bf16.mxu0 0
    %4959 = vmatpush1.bf16.msra.mxu0 %v4882
    %4960 = vmatprep.subr.bf16.mxu0 0
    %4961 = vmatpush1.bf16.msra.mxu0 %v4885
    %4962 = vmatprep.subr.bf16.mxu0 0
    %4963 = vmatpush1.bf16.msra.mxu0 %v4911
    %4964 = vmatprep.subr.bf16.mxu0 0
    %4965 = vmatpush1.bf16.msra.mxu0 0
    %4966 = vmatprep.subr.bf16.mxu0 0
    %4967 = vmatpush1.bf16.msra.mxu0 0
    %4968 = vmatprep.subr.bf16.mxu0 0
    %4969 = vmatpush1.bf16.msra.mxu0 0
    %4970 = vmatprep.subr.bf16.mxu0 0
    %4971 = vmatpush1.bf16.msra.mxu0 0
    %4972 = vmatprep.subr.bf16.mxu0 0
    %4973 = vmatpush1.bf16.msra.mxu0 0
    %4974 = vmatprep.subr.bf16.mxu0 0
    %4975 = vmatpush1.bf16.msra.mxu0 0
    %4976 = vmatprep.subr.bf16.mxu0 0
    %4977 = vmatpush1.bf16.msra.mxu0 0
    %4978 = vmatprep.subr.bf16.mxu0 0
    %4979 = vmatpush1.bf16.msra.mxu0 0
    %4980 = vmatprep.subr.bf16.mxu0 0
    %4981 = vmatpush1.bf16.msra.mxu0 0
    %4982 = vmatprep.subr.bf16.mxu0 0
    %4983 = vmatpush1.bf16.msra.mxu0 0
    %4984 = vmatprep.subr.bf16.mxu0 0
    %4985 = vmatpush1.bf16.msra.mxu0 0
    %4986 = vmatprep.mubr.bf16.mxu0 0
    %4987 = vmatmul.mubr.bf16.gmra.mrb[0].mxu0 %v4902
    %v4988 = vpop.f32.mrb[0].mxu0
    %v4989 = vadd.f32 %v4825, %v4988
    %v4990 = vpop.f32.mrb[0].mxu0
    %v4991 = vpop.f32.mrb[0].mxu0
    %v4992 = vpop.f32.mrb[0].mxu0
    %4993 = vdwg.mxu0
    %v4994 = vadd.f32 %v4948, 3.0
    %v4995 = vadd.f32 %v4950, 3.0
    %v4996 = vadd.f32 %v4989, 3.0
    %v4997 = vmax.f32 %v4994, 0.0
    %v4998 = vmax.f32 %v4995, 0.0
    %v4999 = vmax.f32 %v4996, 0.0
    %v5000 = vmin.f32 %v4997, 6.0
    %v5001 = vmin.f32 %v4998, 6.0
    %v5002 = vmin.f32 %v4999, 6.0
    %v5003 = vmul.f32 %v5000, 0.16666667
    %v5004 = vmul.f32 %v5001, 0.16666667
    %v5005 = vmul.f32 %v5002, 0.16666667
    %v5006 = vmul.f32 %v4557, %v5003
    %v5007 = vmul.f32 %v4558, %v5004
    %v5008 = vmul.f32 %v4559, %v5005
    %v5009 = vpack.c.bf16 %v5006, %v5006
    %v5010 = vpack.c.bf16 %v5007, %v5007
    %v5011 = vpack.c.bf16 %v5008, %v5008
    %v5012 = vld [vmem:[%s95] sm:$0xf]
    %v5013 = vld [vmem:[%s95 + $0x4] sm:$0xf]
    %v5014 = vld [vmem:[%s95 + $0x8] sm:$0xf]
    %v5015 = vld [vmem:[%s95 + $0xc] sm:$0xf]
    %v5016 = vld [vmem:[%s95 + $0x10] sm:$0xf]
    %v5017 = vld [vmem:[%s95 + $0x14] sm:$0xf]
    %v5018 = vld [vmem:[%s95 + $0x18] sm:$0xf]
    %v5019 = vld [vmem:[%s95 + $0x1c] sm:$0xf]
    %v5020 = vld [vmem:[%s95 + $0x20] sm:$0xf]
    %v5021 = vld [vmem:[%s95 + $0x24] sm:$0xf]
    %v5022 = vld [vmem:[%s95 + $0x28] sm:$0xf]
    %v5023 = vld [vmem:[%s95 + $0x2c] sm:$0xf]
    %v5024 = vld [vmem:[%s95 + $0x30] sm:$0xf]
    %v5025 = vld [vmem:[%s95 + $0x34] sm:$0xf]
    %v5026 = vld [vmem:[%s95 + $0x38] sm:$0xf]
    %v5027 = vld [vmem:[%s95 + $0x3c] sm:$0xf]
    %v5028 = vld [vmem:[%s95 + $0x40] sm:$0xf]
    %v5029 = vld [vmem:[%s95 + $0x44] sm:$0xf]
    %v5030 = vld [vmem:[%s95 + $0x48] sm:$0xf]
    %v5031 = vld [vmem:[%s95 + $0x4c] sm:$0xf]
    %v5032 = vld [vmem:[%s95 + $0x50] sm:$0xf]
    %v5033 = vld [vmem:[%s95 + $0x54] sm:$0xf]
    %v5034 = vld [vmem:[%s95 + $0x58] sm:$0xf]
    %v5035 = vld [vmem:[%s95 + $0x5c] sm:$0xf]
    %v5036 = vld [vmem:[%s95 + $0x60] sm:$0xf]
    %v5037 = vld [vmem:[%s95 + $0x64] sm:$0xf]
    %v5038 = vld [vmem:[%s95 + $0x68] sm:$0xf]
    %v5039 = vld [vmem:[%s95 + $0x6c] sm:$0xf]
    %v5040 = vld [vmem:[%s95 + $0x70] sm:$0xf]
    %v5041 = vld [vmem:[%s95 + $0x74] sm:$0xf]
    %v5042 = vld [vmem:[%s95 + $0x78] sm:$0xf]
    %v5043 = vld [vmem:[%s95 + $0x7c] sm:$0xf]
    %v5044 = vld [vmem:[%s95 + $0x80] sm:$0xf]
    %v5045 = vld [vmem:[%s95 + $0x84] sm:$0xf]
    %v5046 = vld [vmem:[%s95 + $0x88] sm:$0xf]
    %v5047 = vld [vmem:[%s95 + $0x8c] sm:$0xf]
    %v5048 = vld [vmem:[%s1 + $0xc8] ss:$0 sm:$0xff]
    %v5085 = vunpack.c.l.b16 %v5012
    %v5086 = vunpack.c.l.b16 %v5013
    %v5087 = vunpack.c.l.b16 %v5014
    %v5088 = vunpack.c.l.b16 %v5015
    %v5089 = vunpack.c.l.b16 %v5016
    %v5090 = vunpack.c.l.b16 %v5017
    %v5091 = vunpack.c.l.b16 %v5018
    %v5092 = vunpack.c.l.b16 %v5019
    %v5093 = vunpack.c.l.b16 %v5020
    %v5094 = vunpack.c.l.b16 %v5021
    %v5095 = vunpack.c.l.b16 %v5022
    %v5096 = vunpack.c.l.b16 %v5023
    %v5097 = vunpack.c.l.b16 %v5024
    %v5098 = vunpack.c.l.b16 %v5025
    %v5099 = vunpack.c.l.b16 %v5026
    %v5100 = vunpack.c.l.b16 %v5027
    %v5101 = vunpack.c.l.b16 %v5028
    %v5102 = vunpack.c.l.b16 %v5029
    %v5103 = vunpack.c.l.b16 %v5030
    %v5104 = vunpack.c.l.b16 %v5031
    %v5105 = vunpack.c.l.b16 %v5032
    %v5106 = vunpack.c.l.b16 %v5033
    %v5107 = vunpack.c.l.b16 %v5034
    %v5108 = vunpack.c.l.b16 %v5035
    %v5109 = vunpack.c.l.b16 %v5036
    %v5110 = vunpack.c.l.b16 %v5037
    %v5111 = vunpack.c.l.b16 %v5038
    %v5112 = vunpack.c.l.b16 %v5039
    %v5113 = vunpack.c.l.b16 %v5040
    %v5114 = vunpack.c.l.b16 %v5041
    %v5115 = vunpack.c.l.b16 %v5042
    %v5116 = vunpack.c.l.b16 %v5043
    %v5117 = vunpack.c.l.b16 %v5044
    %v5118 = vunpack.c.l.b16 %v5045
    %v5119 = vunpack.c.l.b16 %v5046
    %v5120 = vunpack.c.l.b16 %v5047
    %v5121 = vpack.c.b16 %v5086, %v5085
    %v5122 = vpack.c.b16 %v5088, %v5087
    %v5123 = vpack.c.b16 %v5090, %v5089
    %v5124 = vpack.c.b16 %v5092, %v5091
    %v5125 = vpack.c.b16 %v5094, %v5093
    %v5126 = vpack.c.b16 %v5096, %v5095
    %v5127 = vpack.c.b16 %v5098, %v5097
    %v5128 = vpack.c.b16 %v5100, %v5099
    %v5129 = vpack.c.b16 %v5102, %v5101
    %v5130 = vpack.c.b16 %v5104, %v5103
    %v5131 = vpack.c.b16 %v5106, %v5105
    %v5132 = vpack.c.b16 %v5108, %v5107
    %v5133 = vpack.c.b16 %v5110, %v5109
    %v5134 = vpack.c.b16 %v5112, %v5111
    %v5135 = vpack.c.b16 %v5114, %v5113
    %v5136 = vpack.c.b16 %v5116, %v5115
    %v5137 = vpack.c.b16 %v5118, %v5117
    %v5138 = vpack.c.b16 %v5120, %v5119
    %v5158 = vsel %vm303, %v5011, 0
    %5160 = vmatprep.subr.bf16.mxu0 0
    %5161 = vmatpush1.bf16.msra.mxu0 %v5121
    %5162 = vmatprep.subr.bf16.mxu0 0
    %5163 = vmatpush1.bf16.msra.mxu0 %v5122
    %5164 = vmatprep.subr.bf16.mxu0 0
    %5165 = vmatpush1.bf16.msra.mxu0 %v5123
    %5166 = vmatprep.subr.bf16.mxu0 0
    %5167 = vmatpush1.bf16.msra.mxu0 %v5124
    %5168 = vmatprep.subr.bf16.mxu0 0
    %5169 = vmatpush1.bf16.msra.mxu0 %v5125
    %5170 = vmatprep.subr.bf16.mxu0 0
    %5171 = vmatpush1.bf16.msra.mxu0 %v5126
    %5172 = vmatprep.subr.bf16.mxu0 0
    %5173 = vmatpush1.bf16.msra.mxu0 %v5127
    %5174 = vmatprep.subr.bf16.mxu0 0
    %5175 = vmatpush1.bf16.msra.mxu0 %v5128
    %5176 = vmatprep.subr.bf16.mxu0 0
    %5177 = vmatpush1.bf16.msra.mxu0 %v5129
    %5178 = vmatprep.subr.bf16.mxu0 0
    %5179 = vmatpush1.bf16.msra.mxu0 %v5130
    %5180 = vmatprep.subr.bf16.mxu0 0
    %5181 = vmatpush1.bf16.msra.mxu0 %v5131
    %5182 = vmatprep.subr.bf16.mxu0 0
    %5183 = vmatpush1.bf16.msra.mxu0 %v5132
    %5184 = vmatprep.subr.bf16.mxu0 0
    %5185 = vmatpush1.bf16.msra.mxu0 %v5133
    %5186 = vmatprep.subr.bf16.mxu0 0
    %5187 = vmatpush1.bf16.msra.mxu0 %v5134
    %5188 = vmatprep.subr.bf16.mxu0 0
    %5189 = vmatpush1.bf16.msra.mxu0 %v5135
    %5190 = vmatprep.subr.bf16.mxu0 0
    %5191 = vmatpush1.bf16.msra.mxu0 %v5136
    %5192 = vmatprep.mubr.bf16.mxu0 %v5010
    %5193 = vmatmul.mubr.bf16.gmra.mrb[0].mxu0 %v5009
    %v5194 = vpop.f32.mrb[0].mxu0
    %v5195 = vadd.f32 %v5048, %v5194
    %v5196 = vpop.f32.mrb[0].mxu0
    %v5197 = vpop.f32.mrb[0].mxu0
    %v5198 = vpop.f32.mrb[0].mxu0
    %5199 = vdwg.mxu0
    %5200 = vmatprep.subr.bf16.mxu0 0
    %5201 = vmatpush1.bf16.msra.mxu0 %v5137
    %5202 = vmatprep.subr.bf16.mxu0 0
    %5203 = vmatpush1.bf16.msra.mxu0 %v5138
    %5204 = vmatprep.subr.bf16.mxu0 0
    %5205 = vmatpush1.bf16.msra.mxu0 0
    %5206 = vmatprep.subr.bf16.mxu0 0
    %5207 = vmatpush1.bf16.msra.mxu0 0
    %5208 = vmatprep.subr.bf16.mxu0 0
    %5209 = vmatpush1.bf16.msra.mxu0 0
    %5210 = vmatprep.subr.bf16.mxu0 0
    %5211 = vmatpush1.bf16.msra.mxu0 0
    %5212 = vmatprep.subr.bf16.mxu0 0
    %5213 = vmatpush1.bf16.msra.mxu0 0
    %5214 = vmatprep.subr.bf16.mxu0 0
    %5215 = vmatpush1.bf16.msra.mxu0 0
    %5216 = vmatprep.subr.bf16.mxu0 0
    %5217 = vmatpush1.bf16.msra.mxu0 0
    %5218 = vmatprep.subr.bf16.mxu0 0
    %5219 = vmatpush1.bf16.msra.mxu0 0
    %5220 = vmatprep.subr.bf16.mxu0 0
    %5221 = vmatpush1.bf16.msra.mxu0 0
    %5222 = vmatprep.subr.bf16.mxu0 0
    %5223 = vmatpush1.bf16.msra.mxu0 0
    %5224 = vmatprep.subr.bf16.mxu0 0
    %5225 = vmatpush1.bf16.msra.mxu0 0
    %5226 = vmatprep.subr.bf16.mxu0 0
    %5227 = vmatpush1.bf16.msra.mxu0 0
    %5228 = vmatprep.subr.bf16.mxu0 0
    %5229 = vmatpush1.bf16.msra.mxu0 0
    %5230 = vmatprep.subr.bf16.mxu0 0
    %5231 = vmatpush1.bf16.msra.mxu0 0
    %5232 = vmatprep.mubr.bf16.mxu0 0
    %5233 = vmatmul.mubr.bf16.gmra.mrb[0].mxu0 %v5158
    %v5234 = vpop.f32.mrb[0].mxu0
    %v5235 = vadd.f32 %v5195, %v5234
    %v5236 = vpop.f32.mrb[0].mxu0
    %v5237 = vpop.f32.mrb[0].mxu0
    %v5238 = vpop.f32.mrb[0].mxu0
    %5239 = vdwg.mxu0
    %v5240 = vpack.c.bf16 %v5235, %v5235
    %v5241 = vld [vmem:[%s97] sm:$0xff]
    %v5242 = vld [vmem:[%s97 + $0x8] sm:$0xff]
    %v5243 = vld [vmem:[%s97 + $0x10] sm:$0xf]
    %v5244 = vld [vmem:[%s97 + $0x14] sm:$0xff]
    %v5245 = vld [vmem:[%s97 + $0x1c] sm:$0xff]
    %v5246 = vld [vmem:[%s97 + $0x24] sm:$0xf]
    %v5247 = vld [vmem:[%s97 + $0x28] sm:$0xff]
    %v5248 = vld [vmem:[%s97 + $0x30] sm:$0xff]
    %v5249 = vld [vmem:[%s97 + $0x38] sm:$0xf]
    %v5250 = vld [vmem:[%s97 + $0x3c] sm:$0xff]
    %v5251 = vld [vmem:[%s97 + $0x44] sm:$0xff]
    %v5252 = vld [vmem:[%s97 + $0x4c] sm:$0xf]
    %v5253 = vld [vmem:[%s97 + $0x50] sm:$0xff]
    %v5254 = vld [vmem:[%s97 + $0x58] sm:$0xff]
    %v5255 = vld [vmem:[%s97 + $0x60] sm:$0xf]
    %v5256 = vld [vmem:[%s97 + $0x64] sm:$0xff]
    %v5257 = vld [vmem:[%s97 + $0x6c] sm:$0xff]
    %v5258 = vld [vmem:[%s97 + $0x74] sm:$0xf]
    %v5259 = vld [vmem:[%s97 + $0x78] sm:$0xff]
    %v5260 = vld [vmem:[%s97 + $0x80] sm:$0xff]
    %v5261 = vld [vmem:[%s97 + $0x88] sm:$0xf]
    %v5262 = vld [vmem:[%s97 + $0x8c] sm:$0xff]
    %v5263 = vld [vmem:[%s97 + $0x94] sm:$0xff]
    %v5264 = vld [vmem:[%s97 + $0x9c] sm:$0xf]
    %v5265 = vld [vmem:[%s97 + $0xa0] sm:$0xff]
    %v5266 = vld [vmem:[%s97 + $0xa8] sm:$0xff]
    %v5267 = vld [vmem:[%s97 + $0xb0] sm:$0xf]
    %v5268 = vld [vmem:[%s97 + $0xb4] sm:$0xff]
    %v5269 = vld [vmem:[%s97 + $0xbc] sm:$0xff]
    %v5270 = vld [vmem:[%s97 + $0xc4] sm:$0xf]
    %v5271 = vld [vmem:[%s97 + $0xc8] sm:$0xff]
    %v5272 = vld [vmem:[%s97 + $0xd0] sm:$0xff]
    %v5273 = vld [vmem:[%s97 + $0xd8] sm:$0xf]
    %v5274 = vld [vmem:[%s97 + $0xdc] sm:$0xff]
    %v5275 = vld [vmem:[%s97 + $0xe4] sm:$0xff]
    %v5276 = vld [vmem:[%s97 + $0xec] sm:$0xf]
    %s5277 = scalar_lea.vmem %s1, 201
    %v5278 = vld [vmem:[%s5277] ss:$8 sm:$0xf]
    %v5279 = vld [vmem:[%s5277] ss:$8 sm:$0x10]
    %v5280 = vor.u32 %v5278, %v5279
    %v5282 = vlaneseq
    %v5283 = vshrl.u32 %v5282, 7
    %v5284 = vsub.s32 0, %v5283
    %v5285 = vrot.slane %v5280, %v5284
    %v5286 = vlaneseq
    %v5287 = vshrl.u32 %v5286, 7
    %v5288 = vsub.s32 1, %v5287
    %v5289 = vrot.slane %v5280, %v5288
    %v5290 = vlaneseq
    %v5291 = vshrl.u32 %v5290, 7
    %v5292 = vsub.s32 2, %v5291
    %v5293 = vrot.slane %v5280, %v5292
    %v5294 = vlaneseq
    %v5295 = vshrl.u32 %v5294, 7
    %v5296 = vsub.s32 3, %v5295
    %v5297 = vrot.slane %v5280, %v5296
    %v5298 = vlaneseq
    %v5299 = vshrl.u32 %v5298, 7
    %v5300 = vsub.s32 4, %v5299
    %v5301 = vrot.slane %v5280, %v5300
    %v5343 = vunpack.c.l.b16 %v5241
    %v5344 = vunpack.c.h.b16 %v5241
    %v5345 = vunpack.c.l.b16 %v5242
    %v5346 = vunpack.c.h.b16 %v5242
    %v5347 = vunpack.c.l.b16 %v5243
    %v5348 = vunpack.c.l.b16 %v5244
    %v5349 = vunpack.c.h.b16 %v5244
    %v5350 = vunpack.c.l.b16 %v5245
    %v5351 = vunpack.c.h.b16 %v5245
    %v5352 = vunpack.c.l.b16 %v5246
    %v5353 = vunpack.c.l.b16 %v5247
    %v5354 = vunpack.c.h.b16 %v5247
    %v5355 = vunpack.c.l.b16 %v5248
    %v5356 = vunpack.c.h.b16 %v5248
    %v5357 = vunpack.c.l.b16 %v5249
    %v5358 = vunpack.c.l.b16 %v5250
    %v5359 = vunpack.c.h.b16 %v5250
    %v5360 = vunpack.c.l.b16 %v5251
    %v5361 = vunpack.c.h.b16 %v5251
    %v5362 = vunpack.c.l.b16 %v5252
    %v5363 = vunpack.c.l.b16 %v5253
    %v5364 = vunpack.c.h.b16 %v5253
    %v5365 = vunpack.c.l.b16 %v5254
    %v5366 = vunpack.c.h.b16 %v5254
    %v5367 = vunpack.c.l.b16 %v5255
    %v5368 = vunpack.c.l.b16 %v5256
    %v5369 = vunpack.c.h.b16 %v5256
    %v5370 = vunpack.c.l.b16 %v5257
    %v5371 = vunpack.c.h.b16 %v5257
    %v5372 = vunpack.c.l.b16 %v5258
    %v5373 = vunpack.c.l.b16 %v5259
    %v5374 = vunpack.c.h.b16 %v5259
    %v5375 = vunpack.c.l.b16 %v5260
    %v5376 = vunpack.c.h.b16 %v5260
    %v5377 = vunpack.c.l.b16 %v5261
    %v5378 = vunpack.c.l.b16 %v5262
    %v5379 = vunpack.c.h.b16 %v5262
    %v5380 = vunpack.c.l.b16 %v5263
    %v5381 = vunpack.c.h.b16 %v5263
    %v5382 = vunpack.c.l.b16 %v5264
    %v5383 = vunpack.c.l.b16 %v5265
    %v5384 = vunpack.c.h.b16 %v5265
    %v5385 = vunpack.c.l.b16 %v5266
    %v5386 = vunpack.c.h.b16 %v5266
    %v5387 = vunpack.c.l.b16 %v5267
    %v5388 = vunpack.c.l.b16 %v5268
    %v5389 = vunpack.c.h.b16 %v5268
    %v5390 = vunpack.c.l.b16 %v5269
    %v5391 = vunpack.c.h.b16 %v5269
    %v5392 = vunpack.c.l.b16 %v5270
    %v5393 = vunpack.c.l.b16 %v5271
    %v5394 = vunpack.c.h.b16 %v5271
    %v5395 = vunpack.c.l.b16 %v5272
    %v5396 = vunpack.c.h.b16 %v5272
    %v5397 = vunpack.c.l.b16 %v5273
    %v5398 = vunpack.c.l.b16 %v5274
    %v5399 = vunpack.c.h.b16 %v5274
    %v5400 = vunpack.c.l.b16 %v5275
    %v5401 = vunpack.c.h.b16 %v5275
    %v5402 = vunpack.c.l.b16 %v5276
    %v5403 = vpack.c.b16 %v5348, %v5343
    %v5404 = vpack.c.b16 %v5349, %v5344
    %v5405 = vpack.c.b16 %v5350, %v5345
    %v5406 = vpack.c.b16 %v5351, %v5346
    %v5407 = vpack.c.b16 %v5352, %v5347
    %v5408 = vpack.c.b16 %v5358, %v5353
    %v5409 = vpack.c.b16 %v5359, %v5354
    %v5410 = vpack.c.b16 %v5360, %v5355
    %v5411 = vpack.c.b16 %v5361, %v5356
    %v5412 = vpack.c.b16 %v5362, %v5357
    %v5413 = vpack.c.b16 %v5368, %v5363
    %v5414 = vpack.c.b16 %v5369, %v5364
    %v5415 = vpack.c.b16 %v5370, %v5365
    %v5416 = vpack.c.b16 %v5371, %v5366
    %v5417 = vpack.c.b16 %v5372, %v5367
    %v5418 = vpack.c.b16 %v5378, %v5373
    %v5419 = vpack.c.b16 %v5379, %v5374
    %v5420 = vpack.c.b16 %v5380, %v5375
    %v5421 = vpack.c.b16 %v5381, %v5376
    %v5422 = vpack.c.b16 %v5382, %v5377
    %v5423 = vpack.c.b16 %v5388, %v5383
    %v5424 = vpack.c.b16 %v5389, %v5384
    %v5425 = vpack.c.b16 %v5390, %v5385
    %v5426 = vpack.c.b16 %v5391, %v5386
    %v5427 = vpack.c.b16 %v5392, %v5387
    %v5428 = vpack.c.b16 %v5398, %v5393
    %v5429 = vpack.c.b16 %v5399, %v5394
    %v5430 = vpack.c.b16 %v5400, %v5395
    %v5431 = vpack.c.b16 %v5401, %v5396
    %v5432 = vpack.c.b16 %v5402, %v5397
    %v5464 = vsel %vm2084, %v5240, 0
    %5466 = vmatprep.subr.bf16.mxu0 %v5404
    %5467 = vmatpush1.bf16.msra.mxu0 %v5403
    %5468 = vmatprep.subr.bf16.mxu0 %v5409
    %5469 = vmatpush1.bf16.msra.mxu0 %v5408
    %5470 = vmatprep.subr.bf16.mxu0 %v5414
    %5471 = vmatpush1.bf16.msra.mxu0 %v5413
    %5472 = vmatprep.subr.bf16.mxu0 %v5419
    %5473 = vmatpush1.bf16.msra.mxu0 %v5418
    %5474 = vmatprep.subr.bf16.mxu0 %v5424
    %5475 = vmatpush1.bf16.msra.mxu0 %v5423
    %5476 = vmatprep.subr.bf16.mxu0 %v5429
    %5477 = vmatpush1.bf16.msra.mxu0 %v5428
    %5478 = vmatprep.subr.bf16.mxu0 0
    %5479 = vmatpush1.bf16.msra.mxu0 0
    %5480 = vmatprep.subr.bf16.mxu0 0
    %5481 = vmatpush1.bf16.msra.mxu0 0
    %5482 = vmatprep.subr.bf16.mxu0 0
    %5483 = vmatpush1.bf16.msra.mxu0 0
    %5484 = vmatprep.subr.bf16.mxu0 0
    %5485 = vmatpush1.bf16.msra.mxu0 0
    %5486 = vmatprep.subr.bf16.mxu0 0
    %5487 = vmatpush1.bf16.msra.mxu0 0
    %5488 = vmatprep.subr.bf16.mxu0 0
    %5489 = vmatpush1.bf16.msra.mxu0 0
    %5490 = vmatprep.subr.bf16.mxu0 0
    %5491 = vmatpush1.bf16.msra.mxu0 0
    %5492 = vmatprep.subr.bf16.mxu0 0
    %5493 = vmatpush1.bf16.msra.mxu0 0
    %5494 = vmatprep.subr.bf16.mxu0 0
    %5495 = vmatpush1.bf16.msra.mxu0 0
    %5496 = vmatprep.subr.bf16.mxu0 0
    %5497 = vmatpush1.bf16.msra.mxu0 0
    %5498 = vmatprep.mubr.bf16.mxu0 0
    %5499 = vmatmul.mubr.bf16.gmra.mrb[0].mxu0 %v5464
    %v5500 = vpop.f32.mrb[0].mxu0
    %v5501 = vadd.f32 %v5285, %v5500
    %v5502 = vpop.f32.mrb[0].mxu0
    %v5503 = vadd.f32 %v5289, %v5502
    %v5504 = vpop.f32.mrb[0].mxu0
    %v5505 = vpop.f32.mrb[0].mxu0
    %5506 = vdwg.mxu0
    %5507 = vmatprep.subr.bf16.mxu0 %v5406
    %5508 = vmatpush1.bf16.msra.mxu0 %v5405
    %5509 = vmatprep.subr.bf16.mxu0 %v5411
    %5510 = vmatpush1.bf16.msra.mxu0 %v5410
    %5511 = vmatprep.subr.bf16.mxu0 %v5416
    %5512 = vmatpush1.bf16.msra.mxu0 %v5415
    %5513 = vmatprep.subr.bf16.mxu0 %v5421
    %5514 = vmatpush1.bf16.msra.mxu0 %v5420
    %5515 = vmatprep.subr.bf16.mxu0 %v5426
    %5516 = vmatpush1.bf16.msra.mxu0 %v5425
    %5517 = vmatprep.subr.bf16.mxu0 %v5431
    %5518 = vmatpush1.bf16.msra.mxu0 %v5430
    %5519 = vmatprep.subr.bf16.mxu0 0
    %5520 = vmatpush1.bf16.msra.mxu0 0
    %5521 = vmatprep.subr.bf16.mxu0 0
    %5522 = vmatpush1.bf16.msra.mxu0 0
    %5523 = vmatprep.subr.bf16.mxu0 0
    %5524 = vmatpush1.bf16.msra.mxu0 0
    %5525 = vmatprep.subr.bf16.mxu0 0
    %5526 = vmatpush1.bf16.msra.mxu0 0
    %5527 = vmatprep.subr.bf16.mxu0 0
    %5528 = vmatpush1.bf16.msra.mxu0 0
    %5529 = vmatprep.subr.bf16.mxu0 0
    %5530 = vmatpush1.bf16.msra.mxu0 0
    %5531 = vmatprep.subr.bf16.mxu0 0
    %5532 = vmatpush1.bf16.msra.mxu0 0
    %5533 = vmatprep.subr.bf16.mxu0 0
    %5534 = vmatpush1.bf16.msra.mxu0 0
    %5535 = vmatprep.subr.bf16.mxu0 0
    %5536 = vmatpush1.bf16.msra.mxu0 0
    %5537 = vmatprep.subr.bf16.mxu0 0
    %5538 = vmatpush1.bf16.msra.mxu0 0
    %5539 = vmatprep.mubr.bf16.mxu0 0
    %5540 = vmatmul.mubr.bf16.gmra.mrb[0].mxu0 %v5464
    %v5541 = vpop.f32.mrb[0].mxu0
    %v5542 = vadd.f32 %v5293, %v5541
    %v5543 = vpop.f32.mrb[0].mxu0
    %v5544 = vadd.f32 %v5297, %v5543
    %v5545 = vpop.f32.mrb[0].mxu0
    %v5546 = vpop.f32.mrb[0].mxu0
    %5547 = vdwg.mxu0
    %5548 = vmatprep.subr.bf16.mxu0 0
    %5549 = vmatpush1.bf16.msra.mxu0 %v5407
    %5550 = vmatprep.subr.bf16.mxu0 0
    %5551 = vmatpush1.bf16.msra.mxu0 %v5412
    %5552 = vmatprep.subr.bf16.mxu0 0
    %5553 = vmatpush1.bf16.msra.mxu0 %v5417
    %5554 = vmatprep.subr.bf16.mxu0 0
    %5555 = vmatpush1.bf16.msra.mxu0 %v5422
    %5556 = vmatprep.subr.bf16.mxu0 0
    %5557 = vmatpush1.bf16.msra.mxu0 %v5427
    %5558 = vmatprep.subr.bf16.mxu0 0
    %5559 = vmatpush1.bf16.msra.mxu0 %v5432
    %5560 = vmatprep.subr.bf16.mxu0 0
    %5561 = vmatpush1.bf16.msra.mxu0 0
    %5562 = vmatprep.subr.bf16.mxu0 0
    %5563 = vmatpush1.bf16.msra.mxu0 0
    %5564 = vmatprep.subr.bf16.mxu0 0
    %5565 = vmatpush1.bf16.msra.mxu0 0
    %5566 = vmatprep.subr.bf16.mxu0 0
    %5567 = vmatpush1.bf16.msra.mxu0 0
    %5568 = vmatprep.subr.bf16.mxu0 0
    %5569 = vmatpush1.bf16.msra.mxu0 0
    %5570 = vmatprep.subr.bf16.mxu0 0
    %5571 = vmatpush1.bf16.msra.mxu0 0
    %5572 = vmatprep.subr.bf16.mxu0 0
    %5573 = vmatpush1.bf16.msra.mxu0 0
    %5574 = vmatprep.subr.bf16.mxu0 0
    %5575 = vmatpush1.bf16.msra.mxu0 0
    %5576 = vmatprep.subr.bf16.mxu0 0
    %5577 = vmatpush1.bf16.msra.mxu0 0
    %5578 = vmatprep.subr.bf16.mxu0 0
    %5579 = vmatpush1.bf16.msra.mxu0 0
    %5580 = vmatprep.mubr.bf16.mxu0 0
    %5581 = vmatmul.mubr.bf16.gmra.mrb[0].mxu0 %v5464
    %v5582 = vpop.f32.mrb[0].mxu0
    %v5583 = vadd.f32 %v5301, %v5582
    %v5584 = vpop.f32.mrb[0].mxu0
    %v5585 = vpop.f32.mrb[0].mxu0
    %v5586 = vpop.f32.mrb[0].mxu0
    %5587 = vdwg.mxu0
    %v5588 = vadd.f32 %v5501, 3.0
    %v5589 = vadd.f32 %v5503, 3.0
    %v5590 = vadd.f32 %v5542, 3.0
    %v5591 = vadd.f32 %v5544, 3.0
    %v5592 = vadd.f32 %v5583, 3.0
    %v5593 = vmax.f32 %v5588, 0.0
    %v5594 = vmax.f32 %v5589, 0.0
    %v5595 = vmax.f32 %v5590, 0.0
    %v5596 = vmax.f32 %v5591, 0.0
    %v5597 = vmax.f32 %v5592, 0.0
    %v5598 = vmin.f32 %v5593, 6.0
    %v5599 = vmin.f32 %v5594, 6.0
    %v5600 = vmin.f32 %v5595, 6.0
    %v5601 = vmin.f32 %v5596, 6.0
    %v5602 = vmin.f32 %v5597, 6.0
    %v5603 = vmul.f32 %v5598, 0.16666667
    %v5604 = vmul.f32 %v5599, 0.16666667
    %v5605 = vmul.f32 %v5600, 0.16666667
    %v5606 = vmul.f32 %v5601, 0.16666667
    %v5607 = vmul.f32 %v5602, 0.16666667
    %v5608 = vmul.f32 %v5501, %v5603
    %v5609 = vmul.f32 %v5503, %v5604
    %v5610 = vmul.f32 %v5542, %v5605
    %v5611 = vmul.f32 %v5544, %v5606
    %v5612 = vmul.f32 %v5583, %v5607
    %v5613 = vld [vmem:[%s99 + $0x28] sm:$0xff]
    %v5614 = vld [vmem:[%s99 + $0x30] sm:$0xff]
    %v5615 = vld [vmem:[%s99 + $0x38] sm:$0xff]
    %v5616 = vld [vmem:[%s99 + $0x40] sm:$0xff]
    %v5617 = vld [vmem:[%s99 + $0x48] sm:$0xff]
    %v5618 = vlaneseq
    %v5619 = vshrl.u32 %v5618, 7
    %v5620 = vsub.s32 4, %v5619
    %v5621 = vrot.slane %v5613, %v5620
    %v5622 = vlaneseq
    %v5623 = vshrl.u32 %v5622, 7
    %v5624 = vsub.s32 4, %v5623
    %v5625 = vrot.slane %v5614, %v5624
    %v5626 = vlaneseq
    %v5627 = vshrl.u32 %v5626, 7
    %v5628 = vsub.s32 4, %v5627
    %v5629 = vrot.slane %v5615, %v5628
    %v5630 = vlaneseq
    %v5631 = vshrl.u32 %v5630, 7
    %v5632 = vsub.s32 4, %v5631
    %v5633 = vrot.slane %v5616, %v5632
    %v5634 = vlaneseq
    %v5635 = vshrl.u32 %v5634, 7
    %v5636 = vsub.s32 4, %v5635
    %v5637 = vrot.slane %v5617, %v5636
    %v5638 = vmul.f32 %v5608, %v5621
    %v5639 = vmul.f32 %v5609, %v5625
    %v5640 = vmul.f32 %v5610, %v5629
    %v5641 = vmul.f32 %v5611, %v5633
    %v5642 = vmul.f32 %v5612, %v5637
    %s5643 = scalar_lea.vmem %s1, 202
    %v5644 = vld [vmem:[%s5643] ss:$8 sm:$0xf]
    %v5645 = vld [vmem:[%s5643] ss:$8 sm:$0x10]
    %v5646 = vor.u32 %v5644, %v5645
    %v5648 = vlaneseq
    %v5649 = vshrl.u32 %v5648, 7
    %v5650 = vsub.s32 0, %v5649
    %v5651 = vrot.slane %v5646, %v5650
    %v5652 = vlaneseq
    %v5653 = vshrl.u32 %v5652, 7
    %v5654 = vsub.s32 1, %v5653
    %v5655 = vrot.slane %v5646, %v5654
    %v5656 = vlaneseq
    %v5657 = vshrl.u32 %v5656, 7
    %v5658 = vsub.s32 2, %v5657
    %v5659 = vrot.slane %v5646, %v5658
    %v5660 = vlaneseq
    %v5661 = vshrl.u32 %v5660, 7
    %v5662 = vsub.s32 3, %v5661
    %v5663 = vrot.slane %v5646, %v5662
    %v5664 = vlaneseq
    %v5665 = vshrl.u32 %v5664, 7
    %v5666 = vsub.s32 4, %v5665
    %v5667 = vrot.slane %v5646, %v5666
    %v5673 = vadd.f32 %v5638, %v5651
    %v5674 = vadd.f32 %v5639, %v5655
    %v5675 = vadd.f32 %v5640, %v5659
    %v5676 = vadd.f32 %v5641, %v5663
    %v5677 = vadd.f32 %v5642, %v5667
    %v5678 = vadd.f32 %v5673, 3.0
    %v5679 = vadd.f32 %v5674, 3.0
    %v5680 = vadd.f32 %v5675, 3.0
    %v5681 = vadd.f32 %v5676, 3.0
    %v5682 = vadd.f32 %v5677, 3.0
    %v5683 = vmax.f32 %v5678, 0.0
    %v5684 = vmax.f32 %v5679, 0.0
    %v5685 = vmax.f32 %v5680, 0.0
    %v5686 = vmax.f32 %v5681, 0.0
    %v5687 = vmax.f32 %v5682, 0.0
    %v5688 = vmin.f32 %v5683, 6.0
    %v5689 = vmin.f32 %v5684, 6.0
    %v5690 = vmin.f32 %v5685, 6.0
    %v5691 = vmin.f32 %v5686, 6.0
    %v5692 = vmin.f32 %v5687, 6.0
    %v5693 = vmul.f32 %v5688, 0.16666667
    %v5694 = vmul.f32 %v5689, 0.16666667
    %v5695 = vmul.f32 %v5690, 0.16666667
    %v5696 = vmul.f32 %v5691, 0.16666667
    %v5697 = vmul.f32 %v5692, 0.16666667
    %v5698 = vmul.f32 %v5673, %v5693
    %v5699 = vmul.f32 %v5674, %v5694
    %v5700 = vmul.f32 %v5675, %v5695
    %v5701 = vmul.f32 %v5676, %v5696
    %v5702 = vmul.f32 %v5677, %v5697
    %v5703 = vpack.c.bf16 %v5698, %v5698
    %v5704 = vpack.c.bf16 %v5699, %v5699
    %v5705 = vpack.c.bf16 %v5700, %v5700
    %v5706 = vpack.c.bf16 %v5701, %v5701
    %v5707 = vpack.c.bf16 %v5702, %v5702
    %v5708 = vld [vmem:[%s101] sm:$0xff]
    %v5709 = vld [vmem:[%s101 + $0x8] sm:$0xff]
    %v5710 = vld [vmem:[%s101 + $0x10] sm:$0xff]
    %v5711 = vld [vmem:[%s101 + $0x18] sm:$0xff]
    %v5712 = vld [vmem:[%s101 + $0x20] sm:$0xff]
    %v5713 = vld [vmem:[%s101 + $0x28] sm:$0xff]
    %v5714 = vld [vmem:[%s101 + $0x30] sm:$0xff]
    %v5715 = vld [vmem:[%s101 + $0x38] sm:$0xff]
    %v5716 = vld [vmem:[%s101 + $0x40] sm:$0xff]
    %v5717 = vld [vmem:[%s101 + $0x48] sm:$0xff]
    %v5718 = vld [vmem:[%s101 + $0x50] sm:$0xff]
    %v5719 = vld [vmem:[%s101 + $0x58] sm:$0xff]
    %v5720 = vld [vmem:[%s101 + $0x60] sm:$0xff]
    %v5721 = vld [vmem:[%s101 + $0x68] sm:$0xff]
    %v5722 = vld [vmem:[%s101 + $0x70] sm:$0xff]
    %v5723 = vld [vmem:[%s101 + $0x78] sm:$0xff]
    %v5724 = vld [vmem:[%s101 + $0x80] sm:$0xff]
    %v5725 = vld [vmem:[%s101 + $0x88] sm:$0xff]
    %v5726 = vld [vmem:[%s101 + $0x90] sm:$0xff]
    %v5727 = vld [vmem:[%s101 + $0x98] sm:$0xff]
    %v5728 = vld [vmem:[%s101 + $0xa0] sm:$0xff]
    %v5729 = vld [vmem:[%s101 + $0xa8] sm:$0xff]
    %v5730 = vld [vmem:[%s101 + $0xb0] sm:$0xff]
    %v5731 = vld [vmem:[%s101 + $0xb8] sm:$0xff]
    %v5732 = vld [vmem:[%s101 + $0xc0] sm:$0xff]
    %v5733 = vld [vmem:[%s101 + $0xc8] sm:$0xff]
    %v5734 = vld [vmem:[%s101 + $0xd0] sm:$0xff]
    %v5735 = vld [vmem:[%s101 + $0xd8] sm:$0xff]
    %v5736 = vld [vmem:[%s101 + $0xe0] sm:$0xff]
    %v5737 = vld [vmem:[%s101 + $0xe8] sm:$0xff]
    %v5738 = vld [vmem:[%s101 + $0xf0] sm:$0xff]
    %v5739 = vld [vmem:[%s101 + $0xf8] sm:$0xff]
    %v5740 = vld [vmem:[%s101 + $0x100] sm:$0xff]
    %v5741 = vld [vmem:[%s101 + $0x108] sm:$0xff]
    %v5742 = vld [vmem:[%s101 + $0x110] sm:$0xff]
    %v5743 = vld [vmem:[%s101 + $0x118] sm:$0xff]
    %v5744 = vld [vmem:[%s101 + $0x120] sm:$0xff]
    %v5745 = vld [vmem:[%s101 + $0x128] sm:$0xff]
    %v5746 = vld [vmem:[%s101 + $0x130] sm:$0xff]
    %v5747 = vld [vmem:[%s101 + $0x138] sm:$0xff]
    %v5748 = vld [vmem:[%s101 + $0x140] sm:$0xff]
    %v5749 = vld [vmem:[%s101 + $0x148] sm:$0xff]
    %v5750 = vld [vmem:[%s101 + $0x150] sm:$0xff]
    %v5751 = vld [vmem:[%s101 + $0x158] sm:$0xff]
    %v5752 = vld [vmem:[%s101 + $0x160] sm:$0xff]
    %v5753 = vld [vmem:[%s101 + $0x168] sm:$0xff]
    %v5754 = vld [vmem:[%s101 + $0x170] sm:$0xff]
    %v5755 = vld [vmem:[%s101 + $0x178] sm:$0xff]
    %v5756 = vld [vmem:[%s101 + $0x180] sm:$0xff]
    %v5757 = vld [vmem:[%s101 + $0x188] sm:$0xff]
    %v5758 = vld [vmem:[%s101 + $0x190] sm:$0xff]
    %v5759 = vld [vmem:[%s101 + $0x198] sm:$0xff]
    %v5760 = vld [vmem:[%s101 + $0x1a0] sm:$0xff]
    %v5761 = vld [vmem:[%s101 + $0x1a8] sm:$0xff]
    %v5762 = vld [vmem:[%s101 + $0x1b0] sm:$0xff]
    %v5763 = vld [vmem:[%s101 + $0x1b8] sm:$0xff]
    %v5764 = vld [vmem:[%s101 + $0x1c0] sm:$0xff]
    %v5765 = vld [vmem:[%s101 + $0x1c8] sm:$0xff]
    %v5766 = vld [vmem:[%s101 + $0x1d0] sm:$0xff]
    %v5767 = vld [vmem:[%s101 + $0x1d8] sm:$0xff]
    %v5768 = vld [vmem:[%s101 + $0x1e0] sm:$0xff]
    %v5769 = vld [vmem:[%s101 + $0x1e8] sm:$0xff]
    %v5770 = vld [vmem:[%s101 + $0x1f0] sm:$0xff]
    %v5771 = vld [vmem:[%s101 + $0x1f8] sm:$0xff]
    %v5772 = vld [vmem:[%s101 + $0x200] sm:$0xff]
    %v5773 = vld [vmem:[%s101 + $0x208] sm:$0xff]
    %v5774 = vld [vmem:[%s101 + $0x210] sm:$0xff]
    %v5775 = vld [vmem:[%s101 + $0x218] sm:$0xff]
    %v5776 = vld [vmem:[%s101 + $0x220] sm:$0xff]
    %v5777 = vld [vmem:[%s101 + $0x228] sm:$0xff]
    %v5778 = vld [vmem:[%s101 + $0x230] sm:$0xff]
    %v5779 = vld [vmem:[%s101 + $0x238] sm:$0xff]
    %s5780 = scalar_lea.vmem %s1, 203
    %v5781 = vld [vmem:[%s5780] ss:$8 sm:$0x3]
    %v5783 = vlaneseq
    %v5784 = vshrl.u32 %v5783, 7
    %v5785 = vsub.s32 0, %v5784
    %v5786 = vrot.slane %v5781, %v5785
    %v5787 = vlaneseq
    %v5788 = vshrl.u32 %v5787, 7
    %v5789 = vsub.s32 1, %v5788
    %v5790 = vrot.slane %v5781, %v5789
    %v5865 = vunpack.c.l.b16 %v5708
    %v5866 = vunpack.c.h.b16 %v5708
    %v5867 = vunpack.c.l.b16 %v5709
    %v5868 = vunpack.c.h.b16 %v5709
    %v5869 = vunpack.c.l.b16 %v5710
    %v5870 = vunpack.c.h.b16 %v5710
    %v5871 = vunpack.c.l.b16 %v5711
    %v5872 = vunpack.c.h.b16 %v5711
    %v5873 = vunpack.c.l.b16 %v5712
    %v5874 = vunpack.c.h.b16 %v5712
    %v5875 = vunpack.c.l.b16 %v5713
    %v5876 = vunpack.c.h.b16 %v5713
    %v5877 = vunpack.c.l.b16 %v5714
    %v5878 = vunpack.c.h.b16 %v5714
    %v5879 = vunpack.c.l.b16 %v5715
    %v5880 = vunpack.c.h.b16 %v5715
    %v5881 = vunpack.c.l.b16 %v5716
    %v5882 = vunpack.c.h.b16 %v5716
    %v5883 = vunpack.c.l.b16 %v5717
    %v5884 = vunpack.c.h.b16 %v5717
    %v5885 = vunpack.c.l.b16 %v5718
    %v5886 = vunpack.c.h.b16 %v5718
    %v5887 = vunpack.c.l.b16 %v5719
    %v5888 = vunpack.c.h.b16 %v5719
    %v5889 = vunpack.c.l.b16 %v5720
    %v5890 = vunpack.c.h.b16 %v5720
    %v5891 = vunpack.c.l.b16 %v5721
    %v5892 = vunpack.c.h.b16 %v5721
    %v5893 = vunpack.c.l.b16 %v5722
    %v5894 = vunpack.c.h.b16 %v5722
    %v5895 = vunpack.c.l.b16 %v5723
    %v5896 = vunpack.c.h.b16 %v5723
    %v5897 = vunpack.c.l.b16 %v5724
    %v5898 = vunpack.c.h.b16 %v5724
    %v5899 = vunpack.c.l.b16 %v5725
    %v5900 = vunpack.c.h.b16 %v5725
    %v5901 = vunpack.c.l.b16 %v5726
    %v5902 = vunpack.c.h.b16 %v5726
    %v5903 = vunpack.c.l.b16 %v5727
    %v5904 = vunpack.c.h.b16 %v5727
    %v5905 = vunpack.c.l.b16 %v5728
    %v5906 = vunpack.c.h.b16 %v5728
    %v5907 = vunpack.c.l.b16 %v5729
    %v5908 = vunpack.c.h.b16 %v5729
    %v5909 = vunpack.c.l.b16 %v5730
    %v5910 = vunpack.c.h.b16 %v5730
    %v5911 = vunpack.c.l.b16 %v5731
    %v5912 = vunpack.c.h.b16 %v5731
    %v5913 = vunpack.c.l.b16 %v5732
    %v5914 = vunpack.c.h.b16 %v5732
    %v5915 = vunpack.c.l.b16 %v5733
    %v5916 = vunpack.c.h.b16 %v5733
    %v5917 = vunpack.c.l.b16 %v5734
    %v5918 = vunpack.c.h.b16 %v5734
    %v5919 = vunpack.c.l.b16 %v5735
    %v5920 = vunpack.c.h.b16 %v5735
    %v5921 = vunpack.c.l.b16 %v5736
    %v5922 = vunpack.c.h.b16 %v5736
    %v5923 = vunpack.c.l.b16 %v5737
    %v5924 = vunpack.c.h.b16 %v5737
    %v5925 = vunpack.c.l.b16 %v5738
    %v5926 = vunpack.c.h.b16 %v5738
    %v5927 = vunpack.c.l.b16 %v5739
    %v5928 = vunpack.c.h.b16 %v5739
    %v5929 = vunpack.c.l.b16 %v5740
    %v5930 = vunpack.c.h.b16 %v5740
    %v5931 = vunpack.c.l.b16 %v5741
    %v5932 = vunpack.c.h.b16 %v5741
    %v5933 = vunpack.c.l.b16 %v5742
    %v5934 = vunpack.c.h.b16 %v5742
    %v5935 = vunpack.c.l.b16 %v5743
    %v5936 = vunpack.c.h.b16 %v5743
    %v5937 = vunpack.c.l.b16 %v5744
    %v5938 = vunpack.c.h.b16 %v5744
    %v5939 = vunpack.c.l.b16 %v5745
    %v5940 = vunpack.c.h.b16 %v5745
    %v5941 = vunpack.c.l.b16 %v5746
    %v5942 = vunpack.c.h.b16 %v5746
    %v5943 = vunpack.c.l.b16 %v5747
    %v5944 = vunpack.c.h.b16 %v5747
    %v5945 = vunpack.c.l.b16 %v5748
    %v5946 = vunpack.c.h.b16 %v5748
    %v5947 = vunpack.c.l.b16 %v5749
    %v5948 = vunpack.c.h.b16 %v5749
    %v5949 = vunpack.c.l.b16 %v5750
    %v5950 = vunpack.c.h.b16 %v5750
    %v5951 = vunpack.c.l.b16 %v5751
    %v5952 = vunpack.c.h.b16 %v5751
    %v5953 = vunpack.c.l.b16 %v5752
    %v5954 = vunpack.c.h.b16 %v5752
    %v5955 = vunpack.c.l.b16 %v5753
    %v5956 = vunpack.c.h.b16 %v5753
    %v5957 = vunpack.c.l.b16 %v5754
    %v5958 = vunpack.c.h.b16 %v5754
    %v5959 = vunpack.c.l.b16 %v5755
    %v5960 = vunpack.c.h.b16 %v5755
    %v5961 = vunpack.c.l.b16 %v5756
    %v5962 = vunpack.c.h.b16 %v5756
    %v5963 = vunpack.c.l.b16 %v5757
    %v5964 = vunpack.c.h.b16 %v5757
    %v5965 = vunpack.c.l.b16 %v5758
    %v5966 = vunpack.c.h.b16 %v5758
    %v5967 = vunpack.c.l.b16 %v5759
    %v5968 = vunpack.c.h.b16 %v5759
    %v5969 = vunpack.c.l.b16 %v5760
    %v5970 = vunpack.c.h.b16 %v5760
    %v5971 = vunpack.c.l.b16 %v5761
    %v5972 = vunpack.c.h.b16 %v5761
    %v5973 = vunpack.c.l.b16 %v5762
    %v5974 = vunpack.c.h.b16 %v5762
    %v5975 = vunpack.c.l.b16 %v5763
    %v5976 = vunpack.c.h.b16 %v5763
    %v5977 = vunpack.c.l.b16 %v5764
    %v5978 = vunpack.c.h.b16 %v5764
    %v5979 = vunpack.c.l.b16 %v5765
    %v5980 = vunpack.c.h.b16 %v5765
    %v5981 = vunpack.c.l.b16 %v5766
    %v5982 = vunpack.c.h.b16 %v5766
    %v5983 = vunpack.c.l.b16 %v5767
    %v5984 = vunpack.c.h.b16 %v5767
    %v5985 = vunpack.c.l.b16 %v5768
    %v5986 = vunpack.c.h.b16 %v5768
    %v5987 = vunpack.c.l.b16 %v5769
    %v5988 = vunpack.c.h.b16 %v5769
    %v5989 = vunpack.c.l.b16 %v5770
    %v5990 = vunpack.c.h.b16 %v5770
    %v5991 = vunpack.c.l.b16 %v5771
    %v5992 = vunpack.c.h.b16 %v5771
    %v5993 = vunpack.c.l.b16 %v5772
    %v5994 = vunpack.c.h.b16 %v5772
    %v5995 = vunpack.c.l.b16 %v5773
    %v5996 = vunpack.c.h.b16 %v5773
    %v5997 = vunpack.c.l.b16 %v5774
    %v5998 = vunpack.c.h.b16 %v5774
    %v5999 = vunpack.c.l.b16 %v5775
    %v6000 = vunpack.c.h.b16 %v5775
    %v6001 = vunpack.c.l.b16 %v5776
    %v6002 = vunpack.c.h.b16 %v5776
    %v6003 = vunpack.c.l.b16 %v5777
    %v6004 = vunpack.c.h.b16 %v5777
    %v6005 = vunpack.c.l.b16 %v5778
    %v6006 = vunpack.c.h.b16 %v5778
    %v6007 = vunpack.c.l.b16 %v5779
    %v6008 = vunpack.c.h.b16 %v5779
    %v6009 = vpack.c.b16 %v5867, %v5865
    %v6010 = vpack.c.b16 %v5868, %v5866
    %v6011 = vpack.c.b16 %v5871, %v5869
    %v6012 = vpack.c.b16 %v5872, %v5870
    %v6013 = vpack.c.b16 %v5875, %v5873
    %v6014 = vpack.c.b16 %v5876, %v5874
    %v6015 = vpack.c.b16 %v5879, %v5877
    %v6016 = vpack.c.b16 %v5880, %v5878
    %v6017 = vpack.c.b16 %v5883, %v5881
    %v6018 = vpack.c.b16 %v5884, %v5882
    %v6019 = vpack.c.b16 %v5887, %v5885
    %v6020 = vpack.c.b16 %v5888, %v5886
    %v6021 = vpack.c.b16 %v5891, %v5889
    %v6022 = vpack.c.b16 %v5892, %v5890
    %v6023 = vpack.c.b16 %v5895, %v5893
    %v6024 = vpack.c.b16 %v5896, %v5894
    %v6025 = vpack.c.b16 %v5899, %v5897
    %v6026 = vpack.c.b16 %v5900, %v5898
    %v6027 = vpack.c.b16 %v5903, %v5901
    %v6028 = vpack.c.b16 %v5904, %v5902
    %v6029 = vpack.c.b16 %v5907, %v5905
    %v6030 = vpack.c.b16 %v5908, %v5906
    %v6031 = vpack.c.b16 %v5911, %v5909
    %v6032 = vpack.c.b16 %v5912, %v5910
    %v6033 = vpack.c.b16 %v5915, %v5913
    %v6034 = vpack.c.b16 %v5916, %v5914
    %v6035 = vpack.c.b16 %v5919, %v5917
    %v6036 = vpack.c.b16 %v5920, %v5918
    %v6037 = vpack.c.b16 %v5923, %v5921
    %v6038 = vpack.c.b16 %v5924, %v5922
    %v6039 = vpack.c.b16 %v5927, %v5925
    %v6040 = vpack.c.b16 %v5928, %v5926
    %v6041 = vpack.c.b16 %v5931, %v5929
    %v6042 = vpack.c.b16 %v5932, %v5930
    %v6043 = vpack.c.b16 %v5935, %v5933
    %v6044 = vpack.c.b16 %v5936, %v5934
    %v6045 = vpack.c.b16 %v5939, %v5937
    %v6046 = vpack.c.b16 %v5940, %v5938
    %v6047 = vpack.c.b16 %v5943, %v5941
    %v6048 = vpack.c.b16 %v5944, %v5942
    %v6049 = vpack.c.b16 %v5947, %v5945
    %v6050 = vpack.c.b16 %v5948, %v5946
    %v6051 = vpack.c.b16 %v5951, %v5949
    %v6052 = vpack.c.b16 %v5952, %v5950
    %v6053 = vpack.c.b16 %v5955, %v5953
    %v6054 = vpack.c.b16 %v5956, %v5954
    %v6055 = vpack.c.b16 %v5959, %v5957
    %v6056 = vpack.c.b16 %v5960, %v5958
    %v6057 = vpack.c.b16 %v5963, %v5961
    %v6058 = vpack.c.b16 %v5964, %v5962
    %v6059 = vpack.c.b16 %v5967, %v5965
    %v6060 = vpack.c.b16 %v5968, %v5966
    %v6061 = vpack.c.b16 %v5971, %v5969
    %v6062 = vpack.c.b16 %v5972, %v5970
    %v6063 = vpack.c.b16 %v5975, %v5973
    %v6064 = vpack.c.b16 %v5976, %v5974
    %v6065 = vpack.c.b16 %v5979, %v5977
    %v6066 = vpack.c.b16 %v5980, %v5978
    %v6067 = vpack.c.b16 %v5983, %v5981
    %v6068 = vpack.c.b16 %v5984, %v5982
    %v6069 = vpack.c.b16 %v5987, %v5985
    %v6070 = vpack.c.b16 %v5988, %v5986
    %v6071 = vpack.c.b16 %v5991, %v5989
    %v6072 = vpack.c.b16 %v5992, %v5990
    %v6073 = vpack.c.b16 %v5995, %v5993
    %v6074 = vpack.c.b16 %v5996, %v5994
    %v6075 = vpack.c.b16 %v5999, %v5997
    %v6076 = vpack.c.b16 %v6000, %v5998
    %v6077 = vpack.c.b16 %v6003, %v6001
    %v6078 = vpack.c.b16 %v6004, %v6002
    %v6079 = vpack.c.b16 %v6007, %v6005
    %v6080 = vpack.c.b16 %v6008, %v6006
    %v6154 = vsel %vm2659, %v5707, 0
    %6156 = vmatprep.subr.bf16.mxu0 %v6010
    %6157 = vmatpush1.bf16.msra.mxu0 %v6009
    %6158 = vmatprep.subr.bf16.mxu0 %v6012
    %6159 = vmatpush1.bf16.msra.mxu0 %v6011
    %6160 = vmatprep.subr.bf16.mxu0 %v6014
    %6161 = vmatpush1.bf16.msra.mxu0 %v6013
    %6162 = vmatprep.subr.bf16.mxu0 %v6016
    %6163 = vmatpush1.bf16.msra.mxu0 %v6015
    %6164 = vmatprep.subr.bf16.mxu0 %v6018
    %6165 = vmatpush1.bf16.msra.mxu0 %v6017
    %6166 = vmatprep.subr.bf16.mxu0 %v6020
    %6167 = vmatpush1.bf16.msra.mxu0 %v6019
    %6168 = vmatprep.subr.bf16.mxu0 %v6022
    %6169 = vmatpush1.bf16.msra.mxu0 %v6021
    %6170 = vmatprep.subr.bf16.mxu0 %v6024
    %6171 = vmatpush1.bf16.msra.mxu0 %v6023
    %6172 = vmatprep.subr.bf16.mxu0 %v6026
    %6173 = vmatpush1.bf16.msra.mxu0 %v6025
    %6174 = vmatprep.subr.bf16.mxu0 %v6028
    %6175 = vmatpush1.bf16.msra.mxu0 %v6027
    %6176 = vmatprep.subr.bf16.mxu0 %v6030
    %6177 = vmatpush1.bf16.msra.mxu0 %v6029
    %6178 = vmatprep.subr.bf16.mxu0 %v6032
    %6179 = vmatpush1.bf16.msra.mxu0 %v6031
    %6180 = vmatprep.subr.bf16.mxu0 %v6034
    %6181 = vmatpush1.bf16.msra.mxu0 %v6033
    %6182 = vmatprep.subr.bf16.mxu0 %v6036
    %6183 = vmatpush1.bf16.msra.mxu0 %v6035
    %6184 = vmatprep.subr.bf16.mxu0 %v6038
    %6185 = vmatpush1.bf16.msra.mxu0 %v6037
    %6186 = vmatprep.subr.bf16.mxu0 %v6040
    %6187 = vmatpush1.bf16.msra.mxu0 %v6039
    %6188 = vmatprep.mubr.bf16.mxu0 %v5704
    %6189 = vmatmul.mubr.bf16.gmra.mrb[0].mxu0 %v5703
    %v6190 = vpop.f32.mrb[0].mxu0
    %v6191 = vadd.f32 %v5786, %v6190
    %v6192 = vpop.f32.mrb[0].mxu0
    %v6193 = vadd.f32 %v5790, %v6192
    %v6194 = vpop.f32.mrb[0].mxu0
    %v6195 = vpop.f32.mrb[0].mxu0
    %6196 = vdwg.mxu0
    %6197 = vmatprep.subr.bf16.mxu0 %v6042
    %6198 = vmatpush1.bf16.msra.mxu0 %v6041
    %6199 = vmatprep.subr.bf16.mxu0 %v6044
    %6200 = vmatpush1.bf16.msra.mxu0 %v6043
    %6201 = vmatprep.subr.bf16.mxu0 %v6046
    %6202 = vmatpush1.bf16.msra.mxu0 %v6045
    %6203 = vmatprep.subr.bf16.mxu0 %v6048
    %6204 = vmatpush1.bf16.msra.mxu0 %v6047
    %6205 = vmatprep.subr.bf16.mxu0 %v6050
    %6206 = vmatpush1.bf16.msra.mxu0 %v6049
    %6207 = vmatprep.subr.bf16.mxu0 %v6052
    %6208 = vmatpush1.bf16.msra.mxu0 %v6051
    %6209 = vmatprep.subr.bf16.mxu0 %v6054
    %6210 = vmatpush1.bf16.msra.mxu0 %v6053
    %6211 = vmatprep.subr.bf16.mxu0 %v6056
    %6212 = vmatpush1.bf16.msra.mxu0 %v6055
    %6213 = vmatprep.subr.bf16.mxu0 %v6058
    %6214 = vmatpush1.bf16.msra.mxu0 %v6057
    %6215 = vmatprep.subr.bf16.mxu0 %v6060
    %6216 = vmatpush1.bf16.msra.mxu0 %v6059
    %6217 = vmatprep.subr.bf16.mxu0 %v6062
    %6218 = vmatpush1.bf16.msra.mxu0 %v6061
    %6219 = vmatprep.subr.bf16.mxu0 %v6064
    %6220 = vmatpush1.bf16.msra.mxu0 %v6063
    %6221 = vmatprep.subr.bf16.mxu0 %v6066
    %6222 = vmatpush1.bf16.msra.mxu0 %v6065
    %6223 = vmatprep.subr.bf16.mxu0 %v6068
    %6224 = vmatpush1.bf16.msra.mxu0 %v6067
    %6225 = vmatprep.subr.bf16.mxu0 %v6070
    %6226 = vmatpush1.bf16.msra.mxu0 %v6069
    %6227 = vmatprep.subr.bf16.mxu0 %v6072
    %6228 = vmatpush1.bf16.msra.mxu0 %v6071
    %6229 = vmatprep.mubr.bf16.mxu0 %v5706
    %6230 = vmatmul.mubr.bf16.gmra.mrb[0].mxu0 %v5705
    %v6231 = vpop.f32.mrb[0].mxu0
    %v6232 = vadd.f32 %v6191, %v6231
    %v6233 = vpop.f32.mrb[0].mxu0
    %v6234 = vadd.f32 %v6193, %v6233
    %v6235 = vpop.f32.mrb[0].mxu0
    %v6236 = vpop.f32.mrb[0].mxu0
    %6237 = vdwg.mxu0
    %6238 = vmatprep.subr.bf16.mxu0 %v6074
    %6239 = vmatpush1.bf16.msra.mxu0 %v6073
    %6240 = vmatprep.subr.bf16.mxu0 %v6076
    %6241 = vmatpush1.bf16.msra.mxu0 %v6075
    %6242 = vmatprep.subr.bf16.mxu0 %v6078
    %6243 = vmatpush1.bf16.msra.mxu0 %v6077
    %6244 = vmatprep.subr.bf16.mxu0 %v6080
    %6245 = vmatpush1.bf16.msra.mxu0 %v6079
    %6246 = vmatprep.subr.bf16.mxu0 0
    %6247 = vmatpush1.bf16.msra.mxu0 0
    %6248 = vmatprep.subr.bf16.mxu0 0
    %6249 = vmatpush1.bf16.msra.mxu0 0
    %6250 = vmatprep.subr.bf16.mxu0 0
    %6251 = vmatpush1.bf16.msra.mxu0 0
    %6252 = vmatprep.subr.bf16.mxu0 0
    %6253 = vmatpush1.bf16.msra.mxu0 0
    %6254 = vmatprep.subr.bf16.mxu0 0
    %6255 = vmatpush1.bf16.msra.mxu0 0
    %6256 = vmatprep.subr.bf16.mxu0 0
    %6257 = vmatpush1.bf16.msra.mxu0 0
    %6258 = vmatprep.subr.bf16.mxu0 0
    %6259 = vmatpush1.bf16.msra.mxu0 0
    %6260 = vmatprep.subr.bf16.mxu0 0
    %6261 = vmatpush1.bf16.msra.mxu0 0
    %6262 = vmatprep.subr.bf16.mxu0 0
    %6263 = vmatpush1.bf16.msra.mxu0 0
    %6264 = vmatprep.subr.bf16.mxu0 0
    %6265 = vmatpush1.bf16.msra.mxu0 0
    %6266 = vmatprep.subr.bf16.mxu0 0
    %6267 = vmatpush1.bf16.msra.mxu0 0
    %6268 = vmatprep.subr.bf16.mxu0 0
    %6269 = vmatpush1.bf16.msra.mxu0 0
    %6270 = vmatprep.mubr.bf16.mxu0 0
    %6271 = vmatmul.mubr.bf16.gmra.mrb[0].mxu0 %v6154
    %v6272 = vpop.f32.mrb[0].mxu0
    %v6273 = vadd.f32 %v6232, %v6272
    %v6274 = vpop.f32.mrb[0].mxu0
    %v6275 = vadd.f32 %v6234, %v6274
    %v6276 = vpop.f32.mrb[0].mxu0
    %v6277 = vpop.f32.mrb[0].mxu0
    %6278 = vdwg.mxu0
    %v6279 = vmax.f32 %v6273, 0.0
    %v6280 = vmax.f32 %v6275, 0.0
    %v6281 = vpack.c.bf16 %v6279, %v6279
    %v6282 = vpack.c.bf16 %v6280, %v6280
    %v6283 = vld [vmem:[%s103] sm:$0xff]
    %v6284 = vld [vmem:[%s103 + $0x8] sm:$0xff]
    %v6285 = vld [vmem:[%s103 + $0x10] sm:$0xf]
    %v6286 = vld [vmem:[%s103 + $0x14] sm:$0xff]
    %v6287 = vld [vmem:[%s103 + $0x1c] sm:$0xff]
    %v6288 = vld [vmem:[%s103 + $0x24] sm:$0xf]
    %v6289 = vld [vmem:[%s103 + $0x28] sm:$0xff]
    %v6290 = vld [vmem:[%s103 + $0x30] sm:$0xff]
    %v6291 = vld [vmem:[%s103 + $0x38] sm:$0xf]
    %v6292 = vld [vmem:[%s103 + $0x3c] sm:$0xff]
    %v6293 = vld [vmem:[%s103 + $0x44] sm:$0xff]
    %v6294 = vld [vmem:[%s103 + $0x4c] sm:$0xf]
    %v6295 = vld [vmem:[%s103 + $0x50] sm:$0xff]
    %v6296 = vld [vmem:[%s103 + $0x58] sm:$0xff]
    %v6297 = vld [vmem:[%s103 + $0x60] sm:$0xf]
    %v6298 = vld [vmem:[%s103 + $0x64] sm:$0xff]
    %v6299 = vld [vmem:[%s103 + $0x6c] sm:$0xff]
    %v6300 = vld [vmem:[%s103 + $0x74] sm:$0xf]
    %v6301 = vld [vmem:[%s103 + $0x78] sm:$0xff]
    %v6302 = vld [vmem:[%s103 + $0x80] sm:$0xff]
    %v6303 = vld [vmem:[%s103 + $0x88] sm:$0xf]
    %v6304 = vld [vmem:[%s103 + $0x8c] sm:$0xff]
    %v6305 = vld [vmem:[%s103 + $0x94] sm:$0xff]
    %v6306 = vld [vmem:[%s103 + $0x9c] sm:$0xf]
    %v6307 = vld [vmem:[%s103 + $0xa0] sm:$0xff]
    %v6308 = vld [vmem:[%s103 + $0xa8] sm:$0xff]
    %v6309 = vld [vmem:[%s103 + $0xb0] sm:$0xf]
    %v6310 = vld [vmem:[%s103 + $0xb4] sm:$0xff]
    %v6311 = vld [vmem:[%s103 + $0xbc] sm:$0xff]
    %v6312 = vld [vmem:[%s103 + $0xc4] sm:$0xf]
    %v6313 = vld [vmem:[%s103 + $0xc8] sm:$0xff]
    %v6314 = vld [vmem:[%s103 + $0xd0] sm:$0xff]
    %v6315 = vld [vmem:[%s103 + $0xd8] sm:$0xf]
    %v6316 = vld [vmem:[%s103 + $0xdc] sm:$0xff]
    %v6317 = vld [vmem:[%s103 + $0xe4] sm:$0xff]
    %v6318 = vld [vmem:[%s103 + $0xec] sm:$0xf]
    %v6319 = vld [vmem:[%s103 + $0xf0] sm:$0xff]
    %v6320 = vld [vmem:[%s103 + $0xf8] sm:$0xff]
    %v6321 = vld [vmem:[%s103 + $0x100] sm:$0xf]
    %v6322 = vld [vmem:[%s103 + $0x104] sm:$0xff]
    %v6323 = vld [vmem:[%s103 + $0x10c] sm:$0xff]
    %v6324 = vld [vmem:[%s103 + $0x114] sm:$0xf]
    %v6325 = vld [vmem:[%s103 + $0x118] sm:$0xff]
    %v6326 = vld [vmem:[%s103 + $0x120] sm:$0xff]
    %v6327 = vld [vmem:[%s103 + $0x128] sm:$0xf]
    %v6328 = vld [vmem:[%s103 + $0x12c] sm:$0xff]
    %v6329 = vld [vmem:[%s103 + $0x134] sm:$0xff]
    %v6330 = vld [vmem:[%s103 + $0x13c] sm:$0xf]
    %v6331 = vld [vmem:[%s103 + $0x140] sm:$0xff]
    %v6332 = vld [vmem:[%s103 + $0x148] sm:$0xff]
    %v6333 = vld [vmem:[%s103 + $0x150] sm:$0xf]
    %v6334 = vld [vmem:[%s103 + $0x154] sm:$0xff]
    %v6335 = vld [vmem:[%s103 + $0x15c] sm:$0xff]
    %v6336 = vld [vmem:[%s103 + $0x164] sm:$0xf]
    %s6337 = scalar_lea.vmem %s1, 204
    %v6338 = vld [vmem:[%s6337] ss:$8 sm:$0xf]
    %v6339 = vld [vmem:[%s6337] ss:$8 sm:$0x10]
    %v6340 = vor.u32 %v6338, %v6339
    %v6342 = vlaneseq
    %v6343 = vshrl.u32 %v6342, 7
    %v6344 = vsub.s32 0, %v6343
    %v6345 = vrot.slane %v6340, %v6344
    %v6346 = vlaneseq
    %v6347 = vshrl.u32 %v6346, 7
    %v6348 = vsub.s32 1, %v6347
    %v6349 = vrot.slane %v6340, %v6348
    %v6350 = vlaneseq
    %v6351 = vshrl.u32 %v6350, 7
    %v6352 = vsub.s32 2, %v6351
    %v6353 = vrot.slane %v6340, %v6352
    %v6354 = vlaneseq
    %v6355 = vshrl.u32 %v6354, 7
    %v6356 = vsub.s32 3, %v6355
    %v6357 = vrot.slane %v6340, %v6356
    %v6358 = vlaneseq
    %v6359 = vshrl.u32 %v6358, 7
    %v6360 = vsub.s32 4, %v6359
    %v6361 = vrot.slane %v6340, %v6360
    %v6421 = vunpack.c.l.b16 %v6283
    %v6422 = vunpack.c.h.b16 %v6283
    %v6423 = vunpack.c.l.b16 %v6284
    %v6424 = vunpack.c.h.b16 %v6284
    %v6425 = vunpack.c.l.b16 %v6285
    %v6426 = vunpack.c.l.b16 %v6286
    %v6427 = vunpack.c.h.b16 %v6286
    %v6428 = vunpack.c.l.b16 %v6287
    %v6429 = vunpack.c.h.b16 %v6287
    %v6430 = vunpack.c.l.b16 %v6288
    %v6431 = vunpack.c.l.b16 %v6289
    %v6432 = vunpack.c.h.b16 %v6289
    %v6433 = vunpack.c.l.b16 %v6290
    %v6434 = vunpack.c.h.b16 %v6290
    %v6435 = vunpack.c.l.b16 %v6291
    %v6436 = vunpack.c.l.b16 %v6292
    %v6437 = vunpack.c.h.b16 %v6292
    %v6438 = vunpack.c.l.b16 %v6293
    %v6439 = vunpack.c.h.b16 %v6293
    %v6440 = vunpack.c.l.b16 %v6294
    %v6441 = vunpack.c.l.b16 %v6295
    %v6442 = vunpack.c.h.b16 %v6295
    %v6443 = vunpack.c.l.b16 %v6296
    %v6444 = vunpack.c.h.b16 %v6296
    %v6445 = vunpack.c.l.b16 %v6297
    %v6446 = vunpack.c.l.b16 %v6298
    %v6447 = vunpack.c.h.b16 %v6298
    %v6448 = vunpack.c.l.b16 %v6299
    %v6449 = vunpack.c.h.b16 %v6299
    %v6450 = vunpack.c.l.b16 %v6300
    %v6451 = vunpack.c.l.b16 %v6301
    %v6452 = vunpack.c.h.b16 %v6301
    %v6453 = vunpack.c.l.b16 %v6302
    %v6454 = vunpack.c.h.b16 %v6302
    %v6455 = vunpack.c.l.b16 %v6303
    %v6456 = vunpack.c.l.b16 %v6304
    %v6457 = vunpack.c.h.b16 %v6304
    %v6458 = vunpack.c.l.b16 %v6305
    %v6459 = vunpack.c.h.b16 %v6305
    %v6460 = vunpack.c.l.b16 %v6306
    %v6461 = vunpack.c.l.b16 %v6307
    %v6462 = vunpack.c.h.b16 %v6307
    %v6463 = vunpack.c.l.b16 %v6308
    %v6464 = vunpack.c.h.b16 %v6308
    %v6465 = vunpack.c.l.b16 %v6309
    %v6466 = vunpack.c.l.b16 %v6310
    %v6467 = vunpack.c.h.b16 %v6310
    %v6468 = vunpack.c.l.b16 %v6311
    %v6469 = vunpack.c.h.b16 %v6311
    %v6470 = vunpack.c.l.b16 %v6312
    %v6471 = vunpack.c.l.b16 %v6313
    %v6472 = vunpack.c.h.b16 %v6313
    %v6473 = vunpack.c.l.b16 %v6314
    %v6474 = vunpack.c.h.b16 %v6314
    %v6475 = vunpack.c.l.b16 %v6315
    %v6476 = vunpack.c.l.b16 %v6316
    %v6477 = vunpack.c.h.b16 %v6316
    %v6478 = vunpack.c.l.b16 %v6317
    %v6479 = vunpack.c.h.b16 %v6317
    %v6480 = vunpack.c.l.b16 %v6318
    %v6481 = vunpack.c.l.b16 %v6319
    %v6482 = vunpack.c.h.b16 %v6319
    %v6483 = vunpack.c.l.b16 %v6320
    %v6484 = vunpack.c.h.b16 %v6320
    %v6485 = vunpack.c.l.b16 %v6321
    %v6486 = vunpack.c.l.b16 %v6322
    %v6487 = vunpack.c.h.b16 %v6322
    %v6488 = vunpack.c.l.b16 %v6323
    %v6489 = vunpack.c.h.b16 %v6323
    %v6490 = vunpack.c.l.b16 %v6324
    %v6491 = vunpack.c.l.b16 %v6325
    %v6492 = vunpack.c.h.b16 %v6325
    %v6493 = vunpack.c.l.b16 %v6326
    %v6494 = vunpack.c.h.b16 %v6326
    %v6495 = vunpack.c.l.b16 %v6327
    %v6496 = vunpack.c.l.b16 %v6328
    %v6497 = vunpack.c.h.b16 %v6328
    %v6498 = vunpack.c.l.b16 %v6329
    %v6499 = vunpack.c.h.b16 %v6329
    %v6500 = vunpack.c.l.b16 %v6330
    %v6501 = vunpack.c.l.b16 %v6331
    %v6502 = vunpack.c.h.b16 %v6331
    %v6503 = vunpack.c.l.b16 %v6332
    %v6504 = vunpack.c.h.b16 %v6332
    %v6505 = vunpack.c.l.b16 %v6333
    %v6506 = vunpack.c.l.b16 %v6334
    %v6507 = vunpack.c.h.b16 %v6334
    %v6508 = vunpack.c.l.b16 %v6335
    %v6509 = vunpack.c.h.b16 %v6335
    %v6510 = vunpack.c.l.b16 %v6336
    %v6511 = vpack.c.b16 %v6426, %v6421
    %v6512 = vpack.c.b16 %v6427, %v6422
    %v6513 = vpack.c.b16 %v6428, %v6423
    %v6514 = vpack.c.b16 %v6429, %v6424
    %v6515 = vpack.c.b16 %v6430, %v6425
    %v6516 = vpack.c.b16 %v6436, %v6431
    %v6517 = vpack.c.b16 %v6437, %v6432
    %v6518 = vpack.c.b16 %v6438, %v6433
    %v6519 = vpack.c.b16 %v6439, %v6434
    %v6520 = vpack.c.b16 %v6440, %v6435
    %v6521 = vpack.c.b16 %v6446, %v6441
    %v6522 = vpack.c.b16 %v6447, %v6442
    %v6523 = vpack.c.b16 %v6448, %v6443
    %v6524 = vpack.c.b16 %v6449, %v6444
    %v6525 = vpack.c.b16 %v6450, %v6445
    %v6526 = vpack.c.b16 %v6456, %v6451
    %v6527 = vpack.c.b16 %v6457, %v6452
    %v6528 = vpack.c.b16 %v6458, %v6453
    %v6529 = vpack.c.b16 %v6459, %v6454
    %v6530 = vpack.c.b16 %v6460, %v6455
    %v6531 = vpack.c.b16 %v6466, %v6461
    %v6532 = vpack.c.b16 %v6467, %v6462
    %v6533 = vpack.c.b16 %v6468, %v6463
    %v6534 = vpack.c.b16 %v6469, %v6464
    %v6535 = vpack.c.b16 %v6470, %v6465
    %v6536 = vpack.c.b16 %v6476, %v6471
    %v6537 = vpack.c.b16 %v6477, %v6472
    %v6538 = vpack.c.b16 %v6478, %v6473
    %v6539 = vpack.c.b16 %v6479, %v6474
    %v6540 = vpack.c.b16 %v6480, %v6475
    %v6541 = vpack.c.b16 %v6486, %v6481
    %v6542 = vpack.c.b16 %v6487, %v6482
    %v6543 = vpack.c.b16 %v6488, %v6483
    %v6544 = vpack.c.b16 %v6489, %v6484
    %v6545 = vpack.c.b16 %v6490, %v6485
    %v6546 = vpack.c.b16 %v6496, %v6491
    %v6547 = vpack.c.b16 %v6497, %v6492
    %v6548 = vpack.c.b16 %v6498, %v6493
    %v6549 = vpack.c.b16 %v6499, %v6494
    %v6550 = vpack.c.b16 %v6500, %v6495
    %v6551 = vpack.c.b16 %v6506, %v6501
    %v6552 = vpack.c.b16 %v6507, %v6502
    %v6553 = vpack.c.b16 %v6508, %v6503
    %v6554 = vpack.c.b16 %v6509, %v6504
    %v6555 = vpack.c.b16 %v6510, %v6505
    %v6602 = vsel %vm1005, %v6282, 0
    %6604 = vmatprep.subr.bf16.mxu0 %v6512
    %6605 = vmatpush1.bf16.msra.mxu0 %v6511
    %6606 = vmatprep.subr.bf16.mxu0 %v6517
    %6607 = vmatpush1.bf16.msra.mxu0 %v6516
    %6608 = vmatprep.subr.bf16.mxu0 %v6522
    %6609 = vmatpush1.bf16.msra.mxu0 %v6521
    %6610 = vmatprep.subr.bf16.mxu0 %v6527
    %6611 = vmatpush1.bf16.msra.mxu0 %v6526
    %6612 = vmatprep.subr.bf16.mxu0 %v6532
    %6613 = vmatpush1.bf16.msra.mxu0 %v6531
    %6614 = vmatprep.subr.bf16.mxu0 %v6537
    %6615 = vmatpush1.bf16.msra.mxu0 %v6536
    %6616 = vmatprep.subr.bf16.mxu0 %v6542
    %6617 = vmatpush1.bf16.msra.mxu0 %v6541
    %6618 = vmatprep.subr.bf16.mxu0 %v6547
    %6619 = vmatpush1.bf16.msra.mxu0 %v6546
    %6620 = vmatprep.subr.bf16.mxu0 %v6552
    %6621 = vmatpush1.bf16.msra.mxu0 %v6551
    %6622 = vmatprep.subr.bf16.mxu0 0
    %6623 = vmatpush1.bf16.msra.mxu0 0
    %6624 = vmatprep.subr.bf16.mxu0 0
    %6625 = vmatpush1.bf16.msra.mxu0 0
    %6626 = vmatprep.subr.bf16.mxu0 0
    %6627 = vmatpush1.bf16.msra.mxu0 0
    %6628 = vmatprep.subr.bf16.mxu0 0
    %6629 = vmatpush1.bf16.msra.mxu0 0
    %6630 = vmatprep.subr.bf16.mxu0 0
    %6631 = vmatpush1.bf16.msra.mxu0 0
    %6632 = vmatprep.subr.bf16.mxu0 0
    %6633 = vmatpush1.bf16.msra.mxu0 0
    %6634 = vmatprep.subr.bf16.mxu0 0
    %6635 = vmatpush1.bf16.msra.mxu0 0
    %6636 = vmatprep.mubr.bf16.mxu0 %v6602
    %6637 = vmatmul.mubr.bf16.gmra.mrb[0].mxu0 %v6281
    %v6638 = vpop.f32.mrb[0].mxu0
    %v6639 = vadd.f32 %v6345, %v6638
    %v6640 = vpop.f32.mrb[0].mxu0
    %v6641 = vadd.f32 %v6349, %v6640
    %v6642 = vpop.f32.mrb[0].mxu0
    %v6643 = vpop.f32.mrb[0].mxu0
    %6644 = vdwg.mxu0
    %6645 = vmatprep.subr.bf16.mxu0 %v6514
    %6646 = vmatpush1.bf16.msra.mxu0 %v6513
    %6647 = vmatprep.subr.bf16.mxu0 %v6519
    %6648 = vmatpush1.bf16.msra.mxu0 %v6518
    %6649 = vmatprep.subr.bf16.mxu0 %v6524
    %6650 = vmatpush1.bf16.msra.mxu0 %v6523
    %6651 = vmatprep.subr.bf16.mxu0 %v6529
    %6652 = vmatpush1.bf16.msra.mxu0 %v6528
    %6653 = vmatprep.subr.bf16.mxu0 %v6534
    %6654 = vmatpush1.bf16.msra.mxu0 %v6533
    %6655 = vmatprep.subr.bf16.mxu0 %v6539
    %6656 = vmatpush1.bf16.msra.mxu0 %v6538
    %6657 = vmatprep.subr.bf16.mxu0 %v6544
    %6658 = vmatpush1.bf16.msra.mxu0 %v6543
    %6659 = vmatprep.subr.bf16.mxu0 %v6549
    %6660 = vmatpush1.bf16.msra.mxu0 %v6548
    %6661 = vmatprep.subr.bf16.mxu0 %v6554
    %6662 = vmatpush1.bf16.msra.mxu0 %v6553
    %6663 = vmatprep.subr.bf16.mxu0 0
    %6664 = vmatpush1.bf16.msra.mxu0 0
    %6665 = vmatprep.subr.bf16.mxu0 0
    %6666 = vmatpush1.bf16.msra.mxu0 0
    %6667 = vmatprep.subr.bf16.mxu0 0
    %6668 = vmatpush1.bf16.msra.mxu0 0
    %6669 = vmatprep.subr.bf16.mxu0 0
    %6670 = vmatpush1.bf16.msra.mxu0 0
    %6671 = vmatprep.subr.bf16.mxu0 0
    %6672 = vmatpush1.bf16.msra.mxu0 0
    %6673 = vmatprep.subr.bf16.mxu0 0
    %6674 = vmatpush1.bf16.msra.mxu0 0
    %6675 = vmatprep.subr.bf16.mxu0 0
    %6676 = vmatpush1.bf16.msra.mxu0 0
    %6677 = vmatprep.mubr.bf16.mxu0 %v6602
    %6678 = vmatmul.mubr.bf16.gmra.mrb[0].mxu0 %v6281
    %v6679 = vpop.f32.mrb[0].mxu0
    %v6680 = vadd.f32 %v6353, %v6679
    %v6681 = vpop.f32.mrb[0].mxu0
    %v6682 = vadd.f32 %v6357, %v6681
    %v6683 = vpop.f32.mrb[0].mxu0
    %v6684 = vpop.f32.mrb[0].mxu0
    %6685 = vdwg.mxu0
    %6686 = vmatprep.subr.bf16.mxu0 0
    %6687 = vmatpush1.bf16.msra.mxu0 %v6515
    %6688 = vmatprep.subr.bf16.mxu0 0
    %6689 = vmatpush1.bf16.msra.mxu0 %v6520
    %6690 = vmatprep.subr.bf16.mxu0 0
    %6691 = vmatpush1.bf16.msra.mxu0 %v6525
    %6692 = vmatprep.subr.bf16.mxu0 0
    %6693 = vmatpush1.bf16.msra.mxu0 %v6530
    %6694 = vmatprep.subr.bf16.mxu0 0
    %6695 = vmatpush1.bf16.msra.mxu0 %v6535
    %6696 = vmatprep.subr.bf16.mxu0 0
    %6697 = vmatpush1.bf16.msra.mxu0 %v6540
    %6698 = vmatprep.subr.bf16.mxu0 0
    %6699 = vmatpush1.bf16.msra.mxu0 %v6545
    %6700 = vmatprep.subr.bf16.mxu0 0
    %6701 = vmatpush1.bf16.msra.mxu0 %v6550
    %6702 = vmatprep.subr.bf16.mxu0 0
    %6703 = vmatpush1.bf16.msra.mxu0 %v6555
    %6704 = vmatprep.subr.bf16.mxu0 0
    %6705 = vmatpush1.bf16.msra.mxu0 0
    %6706 = vmatprep.subr.bf16.mxu0 0
    %6707 = vmatpush1.bf16.msra.mxu0 0
    %6708 = vmatprep.subr.bf16.mxu0 0
    %6709 = vmatpush1.bf16.msra.mxu0 0
    %6710 = vmatprep.subr.bf16.mxu0 0
    %6711 = vmatpush1.bf16.msra.mxu0 0
    %6712 = vmatprep.subr.bf16.mxu0 0
    %6713 = vmatpush1.bf16.msra.mxu0 0
    %6714 = vmatprep.subr.bf16.mxu0 0
    %6715 = vmatpush1.bf16.msra.mxu0 0
    %6716 = vmatprep.subr.bf16.mxu0 0
    %6717 = vmatpush1.bf16.msra.mxu0 0
    %6718 = vmatprep.mubr.bf16.mxu0 %v6602
    %6719 = vmatmul.mubr.bf16.gmra.mrb[0].mxu0 %v6281
    %v6720 = vpop.f32.mrb[0].mxu0
    %v6721 = vadd.f32 %v6361, %v6720
    %v6722 = vpop.f32.mrb[0].mxu0
    %v6723 = vpop.f32.mrb[0].mxu0
    %v6724 = vpop.f32.mrb[0].mxu0
    %6725 = vdwg.mxu0
    %v6726 = vadd.f32 %v6639, 3.0
    %v6727 = vadd.f32 %v6641, 3.0
    %v6728 = vadd.f32 %v6680, 3.0
    %v6729 = vadd.f32 %v6682, 3.0
    %v6730 = vadd.f32 %v6721, 3.0
    %v6731 = vmax.f32 %v6726, 0.0
    %v6732 = vmax.f32 %v6727, 0.0
    %v6733 = vmax.f32 %v6728, 0.0
    %v6734 = vmax.f32 %v6729, 0.0
    %v6735 = vmax.f32 %v6730, 0.0
    %v6736 = vmin.f32 %v6731, 6.0
    %v6737 = vmin.f32 %v6732, 6.0
    %v6738 = vmin.f32 %v6733, 6.0
    %v6739 = vmin.f32 %v6734, 6.0
    %v6740 = vmin.f32 %v6735, 6.0
    %v6741 = vmul.f32 %v6736, 0.16666667
    %v6742 = vmul.f32 %v6737, 0.16666667
    %v6743 = vmul.f32 %v6738, 0.16666667
    %v6744 = vmul.f32 %v6739, 0.16666667
    %v6745 = vmul.f32 %v6740, 0.16666667
    %v6746 = vmul.f32 %v5698, %v6741
    %v6747 = vmul.f32 %v5699, %v6742
    %v6748 = vmul.f32 %v5700, %v6743
    %v6749 = vmul.f32 %v5701, %v6744
    %v6750 = vmul.f32 %v5702, %v6745
    %v6751 = vpack.c.bf16 %v6746, %v6746
    %v6752 = vpack.c.bf16 %v6747, %v6747
    %v6753 = vpack.c.bf16 %v6748, %v6748
    %v6754 = vpack.c.bf16 %v6749, %v6749
    %v6755 = vpack.c.bf16 %v6750, %v6750
    %v6756 = vld [vmem:[%s105] sm:$0xf]
    %v6757 = vld [vmem:[%s105 + $0x4] sm:$0xf]
    %v6758 = vld [vmem:[%s105 + $0x8] sm:$0xf]
    %v6759 = vld [vmem:[%s105 + $0xc] sm:$0xf]
    %v6760 = vld [vmem:[%s105 + $0x10] sm:$0xf]
    %v6761 = vld [vmem:[%s105 + $0x14] sm:$0xf]
    %v6762 = vld [vmem:[%s105 + $0x18] sm:$0xf]
    %v6763 = vld [vmem:[%s105 + $0x1c] sm:$0xf]
    %v6764 = vld [vmem:[%s105 + $0x20] sm:$0xf]
    %v6765 = vld [vmem:[%s105 + $0x24] sm:$0xf]
    %v6766 = vld [vmem:[%s105 + $0x28] sm:$0xf]
    %v6767 = vld [vmem:[%s105 + $0x2c] sm:$0xf]
    %v6768 = vld [vmem:[%s105 + $0x30] sm:$0xf]
    %v6769 = vld [vmem:[%s105 + $0x34] sm:$0xf]
    %v6770 = vld [vmem:[%s105 + $0x38] sm:$0xf]
    %v6771 = vld [vmem:[%s105 + $0x3c] sm:$0xf]
    %v6772 = vld [vmem:[%s105 + $0x40] sm:$0xf]
    %v6773 = vld [vmem:[%s105 + $0x44] sm:$0xf]
    %v6774 = vld [vmem:[%s105 + $0x48] sm:$0xf]
    %v6775 = vld [vmem:[%s105 + $0x4c] sm:$0xf]
    %v6776 = vld [vmem:[%s105 + $0x50] sm:$0xf]
    %v6777 = vld [vmem:[%s105 + $0x54] sm:$0xf]
    %v6778 = vld [vmem:[%s105 + $0x58] sm:$0xf]
    %v6779 = vld [vmem:[%s105 + $0x5c] sm:$0xf]
    %v6780 = vld [vmem:[%s105 + $0x60] sm:$0xf]
    %v6781 = vld [vmem:[%s105 + $0x64] sm:$0xf]
    %v6782 = vld [vmem:[%s105 + $0x68] sm:$0xf]
    %v6783 = vld [vmem:[%s105 + $0x6c] sm:$0xf]
    %v6784 = vld [vmem:[%s105 + $0x70] sm:$0xf]
    %v6785 = vld [vmem:[%s105 + $0x74] sm:$0xf]
    %v6786 = vld [vmem:[%s105 + $0x78] sm:$0xf]
    %v6787 = vld [vmem:[%s105 + $0x7c] sm:$0xf]
    %v6788 = vld [vmem:[%s105 + $0x80] sm:$0xf]
    %v6789 = vld [vmem:[%s105 + $0x84] sm:$0xf]
    %v6790 = vld [vmem:[%s105 + $0x88] sm:$0xf]
    %v6791 = vld [vmem:[%s105 + $0x8c] sm:$0xf]
    %v6792 = vld [vmem:[%s105 + $0x90] sm:$0xf]
    %v6793 = vld [vmem:[%s105 + $0x94] sm:$0xf]
    %v6794 = vld [vmem:[%s105 + $0x98] sm:$0xf]
    %v6795 = vld [vmem:[%s105 + $0x9c] sm:$0xf]
    %v6796 = vld [vmem:[%s105 + $0xa0] sm:$0xf]
    %v6797 = vld [vmem:[%s105 + $0xa4] sm:$0xf]
    %v6798 = vld [vmem:[%s105 + $0xa8] sm:$0xf]
    %v6799 = vld [vmem:[%s105 + $0xac] sm:$0xf]
    %v6800 = vld [vmem:[%s105 + $0xb0] sm:$0xf]
    %v6801 = vld [vmem:[%s105 + $0xb4] sm:$0xf]
    %v6802 = vld [vmem:[%s105 + $0xb8] sm:$0xf]
    %v6803 = vld [vmem:[%s105 + $0xbc] sm:$0xf]
    %v6804 = vld [vmem:[%s105 + $0xc0] sm:$0xf]
    %v6805 = vld [vmem:[%s105 + $0xc4] sm:$0xf]
    %v6806 = vld [vmem:[%s105 + $0xc8] sm:$0xf]
    %v6807 = vld [vmem:[%s105 + $0xcc] sm:$0xf]
    %v6808 = vld [vmem:[%s105 + $0xd0] sm:$0xf]
    %v6809 = vld [vmem:[%s105 + $0xd4] sm:$0xf]
    %v6810 = vld [vmem:[%s105 + $0xd8] sm:$0xf]
    %v6811 = vld [vmem:[%s105 + $0xdc] sm:$0xf]
    %v6812 = vld [vmem:[%s105 + $0xe0] sm:$0xf]
    %v6813 = vld [vmem:[%s105 + $0xe4] sm:$0xf]
    %v6814 = vld [vmem:[%s105 + $0xe8] sm:$0xf]
    %v6815 = vld [vmem:[%s105 + $0xec] sm:$0xf]
    %v6816 = vld [vmem:[%s105 + $0xf0] sm:$0xf]
    %v6817 = vld [vmem:[%s105 + $0xf4] sm:$0xf]
    %v6818 = vld [vmem:[%s105 + $0xf8] sm:$0xf]
    %v6819 = vld [vmem:[%s105 + $0xfc] sm:$0xf]
    %v6820 = vld [vmem:[%s105 + $0x100] sm:$0xf]
    %v6821 = vld [vmem:[%s105 + $0x104] sm:$0xf]
    %v6822 = vld [vmem:[%s105 + $0x108] sm:$0xf]
    %v6823 = vld [vmem:[%s105 + $0x10c] sm:$0xf]
    %v6824 = vld [vmem:[%s105 + $0x110] sm:$0xf]
    %v6825 = vld [vmem:[%s105 + $0x114] sm:$0xf]
    %v6826 = vld [vmem:[%s105 + $0x118] sm:$0xf]
    %v6827 = vld [vmem:[%s105 + $0x11c] sm:$0xf]
    %v6828 = vld [vmem:[%s1 + $0xcd] ss:$0 sm:$0xff]
    %v6901 = vunpack.c.l.b16 %v6756
    %v6902 = vunpack.c.l.b16 %v6757
    %v6903 = vunpack.c.l.b16 %v6758
    %v6904 = vunpack.c.l.b16 %v6759
    %v6905 = vunpack.c.l.b16 %v6760
    %v6906 = vunpack.c.l.b16 %v6761
    %v6907 = vunpack.c.l.b16 %v6762
    %v6908 = vunpack.c.l.b16 %v6763
    %v6909 = vunpack.c.l.b16 %v6764
    %v6910 = vunpack.c.l.b16 %v6765
    %v6911 = vunpack.c.l.b16 %v6766
    %v6912 = vunpack.c.l.b16 %v6767
    %v6913 = vunpack.c.l.b16 %v6768
    %v6914 = vunpack.c.l.b16 %v6769
    %v6915 = vunpack.c.l.b16 %v6770
    %v6916 = vunpack.c.l.b16 %v6771
    %v6917 = vunpack.c.l.b16 %v6772
    %v6918 = vunpack.c.l.b16 %v6773
    %v6919 = vunpack.c.l.b16 %v6774
    %v6920 = vunpack.c.l.b16 %v6775
    %v6921 = vunpack.c.l.b16 %v6776
    %v6922 = vunpack.c.l.b16 %v6777
    %v6923 = vunpack.c.l.b16 %v6778
    %v6924 = vunpack.c.l.b16 %v6779
    %v6925 = vunpack.c.l.b16 %v6780
    %v6926 = vunpack.c.l.b16 %v6781
    %v6927 = vunpack.c.l.b16 %v6782
    %v6928 = vunpack.c.l.b16 %v6783
    %v6929 = vunpack.c.l.b16 %v6784
    %v6930 = vunpack.c.l.b16 %v6785
    %v6931 = vunpack.c.l.b16 %v6786
    %v6932 = vunpack.c.l.b16 %v6787
    %v6933 = vunpack.c.l.b16 %v6788
    %v6934 = vunpack.c.l.b16 %v6789
    %v6935 = vunpack.c.l.b16 %v6790
    %v6936 = vunpack.c.l.b16 %v6791
    %v6937 = vunpack.c.l.b16 %v6792
    %v6938 = vunpack.c.l.b16 %v6793
    %v6939 = vunpack.c.l.b16 %v6794
    %v6940 = vunpack.c.l.b16 %v6795
    %v6941 = vunpack.c.l.b16 %v6796
    %v6942 = vunpack.c.l.b16 %v6797
    %v6943 = vunpack.c.l.b16 %v6798
    %v6944 = vunpack.c.l.b16 %v6799
    %v6945 = vunpack.c.l.b16 %v6800
    %v6946 = vunpack.c.l.b16 %v6801
    %v6947 = vunpack.c.l.b16 %v6802
    %v6948 = vunpack.c.l.b16 %v6803
    %v6949 = vunpack.c.l.b16 %v6804
    %v6950 = vunpack.c.l.b16 %v6805
    %v6951 = vunpack.c.l.b16 %v6806
    %v6952 = vunpack.c.l.b16 %v6807
    %v6953 = vunpack.c.l.b16 %v6808
    %v6954 = vunpack.c.l.b16 %v6809
    %v6955 = vunpack.c.l.b16 %v6810
    %v6956 = vunpack.c.l.b16 %v6811
    %v6957 = vunpack.c.l.b16 %v6812
    %v6958 = vunpack.c.l.b16 %v6813
    %v6959 = vunpack.c.l.b16 %v6814
    %v6960 = vunpack.c.l.b16 %v6815
    %v6961 = vunpack.c.l.b16 %v6816
    %v6962 = vunpack.c.l.b16 %v6817
    %v6963 = vunpack.c.l.b16 %v6818
    %v6964 = vunpack.c.l.b16 %v6819
    %v6965 = vunpack.c.l.b16 %v6820
    %v6966 = vunpack.c.l.b16 %v6821
    %v6967 = vunpack.c.l.b16 %v6822
    %v6968 = vunpack.c.l.b16 %v6823
    %v6969 = vunpack.c.l.b16 %v6824
    %v6970 = vunpack.c.l.b16 %v6825
    %v6971 = vunpack.c.l.b16 %v6826
    %v6972 = vunpack.c.l.b16 %v6827
    %v6973 = vpack.c.b16 %v6902, %v6901
    %v6974 = vpack.c.b16 %v6904, %v6903
    %v6975 = vpack.c.b16 %v6906, %v6905
    %v6976 = vpack.c.b16 %v6908, %v6907
    %v6977 = vpack.c.b16 %v6910, %v6909
    %v6978 = vpack.c.b16 %v6912, %v6911
    %v6979 = vpack.c.b16 %v6914, %v6913
    %v6980 = vpack.c.b16 %v6916, %v6915
    %v6981 = vpack.c.b16 %v6918, %v6917
    %v6982 = vpack.c.b16 %v6920, %v6919
    %v6983 = vpack.c.b16 %v6922, %v6921
    %v6984 = vpack.c.b16 %v6924, %v6923
    %v6985 = vpack.c.b16 %v6926, %v6925
    %v6986 = vpack.c.b16 %v6928, %v6927
    %v6987 = vpack.c.b16 %v6930, %v6929
    %v6988 = vpack.c.b16 %v6932, %v6931
    %v6989 = vpack.c.b16 %v6934, %v6933
    %v6990 = vpack.c.b16 %v6936, %v6935
    %v6991 = vpack.c.b16 %v6938, %v6937
    %v6992 = vpack.c.b16 %v6940, %v6939
    %v6993 = vpack.c.b16 %v6942, %v6941
    %v6994 = vpack.c.b16 %v6944, %v6943
    %v6995 = vpack.c.b16 %v6946, %v6945
    %v6996 = vpack.c.b16 %v6948, %v6947
    %v6997 = vpack.c.b16 %v6950, %v6949
    %v6998 = vpack.c.b16 %v6952, %v6951
    %v6999 = vpack.c.b16 %v6954, %v6953
    %v7000 = vpack.c.b16 %v6956, %v6955
    %v7001 = vpack.c.b16 %v6958, %v6957
    %v7002 = vpack.c.b16 %v6960, %v6959
    %v7003 = vpack.c.b16 %v6962, %v6961
    %v7004 = vpack.c.b16 %v6964, %v6963
    %v7005 = vpack.c.b16 %v6966, %v6965
    %v7006 = vpack.c.b16 %v6968, %v6967
    %v7007 = vpack.c.b16 %v6970, %v6969
    %v7008 = vpack.c.b16 %v6972, %v6971
    %v7046 = vsel %vm2659, %v6755, 0
    %7048 = vmatprep.subr.bf16.mxu0 0
    %7049 = vmatpush1.bf16.msra.mxu0 %v6973
    %7050 = vmatprep.subr.bf16.mxu0 0
    %7051 = vmatpush1.bf16.msra.mxu0 %v6974
    %7052 = vmatprep.subr.bf16.mxu0 0
    %7053 = vmatpush1.bf16.msra.mxu0 %v6975
    %7054 = vmatprep.subr.bf16.mxu0 0
    %7055 = vmatpush1.bf16.msra.mxu0 %v6976
    %7056 = vmatprep.subr.bf16.mxu0 0
    %7057 = vmatpush1.bf16.msra.mxu0 %v6977
    %7058 = vmatprep.subr.bf16.mxu0 0
    %7059 = vmatpush1.bf16.msra.mxu0 %v6978
    %7060 = vmatprep.subr.bf16.mxu0 0
    %7061 = vmatpush1.bf16.msra.mxu0 %v6979
    %7062 = vmatprep.subr.bf16.mxu0 0
    %7063 = vmatpush1.bf16.msra.mxu0 %v6980
    %7064 = vmatprep.subr.bf16.mxu0 0
    %7065 = vmatpush1.bf16.msra.mxu0 %v6981
    %7066 = vmatprep.subr.bf16.mxu0 0
    %7067 = vmatpush1.bf16.msra.mxu0 %v6982
    %7068 = vmatprep.subr.bf16.mxu0 0
    %7069 = vmatpush1.bf16.msra.mxu0 %v6983
    %7070 = vmatprep.subr.bf16.mxu0 0
    %7071 = vmatpush1.bf16.msra.mxu0 %v6984
    %7072 = vmatprep.subr.bf16.mxu0 0
    %7073 = vmatpush1.bf16.msra.mxu0 %v6985
    %7074 = vmatprep.subr.bf16.mxu0 0
    %7075 = vmatpush1.bf16.msra.mxu0 %v6986
    %7076 = vmatprep.subr.bf16.mxu0 0
    %7077 = vmatpush1.bf16.msra.mxu0 %v6987
    %7078 = vmatprep.subr.bf16.mxu0 0
    %7079 = vmatpush1.bf16.msra.mxu0 %v6988
    %7080 = vmatprep.mubr.bf16.mxu0 %v6752
    %7081 = vmatmul.mubr.bf16.gmra.mrb[0].mxu0 %v6751
    %v7082 = vpop.f32.mrb[0].mxu0
    %v7083 = vadd.f32 %v6828, %v7082
    %v7084 = vpop.f32.mrb[0].mxu0
    %v7085 = vpop.f32.mrb[0].mxu0
    %v7086 = vpop.f32.mrb[0].mxu0
    %7087 = vdwg.mxu0
    %7088 = vmatprep.subr.bf16.mxu0 0
    %7089 = vmatpush1.bf16.msra.mxu0 %v6989
    %7090 = vmatprep.subr.bf16.mxu0 0
    %7091 = vmatpush1.bf16.msra.mxu0 %v6990
    %7092 = vmatprep.subr.bf16.mxu0 0
    %7093 = vmatpush1.bf16.msra.mxu0 %v6991
    %7094 = vmatprep.subr.bf16.mxu0 0
    %7095 = vmatpush1.bf16.msra.mxu0 %v6992
    %7096 = vmatprep.subr.bf16.mxu0 0
    %7097 = vmatpush1.bf16.msra.mxu0 %v6993
    %7098 = vmatprep.subr.bf16.mxu0 0
    %7099 = vmatpush1.bf16.msra.mxu0 %v6994
    %7100 = vmatprep.subr.bf16.mxu0 0
    %7101 = vmatpush1.bf16.msra.mxu0 %v6995
    %7102 = vmatprep.subr.bf16.mxu0 0
    %7103 = vmatpush1.bf16.msra.mxu0 %v6996
    %7104 = vmatprep.subr.bf16.mxu0 0
    %7105 = vmatpush1.bf16.msra.mxu0 %v6997
    %7106 = vmatprep.subr.bf16.mxu0 0
    %7107 = vmatpush1.bf16.msra.mxu0 %v6998
    %7108 = vmatprep.subr.bf16.mxu0 0
    %7109 = vmatpush1.bf16.msra.mxu0 %v6999
    %7110 = vmatprep.subr.bf16.mxu0 0
    %7111 = vmatpush1.bf16.msra.mxu0 %v7000
    %7112 = vmatprep.subr.bf16.mxu0 0
    %7113 = vmatpush1.bf16.msra.mxu0 %v7001
    %7114 = vmatprep.subr.bf16.mxu0 0
    %7115 = vmatpush1.bf16.msra.mxu0 %v7002
    %7116 = vmatprep.subr.bf16.mxu0 0
    %7117 = vmatpush1.bf16.msra.mxu0 %v7003
    %7118 = vmatprep.subr.bf16.mxu0 0
    %7119 = vmatpush1.bf16.msra.mxu0 %v7004
    %7120 = vmatprep.mubr.bf16.mxu0 %v6754
    %7121 = vmatmul.mubr.bf16.gmra.mrb[0].mxu0 %v6753
    %v7122 = vpop.f32.mrb[0].mxu0
    %v7123 = vadd.f32 %v7083, %v7122
    %v7124 = vpop.f32.mrb[0].mxu0
    %v7125 = vpop.f32.mrb[0].mxu0
    %v7126 = vpop.f32.mrb[0].mxu0
    %7127 = vdwg.mxu0
    %7128 = vmatprep.subr.bf16.mxu0 0
    %7129 = vmatpush1.bf16.msra.mxu0 %v7005
    %7130 = vmatprep.subr.bf16.mxu0 0
    %7131 = vmatpush1.bf16.msra.mxu0 %v7006
    %7132 = vmatprep.subr.bf16.mxu0 0
    %7133 = vmatpush1.bf16.msra.mxu0 %v7007
    %7134 = vmatprep.subr.bf16.mxu0 0
    %7135 = vmatpush1.bf16.msra.mxu0 %v7008
    %7136 = vmatprep.subr.bf16.mxu0 0
    %7137 = vmatpush1.bf16.msra.mxu0 0
    %7138 = vmatprep.subr.bf16.mxu0 0
    %7139 = vmatpush1.bf16.msra.mxu0 0
    %7140 = vmatprep.subr.bf16.mxu0 0
    %7141 = vmatpush1.bf16.msra.mxu0 0
    %7142 = vmatprep.subr.bf16.mxu0 0
    %7143 = vmatpush1.bf16.msra.mxu0 0
    %7144 = vmatprep.subr.bf16.mxu0 0
    %7145 = vmatpush1.bf16.msra.mxu0 0
    %7146 = vmatprep.subr.bf16.mxu0 0
    %7147 = vmatpush1.bf16.msra.mxu0 0
    %7148 = vmatprep.subr.bf16.mxu0 0
    %7149 = vmatpush1.bf16.msra.mxu0 0
    %7150 = vmatprep.subr.bf16.mxu0 0
    %7151 = vmatpush1.bf16.msra.mxu0 0
    %7152 = vmatprep.subr.bf16.mxu0 0
    %7153 = vmatpush1.bf16.msra.mxu0 0
    %7154 = vmatprep.subr.bf16.mxu0 0
    %7155 = vmatpush1.bf16.msra.mxu0 0
    %7156 = vmatprep.subr.bf16.mxu0 0
    %7157 = vmatpush1.bf16.msra.mxu0 0
    %7158 = vmatprep.subr.bf16.mxu0 0
    %7159 = vmatpush1.bf16.msra.mxu0 0
    %7160 = vmatprep.mubr.bf16.mxu0 0
    %7161 = vmatmul.mubr.bf16.gmra.mrb[0].mxu0 %v7046
    %v7162 = vpop.f32.mrb[0].mxu0
    %v7163 = vadd.f32 %v7123, %v7162
    %v7164 = vpop.f32.mrb[0].mxu0
    %v7165 = vpop.f32.mrb[0].mxu0
    %v7166 = vpop.f32.mrb[0].mxu0
    %7167 = vdwg.mxu0
    %v7168 = vadd.f32 %v7163, %v5235
    %v7169 = vpack.c.bf16 %v7168, %v7168
    %v7170 = vld [vmem:[%s107] sm:$0xff]
    %v7171 = vld [vmem:[%s107 + $0x8] sm:$0xff]
    %v7172 = vld [vmem:[%s107 + $0x10] sm:$0xf]
    %v7173 = vld [vmem:[%s107 + $0x14] sm:$0xff]
    %v7174 = vld [vmem:[%s107 + $0x1c] sm:$0xff]
    %v7175 = vld [vmem:[%s107 + $0x24] sm:$0xf]
    %v7176 = vld [vmem:[%s107 + $0x28] sm:$0xff]
    %v7177 = vld [vmem:[%s107 + $0x30] sm:$0xff]
    %v7178 = vld [vmem:[%s107 + $0x38] sm:$0xf]
    %v7179 = vld [vmem:[%s107 + $0x3c] sm:$0xff]
    %v7180 = vld [vmem:[%s107 + $0x44] sm:$0xff]
    %v7181 = vld [vmem:[%s107 + $0x4c] sm:$0xf]
    %v7182 = vld [vmem:[%s107 + $0x50] sm:$0xff]
    %v7183 = vld [vmem:[%s107 + $0x58] sm:$0xff]
    %v7184 = vld [vmem:[%s107 + $0x60] sm:$0xf]
    %v7185 = vld [vmem:[%s107 + $0x64] sm:$0xff]
    %v7186 = vld [vmem:[%s107 + $0x6c] sm:$0xff]
    %v7187 = vld [vmem:[%s107 + $0x74] sm:$0xf]
    %v7188 = vld [vmem:[%s107 + $0x78] sm:$0xff]
    %v7189 = vld [vmem:[%s107 + $0x80] sm:$0xff]
    %v7190 = vld [vmem:[%s107 + $0x88] sm:$0xf]
    %v7191 = vld [vmem:[%s107 + $0x8c] sm:$0xff]
    %v7192 = vld [vmem:[%s107 + $0x94] sm:$0xff]
    %v7193 = vld [vmem:[%s107 + $0x9c] sm:$0xf]
    %v7194 = vld [vmem:[%s107 + $0xa0] sm:$0xff]
    %v7195 = vld [vmem:[%s107 + $0xa8] sm:$0xff]
    %v7196 = vld [vmem:[%s107 + $0xb0] sm:$0xf]
    %v7197 = vld [vmem:[%s107 + $0xb4] sm:$0xff]
    %v7198 = vld [vmem:[%s107 + $0xbc] sm:$0xff]
    %v7199 = vld [vmem:[%s107 + $0xc4] sm:$0xf]
    %v7200 = vld [vmem:[%s107 + $0xc8] sm:$0xff]
    %v7201 = vld [vmem:[%s107 + $0xd0] sm:$0xff]
    %v7202 = vld [vmem:[%s107 + $0xd8] sm:$0xf]
    %v7203 = vld [vmem:[%s107 + $0xdc] sm:$0xff]
    %v7204 = vld [vmem:[%s107 + $0xe4] sm:$0xff]
    %v7205 = vld [vmem:[%s107 + $0xec] sm:$0xf]
    %s7206 = scalar_lea.vmem %s1, 206
    %v7207 = vld [vmem:[%s7206] ss:$8 sm:$0xf]
    %v7208 = vld [vmem:[%s7206] ss:$8 sm:$0x10]
    %v7209 = vor.u32 %v7207, %v7208
    %v7211 = vlaneseq
    %v7212 = vshrl.u32 %v7211, 7
    %v7213 = vsub.s32 0, %v7212
    %v7214 = vrot.slane %v7209, %v7213
    %v7215 = vlaneseq
    %v7216 = vshrl.u32 %v7215, 7
    %v7217 = vsub.s32 1, %v7216
    %v7218 = vrot.slane %v7209, %v7217
    %v7219 = vlaneseq
    %v7220 = vshrl.u32 %v7219, 7
    %v7221 = vsub.s32 2, %v7220
    %v7222 = vrot.slane %v7209, %v7221
    %v7223 = vlaneseq
    %v7224 = vshrl.u32 %v7223, 7
    %v7225 = vsub.s32 3, %v7224
    %v7226 = vrot.slane %v7209, %v7225
    %v7227 = vlaneseq
    %v7228 = vshrl.u32 %v7227, 7
    %v7229 = vsub.s32 4, %v7228
    %v7230 = vrot.slane %v7209, %v7229
    %v7272 = vunpack.c.l.b16 %v7170
    %v7273 = vunpack.c.h.b16 %v7170
    %v7274 = vunpack.c.l.b16 %v7171
    %v7275 = vunpack.c.h.b16 %v7171
    %v7276 = vunpack.c.l.b16 %v7172
    %v7277 = vunpack.c.l.b16 %v7173
    %v7278 = vunpack.c.h.b16 %v7173
    %v7279 = vunpack.c.l.b16 %v7174
    %v7280 = vunpack.c.h.b16 %v7174
    %v7281 = vunpack.c.l.b16 %v7175
    %v7282 = vunpack.c.l.b16 %v7176
    %v7283 = vunpack.c.h.b16 %v7176
    %v7284 = vunpack.c.l.b16 %v7177
    %v7285 = vunpack.c.h.b16 %v7177
    %v7286 = vunpack.c.l.b16 %v7178
    %v7287 = vunpack.c.l.b16 %v7179
    %v7288 = vunpack.c.h.b16 %v7179
    %v7289 = vunpack.c.l.b16 %v7180
    %v7290 = vunpack.c.h.b16 %v7180
    %v7291 = vunpack.c.l.b16 %v7181
    %v7292 = vunpack.c.l.b16 %v7182
    %v7293 = vunpack.c.h.b16 %v7182
    %v7294 = vunpack.c.l.b16 %v7183
    %v7295 = vunpack.c.h.b16 %v7183
    %v7296 = vunpack.c.l.b16 %v7184
    %v7297 = vunpack.c.l.b16 %v7185
    %v7298 = vunpack.c.h.b16 %v7185
    %v7299 = vunpack.c.l.b16 %v7186
    %v7300 = vunpack.c.h.b16 %v7186
    %v7301 = vunpack.c.l.b16 %v7187
    %v7302 = vunpack.c.l.b16 %v7188
    %v7303 = vunpack.c.h.b16 %v7188
    %v7304 = vunpack.c.l.b16 %v7189
    %v7305 = vunpack.c.h.b16 %v7189
    %v7306 = vunpack.c.l.b16 %v7190
    %v7307 = vunpack.c.l.b16 %v7191
    %v7308 = vunpack.c.h.b16 %v7191
    %v7309 = vunpack.c.l.b16 %v7192
    %v7310 = vunpack.c.h.b16 %v7192
    %v7311 = vunpack.c.l.b16 %v7193
    %v7312 = vunpack.c.l.b16 %v7194
    %v7313 = vunpack.c.h.b16 %v7194
    %v7314 = vunpack.c.l.b16 %v7195
    %v7315 = vunpack.c.h.b16 %v7195
    %v7316 = vunpack.c.l.b16 %v7196
    %v7317 = vunpack.c.l.b16 %v7197
    %v7318 = vunpack.c.h.b16 %v7197
    %v7319 = vunpack.c.l.b16 %v7198
    %v7320 = vunpack.c.h.b16 %v7198
    %v7321 = vunpack.c.l.b16 %v7199
    %v7322 = vunpack.c.l.b16 %v7200
    %v7323 = vunpack.c.h.b16 %v7200
    %v7324 = vunpack.c.l.b16 %v7201
    %v7325 = vunpack.c.h.b16 %v7201
    %v7326 = vunpack.c.l.b16 %v7202
    %v7327 = vunpack.c.l.b16 %v7203
    %v7328 = vunpack.c.h.b16 %v7203
    %v7329 = vunpack.c.l.b16 %v7204
    %v7330 = vunpack.c.h.b16 %v7204
    %v7331 = vunpack.c.l.b16 %v7205
    %v7332 = vpack.c.b16 %v7277, %v7272
    %v7333 = vpack.c.b16 %v7278, %v7273
    %v7334 = vpack.c.b16 %v7279, %v7274
    %v7335 = vpack.c.b16 %v7280, %v7275
    %v7336 = vpack.c.b16 %v7281, %v7276
    %v7337 = vpack.c.b16 %v7287, %v7282
    %v7338 = vpack.c.b16 %v7288, %v7283
    %v7339 = vpack.c.b16 %v7289, %v7284
    %v7340 = vpack.c.b16 %v7290, %v7285
    %v7341 = vpack.c.b16 %v7291, %v7286
    %v7342 = vpack.c.b16 %v7297, %v7292
    %v7343 = vpack.c.b16 %v7298, %v7293
    %v7344 = vpack.c.b16 %v7299, %v7294
    %v7345 = vpack.c.b16 %v7300, %v7295
    %v7346 = vpack.c.b16 %v7301, %v7296
    %v7347 = vpack.c.b16 %v7307, %v7302
    %v7348 = vpack.c.b16 %v7308, %v7303
    %v7349 = vpack.c.b16 %v7309, %v7304
    %v7350 = vpack.c.b16 %v7310, %v7305
    %v7351 = vpack.c.b16 %v7311, %v7306
    %v7352 = vpack.c.b16 %v7317, %v7312
    %v7353 = vpack.c.b16 %v7318, %v7313
    %v7354 = vpack.c.b16 %v7319, %v7314
    %v7355 = vpack.c.b16 %v7320, %v7315
    %v7356 = vpack.c.b16 %v7321, %v7316
    %v7357 = vpack.c.b16 %v7327, %v7322
    %v7358 = vpack.c.b16 %v7328, %v7323
    %v7359 = vpack.c.b16 %v7329, %v7324
    %v7360 = vpack.c.b16 %v7330, %v7325
    %v7361 = vpack.c.b16 %v7331, %v7326
    %v7393 = vsel %vm2084, %v7169, 0
    %7395 = vmatprep.subr.bf16.mxu0 %v7333
    %7396 = vmatpush1.bf16.msra.mxu0 %v7332
    %7397 = vmatprep.subr.bf16.mxu0 %v7338
    %7398 = vmatpush1.bf16.msra.mxu0 %v7337
    %7399 = vmatprep.subr.bf16.mxu0 %v7343
    %7400 = vmatpush1.bf16.msra.mxu0 %v7342
    %7401 = vmatprep.subr.bf16.mxu0 %v7348
    %7402 = vmatpush1.bf16.msra.mxu0 %v7347
    %7403 = vmatprep.subr.bf16.mxu0 %v7353
    %7404 = vmatpush1.bf16.msra.mxu0 %v7352
    %7405 = vmatprep.subr.bf16.mxu0 %v7358
    %7406 = vmatpush1.bf16.msra.mxu0 %v7357
    %7407 = vmatprep.subr.bf16.mxu0 0
    %7408 = vmatpush1.bf16.msra.mxu0 0
    %7409 = vmatprep.subr.bf16.mxu0 0
    %7410 = vmatpush1.bf16.msra.mxu0 0
    %7411 = vmatprep.subr.bf16.mxu0 0
    %7412 = vmatpush1.bf16.msra.mxu0 0
    %7413 = vmatprep.subr.bf16.mxu0 0
    %7414 = vmatpush1.bf16.msra.mxu0 0
    %7415 = vmatprep.subr.bf16.mxu0 0
    %7416 = vmatpush1.bf16.msra.mxu0 0
    %7417 = vmatprep.subr.bf16.mxu0 0
    %7418 = vmatpush1.bf16.msra.mxu0 0
    %7419 = vmatprep.subr.bf16.mxu0 0
    %7420 = vmatpush1.bf16.msra.mxu0 0
    %7421 = vmatprep.subr.bf16.mxu0 0
    %7422 = vmatpush1.bf16.msra.mxu0 0
    %7423 = vmatprep.subr.bf16.mxu0 0
    %7424 = vmatpush1.bf16.msra.mxu0 0
    %7425 = vmatprep.subr.bf16.mxu0 0
    %7426 = vmatpush1.bf16.msra.mxu0 0
    %7427 = vmatprep.mubr.bf16.mxu0 0
    %7428 = vmatmul.mubr.bf16.gmra.mrb[0].mxu0 %v7393
    %v7429 = vpop.f32.mrb[0].mxu0
    %v7430 = vadd.f32 %v7214, %v7429
    %v7431 = vpop.f32.mrb[0].mxu0
    %v7432 = vadd.f32 %v7218, %v7431
    %v7433 = vpop.f32.mrb[0].mxu0
    %v7434 = vpop.f32.mrb[0].mxu0
    %7435 = vdwg.mxu0
    %7436 = vmatprep.subr.bf16.mxu0 %v7335
    %7437 = vmatpush1.bf16.msra.mxu0 %v7334
    %7438 = vmatprep.subr.bf16.mxu0 %v7340
    %7439 = vmatpush1.bf16.msra.mxu0 %v7339
    %7440 = vmatprep.subr.bf16.mxu0 %v7345
    %7441 = vmatpush1.bf16.msra.mxu0 %v7344
    %7442 = vmatprep.subr.bf16.mxu0 %v7350
    %7443 = vmatpush1.bf16.msra.mxu0 %v7349
    %7444 = vmatprep.subr.bf16.mxu0 %v7355
    %7445 = vmatpush1.bf16.msra.mxu0 %v7354
    %7446 = vmatprep.subr.bf16.mxu0 %v7360
    %7447 = vmatpush1.bf16.msra.mxu0 %v7359
    %7448 = vmatprep.subr.bf16.mxu0 0
    %7449 = vmatpush1.bf16.msra.mxu0 0
    %7450 = vmatprep.subr.bf16.mxu0 0
    %7451 = vmatpush1.bf16.msra.mxu0 0
    %7452 = vmatprep.subr.bf16.mxu0 0
    %7453 = vmatpush1.bf16.msra.mxu0 0
    %7454 = vmatprep.subr.bf16.mxu0 0
    %7455 = vmatpush1.bf16.msra.mxu0 0
    %7456 = vmatprep.subr.bf16.mxu0 0
    %7457 = vmatpush1.bf16.msra.mxu0 0
    %7458 = vmatprep.subr.bf16.mxu0 0
    %7459 = vmatpush1.bf16.msra.mxu0 0
    %7460 = vmatprep.subr.bf16.mxu0 0
    %7461 = vmatpush1.bf16.msra.mxu0 0
    %7462 = vmatprep.subr.bf16.mxu0 0
    %7463 = vmatpush1.bf16.msra.mxu0 0
    %7464 = vmatprep.subr.bf16.mxu0 0
    %7465 = vmatpush1.bf16.msra.mxu0 0
    %7466 = vmatprep.subr.bf16.mxu0 0
    %7467 = vmatpush1.bf16.msra.mxu0 0
    %7468 = vmatprep.mubr.bf16.mxu0 0
    %7469 = vmatmul.mubr.bf16.gmra.mrb[0].mxu0 %v7393
    %v7470 = vpop.f32.mrb[0].mxu0
    %v7471 = vadd.f32 %v7222, %v7470
    %v7472 = vpop.f32.mrb[0].mxu0
    %v7473 = vadd.f32 %v7226, %v7472
    %v7474 = vpop.f32.mrb[0].mxu0
    %v7475 = vpop.f32.mrb[0].mxu0
    %7476 = vdwg.mxu0
    %7477 = vmatprep.subr.bf16.mxu0 0
    %7478 = vmatpush1.bf16.msra.mxu0 %v7336
    %7479 = vmatprep.subr.bf16.mxu0 0
    %7480 = vmatpush1.bf16.msra.mxu0 %v7341
    %7481 = vmatprep.subr.bf16.mxu0 0
    %7482 = vmatpush1.bf16.msra.mxu0 %v7346
    %7483 = vmatprep.subr.bf16.mxu0 0
    %7484 = vmatpush1.bf16.msra.mxu0 %v7351
    %7485 = vmatprep.subr.bf16.mxu0 0
    %7486 = vmatpush1.bf16.msra.mxu0 %v7356
    %7487 = vmatprep.subr.bf16.mxu0 0
    %7488 = vmatpush1.bf16.msra.mxu0 %v7361
    %7489 = vmatprep.subr.bf16.mxu0 0
    %7490 = vmatpush1.bf16.msra.mxu0 0
    %7491 = vmatprep.subr.bf16.mxu0 0
    %7492 = vmatpush1.bf16.msra.mxu0 0
    %7493 = vmatprep.subr.bf16.mxu0 0
    %7494 = vmatpush1.bf16.msra.mxu0 0
    %7495 = vmatprep.subr.bf16.mxu0 0
    %7496 = vmatpush1.bf16.msra.mxu0 0
    %7497 = vmatprep.subr.bf16.mxu0 0
    %7498 = vmatpush1.bf16.msra.mxu0 0
    %7499 = vmatprep.subr.bf16.mxu0 0
    %7500 = vmatpush1.bf16.msra.mxu0 0
    %7501 = vmatprep.subr.bf16.mxu0 0
    %7502 = vmatpush1.bf16.msra.mxu0 0
    %7503 = vmatprep.subr.bf16.mxu0 0
    %7504 = vmatpush1.bf16.msra.mxu0 0
    %7505 = vmatprep.subr.bf16.mxu0 0
    %7506 = vmatpush1.bf16.msra.mxu0 0
    %7507 = vmatprep.subr.bf16.mxu0 0
    %7508 = vmatpush1.bf16.msra.mxu0 0
    %7509 = vmatprep.mubr.bf16.mxu0 0
    %7510 = vmatmul.mubr.bf16.gmra.mrb[0].mxu0 %v7393
    %v7511 = vpop.f32.mrb[0].mxu0
    %v7512 = vadd.f32 %v7230, %v7511
    %v7513 = vpop.f32.mrb[0].mxu0
    %v7514 = vpop.f32.mrb[0].mxu0
    %v7515 = vpop.f32.mrb[0].mxu0
    %7516 = vdwg.mxu0
    %v7517 = vadd.f32 %v7430, 3.0
    %v7518 = vadd.f32 %v7432, 3.0
    %v7519 = vadd.f32 %v7471, 3.0
    %v7520 = vadd.f32 %v7473, 3.0
    %v7521 = vadd.f32 %v7512, 3.0
    %v7522 = vmax.f32 %v7517, 0.0
    %v7523 = vmax.f32 %v7518, 0.0
    %v7524 = vmax.f32 %v7519, 0.0
    %v7525 = vmax.f32 %v7520, 0.0
    %v7526 = vmax.f32 %v7521, 0.0
    %v7527 = vmin.f32 %v7522, 6.0
    %v7528 = vmin.f32 %v7523, 6.0
    %v7529 = vmin.f32 %v7524, 6.0
    %v7530 = vmin.f32 %v7525, 6.0
    %v7531 = vmin.f32 %v7526, 6.0
    %v7532 = vmul.f32 %v7527, 0.16666667
    %v7533 = vmul.f32 %v7528, 0.16666667
    %v7534 = vmul.f32 %v7529, 0.16666667
    %v7535 = vmul.f32 %v7530, 0.16666667
    %v7536 = vmul.f32 %v7531, 0.16666667
    %v7537 = vmul.f32 %v7430, %v7532
    %v7538 = vmul.f32 %v7432, %v7533
    %v7539 = vmul.f32 %v7471, %v7534
    %v7540 = vmul.f32 %v7473, %v7535
    %v7541 = vmul.f32 %v7512, %v7536
    %v7542 = vld [vmem:[%s109 + $0x28] sm:$0xff]
    %v7543 = vld [vmem:[%s109 + $0x30] sm:$0xff]
    %v7544 = vld [vmem:[%s109 + $0x38] sm:$0xff]
    %v7545 = vld [vmem:[%s109 + $0x40] sm:$0xff]
    %v7546 = vld [vmem:[%s109 + $0x48] sm:$0xff]
    %v7547 = vlaneseq
    %v7548 = vshrl.u32 %v7547, 7
    %v7549 = vsub.s32 4, %v7548
    %v7550 = vrot.slane %v7542, %v7549
    %v7551 = vlaneseq
    %v7552 = vshrl.u32 %v7551, 7
    %v7553 = vsub.s32 4, %v7552
    %v7554 = vrot.slane %v7543, %v7553
    %v7555 = vlaneseq
    %v7556 = vshrl.u32 %v7555, 7
    %v7557 = vsub.s32 4, %v7556
    %v7558 = vrot.slane %v7544, %v7557
    %v7559 = vlaneseq
    %v7560 = vshrl.u32 %v7559, 7
    %v7561 = vsub.s32 4, %v7560
    %v7562 = vrot.slane %v7545, %v7561
    %v7563 = vlaneseq
    %v7564 = vshrl.u32 %v7563, 7
    %v7565 = vsub.s32 4, %v7564
    %v7566 = vrot.slane %v7546, %v7565
    %v7567 = vmul.f32 %v7537, %v7550
    %v7568 = vmul.f32 %v7538, %v7554
    %v7569 = vmul.f32 %v7539, %v7558
    %v7570 = vmul.f32 %v7540, %v7562
    %v7571 = vmul.f32 %v7541, %v7566
    %s7572 = scalar_lea.vmem %s1, 207
    %v7573 = vld [vmem:[%s7572] ss:$8 sm:$0xf]
    %v7574 = vld [vmem:[%s7572] ss:$8 sm:$0x10]
    %v7575 = vor.u32 %v7573, %v7574
    %v7577 = vlaneseq
    %v7578 = vshrl.u32 %v7577, 7
    %v7579 = vsub.s32 0, %v7578
    %v7580 = vrot.slane %v7575, %v7579
    %v7581 = vlaneseq
    %v7582 = vshrl.u32 %v7581, 7
    %v7583 = vsub.s32 1, %v7582
    %v7584 = vrot.slane %v7575, %v7583
    %v7585 = vlaneseq
    %v7586 = vshrl.u32 %v7585, 7
    %v7587 = vsub.s32 2, %v7586
    %v7588 = vrot.slane %v7575, %v7587
    %v7589 = vlaneseq
    %v7590 = vshrl.u32 %v7589, 7
    %v7591 = vsub.s32 3, %v7590
    %v7592 = vrot.slane %v7575, %v7591
    %v7593 = vlaneseq
    %v7594 = vshrl.u32 %v7593, 7
    %v7595 = vsub.s32 4, %v7594
    %v7596 = vrot.slane %v7575, %v7595
    %v7602 = vadd.f32 %v7567, %v7580
    %v7603 = vadd.f32 %v7568, %v7584
    %v7604 = vadd.f32 %v7569, %v7588
    %v7605 = vadd.f32 %v7570, %v7592
    %v7606 = vadd.f32 %v7571, %v7596
    %v7607 = vadd.f32 %v7602, 3.0
    %v7608 = vadd.f32 %v7603, 3.0
    %v7609 = vadd.f32 %v7604, 3.0
    %v7610 = vadd.f32 %v7605, 3.0
    %v7611 = vadd.f32 %v7606, 3.0
    %v7612 = vmax.f32 %v7607, 0.0
    %v7613 = vmax.f32 %v7608, 0.0
    %v7614 = vmax.f32 %v7609, 0.0
    %v7615 = vmax.f32 %v7610, 0.0
    %v7616 = vmax.f32 %v7611, 0.0
    %v7617 = vmin.f32 %v7612, 6.0
    %v7618 = vmin.f32 %v7613, 6.0
    %v7619 = vmin.f32 %v7614, 6.0
    %v7620 = vmin.f32 %v7615, 6.0
    %v7621 = vmin.f32 %v7616, 6.0
    %v7622 = vmul.f32 %v7617, 0.16666667
    %v7623 = vmul.f32 %v7618, 0.16666667
    %v7624 = vmul.f32 %v7619, 0.16666667
    %v7625 = vmul.f32 %v7620, 0.16666667
    %v7626 = vmul.f32 %v7621, 0.16666667
    %v7627 = vmul.f32 %v7602, %v7622
    %v7628 = vmul.f32 %v7603, %v7623
    %v7629 = vmul.f32 %v7604, %v7624
    %v7630 = vmul.f32 %v7605, %v7625
    %v7631 = vmul.f32 %v7606, %v7626
    %v7632 = vpack.c.bf16 %v7627, %v7627
    %v7633 = vpack.c.bf16 %v7628, %v7628
    %v7634 = vpack.c.bf16 %v7629, %v7629
    %v7635 = vpack.c.bf16 %v7630, %v7630
    %v7636 = vpack.c.bf16 %v7631, %v7631
    %v7637 = vld [vmem:[%s111] sm:$0xff]
    %v7638 = vld [vmem:[%s111 + $0x8] sm:$0xff]
    %v7639 = vld [vmem:[%s111 + $0x10] sm:$0xff]
    %v7640 = vld [vmem:[%s111 + $0x18] sm:$0xff]
    %v7641 = vld [vmem:[%s111 + $0x20] sm:$0xff]
    %v7642 = vld [vmem:[%s111 + $0x28] sm:$0xff]
    %v7643 = vld [vmem:[%s111 + $0x30] sm:$0xff]
    %v7644 = vld [vmem:[%s111 + $0x38] sm:$0xff]
    %v7645 = vld [vmem:[%s111 + $0x40] sm:$0xff]
    %v7646 = vld [vmem:[%s111 + $0x48] sm:$0xff]
    %v7647 = vld [vmem:[%s111 + $0x50] sm:$0xff]
    %v7648 = vld [vmem:[%s111 + $0x58] sm:$0xff]
    %v7649 = vld [vmem:[%s111 + $0x60] sm:$0xff]
    %v7650 = vld [vmem:[%s111 + $0x68] sm:$0xff]
    %v7651 = vld [vmem:[%s111 + $0x70] sm:$0xff]
    %v7652 = vld [vmem:[%s111 + $0x78] sm:$0xff]
    %v7653 = vld [vmem:[%s111 + $0x80] sm:$0xff]
    %v7654 = vld [vmem:[%s111 + $0x88] sm:$0xff]
    %v7655 = vld [vmem:[%s111 + $0x90] sm:$0xff]
    %v7656 = vld [vmem:[%s111 + $0x98] sm:$0xff]
    %v7657 = vld [vmem:[%s111 + $0xa0] sm:$0xff]
    %v7658 = vld [vmem:[%s111 + $0xa8] sm:$0xff]
    %v7659 = vld [vmem:[%s111 + $0xb0] sm:$0xff]
    %v7660 = vld [vmem:[%s111 + $0xb8] sm:$0xff]
    %v7661 = vld [vmem:[%s111 + $0xc0] sm:$0xff]
    %v7662 = vld [vmem:[%s111 + $0xc8] sm:$0xff]
    %v7663 = vld [vmem:[%s111 + $0xd0] sm:$0xff]
    %v7664 = vld [vmem:[%s111 + $0xd8] sm:$0xff]
    %v7665 = vld [vmem:[%s111 + $0xe0] sm:$0xff]
    %v7666 = vld [vmem:[%s111 + $0xe8] sm:$0xff]
    %v7667 = vld [vmem:[%s111 + $0xf0] sm:$0xff]
    %v7668 = vld [vmem:[%s111 + $0xf8] sm:$0xff]
    %v7669 = vld [vmem:[%s111 + $0x100] sm:$0xff]
    %v7670 = vld [vmem:[%s111 + $0x108] sm:$0xff]
    %v7671 = vld [vmem:[%s111 + $0x110] sm:$0xff]
    %v7672 = vld [vmem:[%s111 + $0x118] sm:$0xff]
    %v7673 = vld [vmem:[%s111 + $0x120] sm:$0xff]
    %v7674 = vld [vmem:[%s111 + $0x128] sm:$0xff]
    %v7675 = vld [vmem:[%s111 + $0x130] sm:$0xff]
    %v7676 = vld [vmem:[%s111 + $0x138] sm:$0xff]
    %v7677 = vld [vmem:[%s111 + $0x140] sm:$0xff]
    %v7678 = vld [vmem:[%s111 + $0x148] sm:$0xff]
    %v7679 = vld [vmem:[%s111 + $0x150] sm:$0xff]
    %v7680 = vld [vmem:[%s111 + $0x158] sm:$0xff]
    %v7681 = vld [vmem:[%s111 + $0x160] sm:$0xff]
    %v7682 = vld [vmem:[%s111 + $0x168] sm:$0xff]
    %v7683 = vld [vmem:[%s111 + $0x170] sm:$0xff]
    %v7684 = vld [vmem:[%s111 + $0x178] sm:$0xff]
    %v7685 = vld [vmem:[%s111 + $0x180] sm:$0xff]
    %v7686 = vld [vmem:[%s111 + $0x188] sm:$0xff]
    %v7687 = vld [vmem:[%s111 + $0x190] sm:$0xff]
    %v7688 = vld [vmem:[%s111 + $0x198] sm:$0xff]
    %v7689 = vld [vmem:[%s111 + $0x1a0] sm:$0xff]
    %v7690 = vld [vmem:[%s111 + $0x1a8] sm:$0xff]
    %v7691 = vld [vmem:[%s111 + $0x1b0] sm:$0xff]
    %v7692 = vld [vmem:[%s111 + $0x1b8] sm:$0xff]
    %v7693 = vld [vmem:[%s111 + $0x1c0] sm:$0xff]
    %v7694 = vld [vmem:[%s111 + $0x1c8] sm:$0xff]
    %v7695 = vld [vmem:[%s111 + $0x1d0] sm:$0xff]
    %v7696 = vld [vmem:[%s111 + $0x1d8] sm:$0xff]
    %v7697 = vld [vmem:[%s111 + $0x1e0] sm:$0xff]
    %v7698 = vld [vmem:[%s111 + $0x1e8] sm:$0xff]
    %v7699 = vld [vmem:[%s111 + $0x1f0] sm:$0xff]
    %v7700 = vld [vmem:[%s111 + $0x1f8] sm:$0xff]
    %v7701 = vld [vmem:[%s111 + $0x200] sm:$0xff]
    %v7702 = vld [vmem:[%s111 + $0x208] sm:$0xff]
    %v7703 = vld [vmem:[%s111 + $0x210] sm:$0xff]
    %v7704 = vld [vmem:[%s111 + $0x218] sm:$0xff]
    %v7705 = vld [vmem:[%s111 + $0x220] sm:$0xff]
    %v7706 = vld [vmem:[%s111 + $0x228] sm:$0xff]
    %v7707 = vld [vmem:[%s111 + $0x230] sm:$0xff]
    %v7708 = vld [vmem:[%s111 + $0x238] sm:$0xff]
    %s7709 = scalar_lea.vmem %s1, 240
    %v7710 = vld [vmem:[%s7709] ss:$8 sm:$0x3]
    %v7712 = vlaneseq
    %v7713 = vshrl.u32 %v7712, 7
    %v7714 = vsub.s32 0, %v7713
    %v7715 = vrot.slane %v7710, %v7714
    %v7716 = vlaneseq
    %v7717 = vshrl.u32 %v7716, 7
    %v7718 = vsub.s32 1, %v7717
    %v7719 = vrot.slane %v7710, %v7718
    %v7794 = vunpack.c.l.b16 %v7637
    %v7795 = vunpack.c.h.b16 %v7637
    %v7796 = vunpack.c.l.b16 %v7638
    %v7797 = vunpack.c.h.b16 %v7638
    %v7798 = vunpack.c.l.b16 %v7639
    %v7799 = vunpack.c.h.b16 %v7639
    %v7800 = vunpack.c.l.b16 %v7640
    %v7801 = vunpack.c.h.b16 %v7640
    %v7802 = vunpack.c.l.b16 %v7641
    %v7803 = vunpack.c.h.b16 %v7641
    %v7804 = vunpack.c.l.b16 %v7642
    %v7805 = vunpack.c.h.b16 %v7642
    %v7806 = vunpack.c.l.b16 %v7643
    %v7807 = vunpack.c.h.b16 %v7643
    %v7808 = vunpack.c.l.b16 %v7644
    %v7809 = vunpack.c.h.b16 %v7644
    %v7810 = vunpack.c.l.b16 %v7645
    %v7811 = vunpack.c.h.b16 %v7645
    %v7812 = vunpack.c.l.b16 %v7646
    %v7813 = vunpack.c.h.b16 %v7646
    %v7814 = vunpack.c.l.b16 %v7647
    %v7815 = vunpack.c.h.b16 %v7647
    %v7816 = vunpack.c.l.b16 %v7648
    %v7817 = vunpack.c.h.b16 %v7648
    %v7818 = vunpack.c.l.b16 %v7649
    %v7819 = vunpack.c.h.b16 %v7649
    %v7820 = vunpack.c.l.b16 %v7650
    %v7821 = vunpack.c.h.b16 %v7650
    %v7822 = vunpack.c.l.b16 %v7651
    %v7823 = vunpack.c.h.b16 %v7651
    %v7824 = vunpack.c.l.b16 %v7652
    %v7825 = vunpack.c.h.b16 %v7652
    %v7826 = vunpack.c.l.b16 %v7653
    %v7827 = vunpack.c.h.b16 %v7653
    %v7828 = vunpack.c.l.b16 %v7654
    %v7829 = vunpack.c.h.b16 %v7654
    %v7830 = vunpack.c.l.b16 %v7655
    %v7831 = vunpack.c.h.b16 %v7655
    %v7832 = vunpack.c.l.b16 %v7656
    %v7833 = vunpack.c.h.b16 %v7656
    %v7834 = vunpack.c.l.b16 %v7657
    %v7835 = vunpack.c.h.b16 %v7657
    %v7836 = vunpack.c.l.b16 %v7658
    %v7837 = vunpack.c.h.b16 %v7658
    %v7838 = vunpack.c.l.b16 %v7659
    %v7839 = vunpack.c.h.b16 %v7659
    %v7840 = vunpack.c.l.b16 %v7660
    %v7841 = vunpack.c.h.b16 %v7660
    %v7842 = vunpack.c.l.b16 %v7661
    %v7843 = vunpack.c.h.b16 %v7661
    %v7844 = vunpack.c.l.b16 %v7662
    %v7845 = vunpack.c.h.b16 %v7662
    %v7846 = vunpack.c.l.b16 %v7663
    %v7847 = vunpack.c.h.b16 %v7663
    %v7848 = vunpack.c.l.b16 %v7664
    %v7849 = vunpack.c.h.b16 %v7664
    %v7850 = vunpack.c.l.b16 %v7665
    %v7851 = vunpack.c.h.b16 %v7665
    %v7852 = vunpack.c.l.b16 %v7666
    %v7853 = vunpack.c.h.b16 %v7666
    %v7854 = vunpack.c.l.b16 %v7667
    %v7855 = vunpack.c.h.b16 %v7667
    %v7856 = vunpack.c.l.b16 %v7668
    %v7857 = vunpack.c.h.b16 %v7668
    %v7858 = vunpack.c.l.b16 %v7669
    %v7859 = vunpack.c.h.b16 %v7669
    %v7860 = vunpack.c.l.b16 %v7670
    %v7861 = vunpack.c.h.b16 %v7670
    %v7862 = vunpack.c.l.b16 %v7671
    %v7863 = vunpack.c.h.b16 %v7671
    %v7864 = vunpack.c.l.b16 %v7672
    %v7865 = vunpack.c.h.b16 %v7672
    %v7866 = vunpack.c.l.b16 %v7673
    %v7867 = vunpack.c.h.b16 %v7673
    %v7868 = vunpack.c.l.b16 %v7674
    %v7869 = vunpack.c.h.b16 %v7674
    %v7870 = vunpack.c.l.b16 %v7675
    %v7871 = vunpack.c.h.b16 %v7675
    %v7872 = vunpack.c.l.b16 %v7676
    %v7873 = vunpack.c.h.b16 %v7676
    %v7874 = vunpack.c.l.b16 %v7677
    %v7875 = vunpack.c.h.b16 %v7677
    %v7876 = vunpack.c.l.b16 %v7678
    %v7877 = vunpack.c.h.b16 %v7678
    %v7878 = vunpack.c.l.b16 %v7679
    %v7879 = vunpack.c.h.b16 %v7679
    %v7880 = vunpack.c.l.b16 %v7680
    %v7881 = vunpack.c.h.b16 %v7680
    %v7882 = vunpack.c.l.b16 %v7681
    %v7883 = vunpack.c.h.b16 %v7681
    %v7884 = vunpack.c.l.b16 %v7682
    %v7885 = vunpack.c.h.b16 %v7682
    %v7886 = vunpack.c.l.b16 %v7683
    %v7887 = vunpack.c.h.b16 %v7683
    %v7888 = vunpack.c.l.b16 %v7684
    %v7889 = vunpack.c.h.b16 %v7684
    %v7890 = vunpack.c.l.b16 %v7685
    %v7891 = vunpack.c.h.b16 %v7685
    %v7892 = vunpack.c.l.b16 %v7686
    %v7893 = vunpack.c.h.b16 %v7686
    %v7894 = vunpack.c.l.b16 %v7687
    %v7895 = vunpack.c.h.b16 %v7687
    %v7896 = vunpack.c.l.b16 %v7688
    %v7897 = vunpack.c.h.b16 %v7688
    %v7898 = vunpack.c.l.b16 %v7689
    %v7899 = vunpack.c.h.b16 %v7689
    %v7900 = vunpack.c.l.b16 %v7690
    %v7901 = vunpack.c.h.b16 %v7690
    %v7902 = vunpack.c.l.b16 %v7691
    %v7903 = vunpack.c.h.b16 %v7691
    %v7904 = vunpack.c.l.b16 %v7692
    %v7905 = vunpack.c.h.b16 %v7692
    %v7906 = vunpack.c.l.b16 %v7693
    %v7907 = vunpack.c.h.b16 %v7693
    %v7908 = vunpack.c.l.b16 %v7694
    %v7909 = vunpack.c.h.b16 %v7694
    %v7910 = vunpack.c.l.b16 %v7695
    %v7911 = vunpack.c.h.b16 %v7695
    %v7912 = vunpack.c.l.b16 %v7696
    %v7913 = vunpack.c.h.b16 %v7696
    %v7914 = vunpack.c.l.b16 %v7697
    %v7915 = vunpack.c.h.b16 %v7697
    %v7916 = vunpack.c.l.b16 %v7698
    %v7917 = vunpack.c.h.b16 %v7698
    %v7918 = vunpack.c.l.b16 %v7699
    %v7919 = vunpack.c.h.b16 %v7699
    %v7920 = vunpack.c.l.b16 %v7700
    %v7921 = vunpack.c.h.b16 %v7700
    %v7922 = vunpack.c.l.b16 %v7701
    %v7923 = vunpack.c.h.b16 %v7701
    %v7924 = vunpack.c.l.b16 %v7702
    %v7925 = vunpack.c.h.b16 %v7702
    %v7926 = vunpack.c.l.b16 %v7703
    %v7927 = vunpack.c.h.b16 %v7703
    %v7928 = vunpack.c.l.b16 %v7704
    %v7929 = vunpack.c.h.b16 %v7704
    %v7930 = vunpack.c.l.b16 %v7705
    %v7931 = vunpack.c.h.b16 %v7705
    %v7932 = vunpack.c.l.b16 %v7706
    %v7933 = vunpack.c.h.b16 %v7706
    %v7934 = vunpack.c.l.b16 %v7707
    %v7935 = vunpack.c.h.b16 %v7707
    %v7936 = vunpack.c.l.b16 %v7708
    %v7937 = vunpack.c.h.b16 %v7708
    %v7938 = vpack.c.b16 %v7796, %v7794
    %v7939 = vpack.c.b16 %v7797, %v7795
    %v7940 = vpack.c.b16 %v7800, %v7798
    %v7941 = vpack.c.b16 %v7801, %v7799
    %v7942 = vpack.c.b16 %v7804, %v7802
    %v7943 = vpack.c.b16 %v7805, %v7803
    %v7944 = vpack.c.b16 %v7808, %v7806
    %v7945 = vpack.c.b16 %v7809, %v7807
    %v7946 = vpack.c.b16 %v7812, %v7810
    %v7947 = vpack.c.b16 %v7813, %v7811
    %v7948 = vpack.c.b16 %v7816, %v7814
    %v7949 = vpack.c.b16 %v7817, %v7815
    %v7950 = vpack.c.b16 %v7820, %v7818
    %v7951 = vpack.c.b16 %v7821, %v7819
    %v7952 = vpack.c.b16 %v7824, %v7822
    %v7953 = vpack.c.b16 %v7825, %v7823
    %v7954 = vpack.c.b16 %v7828, %v7826
    %v7955 = vpack.c.b16 %v7829, %v7827
    %v7956 = vpack.c.b16 %v7832, %v7830
    %v7957 = vpack.c.b16 %v7833, %v7831
    %v7958 = vpack.c.b16 %v7836, %v7834
    %v7959 = vpack.c.b16 %v7837, %v7835
    %v7960 = vpack.c.b16 %v7840, %v7838
    %v7961 = vpack.c.b16 %v7841, %v7839
    %v7962 = vpack.c.b16 %v7844, %v7842
    %v7963 = vpack.c.b16 %v7845, %v7843
    %v7964 = vpack.c.b16 %v7848, %v7846
    %v7965 = vpack.c.b16 %v7849, %v7847
    %v7966 = vpack.c.b16 %v7852, %v7850
    %v7967 = vpack.c.b16 %v7853, %v7851
    %v7968 = vpack.c.b16 %v7856, %v7854
    %v7969 = vpack.c.b16 %v7857, %v7855
    %v7970 = vpack.c.b16 %v7860, %v7858
    %v7971 = vpack.c.b16 %v7861, %v7859
    %v7972 = vpack.c.b16 %v7864, %v7862
    %v7973 = vpack.c.b16 %v7865, %v7863
    %v7974 = vpack.c.b16 %v7868, %v7866
    %v7975 = vpack.c.b16 %v7869, %v7867
    %v7976 = vpack.c.b16 %v7872, %v7870
    %v7977 = vpack.c.b16 %v7873, %v7871
    %v7978 = vpack.c.b16 %v7876, %v7874
    %v7979 = vpack.c.b16 %v7877, %v7875
    %v7980 = vpack.c.b16 %v7880, %v7878
    %v7981 = vpack.c.b16 %v7881, %v7879
    %v7982 = vpack.c.b16 %v7884, %v7882
    %v7983 = vpack.c.b16 %v7885, %v7883
    %v7984 = vpack.c.b16 %v7888, %v7886
    %v7985 = vpack.c.b16 %v7889, %v7887
    %v7986 = vpack.c.b16 %v7892, %v7890
    %v7987 = vpack.c.b16 %v7893, %v7891
    %v7988 = vpack.c.b16 %v7896, %v7894
    %v7989 = vpack.c.b16 %v7897, %v7895
    %v7990 = vpack.c.b16 %v7900, %v7898
    %v7991 = vpack.c.b16 %v7901, %v7899
    %v7992 = vpack.c.b16 %v7904, %v7902
    %v7993 = vpack.c.b16 %v7905, %v7903
    %v7994 = vpack.c.b16 %v7908, %v7906
    %v7995 = vpack.c.b16 %v7909, %v7907
    %v7996 = vpack.c.b16 %v7912, %v7910
    %v7997 = vpack.c.b16 %v7913, %v7911
    %v7998 = vpack.c.b16 %v7916, %v7914
    %v7999 = vpack.c.b16 %v7917, %v7915
    %v8000 = vpack.c.b16 %v7920, %v7918
    %v8001 = vpack.c.b16 %v7921, %v7919
    %v8002 = vpack.c.b16 %v7924, %v7922
    %v8003 = vpack.c.b16 %v7925, %v7923
    %v8004 = vpack.c.b16 %v7928, %v7926
    %v8005 = vpack.c.b16 %v7929, %v7927
    %v8006 = vpack.c.b16 %v7932, %v7930
    %v8007 = vpack.c.b16 %v7933, %v7931
    %v8008 = vpack.c.b16 %v7936, %v7934
    %v8009 = vpack.c.b16 %v7937, %v7935
    %v8083 = vsel %vm2659, %v7636, 0
    %8085 = vmatprep.subr.bf16.mxu0 %v7939
    %8086 = vmatpush1.bf16.msra.mxu0 %v7938
    %8087 = vmatprep.subr.bf16.mxu0 %v7941
    %8088 = vmatpush1.bf16.msra.mxu0 %v7940
    %8089 = vmatprep.subr.bf16.mxu0 %v7943
    %8090 = vmatpush1.bf16.msra.mxu0 %v7942
    %8091 = vmatprep.subr.bf16.mxu0 %v7945
    %8092 = vmatpush1.bf16.msra.mxu0 %v7944
    %8093 = vmatprep.subr.bf16.mxu0 %v7947
    %8094 = vmatpush1.bf16.msra.mxu0 %v7946
    %8095 = vmatprep.subr.bf16.mxu0 %v7949
    %8096 = vmatpush1.bf16.msra.mxu0 %v7948
    %8097 = vmatprep.subr.bf16.mxu0 %v7951
    %8098 = vmatpush1.bf16.msra.mxu0 %v7950
    %8099 = vmatprep.subr.bf16.mxu0 %v7953
    %8100 = vmatpush1.bf16.msra.mxu0 %v7952
    %8101 = vmatprep.subr.bf16.mxu0 %v7955
    %8102 = vmatpush1.bf16.msra.mxu0 %v7954
    %8103 = vmatprep.subr.bf16.mxu0 %v7957
    %8104 = vmatpush1.bf16.msra.mxu0 %v7956
    %8105 = vmatprep.subr.bf16.mxu0 %v7959
    %8106 = vmatpush1.bf16.msra.mxu0 %v7958
    %8107 = vmatprep.subr.bf16.mxu0 %v7961
    %8108 = vmatpush1.bf16.msra.mxu0 %v7960
    %8109 = vmatprep.subr.bf16.mxu0 %v7963
    %8110 = vmatpush1.bf16.msra.mxu0 %v7962
    %8111 = vmatprep.subr.bf16.mxu0 %v7965
    %8112 = vmatpush1.bf16.msra.mxu0 %v7964
    %8113 = vmatprep.subr.bf16.mxu0 %v7967
    %8114 = vmatpush1.bf16.msra.mxu0 %v7966
    %8115 = vmatprep.subr.bf16.mxu0 %v7969
    %8116 = vmatpush1.bf16.msra.mxu0 %v7968
    %8117 = vmatprep.mubr.bf16.mxu0 %v7633
    %8118 = vmatmul.mubr.bf16.gmra.mrb[0].mxu0 %v7632
    %v8119 = vpop.f32.mrb[0].mxu0
    %v8120 = vadd.f32 %v7715, %v8119
    %v8121 = vpop.f32.mrb[0].mxu0
    %v8122 = vadd.f32 %v7719, %v8121
    %v8123 = vpop.f32.mrb[0].mxu0
    %v8124 = vpop.f32.mrb[0].mxu0
    %8125 = vdwg.mxu0
    %8126 = vmatprep.subr.bf16.mxu0 %v7971
    %8127 = vmatpush1.bf16.msra.mxu0 %v7970
    %8128 = vmatprep.subr.bf16.mxu0 %v7973
    %8129 = vmatpush1.bf16.msra.mxu0 %v7972
    %8130 = vmatprep.subr.bf16.mxu0 %v7975
    %8131 = vmatpush1.bf16.msra.mxu0 %v7974
    %8132 = vmatprep.subr.bf16.mxu0 %v7977
    %8133 = vmatpush1.bf16.msra.mxu0 %v7976
    %8134 = vmatprep.subr.bf16.mxu0 %v7979
    %8135 = vmatpush1.bf16.msra.mxu0 %v7978
    %8136 = vmatprep.subr.bf16.mxu0 %v7981
    %8137 = vmatpush1.bf16.msra.mxu0 %v7980
    %8138 = vmatprep.subr.bf16.mxu0 %v7983
    %8139 = vmatpush1.bf16.msra.mxu0 %v7982
    %8140 = vmatprep.subr.bf16.mxu0 %v7985
    %8141 = vmatpush1.bf16.msra.mxu0 %v7984
    %8142 = vmatprep.subr.bf16.mxu0 %v7987
    %8143 = vmatpush1.bf16.msra.mxu0 %v7986
    %8144 = vmatprep.subr.bf16.mxu0 %v7989
    %8145 = vmatpush1.bf16.msra.mxu0 %v7988
    %8146 = vmatprep.subr.bf16.mxu0 %v7991
    %8147 = vmatpush1.bf16.msra.mxu0 %v7990
    %8148 = vmatprep.subr.bf16.mxu0 %v7993
    %8149 = vmatpush1.bf16.msra.mxu0 %v7992
    %8150 = vmatprep.subr.bf16.mxu0 %v7995
    %8151 = vmatpush1.bf16.msra.mxu0 %v7994
    %8152 = vmatprep.subr.bf16.mxu0 %v7997
    %8153 = vmatpush1.bf16.msra.mxu0 %v7996
    %8154 = vmatprep.subr.bf16.mxu0 %v7999
    %8155 = vmatpush1.bf16.msra.mxu0 %v7998
    %8156 = vmatprep.subr.bf16.mxu0 %v8001
    %8157 = vmatpush1.bf16.msra.mxu0 %v8000
    %8158 = vmatprep.mubr.bf16.mxu0 %v7635
    %8159 = vmatmul.mubr.bf16.gmra.mrb[0].mxu0 %v7634
    %v8160 = vpop.f32.mrb[0].mxu0
    %v8161 = vadd.f32 %v8120, %v8160
    %v8162 = vpop.f32.mrb[0].mxu0
    %v8163 = vadd.f32 %v8122, %v8162
    %v8164 = vpop.f32.mrb[0].mxu0
    %v8165 = vpop.f32.mrb[0].mxu0
    %8166 = vdwg.mxu0
    %8167 = vmatprep.subr.bf16.mxu0 %v8003
    %8168 = vmatpush1.bf16.msra.mxu0 %v8002
    %8169 = vmatprep.subr.bf16.mxu0 %v8005
    %8170 = vmatpush1.bf16.msra.mxu0 %v8004
    %8171 = vmatprep.subr.bf16.mxu0 %v8007
    %8172 = vmatpush1.bf16.msra.mxu0 %v8006
    %8173 = vmatprep.subr.bf16.mxu0 %v8009
    %8174 = vmatpush1.bf16.msra.mxu0 %v8008
    %8175 = vmatprep.subr.bf16.mxu0 0
    %8176 = vmatpush1.bf16.msra.mxu0 0
    %8177 = vmatprep.subr.bf16.mxu0 0
    %8178 = vmatpush1.bf16.msra.mxu0 0
    %8179 = vmatprep.subr.bf16.mxu0 0
    %8180 = vmatpush1.bf16.msra.mxu0 0
    %8181 = vmatprep.subr.bf16.mxu0 0
    %8182 = vmatpush1.bf16.msra.mxu0 0
    %8183 = vmatprep.subr.bf16.mxu0 0
    %8184 = vmatpush1.bf16.msra.mxu0 0
    %8185 = vmatprep.subr.bf16.mxu0 0
    %8186 = vmatpush1.bf16.msra.mxu0 0
    %8187 = vmatprep.subr.bf16.mxu0 0
    %8188 = vmatpush1.bf16.msra.mxu0 0
    %8189 = vmatprep.subr.bf16.mxu0 0
    %8190 = vmatpush1.bf16.msra.mxu0 0
    %8191 = vmatprep.subr.bf16.mxu0 0
    %8192 = vmatpush1.bf16.msra.mxu0 0
    %8193 = vmatprep.subr.bf16.mxu0 0
    %8194 = vmatpush1.bf16.msra.mxu0 0
    %8195 = vmatprep.subr.bf16.mxu0 0
    %8196 = vmatpush1.bf16.msra.mxu0 0
    %8197 = vmatprep.subr.bf16.mxu0 0
    %8198 = vmatpush1.bf16.msra.mxu0 0
    %8199 = vmatprep.mubr.bf16.mxu0 0
    %8200 = vmatmul.mubr.bf16.gmra.mrb[0].mxu0 %v8083
    %v8201 = vpop.f32.mrb[0].mxu0
    %v8202 = vadd.f32 %v8161, %v8201
    %v8203 = vpop.f32.mrb[0].mxu0
    %v8204 = vadd.f32 %v8163, %v8203
    %v8205 = vpop.f32.mrb[0].mxu0
    %v8206 = vpop.f32.mrb[0].mxu0
    %8207 = vdwg.mxu0
    %v8208 = vmax.f32 %v8202, 0.0
    %v8209 = vmax.f32 %v8204, 0.0
    %v8210 = vpack.c.bf16 %v8208, %v8208
    %v8211 = vpack.c.bf16 %v8209, %v8209
    %v8212 = vld [vmem:[%s113] sm:$0xff]
    %v8213 = vld [vmem:[%s113 + $0x8] sm:$0xff]
    %v8214 = vld [vmem:[%s113 + $0x10] sm:$0xf]
    %v8215 = vld [vmem:[%s113 + $0x14] sm:$0xff]
    %v8216 = vld [vmem:[%s113 + $0x1c] sm:$0xff]
    %v8217 = vld [vmem:[%s113 + $0x24] sm:$0xf]
    %v8218 = vld [vmem:[%s113 + $0x28] sm:$0xff]
    %v8219 = vld [vmem:[%s113 + $0x30] sm:$0xff]
    %v8220 = vld [vmem:[%s113 + $0x38] sm:$0xf]
    %v8221 = vld [vmem:[%s113 + $0x3c] sm:$0xff]
    %v8222 = vld [vmem:[%s113 + $0x44] sm:$0xff]
    %v8223 = vld [vmem:[%s113 + $0x4c] sm:$0xf]
    %v8224 = vld [vmem:[%s113 + $0x50] sm:$0xff]
    %v8225 = vld [vmem:[%s113 + $0x58] sm:$0xff]
    %v8226 = vld [vmem:[%s113 + $0x60] sm:$0xf]
    %v8227 = vld [vmem:[%s113 + $0x64] sm:$0xff]
    %v8228 = vld [vmem:[%s113 + $0x6c] sm:$0xff]
    %v8229 = vld [vmem:[%s113 + $0x74] sm:$0xf]
    %v8230 = vld [vmem:[%s113 + $0x78] sm:$0xff]
    %v8231 = vld [vmem:[%s113 + $0x80] sm:$0xff]
    %v8232 = vld [vmem:[%s113 + $0x88] sm:$0xf]
    %v8233 = vld [vmem:[%s113 + $0x8c] sm:$0xff]
    %v8234 = vld [vmem:[%s113 + $0x94] sm:$0xff]
    %v8235 = vld [vmem:[%s113 + $0x9c] sm:$0xf]
    %v8236 = vld [vmem:[%s113 + $0xa0] sm:$0xff]
    %v8237 = vld [vmem:[%s113 + $0xa8] sm:$0xff]
    %v8238 = vld [vmem:[%s113 + $0xb0] sm:$0xf]
    %v8239 = vld [vmem:[%s113 + $0xb4] sm:$0xff]
    %v8240 = vld [vmem:[%s113 + $0xbc] sm:$0xff]
    %v8241 = vld [vmem:[%s113 + $0xc4] sm:$0xf]
    %v8242 = vld [vmem:[%s113 + $0xc8] sm:$0xff]
    %v8243 = vld [vmem:[%s113 + $0xd0] sm:$0xff]
    %v8244 = vld [vmem:[%s113 + $0xd8] sm:$0xf]
    %v8245 = vld [vmem:[%s113 + $0xdc] sm:$0xff]
    %v8246 = vld [vmem:[%s113 + $0xe4] sm:$0xff]
    %v8247 = vld [vmem:[%s113 + $0xec] sm:$0xf]
    %v8248 = vld [vmem:[%s113 + $0xf0] sm:$0xff]
    %v8249 = vld [vmem:[%s113 + $0xf8] sm:$0xff]
    %v8250 = vld [vmem:[%s113 + $0x100] sm:$0xf]
    %v8251 = vld [vmem:[%s113 + $0x104] sm:$0xff]
    %v8252 = vld [vmem:[%s113 + $0x10c] sm:$0xff]
    %v8253 = vld [vmem:[%s113 + $0x114] sm:$0xf]
    %v8254 = vld [vmem:[%s113 + $0x118] sm:$0xff]
    %v8255 = vld [vmem:[%s113 + $0x120] sm:$0xff]
    %v8256 = vld [vmem:[%s113 + $0x128] sm:$0xf]
    %v8257 = vld [vmem:[%s113 + $0x12c] sm:$0xff]
    %v8258 = vld [vmem:[%s113 + $0x134] sm:$0xff]
    %v8259 = vld [vmem:[%s113 + $0x13c] sm:$0xf]
    %v8260 = vld [vmem:[%s113 + $0x140] sm:$0xff]
    %v8261 = vld [vmem:[%s113 + $0x148] sm:$0xff]
    %v8262 = vld [vmem:[%s113 + $0x150] sm:$0xf]
    %v8263 = vld [vmem:[%s113 + $0x154] sm:$0xff]
    %v8264 = vld [vmem:[%s113 + $0x15c] sm:$0xff]
    %v8265 = vld [vmem:[%s113 + $0x164] sm:$0xf]
    %s8266 = scalar_lea.vmem %s1, 241
    %v8267 = vld [vmem:[%s8266] ss:$8 sm:$0xf]
    %v8268 = vld [vmem:[%s8266] ss:$8 sm:$0x10]
    %v8269 = vor.u32 %v8267, %v8268
    %v8271 = vlaneseq
    %v8272 = vshrl.u32 %v8271, 7
    %v8273 = vsub.s32 0, %v8272
    %v8274 = vrot.slane %v8269, %v8273
    %v8275 = vlaneseq
    %v8276 = vshrl.u32 %v8275, 7
    %v8277 = vsub.s32 1, %v8276
    %v8278 = vrot.slane %v8269, %v8277
    %v8279 = vlaneseq
    %v8280 = vshrl.u32 %v8279, 7
    %v8281 = vsub.s32 2, %v8280
    %v8282 = vrot.slane %v8269, %v8281
    %v8283 = vlaneseq
    %v8284 = vshrl.u32 %v8283, 7
    %v8285 = vsub.s32 3, %v8284
    %v8286 = vrot.slane %v8269, %v8285
    %v8287 = vlaneseq
    %v8288 = vshrl.u32 %v8287, 7
    %v8289 = vsub.s32 4, %v8288
    %v8290 = vrot.slane %v8269, %v8289
    %v8350 = vunpack.c.l.b16 %v8212
    %v8351 = vunpack.c.h.b16 %v8212
    %v8352 = vunpack.c.l.b16 %v8213
    %v8353 = vunpack.c.h.b16 %v8213
    %v8354 = vunpack.c.l.b16 %v8214
    %v8355 = vunpack.c.l.b16 %v8215
    %v8356 = vunpack.c.h.b16 %v8215
    %v8357 = vunpack.c.l.b16 %v8216
    %v8358 = vunpack.c.h.b16 %v8216
    %v8359 = vunpack.c.l.b16 %v8217
    %v8360 = vunpack.c.l.b16 %v8218
    %v8361 = vunpack.c.h.b16 %v8218
    %v8362 = vunpack.c.l.b16 %v8219
    %v8363 = vunpack.c.h.b16 %v8219
    %v8364 = vunpack.c.l.b16 %v8220
    %v8365 = vunpack.c.l.b16 %v8221
    %v8366 = vunpack.c.h.b16 %v8221
    %v8367 = vunpack.c.l.b16 %v8222
    %v8368 = vunpack.c.h.b16 %v8222
    %v8369 = vunpack.c.l.b16 %v8223
    %v8370 = vunpack.c.l.b16 %v8224
    %v8371 = vunpack.c.h.b16 %v8224
    %v8372 = vunpack.c.l.b16 %v8225
    %v8373 = vunpack.c.h.b16 %v8225
    %v8374 = vunpack.c.l.b16 %v8226
    %v8375 = vunpack.c.l.b16 %v8227
    %v8376 = vunpack.c.h.b16 %v8227
    %v8377 = vunpack.c.l.b16 %v8228
    %v8378 = vunpack.c.h.b16 %v8228
    %v8379 = vunpack.c.l.b16 %v8229
    %v8380 = vunpack.c.l.b16 %v8230
    %v8381 = vunpack.c.h.b16 %v8230
    %v8382 = vunpack.c.l.b16 %v8231
    %v8383 = vunpack.c.h.b16 %v8231
    %v8384 = vunpack.c.l.b16 %v8232
    %v8385 = vunpack.c.l.b16 %v8233
    %v8386 = vunpack.c.h.b16 %v8233
    %v8387 = vunpack.c.l.b16 %v8234
    %v8388 = vunpack.c.h.b16 %v8234
    %v8389 = vunpack.c.l.b16 %v8235
    %v8390 = vunpack.c.l.b16 %v8236
    %v8391 = vunpack.c.h.b16 %v8236
    %v8392 = vunpack.c.l.b16 %v8237
    %v8393 = vunpack.c.h.b16 %v8237
    %v8394 = vunpack.c.l.b16 %v8238
    %v8395 = vunpack.c.l.b16 %v8239
    %v8396 = vunpack.c.h.b16 %v8239
    %v8397 = vunpack.c.l.b16 %v8240
    %v8398 = vunpack.c.h.b16 %v8240
    %v8399 = vunpack.c.l.b16 %v8241
    %v8400 = vunpack.c.l.b16 %v8242
    %v8401 = vunpack.c.h.b16 %v8242
    %v8402 = vunpack.c.l.b16 %v8243
    %v8403 = vunpack.c.h.b16 %v8243
    %v8404 = vunpack.c.l.b16 %v8244
    %v8405 = vunpack.c.l.b16 %v8245
    %v8406 = vunpack.c.h.b16 %v8245
    %v8407 = vunpack.c.l.b16 %v8246
    %v8408 = vunpack.c.h.b16 %v8246
    %v8409 = vunpack.c.l.b16 %v8247
    %v8410 = vunpack.c.l.b16 %v8248
    %v8411 = vunpack.c.h.b16 %v8248
    %v8412 = vunpack.c.l.b16 %v8249
    %v8413 = vunpack.c.h.b16 %v8249
    %v8414 = vunpack.c.l.b16 %v8250
    %v8415 = vunpack.c.l.b16 %v8251
    %v8416 = vunpack.c.h.b16 %v8251
    %v8417 = vunpack.c.l.b16 %v8252
    %v8418 = vunpack.c.h.b16 %v8252
    %v8419 = vunpack.c.l.b16 %v8253
    %v8420 = vunpack.c.l.b16 %v8254
    %v8421 = vunpack.c.h.b16 %v8254
    %v8422 = vunpack.c.l.b16 %v8255
    %v8423 = vunpack.c.h.b16 %v8255
    %v8424 = vunpack.c.l.b16 %v8256
    %v8425 = vunpack.c.l.b16 %v8257
    %v8426 = vunpack.c.h.b16 %v8257
    %v8427 = vunpack.c.l.b16 %v8258
    %v8428 = vunpack.c.h.b16 %v8258
    %v8429 = vunpack.c.l.b16 %v8259
    %v8430 = vunpack.c.l.b16 %v8260
    %v8431 = vunpack.c.h.b16 %v8260
    %v8432 = vunpack.c.l.b16 %v8261
    %v8433 = vunpack.c.h.b16 %v8261
    %v8434 = vunpack.c.l.b16 %v8262
    %v8435 = vunpack.c.l.b16 %v8263
    %v8436 = vunpack.c.h.b16 %v8263
    %v8437 = vunpack.c.l.b16 %v8264
    %v8438 = vunpack.c.h.b16 %v8264
    %v8439 = vunpack.c.l.b16 %v8265
    %v8440 = vpack.c.b16 %v8355, %v8350
    %v8441 = vpack.c.b16 %v8356, %v8351
    %v8442 = vpack.c.b16 %v8357, %v8352
    %v8443 = vpack.c.b16 %v8358, %v8353
    %v8444 = vpack.c.b16 %v8359, %v8354
    %v8445 = vpack.c.b16 %v8365, %v8360
    %v8446 = vpack.c.b16 %v8366, %v8361
    %v8447 = vpack.c.b16 %v8367, %v8362
    %v8448 = vpack.c.b16 %v8368, %v8363
    %v8449 = vpack.c.b16 %v8369, %v8364
    %v8450 = vpack.c.b16 %v8375, %v8370
    %v8451 = vpack.c.b16 %v8376, %v8371
    %v8452 = vpack.c.b16 %v8377, %v8372
    %v8453 = vpack.c.b16 %v8378, %v8373
    %v8454 = vpack.c.b16 %v8379, %v8374
    %v8455 = vpack.c.b16 %v8385, %v8380
    %v8456 = vpack.c.b16 %v8386, %v8381
    %v8457 = vpack.c.b16 %v8387, %v8382
    %v8458 = vpack.c.b16 %v8388, %v8383
    %v8459 = vpack.c.b16 %v8389, %v8384
    %v8460 = vpack.c.b16 %v8395, %v8390
    %v8461 = vpack.c.b16 %v8396, %v8391
    %v8462 = vpack.c.b16 %v8397, %v8392
    %v8463 = vpack.c.b16 %v8398, %v8393
    %v8464 = vpack.c.b16 %v8399, %v8394
    %v8465 = vpack.c.b16 %v8405, %v8400
    %v8466 = vpack.c.b16 %v8406, %v8401
    %v8467 = vpack.c.b16 %v8407, %v8402
    %v8468 = vpack.c.b16 %v8408, %v8403
    %v8469 = vpack.c.b16 %v8409, %v8404
    %v8470 = vpack.c.b16 %v8415, %v8410
    %v8471 = vpack.c.b16 %v8416, %v8411
    %v8472 = vpack.c.b16 %v8417, %v8412
    %v8473 = vpack.c.b16 %v8418, %v8413
    %v8474 = vpack.c.b16 %v8419, %v8414
    %v8475 = vpack.c.b16 %v8425, %v8420
    %v8476 = vpack.c.b16 %v8426, %v8421
    %v8477 = vpack.c.b16 %v8427, %v8422
    %v8478 = vpack.c.b16 %v8428, %v8423
    %v8479 = vpack.c.b16 %v8429, %v8424
    %v8480 = vpack.c.b16 %v8435, %v8430
    %v8481 = vpack.c.b16 %v8436, %v8431
    %v8482 = vpack.c.b16 %v8437, %v8432
    %v8483 = vpack.c.b16 %v8438, %v8433
    %v8484 = vpack.c.b16 %v8439, %v8434
    %v8531 = vsel %vm1005, %v8211, 0
    %8533 = vmatprep.subr.bf16.mxu0 %v8441
    %8534 = vmatpush1.bf16.msra.mxu0 %v8440
    %8535 = vmatprep.subr.bf16.mxu0 %v8446
    %8536 = vmatpush1.bf16.msra.mxu0 %v8445
    %8537 = vmatprep.subr.bf16.mxu0 %v8451
    %8538 = vmatpush1.bf16.msra.mxu0 %v8450
    %8539 = vmatprep.subr.bf16.mxu0 %v8456
    %8540 = vmatpush1.bf16.msra.mxu0 %v8455
    %8541 = vmatprep.subr.bf16.mxu0 %v8461
    %8542 = vmatpush1.bf16.msra.mxu0 %v8460
    %8543 = vmatprep.subr.bf16.mxu0 %v8466
    %8544 = vmatpush1.bf16.msra.mxu0 %v8465
    %8545 = vmatprep.subr.bf16.mxu0 %v8471
    %8546 = vmatpush1.bf16.msra.mxu0 %v8470
    %8547 = vmatprep.subr.bf16.mxu0 %v8476
    %8548 = vmatpush1.bf16.msra.mxu0 %v8475
    %8549 = vmatprep.subr.bf16.mxu0 %v8481
    %8550 = vmatpush1.bf16.msra.mxu0 %v8480
    %8551 = vmatprep.subr.bf16.mxu0 0
    %8552 = vmatpush1.bf16.msra.mxu0 0
    %8553 = vmatprep.subr.bf16.mxu0 0
    %8554 = vmatpush1.bf16.msra.mxu0 0
    %8555 = vmatprep.subr.bf16.mxu0 0
    %8556 = vmatpush1.bf16.msra.mxu0 0
    %8557 = vmatprep.subr.bf16.mxu0 0
    %8558 = vmatpush1.bf16.msra.mxu0 0
    %8559 = vmatprep.subr.bf16.mxu0 0
    %8560 = vmatpush1.bf16.msra.mxu0 0
    %8561 = vmatprep.subr.bf16.mxu0 0
    %8562 = vmatpush1.bf16.msra.mxu0 0
    %8563 = vmatprep.subr.bf16.mxu0 0
    %8564 = vmatpush1.bf16.msra.mxu0 0
    %8565 = vmatprep.mubr.bf16.mxu0 %v8531
    %8566 = vmatmul.mubr.bf16.gmra.mrb[0].mxu0 %v8210
    %v8567 = vpop.f32.mrb[0].mxu0
    %v8568 = vadd.f32 %v8274, %v8567
    %v8569 = vpop.f32.mrb[0].mxu0
    %v8570 = vadd.f32 %v8278, %v8569
    %v8571 = vpop.f32.mrb[0].mxu0
    %v8572 = vpop.f32.mrb[0].mxu0
    %8573 = vdwg.mxu0
    %8574 = vmatprep.subr.bf16.mxu0 %v8443
    %8575 = vmatpush1.bf16.msra.mxu0 %v8442
    %8576 = vmatprep.subr.bf16.mxu0 %v8448
    %8577 = vmatpush1.bf16.msra.mxu0 %v8447
    %8578 = vmatprep.subr.bf16.mxu0 %v8453
    %8579 = vmatpush1.bf16.msra.mxu0 %v8452
    %8580 = vmatprep.subr.bf16.mxu0 %v8458
    %8581 = vmatpush1.bf16.msra.mxu0 %v8457
    %8582 = vmatprep.subr.bf16.mxu0 %v8463
    %8583 = vmatpush1.bf16.msra.mxu0 %v8462
    %8584 = vmatprep.subr.bf16.mxu0 %v8468
    %8585 = vmatpush1.bf16.msra.mxu0 %v8467
    %8586 = vmatprep.subr.bf16.mxu0 %v8473
    %8587 = vmatpush1.bf16.msra.mxu0 %v8472
    %8588 = vmatprep.subr.bf16.mxu0 %v8478
    %8589 = vmatpush1.bf16.msra.mxu0 %v8477
    %8590 = vmatprep.subr.bf16.mxu0 %v8483
    %8591 = vmatpush1.bf16.msra.mxu0 %v8482
    %8592 = vmatprep.subr.bf16.mxu0 0
    %8593 = vmatpush1.bf16.msra.mxu0 0
    %8594 = vmatprep.subr.bf16.mxu0 0
    %8595 = vmatpush1.bf16.msra.mxu0 0
    %8596 = vmatprep.subr.bf16.mxu0 0
    %8597 = vmatpush1.bf16.msra.mxu0 0
    %8598 = vmatprep.subr.bf16.mxu0 0
    %8599 = vmatpush1.bf16.msra.mxu0 0
    %8600 = vmatprep.subr.bf16.mxu0 0
    %8601 = vmatpush1.bf16.msra.mxu0 0
    %8602 = vmatprep.subr.bf16.mxu0 0
    %8603 = vmatpush1.bf16.msra.mxu0 0
    %8604 = vmatprep.subr.bf16.mxu0 0
    %8605 = vmatpush1.bf16.msra.mxu0 0
    %8606 = vmatprep.mubr.bf16.mxu0 %v8531
    %8607 = vmatmul.mubr.bf16.gmra.mrb[0].mxu0 %v8210
    %v8608 = vpop.f32.mrb[0].mxu0
    %v8609 = vadd.f32 %v8282, %v8608
    %v8610 = vpop.f32.mrb[0].mxu0
    %v8611 = vadd.f32 %v8286, %v8610
    %v8612 = vpop.f32.mrb[0].mxu0
    %v8613 = vpop.f32.mrb[0].mxu0
    %8614 = vdwg.mxu0
    %8615 = vmatprep.subr.bf16.mxu0 0
    %8616 = vmatpush1.bf16.msra.mxu0 %v8444
    %8617 = vmatprep.subr.bf16.mxu0 0
    %8618 = vmatpush1.bf16.msra.mxu0 %v8449
    %8619 = vmatprep.subr.bf16.mxu0 0
    %8620 = vmatpush1.bf16.msra.mxu0 %v8454
    %8621 = vmatprep.subr.bf16.mxu0 0
    %8622 = vmatpush1.bf16.msra.mxu0 %v8459
    %8623 = vmatprep.subr.bf16.mxu0 0
    %8624 = vmatpush1.bf16.msra.mxu0 %v8464
    %8625 = vmatprep.subr.bf16.mxu0 0
    %8626 = vmatpush1.bf16.msra.mxu0 %v8469
    %8627 = vmatprep.subr.bf16.mxu0 0
    %8628 = vmatpush1.bf16.msra.mxu0 %v8474
    %8629 = vmatprep.subr.bf16.mxu0 0
    %8630 = vmatpush1.bf16.msra.mxu0 %v8479
    %8631 = vmatprep.subr.bf16.mxu0 0
    %8632 = vmatpush1.bf16.msra.mxu0 %v8484
    %8633 = vmatprep.subr.bf16.mxu0 0
    %8634 = vmatpush1.bf16.msra.mxu0 0
    %8635 = vmatprep.subr.bf16.mxu0 0
    %8636 = vmatpush1.bf16.msra.mxu0 0
    %8637 = vmatprep.subr.bf16.mxu0 0
    %8638 = vmatpush1.bf16.msra.mxu0 0
    %8639 = vmatprep.subr.bf16.mxu0 0
    %8640 = vmatpush1.bf16.msra.mxu0 0
    %8641 = vmatprep.subr.bf16.mxu0 0
    %8642 = vmatpush1.bf16.msra.mxu0 0
    %8643 = vmatprep.subr.bf16.mxu0 0
    %8644 = vmatpush1.bf16.msra.mxu0 0
    %8645 = vmatprep.subr.bf16.mxu0 0
    %8646 = vmatpush1.bf16.msra.mxu0 0
    %8647 = vmatprep.mubr.bf16.mxu0 %v8531
    %8648 = vmatmul.mubr.bf16.gmra.mrb[0].mxu0 %v8210
    %v8649 = vpop.f32.mrb[0].mxu0
    %v8650 = vadd.f32 %v8290, %v8649
    %v8651 = vpop.f32.mrb[0].mxu0
    %v8652 = vpop.f32.mrb[0].mxu0
    %v8653 = vpop.f32.mrb[0].mxu0
    %8654 = vdwg.mxu0
    %v8655 = vadd.f32 %v8568, 3.0
    %v8656 = vadd.f32 %v8570, 3.0
    %v8657 = vadd.f32 %v8609, 3.0
    %v8658 = vadd.f32 %v8611, 3.0
    %v8659 = vadd.f32 %v8650, 3.0
    %v8660 = vmax.f32 %v8655, 0.0
    %v8661 = vmax.f32 %v8656, 0.0
    %v8662 = vmax.f32 %v8657, 0.0
    %v8663 = vmax.f32 %v8658, 0.0
    %v8664 = vmax.f32 %v8659, 0.0
    %v8665 = vmin.f32 %v8660, 6.0
    %v8666 = vmin.f32 %v8661, 6.0
    %v8667 = vmin.f32 %v8662, 6.0
    %v8668 = vmin.f32 %v8663, 6.0
    %v8669 = vmin.f32 %v8664, 6.0
    %v8670 = vmul.f32 %v8665, 0.16666667
    %v8671 = vmul.f32 %v8666, 0.16666667
    %v8672 = vmul.f32 %v8667, 0.16666667
    %v8673 = vmul.f32 %v8668, 0.16666667
    %v8674 = vmul.f32 %v8669, 0.16666667
    %v8675 = vmul.f32 %v7627, %v8670
    %v8676 = vmul.f32 %v7628, %v8671
    %v8677 = vmul.f32 %v7629, %v8672
    %v8678 = vmul.f32 %v7630, %v8673
    %v8679 = vmul.f32 %v7631, %v8674
    %v8680 = vpack.c.bf16 %v8675, %v8675
    %v8681 = vpack.c.bf16 %v8676, %v8676
    %v8682 = vpack.c.bf16 %v8677, %v8677
    %v8683 = vpack.c.bf16 %v8678, %v8678
    %v8684 = vpack.c.bf16 %v8679, %v8679
    %v8685 = vld [vmem:[%s115] sm:$0xf]
    %v8686 = vld [vmem:[%s115 + $0x4] sm:$0xf]
    %v8687 = vld [vmem:[%s115 + $0x8] sm:$0xf]
    %v8688 = vld [vmem:[%s115 + $0xc] sm:$0xf]
    %v8689 = vld [vmem:[%s115 + $0x10] sm:$0xf]
    %v8690 = vld [vmem:[%s115 + $0x14] sm:$0xf]
    %v8691 = vld [vmem:[%s115 + $0x18] sm:$0xf]
    %v8692 = vld [vmem:[%s115 + $0x1c] sm:$0xf]
    %v8693 = vld [vmem:[%s115 + $0x20] sm:$0xf]
    %v8694 = vld [vmem:[%s115 + $0x24] sm:$0xf]
    %v8695 = vld [vmem:[%s115 + $0x28] sm:$0xf]
    %v8696 = vld [vmem:[%s115 + $0x2c] sm:$0xf]
    %v8697 = vld [vmem:[%s115 + $0x30] sm:$0xf]
    %v8698 = vld [vmem:[%s115 + $0x34] sm:$0xf]
    %v8699 = vld [vmem:[%s115 + $0x38] sm:$0xf]
    %v8700 = vld [vmem:[%s115 + $0x3c] sm:$0xf]
    %v8701 = vld [vmem:[%s115 + $0x40] sm:$0xf]
    %v8702 = vld [vmem:[%s115 + $0x44] sm:$0xf]
    %v8703 = vld [vmem:[%s115 + $0x48] sm:$0xf]
    %v8704 = vld [vmem:[%s115 + $0x4c] sm:$0xf]
    %v8705 = vld [vmem:[%s115 + $0x50] sm:$0xf]
    %v8706 = vld [vmem:[%s115 + $0x54] sm:$0xf]
    %v8707 = vld [vmem:[%s115 + $0x58] sm:$0xf]
    %v8708 = vld [vmem:[%s115 + $0x5c] sm:$0xf]
    %v8709 = vld [vmem:[%s115 + $0x60] sm:$0xf]
    %v8710 = vld [vmem:[%s115 + $0x64] sm:$0xf]
    %v8711 = vld [vmem:[%s115 + $0x68] sm:$0xf]
    %v8712 = vld [vmem:[%s115 + $0x6c] sm:$0xf]
    %v8713 = vld [vmem:[%s115 + $0x70] sm:$0xf]
    %v8714 = vld [vmem:[%s115 + $0x74] sm:$0xf]
    %v8715 = vld [vmem:[%s115 + $0x78] sm:$0xf]
    %v8716 = vld [vmem:[%s115 + $0x7c] sm:$0xf]
    %v8717 = vld [vmem:[%s115 + $0x80] sm:$0xf]
    %v8718 = vld [vmem:[%s115 + $0x84] sm:$0xf]
    %v8719 = vld [vmem:[%s115 + $0x88] sm:$0xf]
    %v8720 = vld [vmem:[%s115 + $0x8c] sm:$0xf]
    %v8721 = vld [vmem:[%s115 + $0x90] sm:$0xf]
    %v8722 = vld [vmem:[%s115 + $0x94] sm:$0xf]
    %v8723 = vld [vmem:[%s115 + $0x98] sm:$0xf]
    %v8724 = vld [vmem:[%s115 + $0x9c] sm:$0xf]
    %v8725 = vld [vmem:[%s115 + $0xa0] sm:$0xf]
    %v8726 = vld [vmem:[%s115 + $0xa4] sm:$0xf]
    %v8727 = vld [vmem:[%s115 + $0xa8] sm:$0xf]
    %v8728 = vld [vmem:[%s115 + $0xac] sm:$0xf]
    %v8729 = vld [vmem:[%s115 + $0xb0] sm:$0xf]
    %v8730 = vld [vmem:[%s115 + $0xb4] sm:$0xf]
    %v8731 = vld [vmem:[%s115 + $0xb8] sm:$0xf]
    %v8732 = vld [vmem:[%s115 + $0xbc] sm:$0xf]
    %v8733 = vld [vmem:[%s115 + $0xc0] sm:$0xf]
    %v8734 = vld [vmem:[%s115 + $0xc4] sm:$0xf]
    %v8735 = vld [vmem:[%s115 + $0xc8] sm:$0xf]
    %v8736 = vld [vmem:[%s115 + $0xcc] sm:$0xf]
    %v8737 = vld [vmem:[%s115 + $0xd0] sm:$0xf]
    %v8738 = vld [vmem:[%s115 + $0xd4] sm:$0xf]
    %v8739 = vld [vmem:[%s115 + $0xd8] sm:$0xf]
    %v8740 = vld [vmem:[%s115 + $0xdc] sm:$0xf]
    %v8741 = vld [vmem:[%s115 + $0xe0] sm:$0xf]
    %v8742 = vld [vmem:[%s115 + $0xe4] sm:$0xf]
    %v8743 = vld [vmem:[%s115 + $0xe8] sm:$0xf]
    %v8744 = vld [vmem:[%s115 + $0xec] sm:$0xf]
    %v8745 = vld [vmem:[%s115 + $0xf0] sm:$0xf]
    %v8746 = vld [vmem:[%s115 + $0xf4] sm:$0xf]
    %v8747 = vld [vmem:[%s115 + $0xf8] sm:$0xf]
    %v8748 = vld [vmem:[%s115 + $0xfc] sm:$0xf]
    %v8749 = vld [vmem:[%s115 + $0x100] sm:$0xf]
    %v8750 = vld [vmem:[%s115 + $0x104] sm:$0xf]
    %v8751 = vld [vmem:[%s115 + $0x108] sm:$0xf]
    %v8752 = vld [vmem:[%s115 + $0x10c] sm:$0xf]
    %v8753 = vld [vmem:[%s115 + $0x110] sm:$0xf]
    %v8754 = vld [vmem:[%s115 + $0x114] sm:$0xf]
    %v8755 = vld [vmem:[%s115 + $0x118] sm:$0xf]
    %v8756 = vld [vmem:[%s115 + $0x11c] sm:$0xf]
    %v8757 = vld [vmem:[%s1 + $0xf2] ss:$0 sm:$0xff]
    %v8830 = vunpack.c.l.b16 %v8685
    %v8831 = vunpack.c.l.b16 %v8686
    %v8832 = vunpack.c.l.b16 %v8687
    %v8833 = vunpack.c.l.b16 %v8688
    %v8834 = vunpack.c.l.b16 %v8689
    %v8835 = vunpack.c.l.b16 %v8690
    %v8836 = vunpack.c.l.b16 %v8691
    %v8837 = vunpack.c.l.b16 %v8692
    %v8838 = vunpack.c.l.b16 %v8693
    %v8839 = vunpack.c.l.b16 %v8694
    %v8840 = vunpack.c.l.b16 %v8695
    %v8841 = vunpack.c.l.b16 %v8696
    %v8842 = vunpack.c.l.b16 %v8697
    %v8843 = vunpack.c.l.b16 %v8698
    %v8844 = vunpack.c.l.b16 %v8699
    %v8845 = vunpack.c.l.b16 %v8700
    %v8846 = vunpack.c.l.b16 %v8701
    %v8847 = vunpack.c.l.b16 %v8702
    %v8848 = vunpack.c.l.b16 %v8703
    %v8849 = vunpack.c.l.b16 %v8704
    %v8850 = vunpack.c.l.b16 %v8705
    %v8851 = vunpack.c.l.b16 %v8706
    %v8852 = vunpack.c.l.b16 %v8707
    %v8853 = vunpack.c.l.b16 %v8708
    %v8854 = vunpack.c.l.b16 %v8709
    %v8855 = vunpack.c.l.b16 %v8710
    %v8856 = vunpack.c.l.b16 %v8711
    %v8857 = vunpack.c.l.b16 %v8712
    %v8858 = vunpack.c.l.b16 %v8713
    %v8859 = vunpack.c.l.b16 %v8714
    %v8860 = vunpack.c.l.b16 %v8715
    %v8861 = vunpack.c.l.b16 %v8716
    %v8862 = vunpack.c.l.b16 %v8717
    %v8863 = vunpack.c.l.b16 %v8718
    %v8864 = vunpack.c.l.b16 %v8719
    %v8865 = vunpack.c.l.b16 %v8720
    %v8866 = vunpack.c.l.b16 %v8721
    %v8867 = vunpack.c.l.b16 %v8722
    %v8868 = vunpack.c.l.b16 %v8723
    %v8869 = vunpack.c.l.b16 %v8724
    %v8870 = vunpack.c.l.b16 %v8725
    %v8871 = vunpack.c.l.b16 %v8726
    %v8872 = vunpack.c.l.b16 %v8727
    %v8873 = vunpack.c.l.b16 %v8728
    %v8874 = vunpack.c.l.b16 %v8729
    %v8875 = vunpack.c.l.b16 %v8730
    %v8876 = vunpack.c.l.b16 %v8731
    %v8877 = vunpack.c.l.b16 %v8732
    %v8878 = vunpack.c.l.b16 %v8733
    %v8879 = vunpack.c.l.b16 %v8734
    %v8880 = vunpack.c.l.b16 %v8735
    %v8881 = vunpack.c.l.b16 %v8736
    %v8882 = vunpack.c.l.b16 %v8737
    %v8883 = vunpack.c.l.b16 %v8738
    %v8884 = vunpack.c.l.b16 %v8739
    %v8885 = vunpack.c.l.b16 %v8740
    %v8886 = vunpack.c.l.b16 %v8741
    %v8887 = vunpack.c.l.b16 %v8742
    %v8888 = vunpack.c.l.b16 %v8743
    %v8889 = vunpack.c.l.b16 %v8744
    %v8890 = vunpack.c.l.b16 %v8745
    %v8891 = vunpack.c.l.b16 %v8746
    %v8892 = vunpack.c.l.b16 %v8747
    %v8893 = vunpack.c.l.b16 %v8748
    %v8894 = vunpack.c.l.b16 %v8749
    %v8895 = vunpack.c.l.b16 %v8750
    %v8896 = vunpack.c.l.b16 %v8751
    %v8897 = vunpack.c.l.b16 %v8752
    %v8898 = vunpack.c.l.b16 %v8753
    %v8899 = vunpack.c.l.b16 %v8754
    %v8900 = vunpack.c.l.b16 %v8755
    %v8901 = vunpack.c.l.b16 %v8756
    %v8902 = vpack.c.b16 %v8831, %v8830
    %v8903 = vpack.c.b16 %v8833, %v8832
    %v8904 = vpack.c.b16 %v8835, %v8834
    %v8905 = vpack.c.b16 %v8837, %v8836
    %v8906 = vpack.c.b16 %v8839, %v8838
    %v8907 = vpack.c.b16 %v8841, %v8840
    %v8908 = vpack.c.b16 %v8843, %v8842
    %v8909 = vpack.c.b16 %v8845, %v8844
    %v8910 = vpack.c.b16 %v8847, %v8846
    %v8911 = vpack.c.b16 %v8849, %v8848
    %v8912 = vpack.c.b16 %v8851, %v8850
    %v8913 = vpack.c.b16 %v8853, %v8852
    %v8914 = vpack.c.b16 %v8855, %v8854
    %v8915 = vpack.c.b16 %v8857, %v8856
    %v8916 = vpack.c.b16 %v8859, %v8858
    %v8917 = vpack.c.b16 %v8861, %v8860
    %v8918 = vpack.c.b16 %v8863, %v8862
    %v8919 = vpack.c.b16 %v8865, %v8864
    %v8920 = vpack.c.b16 %v8867, %v8866
    %v8921 = vpack.c.b16 %v8869, %v8868
    %v8922 = vpack.c.b16 %v8871, %v8870
    %v8923 = vpack.c.b16 %v8873, %v8872
    %v8924 = vpack.c.b16 %v8875, %v8874
    %v8925 = vpack.c.b16 %v8877, %v8876
    %v8926 = vpack.c.b16 %v8879, %v8878
    %v8927 = vpack.c.b16 %v8881, %v8880
    %v8928 = vpack.c.b16 %v8883, %v8882
    %v8929 = vpack.c.b16 %v8885, %v8884
    %v8930 = vpack.c.b16 %v8887, %v8886
    %v8931 = vpack.c.b16 %v8889, %v8888
    %v8932 = vpack.c.b16 %v8891, %v8890
    %v8933 = vpack.c.b16 %v8893, %v8892
    %v8934 = vpack.c.b16 %v8895, %v8894
    %v8935 = vpack.c.b16 %v8897, %v8896
    %v8936 = vpack.c.b16 %v8899, %v8898
    %v8937 = vpack.c.b16 %v8901, %v8900
    %v8975 = vsel %vm2659, %v8684, 0
    %8977 = vmatprep.subr.bf16.mxu0 0
    %8978 = vmatpush1.bf16.msra.mxu0 %v8902
    %8979 = vmatprep.subr.bf16.mxu0 0
    %8980 = vmatpush1.bf16.msra.mxu0 %v8903
    %8981 = vmatprep.subr.bf16.mxu0 0
    %8982 = vmatpush1.bf16.msra.mxu0 %v8904
    %8983 = vmatprep.subr.bf16.mxu0 0
    %8984 = vmatpush1.bf16.msra.mxu0 %v8905
    %8985 = vmatprep.subr.bf16.mxu0 0
    %8986 = vmatpush1.bf16.msra.mxu0 %v8906
    %8987 = vmatprep.subr.bf16.mxu0 0
    %8988 = vmatpush1.bf16.msra.mxu0 %v8907
    %8989 = vmatprep.subr.bf16.mxu0 0
    %8990 = vmatpush1.bf16.msra.mxu0 %v8908
    %8991 = vmatprep.subr.bf16.mxu0 0
    %8992 = vmatpush1.bf16.msra.mxu0 %v8909
    %8993 = vmatprep.subr.bf16.mxu0 0
    %8994 = vmatpush1.bf16.msra.mxu0 %v8910
    %8995 = vmatprep.subr.bf16.mxu0 0
    %8996 = vmatpush1.bf16.msra.mxu0 %v8911
    %8997 = vmatprep.subr.bf16.mxu0 0
    %8998 = vmatpush1.bf16.msra.mxu0 %v8912
    %8999 = vmatprep.subr.bf16.mxu0 0
    %9000 = vmatpush1.bf16.msra.mxu0 %v8913
    %9001 = vmatprep.subr.bf16.mxu0 0
    %9002 = vmatpush1.bf16.msra.mxu0 %v8914
    %9003 = vmatprep.subr.bf16.mxu0 0
    %9004 = vmatpush1.bf16.msra.mxu0 %v8915
    %9005 = vmatprep.subr.bf16.mxu0 0
    %9006 = vmatpush1.bf16.msra.mxu0 %v8916
    %9007 = vmatprep.subr.bf16.mxu0 0
    %9008 = vmatpush1.bf16.msra.mxu0 %v8917
    %9009 = vmatprep.mubr.bf16.mxu0 %v8681
    %9010 = vmatmul.mubr.bf16.gmra.mrb[0].mxu0 %v8680
    %v9011 = vpop.f32.mrb[0].mxu0
    %v9012 = vadd.f32 %v8757, %v9011
    %v9013 = vpop.f32.mrb[0].mxu0
    %v9014 = vpop.f32.mrb[0].mxu0
    %v9015 = vpop.f32.mrb[0].mxu0
    %9016 = vdwg.mxu0
    %9017 = vmatprep.subr.bf16.mxu0 0
    %9018 = vmatpush1.bf16.msra.mxu0 %v8918
    %9019 = vmatprep.subr.bf16.mxu0 0
    %9020 = vmatpush1.bf16.msra.mxu0 %v8919
    %9021 = vmatprep.subr.bf16.mxu0 0
    %9022 = vmatpush1.bf16.msra.mxu0 %v8920
    %9023 = vmatprep.subr.bf16.mxu0 0
    %9024 = vmatpush1.bf16.msra.mxu0 %v8921
    %9025 = vmatprep.subr.bf16.mxu0 0
    %9026 = vmatpush1.bf16.msra.mxu0 %v8922
    %9027 = vmatprep.subr.bf16.mxu0 0
    %9028 = vmatpush1.bf16.msra.mxu0 %v8923
    %9029 = vmatprep.subr.bf16.mxu0 0
    %9030 = vmatpush1.bf16.msra.mxu0 %v8924
    %9031 = vmatprep.subr.bf16.mxu0 0
    %9032 = vmatpush1.bf16.msra.mxu0 %v8925
    %9033 = vmatprep.subr.bf16.mxu0 0
    %9034 = vmatpush1.bf16.msra.mxu0 %v8926
    %9035 = vmatprep.subr.bf16.mxu0 0
    %9036 = vmatpush1.bf16.msra.mxu0 %v8927
    %9037 = vmatprep.subr.bf16.mxu0 0
    %9038 = vmatpush1.bf16.msra.mxu0 %v8928
    %9039 = vmatprep.subr.bf16.mxu0 0
    %9040 = vmatpush1.bf16.msra.mxu0 %v8929
    %9041 = vmatprep.subr.bf16.mxu0 0
    %9042 = vmatpush1.bf16.msra.mxu0 %v8930
    %9043 = vmatprep.subr.bf16.mxu0 0
    %9044 = vmatpush1.bf16.msra.mxu0 %v8931
    %9045 = vmatprep.subr.bf16.mxu0 0
    %9046 = vmatpush1.bf16.msra.mxu0 %v8932
    %9047 = vmatprep.subr.bf16.mxu0 0
    %9048 = vmatpush1.bf16.msra.mxu0 %v8933
    %9049 = vmatprep.mubr.bf16.mxu0 %v8683
    %9050 = vmatmul.mubr.bf16.gmra.mrb[0].mxu0 %v8682
    %v9051 = vpop.f32.mrb[0].mxu0
    %v9052 = vadd.f32 %v9012, %v9051
    %v9053 = vpop.f32.mrb[0].mxu0
    %v9054 = vpop.f32.mrb[0].mxu0
    %v9055 = vpop.f32.mrb[0].mxu0
    %9056 = vdwg.mxu0
    %9057 = vmatprep.subr.bf16.mxu0 0
    %9058 = vmatpush1.bf16.msra.mxu0 %v8934
    %9059 = vmatprep.subr.bf16.mxu0 0
    %9060 = vmatpush1.bf16.msra.mxu0 %v8935
    %9061 = vmatprep.subr.bf16.mxu0 0
    %9062 = vmatpush1.bf16.msra.mxu0 %v8936
    %9063 = vmatprep.subr.bf16.mxu0 0
    %9064 = vmatpush1.bf16.msra.mxu0 %v8937
    %9065 = vmatprep.subr.bf16.mxu0 0
    %9066 = vmatpush1.bf16.msra.mxu0 0
    %9067 = vmatprep.subr.bf16.mxu0 0
    %9068 = vmatpush1.bf16.msra.mxu0 0
    %9069 = vmatprep.subr.bf16.mxu0 0
    %9070 = vmatpush1.bf16.msra.mxu0 0
    %9071 = vmatprep.subr.bf16.mxu0 0
    %9072 = vmatpush1.bf16.msra.mxu0 0
    %9073 = vmatprep.subr.bf16.mxu0 0
    %9074 = vmatpush1.bf16.msra.mxu0 0
    %9075 = vmatprep.subr.bf16.mxu0 0
    %9076 = vmatpush1.bf16.msra.mxu0 0
    %9077 = vmatprep.subr.bf16.mxu0 0
    %9078 = vmatpush1.bf16.msra.mxu0 0
    %9079 = vmatprep.subr.bf16.mxu0 0
    %9080 = vmatpush1.bf16.msra.mxu0 0
    %9081 = vmatprep.subr.bf16.mxu0 0
    %9082 = vmatpush1.bf16.msra.mxu0 0
    %9083 = vmatprep.subr.bf16.mxu0 0
    %9084 = vmatpush1.bf16.msra.mxu0 0
    %9085 = vmatprep.subr.bf16.mxu0 0
    %9086 = vmatpush1.bf16.msra.mxu0 0
    %9087 = vmatprep.subr.bf16.mxu0 0
    %9088 = vmatpush1.bf16.msra.mxu0 0
    %9089 = vmatprep.mubr.bf16.mxu0 0
    %9090 = vmatmul.mubr.bf16.gmra.mrb[0].mxu0 %v8975
    %v9091 = vpop.f32.mrb[0].mxu0
    %v9092 = vadd.f32 %v9052, %v9091
    %v9093 = vpop.f32.mrb[0].mxu0
    %v9094 = vpop.f32.mrb[0].mxu0
    %v9095 = vpop.f32.mrb[0].mxu0
    %9096 = vdwg.mxu0
    %v9097 = vadd.f32 %v9092, %v7168
    %v9098 = vpack.c.bf16 %v9097, %v9097
    %v9099 = vld [vmem:[%s117] sm:$0xff]
    %v9100 = vld [vmem:[%s117 + $0x8] sm:$0xff]
    %v9101 = vld [vmem:[%s117 + $0x10] sm:$0xf]
    %v9102 = vld [vmem:[%s117 + $0x14] sm:$0xff]
    %v9103 = vld [vmem:[%s117 + $0x1c] sm:$0xff]
    %v9104 = vld [vmem:[%s117 + $0x24] sm:$0xf]
    %v9105 = vld [vmem:[%s117 + $0x28] sm:$0xff]
    %v9106 = vld [vmem:[%s117 + $0x30] sm:$0xff]
    %v9107 = vld [vmem:[%s117 + $0x38] sm:$0xf]
    %v9108 = vld [vmem:[%s117 + $0x3c] sm:$0xff]
    %v9109 = vld [vmem:[%s117 + $0x44] sm:$0xff]
    %v9110 = vld [vmem:[%s117 + $0x4c] sm:$0xf]
    %v9111 = vld [vmem:[%s117 + $0x50] sm:$0xff]
    %v9112 = vld [vmem:[%s117 + $0x58] sm:$0xff]
    %v9113 = vld [vmem:[%s117 + $0x60] sm:$0xf]
    %v9114 = vld [vmem:[%s117 + $0x64] sm:$0xff]
    %v9115 = vld [vmem:[%s117 + $0x6c] sm:$0xff]
    %v9116 = vld [vmem:[%s117 + $0x74] sm:$0xf]
    %v9117 = vld [vmem:[%s117 + $0x78] sm:$0xff]
    %v9118 = vld [vmem:[%s117 + $0x80] sm:$0xff]
    %v9119 = vld [vmem:[%s117 + $0x88] sm:$0xf]
    %v9120 = vld [vmem:[%s117 + $0x8c] sm:$0xff]
    %v9121 = vld [vmem:[%s117 + $0x94] sm:$0xff]
    %v9122 = vld [vmem:[%s117 + $0x9c] sm:$0xf]
    %v9123 = vld [vmem:[%s117 + $0xa0] sm:$0xff]
    %v9124 = vld [vmem:[%s117 + $0xa8] sm:$0xff]
    %v9125 = vld [vmem:[%s117 + $0xb0] sm:$0xf]
    %v9126 = vld [vmem:[%s117 + $0xb4] sm:$0xff]
    %v9127 = vld [vmem:[%s117 + $0xbc] sm:$0xff]
    %v9128 = vld [vmem:[%s117 + $0xc4] sm:$0xf]
    %v9129 = vld [vmem:[%s117 + $0xc8] sm:$0xff]
    %v9130 = vld [vmem:[%s117 + $0xd0] sm:$0xff]
    %v9131 = vld [vmem:[%s117 + $0xd8] sm:$0xf]
    %v9132 = vld [vmem:[%s117 + $0xdc] sm:$0xff]
    %v9133 = vld [vmem:[%s117 + $0xe4] sm:$0xff]
    %v9134 = vld [vmem:[%s117 + $0xec] sm:$0xf]
    %s9135 = scalar_lea.vmem %s1, 243
    %v9136 = vld [vmem:[%s9135] ss:$8 sm:$0xf]
    %v9137 = vld [vmem:[%s9135] ss:$8 sm:$0x10]
    %v9138 = vor.u32 %v9136, %v9137
    %v9140 = vlaneseq
    %v9141 = vshrl.u32 %v9140, 7
    %v9142 = vsub.s32 0, %v9141
    %v9143 = vrot.slane %v9138, %v9142
    %v9144 = vlaneseq
    %v9145 = vshrl.u32 %v9144, 7
    %v9146 = vsub.s32 1, %v9145
    %v9147 = vrot.slane %v9138, %v9146
    %v9148 = vlaneseq
    %v9149 = vshrl.u32 %v9148, 7
    %v9150 = vsub.s32 2, %v9149
    %v9151 = vrot.slane %v9138, %v9150
    %v9152 = vlaneseq
    %v9153 = vshrl.u32 %v9152, 7
    %v9154 = vsub.s32 3, %v9153
    %v9155 = vrot.slane %v9138, %v9154
    %v9156 = vlaneseq
    %v9157 = vshrl.u32 %v9156, 7
    %v9158 = vsub.s32 4, %v9157
    %v9159 = vrot.slane %v9138, %v9158
    %v9201 = vunpack.c.l.b16 %v9099
    %v9202 = vunpack.c.h.b16 %v9099
    %v9203 = vunpack.c.l.b16 %v9100
    %v9204 = vunpack.c.h.b16 %v9100
    %v9205 = vunpack.c.l.b16 %v9101
    %v9206 = vunpack.c.l.b16 %v9102
    %v9207 = vunpack.c.h.b16 %v9102
    %v9208 = vunpack.c.l.b16 %v9103
    %v9209 = vunpack.c.h.b16 %v9103
    %v9210 = vunpack.c.l.b16 %v9104
    %v9211 = vunpack.c.l.b16 %v9105
    %v9212 = vunpack.c.h.b16 %v9105
    %v9213 = vunpack.c.l.b16 %v9106
    %v9214 = vunpack.c.h.b16 %v9106
    %v9215 = vunpack.c.l.b16 %v9107
    %v9216 = vunpack.c.l.b16 %v9108
    %v9217 = vunpack.c.h.b16 %v9108
    %v9218 = vunpack.c.l.b16 %v9109
    %v9219 = vunpack.c.h.b16 %v9109
    %v9220 = vunpack.c.l.b16 %v9110
    %v9221 = vunpack.c.l.b16 %v9111
    %v9222 = vunpack.c.h.b16 %v9111
    %v9223 = vunpack.c.l.b16 %v9112
    %v9224 = vunpack.c.h.b16 %v9112
    %v9225 = vunpack.c.l.b16 %v9113
    %v9226 = vunpack.c.l.b16 %v9114
    %v9227 = vunpack.c.h.b16 %v9114
    %v9228 = vunpack.c.l.b16 %v9115
    %v9229 = vunpack.c.h.b16 %v9115
    %v9230 = vunpack.c.l.b16 %v9116
    %v9231 = vunpack.c.l.b16 %v9117
    %v9232 = vunpack.c.h.b16 %v9117
    %v9233 = vunpack.c.l.b16 %v9118
    %v9234 = vunpack.c.h.b16 %v9118
    %v9235 = vunpack.c.l.b16 %v9119
    %v9236 = vunpack.c.l.b16 %v9120
    %v9237 = vunpack.c.h.b16 %v9120
    %v9238 = vunpack.c.l.b16 %v9121
    %v9239 = vunpack.c.h.b16 %v9121
    %v9240 = vunpack.c.l.b16 %v9122
    %v9241 = vunpack.c.l.b16 %v9123
    %v9242 = vunpack.c.h.b16 %v9123
    %v9243 = vunpack.c.l.b16 %v9124
    %v9244 = vunpack.c.h.b16 %v9124
    %v9245 = vunpack.c.l.b16 %v9125
    %v9246 = vunpack.c.l.b16 %v9126
    %v9247 = vunpack.c.h.b16 %v9126
    %v9248 = vunpack.c.l.b16 %v9127
    %v9249 = vunpack.c.h.b16 %v9127
    %v9250 = vunpack.c.l.b16 %v9128
    %v9251 = vunpack.c.l.b16 %v9129
    %v9252 = vunpack.c.h.b16 %v9129
    %v9253 = vunpack.c.l.b16 %v9130
    %v9254 = vunpack.c.h.b16 %v9130
    %v9255 = vunpack.c.l.b16 %v9131
    %v9256 = vunpack.c.l.b16 %v9132
    %v9257 = vunpack.c.h.b16 %v9132
    %v9258 = vunpack.c.l.b16 %v9133
    %v9259 = vunpack.c.h.b16 %v9133
    %v9260 = vunpack.c.l.b16 %v9134
    %v9261 = vpack.c.b16 %v9206, %v9201
    %v9262 = vpack.c.b16 %v9207, %v9202
    %v9263 = vpack.c.b16 %v9208, %v9203
    %v9264 = vpack.c.b16 %v9209, %v9204
    %v9265 = vpack.c.b16 %v9210, %v9205
    %v9266 = vpack.c.b16 %v9216, %v9211
    %v9267 = vpack.c.b16 %v9217, %v9212
    %v9268 = vpack.c.b16 %v9218, %v9213
    %v9269 = vpack.c.b16 %v9219, %v9214
    %v9270 = vpack.c.b16 %v9220, %v9215
    %v9271 = vpack.c.b16 %v9226, %v9221
    %v9272 = vpack.c.b16 %v9227, %v9222
    %v9273 = vpack.c.b16 %v9228, %v9223
    %v9274 = vpack.c.b16 %v9229, %v9224
    %v9275 = vpack.c.b16 %v9230, %v9225
    %v9276 = vpack.c.b16 %v9236, %v9231
    %v9277 = vpack.c.b16 %v9237, %v9232
    %v9278 = vpack.c.b16 %v9238, %v9233
    %v9279 = vpack.c.b16 %v9239, %v9234
    %v9280 = vpack.c.b16 %v9240, %v9235
    %v9281 = vpack.c.b16 %v9246, %v9241
    %v9282 = vpack.c.b16 %v9247, %v9242
    %v9283 = vpack.c.b16 %v9248, %v9243
    %v9284 = vpack.c.b16 %v9249, %v9244
    %v9285 = vpack.c.b16 %v9250, %v9245
    %v9286 = vpack.c.b16 %v9256, %v9251
    %v9287 = vpack.c.b16 %v9257, %v9252
    %v9288 = vpack.c.b16 %v9258, %v9253
    %v9289 = vpack.c.b16 %v9259, %v9254
    %v9290 = vpack.c.b16 %v9260, %v9255
    %v9322 = vsel %vm2084, %v9098, 0
    %9324 = vmatprep.subr.bf16.mxu0 %v9262
    %9325 = vmatpush1.bf16.msra.mxu0 %v9261
    %9326 = vmatprep.subr.bf16.mxu0 %v9267
    %9327 = vmatpush1.bf16.msra.mxu0 %v9266
    %9328 = vmatprep.subr.bf16.mxu0 %v9272
    %9329 = vmatpush1.bf16.msra.mxu0 %v9271
    %9330 = vmatprep.subr.bf16.mxu0 %v9277
    %9331 = vmatpush1.bf16.msra.mxu0 %v9276
    %9332 = vmatprep.subr.bf16.mxu0 %v9282
    %9333 = vmatpush1.bf16.msra.mxu0 %v9281
    %9334 = vmatprep.subr.bf16.mxu0 %v9287
    %9335 = vmatpush1.bf16.msra.mxu0 %v9286
    %9336 = vmatprep.subr.bf16.mxu0 0
    %9337 = vmatpush1.bf16.msra.mxu0 0
    %9338 = vmatprep.subr.bf16.mxu0 0
    %9339 = vmatpush1.bf16.msra.mxu0 0
    %9340 = vmatprep.subr.bf16.mxu0 0
    %9341 = vmatpush1.bf16.msra.mxu0 0
    %9342 = vmatprep.subr.bf16.mxu0 0
    %9343 = vmatpush1.bf16.msra.mxu0 0
    %9344 = vmatprep.subr.bf16.mxu0 0
    %9345 = vmatpush1.bf16.msra.mxu0 0
    %9346 = vmatprep.subr.bf16.mxu0 0
    %9347 = vmatpush1.bf16.msra.mxu0 0
    %9348 = vmatprep.subr.bf16.mxu0 0
    %9349 = vmatpush1.bf16.msra.mxu0 0
    %9350 = vmatprep.subr.bf16.mxu0 0
    %9351 = vmatpush1.bf16.msra.mxu0 0
    %9352 = vmatprep.subr.bf16.mxu0 0
    %9353 = vmatpush1.bf16.msra.mxu0 0
    %9354 = vmatprep.subr.bf16.mxu0 0
    %9355 = vmatpush1.bf16.msra.mxu0 0
    %9356 = vmatprep.mubr.bf16.mxu0 0
    %9357 = vmatmul.mubr.bf16.gmra.mrb[0].mxu0 %v9322
    %v9358 = vpop.f32.mrb[0].mxu0
    %v9359 = vadd.f32 %v9143, %v9358
    %v9360 = vpop.f32.mrb[0].mxu0
    %v9361 = vadd.f32 %v9147, %v9360
    %v9362 = vpop.f32.mrb[0].mxu0
    %v9363 = vpop.f32.mrb[0].mxu0
    %9364 = vdwg.mxu0
    %9365 = vmatprep.subr.bf16.mxu0 %v9264
    %9366 = vmatpush1.bf16.msra.mxu0 %v9263
    %9367 = vmatprep.subr.bf16.mxu0 %v9269
    %9368 = vmatpush1.bf16.msra.mxu0 %v9268
    %9369 = vmatprep.subr.bf16.mxu0 %v9274
    %9370 = vmatpush1.bf16.msra.mxu0 %v9273
    %9371 = vmatprep.subr.bf16.mxu0 %v9279
    %9372 = vmatpush1.bf16.msra.mxu0 %v9278
    %9373 = vmatprep.subr.bf16.mxu0 %v9284
    %9374 = vmatpush1.bf16.msra.mxu0 %v9283
    %9375 = vmatprep.subr.bf16.mxu0 %v9289
    %9376 = vmatpush1.bf16.msra.mxu0 %v9288
    %9377 = vmatprep.subr.bf16.mxu0 0
    %9378 = vmatpush1.bf16.msra.mxu0 0
    %9379 = vmatprep.subr.bf16.mxu0 0
    %9380 = vmatpush1.bf16.msra.mxu0 0
    %9381 = vmatprep.subr.bf16.mxu0 0
    %9382 = vmatpush1.bf16.msra.mxu0 0
    %9383 = vmatprep.subr.bf16.mxu0 0
    %9384 = vmatpush1.bf16.msra.mxu0 0
    %9385 = vmatprep.subr.bf16.mxu0 0
    %9386 = vmatpush1.bf16.msra.mxu0 0
    %9387 = vmatprep.subr.bf16.mxu0 0
    %9388 = vmatpush1.bf16.msra.mxu0 0
    %9389 = vmatprep.subr.bf16.mxu0 0
    %9390 = vmatpush1.bf16.msra.mxu0 0
    %9391 = vmatprep.subr.bf16.mxu0 0
    %9392 = vmatpush1.bf16.msra.mxu0 0
    %9393 = vmatprep.subr.bf16.mxu0 0
    %9394 = vmatpush1.bf16.msra.mxu0 0
    %9395 = vmatprep.subr.bf16.mxu0 0
    %9396 = vmatpush1.bf16.msra.mxu0 0
    %9397 = vmatprep.mubr.bf16.mxu0 0
    %9398 = vmatmul.mubr.bf16.gmra.mrb[0].mxu0 %v9322
    %v9399 = vpop.f32.mrb[0].mxu0
    %v9400 = vadd.f32 %v9151, %v9399
    %v9401 = vpop.f32.mrb[0].mxu0
    %v9402 = vadd.f32 %v9155, %v9401
    %v9403 = vpop.f32.mrb[0].mxu0
    %v9404 = vpop.f32.mrb[0].mxu0
    %9405 = vdwg.mxu0
    %9406 = vmatprep.subr.bf16.mxu0 0
    %9407 = vmatpush1.bf16.msra.mxu0 %v9265
    %9408 = vmatprep.subr.bf16.mxu0 0
    %9409 = vmatpush1.bf16.msra.mxu0 %v9270
    %9410 = vmatprep.subr.bf16.mxu0 0
    %9411 = vmatpush1.bf16.msra.mxu0 %v9275
    %9412 = vmatprep.subr.bf16.mxu0 0
    %9413 = vmatpush1.bf16.msra.mxu0 %v9280
    %9414 = vmatprep.subr.bf16.mxu0 0
    %9415 = vmatpush1.bf16.msra.mxu0 %v9285
    %9416 = vmatprep.subr.bf16.mxu0 0
    %9417 = vmatpush1.bf16.msra.mxu0 %v9290
    %9418 = vmatprep.subr.bf16.mxu0 0
    %9419 = vmatpush1.bf16.msra.mxu0 0
    %9420 = vmatprep.subr.bf16.mxu0 0
    %9421 = vmatpush1.bf16.msra.mxu0 0
    %9422 = vmatprep.subr.bf16.mxu0 0
    %9423 = vmatpush1.bf16.msra.mxu0 0
    %9424 = vmatprep.subr.bf16.mxu0 0
    %9425 = vmatpush1.bf16.msra.mxu0 0
    %9426 = vmatprep.subr.bf16.mxu0 0
    %9427 = vmatpush1.bf16.msra.mxu0 0
    %9428 = vmatprep.subr.bf16.mxu0 0
    %9429 = vmatpush1.bf16.msra.mxu0 0
    %9430 = vmatprep.subr.bf16.mxu0 0
    %9431 = vmatpush1.bf16.msra.mxu0 0
    %9432 = vmatprep.subr.bf16.mxu0 0
    %9433 = vmatpush1.bf16.msra.mxu0 0
    %9434 = vmatprep.subr.bf16.mxu0 0
    %9435 = vmatpush1.bf16.msra.mxu0 0
    %9436 = vmatprep.subr.bf16.mxu0 0
    %9437 = vmatpush1.bf16.msra.mxu0 0
    %9438 = vmatprep.mubr.bf16.mxu0 0
    %9439 = vmatmul.mubr.bf16.gmra.mrb[0].mxu0 %v9322
    %v9440 = vpop.f32.mrb[0].mxu0
    %v9441 = vadd.f32 %v9159, %v9440
    %v9442 = vpop.f32.mrb[0].mxu0
    %v9443 = vpop.f32.mrb[0].mxu0
    %v9444 = vpop.f32.mrb[0].mxu0
    %9445 = vdwg.mxu0
    %v9446 = vadd.f32 %v9359, 3.0
    %v9447 = vadd.f32 %v9361, 3.0
    %v9448 = vadd.f32 %v9400, 3.0
    %v9449 = vadd.f32 %v9402, 3.0
    %v9450 = vadd.f32 %v9441, 3.0
    %v9451 = vmax.f32 %v9446, 0.0
    %v9452 = vmax.f32 %v9447, 0.0
    %v9453 = vmax.f32 %v9448, 0.0
    %v9454 = vmax.f32 %v9449, 0.0
    %v9455 = vmax.f32 %v9450, 0.0
    %v9456 = vmin.f32 %v9451, 6.0
    %v9457 = vmin.f32 %v9452, 6.0
    %v9458 = vmin.f32 %v9453, 6.0
    %v9459 = vmin.f32 %v9454, 6.0
    %v9460 = vmin.f32 %v9455, 6.0
    %v9461 = vmul.f32 %v9456, 0.16666667
    %v9462 = vmul.f32 %v9457, 0.16666667
    %v9463 = vmul.f32 %v9458, 0.16666667
    %v9464 = vmul.f32 %v9459, 0.16666667
    %v9465 = vmul.f32 %v9460, 0.16666667
    %v9466 = vmul.f32 %v9359, %v9461
    %v9467 = vmul.f32 %v9361, %v9462
    %v9468 = vmul.f32 %v9400, %v9463
    %v9469 = vmul.f32 %v9402, %v9464
    %v9470 = vmul.f32 %v9441, %v9465
    %v9476 = vcombine.low %v9466, %v9467
    %v9477 = vcombine.low %v9468, %v9469
    %v9479 = vunpack.c.l.s4 1983009808
    %v9480 = vunpack.c.0.s8 %v9479
    %v9481 = vlaneseq
    %v9482 = vshrl.u32 %v9481, 7
    %v9483 = vsub.s32 %v9480, %v9482
    %v9484 = vrot.slane %v9476, %v9483
    %v9486 = vunpack.c.l.s4 1983009808
    %v9487 = vunpack.c.0.s8 %v9486
    %v9488 = vlaneseq
    %v9489 = vshrl.u32 %v9488, 7
    %v9490 = vsub.s32 %v9487, %v9489
    %v9491 = vrot.slane %v9477, %v9490
    %v9492 = vcombine.low %v9484, %v9491
    %v9494 = vunpack.c.l.s4 1983009808
    %v9495 = vunpack.c.0.s8 %v9494
    %v9496 = vlaneseq
    %v9497 = vshrl.u32 %v9496, 7
    %v9498 = vsub.s32 %v9495, %v9497
    %v9499 = vrot.slane %v9470, %v9498
    %9502 = vst [vmem:[%s119] sm:$0xff] %v9492
    %vm9503 = vcmask 517120
    %9504 = vst.msk [vmem:[%s119 + $0x8] sm:$0x3] %vm9503, %v9499
    // Predicated region
    $region242: #{mobilenet_small_forward.1} parent=1 // pred_check
      _
    $region243: #{mobilenet_small_forward.1} parent=1 // pred_check_branch
      %9506 = sbr.rel (0) target = $region245
    $region244: #{mobilenet_small_forward.1} parent=1 // pred_region
      _
    $region245: #{mobilenet_small_forward.1} parent=1 // pred_fallthru
      _
    // Predicated region
    $region246: #{mobilenet_small_forward.1} parent=1 // pred_check
      _
    $region247: #{mobilenet_small_forward.1} parent=1 // pred_check_branch
      %9508 = sbr.rel (0) target = $region249
    $region248: #{mobilenet_small_forward.1} parent=1 // pred_region
      %s9510 = ssub.s32 32, 32
      %9511 = vsyncadd [#allocation4], %s9510
      %s9513 = sshll.u32 [#allocation5], 4
      %s9514 = int_to_ptr.vmem [resolvable:$true] %s9513
      %9516 = dma.vmem_to_hbm [thread:$0]  %s9514, 32, %s121, [#allocation4]
    $region249: #{mobilenet_small_forward.1} parent=1 // pred_fallthru
      _
    // Predicated region
    $region250: #{mobilenet_small_forward.1} parent=1 // pred_check
      _
    $region251: #{mobilenet_small_forward.1} parent=1 // pred_check_branch
      %9518 = sbr.rel (0) target = $region253
    $region252: #{mobilenet_small_forward.1} parent=1 // pred_region
      %s9520 = ssub.s32 128, 128
      %9521 = vsyncadd [#allocation7], %s9520
      %s9523 = sshll.u32 [#allocation6], 4
      %s9524 = int_to_ptr.vmem [resolvable:$true] %s9523
      %9526 = dma.vmem_to_hbm [thread:$0]  %s9524, 128, %s123, [#allocation7]
    $region253: #{mobilenet_small_forward.1} parent=1 // pred_fallthru
      _
    // Predicated region
    $region254: #{mobilenet_small_forward.1} parent=1 // pred_check
      _
    $region255: #{mobilenet_small_forward.1} parent=1 // pred_check_branch
      %9528 = sbr.rel (0) target = $region257
    $region256: #{mobilenet_small_forward.1} parent=1 // pred_region
      _
    $region257: #{mobilenet_small_forward.1} parent=1 // pred_fallthru
      _
    // Predicated region
    $region258: #{mobilenet_small_forward.1} parent=1 // pred_check
      _
    $region259: #{mobilenet_small_forward.1} parent=1 // pred_check_branch
      %9530 = sbr.rel (0) target = $region261
    $region260: #{mobilenet_small_forward.1} parent=1 // pred_region
      %9531 = dma.done [#allocation4], 32
    $region261: #{mobilenet_small_forward.1} parent=1 // pred_fallthru
      _
    // Predicated region
    $region262: #{mobilenet_small_forward.1} parent=1 // pred_check
      _
    $region263: #{mobilenet_small_forward.1} parent=1 // pred_check_branch
      %9533 = sbr.rel (0) target = $region265
    $region264: #{mobilenet_small_forward.1} parent=1 // pred_region
      %9534 = dma.done [#allocation7], 128
    $region265: #{mobilenet_small_forward.1} parent=1 // pred_fallthru
      _
    %9535 = vsyncpa [#allocation3], 1
    %9536 = vsyncpa [#allocation4], 1
    %9537 = vsyncpa [#allocation7], 1

</llo_original>
